<compile_context>
chip_gen: v6e
topology: v6e:2x2x1
jax: 0.10.0
libtpu: 0.0.40
codegen_flags: <defaults>
</compile_context>

<pallas_src>
import math

import jax
import jax.numpy as jnp
import numpy as np
from jax.experimental import pallas as pl
from jax.experimental.pallas import tpu as pltpu

NUM_HEADS = 4
POOL = 32                      # adaptive_avg_pool2d target (32, 32)
SEQ = POOL * POOL              # 1024 tokens
TQ = 256                       # query tile (SEQ % TQ == 0, lane-dense multiple of 128)


# ---------------------------------------------------------------------------
# Kernel A: adaptive average pooling to (32, 32).
# One grid step per batch element; the whole (C, H, W) plane is pooled with a
# single big (C*H, W) @ (W, 32) width-pool matmul followed by C small
# (32, H) @ (H, 32) height-pool matmuls (static unroll, all MXU work).
# Output is written as (1, C, 32, 32); the wrapper flattens it to (B, C, 1024)
# with a free bitcast so no transpose is ever materialized.
# ---------------------------------------------------------------------------
def _pool_kernel(x_ref, pw_ref, ph_ref, o_ref):
    # x_ref: (1, C*H, W)  pw_ref: (W, 32)  ph_ref: (32, H)  o_ref: (1, C, 32, 32)
    C = o_ref.shape[1]
    H = ph_ref.shape[1]
    x2 = x_ref[0]                                                      # (C*H, W)
    t = jnp.dot(x2, pw_ref[...], preferred_element_type=jnp.float32)   # (C*H, 32) width pool
    for c in range(C):                                                 # static unroll, tiny bodies
        o_ref[0, c] = jnp.dot(ph_ref[...], t[c * H:(c + 1) * H, :],
                              preferred_element_type=jnp.float32)      # (32, 32) height pool


# ---------------------------------------------------------------------------
# Kernel B: multi-head self-attention in the transposed (features, tokens) layout.
# Grid = (B, SEQ // TQ).  Per grid step: one 256-token query tile against all
# 1024 keys/values.  Heads are processed with lax.fori_loop (bounds the live
# (TQ, S) score/prob intermediates to ~1.5 MiB); per-head weights are indexed
# dynamically on the leading axis of the weight refs (no activation slicing).
# ---------------------------------------------------------------------------
def _attn_kernel(xk_ref, xq_ref, wq_ref, wk_ref, wv_ref,
                 bq_ref, bk_ref, bv_ref, wo_ref, bo_ref, o_ref):
    # xk_ref: (1, E, S) tokens for keys/values   xq_ref: (1, E, TQ) query tile
    # wq/wk/wv: (NH, hd, E) bf16   bq/bk/bv: (NH, hd, 1) f32
    # wo: (NH, E, hd) bf16         bo: (E, 1) f32         o_ref: (1, E, TQ) f32
    E = xk_ref.shape[1]
    TQb = xq_ref.shape[2]
    hd = E // NUM_HEADS
    scale = 1.0 / math.sqrt(hd)

    xk = xk_ref[0].astype(jnp.bfloat16)          # (E, S)   bf16 MXU inputs, hoisted
    xq = xq_ref[0].astype(jnp.bfloat16)          # (E, TQ)

    def head_body(h, acc):
        q = jnp.dot(wq_ref[h], xq, preferred_element_type=jnp.float32) + bq_ref[h]   # (hd, TQ)
        k = jnp.dot(wk_ref[h], xk, preferred_element_type=jnp.float32) + bk_ref[h]   # (hd, S)
        v = jnp.dot(wv_ref[h], xk, preferred_element_type=jnp.float32) + bv_ref[h]   # (hd, S)
        s = jax.lax.dot_general(
            (q * scale).astype(jnp.bfloat16), k.astype(jnp.bfloat16),
            (((0,), (0,)), ((), ())), preferred_element_type=jnp.float32)             # (TQ, S)
        m = jnp.max(s, axis=-1, keepdims=True)                                         # f32 softmax
        p = jnp.exp(s - m)
        inv = pl.reciprocal(jnp.sum(p, axis=-1, keepdims=True), approx=True)           # EUP recip
        pb = (p * inv).astype(jnp.bfloat16)
        oh = jax.lax.dot_general(v.astype(jnp.bfloat16), pb,
                                 (((1,), (1,)), ((), ())),
                                 preferred_element_type=jnp.float32)                   # (hd, TQ)
        # head's slice of the output projection: Wo[:, lo:hi] @ oh, accumulated in f32
        return acc + jnp.dot(wo_ref[h], oh.astype(jnp.bfloat16),
                             preferred_element_type=jnp.float32)                       # (E, TQ)

    acc = jax.lax.fori_loop(0, NUM_HEADS, head_body,
                            jnp.zeros((E, TQb), jnp.float32))
    o_ref[...] = (acc + bo_ref[...])[None]


# ---------------------------------------------------------------------------
# Full module forward (only free bitcast reshapes in the wrapper, no transposes).
# ---------------------------------------------------------------------------
def spectral_attention_pallas(x, params):
    B, C, H, W = x.shape
    E = C
    # TODO(synk): exact adaptive pooling implemented only for H, W multiples of 32
    #             (uniform non-overlapping windows -- matches PyTorch in that case).
    assert H % POOL == 0 and W % POOL == 0, "H, W must be multiples of 32"
    assert E % NUM_HEADS == 0, "num_bands must be divisible by num_heads=4"
    kh, kw = H // POOL, W // POOL
    hd = E // NUM_HEADS

    ph = jnp.repeat(jnp.eye(POOL, dtype=jnp.float32), kh, axis=1) / kh     # (32, H)
    pw = jnp.repeat(jnp.eye(POOL, dtype=jnp.float32), kw, axis=1).T / kw   # (W, 32)

    pooled = pl.pallas_call(
        _pool_kernel,
        out_shape=jax.ShapeDtypeStruct((B, C, POOL, POOL), jnp.float32),
        grid=(B,),
        in_specs=[
            pl.BlockSpec((1, C * H, W), lambda b: (b, 0, 0)),
            pl.BlockSpec((W, POOL), lambda b: (0, 0)),
            pl.BlockSpec((POOL, H), lambda b: (0, 0)),
        ],
        out_specs=pl.BlockSpec((1, C, POOL, POOL), lambda b: (b, 0, 0, 0)),
        compiler_params=pltpu.CompilerParams(dimension_semantics=("parallel",)),
    )(x.reshape(B, C * H, W), pw, ph)

    xs = pooled.reshape(B, E, SEQ)          # free bitcast: tokens on the lane axis (E, S)

    wq = params["in_proj_weight"][:E]
    wk = params["in_proj_weight"][E:2 * E]
    wv = params["in_proj_weight"][2 * E:]
    bq = params["in_proj_bias"][:E]
    bk = params["in_proj_bias"][E:2 * E]
    bv = params["in_proj_bias"][2 * E:]
    wo = params["out_proj_weight"]
    bo = params["out_proj_bias"]

    # per-head weight layouts (tiny host-side/XLA reshapes; weights in bf16 for the MXU)
    wq3 = wq.reshape(NUM_HEADS, hd, E).astype(jnp.bfloat16)
    wk3 = wk.reshape(NUM_HEADS, hd, E).astype(jnp.bfloat16)
    wv3 = wv.reshape(NUM_HEADS, hd, E).astype(jnp.bfloat16)
    wo3 = wo.reshape(E, NUM_HEADS, hd).transpose(1, 0, 2).astype(jnp.bfloat16)  # (NH, E, hd)
    bq3 = bq.reshape(NUM_HEADS, hd, 1).astype(jnp.float32)
    bk3 = bk.reshape(NUM_HEADS, hd, 1).astype(jnp.float32)
    bv3 = bv.reshape(NUM_HEADS, hd, 1).astype(jnp.float32)
    bo2 = bo.reshape(E, 1).astype(jnp.float32)

    nq = SEQ // TQ
    w_map = lambda b, q: (0, 0, 0)
    attn = pl.pallas_call(
        _attn_kernel,
        out_shape=jax.ShapeDtypeStruct((B, E, SEQ), jnp.float32),
        grid=(B, nq),
        in_specs=[
            pl.BlockSpec((1, E, SEQ), lambda b, q: (b, 0, 0)),   # K/V tokens (DMA'd once per b)
            pl.BlockSpec((1, E, TQ), lambda b, q: (b, 0, q)),    # query tile
            pl.BlockSpec((NUM_HEADS, hd, E), w_map),
            pl.BlockSpec((NUM_HEADS, hd, E), w_map),
            pl.BlockSpec((NUM_HEADS, hd, E), w_map),
            pl.BlockSpec((NUM_HEADS, hd, 1), w_map),
            pl.BlockSpec((NUM_HEADS, hd, 1), w_map),
            pl.BlockSpec((NUM_HEADS, hd, 1), w_map),
            pl.BlockSpec((NUM_HEADS, E, hd), w_map),
            pl.BlockSpec((E, 1), lambda b, q: (0, 0)),
        ],
        out_specs=pl.BlockSpec((1, E, TQ), lambda b, q: (b, 0, q)),
        compiler_params=pltpu.CompilerParams(
            dimension_semantics=("parallel", "arbitrary"),
            vmem_limit_bytes=32 * 1024 * 1024),
    )(xs, xs, wq3, wk3, wv3, bq3, bk3, bv3, wo3, bo2)

    return attn.reshape(B, E, POOL, POOL)   # free bitcast, NCHW


# ---------------------------------------------------------------------------
# Pure-JAX f32 reference (mirrors torch.nn.MultiheadAttention semantics).
# ---------------------------------------------------------------------------
def spectral_attention_ref(x, params):
    B, C, H, W = x.shape
    E = C
    hd = E // NUM_HEADS
    kh, kw = H // POOL, W // POOL
    pooled = x.reshape(B, C, POOL, kh, POOL, kw).mean(axis=(3, 5))
    xs = pooled.reshape(B, C, SEQ).transpose(0, 2, 1)                  # (B, S, E)

    wq = params["in_proj_weight"][:E]
    wk = params["in_proj_weight"][E:2 * E]
    wv = params["in_proj_weight"][2 * E:]
    bq = params["in_proj_bias"][:E]
    bk = params["in_proj_bias"][E:2 * E]
    bv = params["in_proj_bias"][2 * E:]

    q = xs @ wq.T + bq
    k = xs @ wk.T + bk
    v = xs @ wv.T + bv

    def split(t):
        return t.reshape(B, -1, NUM_HEADS, hd).transpose(0, 2, 1, 3)

    qh, khd, vh = split(q), split(k), split(v)
    s = (qh / math.sqrt(hd)) @ khd.transpose(0, 1, 3, 2)
    p = jax.nn.softmax(s, axis=-1)
    ctx = (p @ vh).transpose(0, 2, 1, 3).reshape(B, -1, E)
    out = ctx @ params["out_proj_weight"].T + params["out_proj_bias"]
    return out.transpose(0, 2, 1).reshape(B, E, POOL, POOL)


if __name__ == "__main__":
    B, C, H, W = 2, 16, 64, 64          # num_bands = 16 (divisible by 4 heads)
    E = C
    key = jax.random.PRNGKey(0)
    kx, k1, k2, k3, k4 = jax.random.split(key, 5)

    x = jax.random.normal(kx, (B, C, H, W), dtype=jnp.float32)
    params = {
        "in_proj_weight": jax.random.normal(k1, (3 * E, E), jnp.float32) / math.sqrt(E),
        "in_proj_bias":   jax.random.normal(k2, (3 * E,), jnp.float32) * 0.02,
        "out_proj_weight": jax.random.normal(k3, (E, E), jnp.float32) / math.sqrt(E),
        "out_proj_bias":  jax.random.normal(k4, (E,), jnp.float32) * 0.02,
    }

    fwd = jax.jit(spectral_attention_pallas)
    out = jax.block_until_ready(fwd(x, params))

    ref = spectral_attention_ref(x, params)
    assert out.shape == (B, C, POOL, POOL)
    np.testing.assert_allclose(np.asarray(out), np.asarray(ref), rtol=2e-2, atol=2e-2)

    print("KERNEL_OK")
</pallas_src>

<mosaic_0001>
module attributes {stable_mosaic.version = 11 : i64} {
  func.func @_pool_kernel(%arg0: i32, %arg1: memref<1x1024x64xf32, #tpu.memory_space<vmem>>, %arg2: memref<64x32xf32, #tpu.memory_space<vmem>>, %arg3: memref<32x64xf32, #tpu.memory_space<vmem>>, %arg4: memref<1x16x32x32xf32, #tpu.memory_space<vmem>>) attributes {dimension_semantics = [#tpu.dimension_semantics<parallel>], iteration_bounds = array<i64: 2>, scalar_prefetch = 0 : i64, scratch_operands = 0 : i64, tpu.core_type = #tpu.core_type<tc>, window_params = [{transform_indices = @transform_0, window_bounds = array<i64: 1, 1024, 64>}, {pipeline_mode = #tpu.pipeline_mode<synchronous>, transform_indices = @transform_1, window_bounds = array<i64: 64, 32>}, {pipeline_mode = #tpu.pipeline_mode<synchronous>, transform_indices = @transform_2, window_bounds = array<i64: 32, 64>}, {transform_indices = @transform_3, window_bounds = array<i64: 1, 16, 32, 32>}]} {
    %c0 = arith.constant 0 : index
    %c0_0 = arith.constant 0 : index
    %c0_1 = arith.constant 0 : index
    %0 = vector.load %arg1[%c0, %c0_0, %c0_1] : memref<1x1024x64xf32, #tpu.memory_space<vmem>>, vector<1x1024x64xf32>
    %1 = vector.shape_cast %0 : vector<1x1024x64xf32> to vector<1024x64xf32>
    %c0_2 = arith.constant 0 : index
    %c0_3 = arith.constant 0 : index
    %2 = vector.load %arg2[%c0_2, %c0_3] : memref<64x32xf32, #tpu.memory_space<vmem>>, vector<64x32xf32>
    %cst = arith.constant dense<0.000000e+00> : vector<1024x32xf32>
    %3 = tpu.matmul %1, %2, %cst {dimension_numbers = #tpu.dot_dimension_numbers<[1], [0], [0], [1], [0, 0, 1, 1], [], []>} : vector<1024x64xf32>, vector<64x32xf32>, vector<1024x32xf32> -> vector<1024x32xf32>
    %c0_4 = arith.constant 0 : index
    %c0_5 = arith.constant 0 : index
    %4 = vector.load %arg3[%c0_4, %c0_5] : memref<32x64xf32, #tpu.memory_space<vmem>>, vector<32x64xf32>
    %5 = vector.extract_strided_slice %3 {offsets = [0, 0], sizes = [64, 32], strides = [1, 1]} : vector<1024x32xf32> to vector<64x32xf32>
    %cst_6 = arith.constant dense<0.000000e+00> : vector<32x32xf32>
    %6 = tpu.matmul %4, %5, %cst_6 {dimension_numbers = #tpu.dot_dimension_numbers<[1], [0], [0], [1], [0, 0, 1, 1], [], []>} : vector<32x64xf32>, vector<64x32xf32>, vector<32x32xf32> -> vector<32x32xf32>
    %c0_7 = arith.constant 0 : index
    %c0_8 = arith.constant 0 : index
    %c0_9 = arith.constant 0 : index
    %c0_10 = arith.constant 0 : index
    %7 = vector.load %arg4[%c0_7, %c0_8, %c0_9, %c0_10] : memref<1x16x32x32xf32, #tpu.memory_space<vmem>>, vector<1x1x32x32xf32>
    %8 = vector.shape_cast %7 : vector<1x1x32x32xf32> to vector<32x32xf32>
    %9 = vector.shape_cast %6 : vector<32x32xf32> to vector<1x1x32x32xf32>
    tpu.vector_store %arg4[%c0_7, %c0_8, %c0_9, %c0_10], %9 {strides = array<i32>} : memref<1x16x32x32xf32, #tpu.memory_space<vmem>>, vector<1x1x32x32xf32>,
    %c0_11 = arith.constant 0 : index
    %c0_12 = arith.constant 0 : index
    %10 = vector.load %arg3[%c0_11, %c0_12] : memref<32x64xf32, #tpu.memory_space<vmem>>, vector<32x64xf32>
    %11 = vector.extract_strided_slice %3 {offsets = [64, 0], sizes = [64, 32], strides = [1, 1]} : vector<1024x32xf32> to vector<64x32xf32>
    %cst_13 = arith.constant dense<0.000000e+00> : vector<32x32xf32>
    %12 = tpu.matmul %10, %11, %cst_13 {dimension_numbers = #tpu.dot_dimension_numbers<[1], [0], [0], [1], [0, 0, 1, 1], [], []>} : vector<32x64xf32>, vector<64x32xf32>, vector<32x32xf32> -> vector<32x32xf32>
    %c0_14 = arith.constant 0 : index
    %c1 = arith.constant 1 : index
    %c0_15 = arith.constant 0 : index
    %c0_16 = arith.constant 0 : index
    %13 = vector.load %arg4[%c0_14, %c1, %c0_15, %c0_16] : memref<1x16x32x32xf32, #tpu.memory_space<vmem>>, vector<1x1x32x32xf32>
    %14 = vector.shape_cast %13 : vector<1x1x32x32xf32> to vector<32x32xf32>
    %15 = vector.shape_cast %12 : vector<32x32xf32> to vector<1x1x32x32xf32>
    tpu.vector_store %arg4[%c0_14, %c1, %c0_15, %c0_16], %15 {strides = array<i32>} : memref<1x16x32x32xf32, #tpu.memory_space<vmem>>, vector<1x1x32x32xf32>,
    %c0_17 = arith.constant 0 : index
    %c0_18 = arith.constant 0 : index
    %16 = vector.load %arg3[%c0_17, %c0_18] : memref<32x64xf32, #tpu.memory_space<vmem>>, vector<32x64xf32>
    %17 = vector.extract_strided_slice %3 {offsets = [128, 0], sizes = [64, 32], strides = [1, 1]} : vector<1024x32xf32> to vector<64x32xf32>
    %cst_19 = arith.constant dense<0.000000e+00> : vector<32x32xf32>
    %18 = tpu.matmul %16, %17, %cst_19 {dimension_numbers = #tpu.dot_dimension_numbers<[1], [0], [0], [1], [0, 0, 1, 1], [], []>} : vector<32x64xf32>, vector<64x32xf32>, vector<32x32xf32> -> vector<32x32xf32>
    %c0_20 = arith.constant 0 : index
    %c2 = arith.constant 2 : index
    %c0_21 = arith.constant 0 : index
    %c0_22 = arith.constant 0 : index
    %19 = vector.load %arg4[%c0_20, %c2, %c0_21, %c0_22] : memref<1x16x32x32xf32, #tpu.memory_space<vmem>>, vector<1x1x32x32xf32>
    %20 = vector.shape_cast %19 : vector<1x1x32x32xf32> to vector<32x32xf32>
    %21 = vector.shape_cast %18 : vector<32x32xf32> to vector<1x1x32x32xf32>
    tpu.vector_store %arg4[%c0_20, %c2, %c0_21, %c0_22], %21 {strides = array<i32>} : memref<1x16x32x32xf32, #tpu.memory_space<vmem>>, vector<1x1x32x32xf32>,
    %c0_23 = arith.constant 0 : index
    %c0_24 = arith.constant 0 : index
    %22 = vector.load %arg3[%c0_23, %c0_24] : memref<32x64xf32, #tpu.memory_space<vmem>>, vector<32x64xf32>
    %23 = vector.extract_strided_slice %3 {offsets = [192, 0], sizes = [64, 32], strides = [1, 1]} : vector<1024x32xf32> to vector<64x32xf32>
    %cst_25 = arith.constant dense<0.000000e+00> : vector<32x32xf32>
    %24 = tpu.matmul %22, %23, %cst_25 {dimension_numbers = #tpu.dot_dimension_numbers<[1], [0], [0], [1], [0, 0, 1, 1], [], []>} : vector<32x64xf32>, vector<64x32xf32>, vector<32x32xf32> -> vector<32x32xf32>
    %c0_26 = arith.constant 0 : index
    %c3 = arith.constant 3 : index
    %c0_27 = arith.constant 0 : index
    %c0_28 = arith.constant 0 : index
    %25 = vector.load %arg4[%c0_26, %c3, %c0_27, %c0_28] : memref<1x16x32x32xf32, #tpu.memory_space<vmem>>, vector<1x1x32x32xf32>
    %26 = vector.shape_cast %25 : vector<1x1x32x32xf32> to vector<32x32xf32>
    %27 = vector.shape_cast %24 : vector<32x32xf32> to vector<1x1x32x32xf32>
    tpu.vector_store %arg4[%c0_26, %c3, %c0_27, %c0_28], %27 {strides = array<i32>} : memref<1x16x32x32xf32, #tpu.memory_space<vmem>>, vector<1x1x32x32xf32>,
    %c0_29 = arith.constant 0 : index
    %c0_30 = arith.constant 0 : index
    %28 = vector.load %arg3[%c0_29, %c0_30] : memref<32x64xf32, #tpu.memory_space<vmem>>, vector<32x64xf32>
    %29 = vector.extract_strided_slice %3 {offsets = [256, 0], sizes = [64, 32], strides = [1, 1]} : vector<1024x32xf32> to vector<64x32xf32>
    %cst_31 = arith.constant dense<0.000000e+00> : vector<32x32xf32>
    %30 = tpu.matmul %28, %29, %cst_31 {dimension_numbers = #tpu.dot_dimension_numbers<[1], [0], [0], [1], [0, 0, 1, 1], [], []>} : vector<32x64xf32>, vector<64x32xf32>, vector<32x32xf32> -> vector<32x32xf32>
    %c0_32 = arith.constant 0 : index
    %c4 = arith.constant 4 : index
    %c0_33 = arith.constant 0 : index
    %c0_34 = arith.constant 0 : index
    %31 = vector.load %arg4[%c0_32, %c4, %c0_33, %c0_34] : memref<1x16x32x32xf32, #tpu.memory_space<vmem>>, vector<1x1x32x32xf32>
    %32 = vector.shape_cast %31 : vector<1x1x32x32xf32> to vector<32x32xf32>
    %33 = vector.shape_cast %30 : vector<32x32xf32> to vector<1x1x32x32xf32>
    tpu.vector_store %arg4[%c0_32, %c4, %c0_33, %c0_34], %33 {strides = array<i32>} : memref<1x16x32x32xf32, #tpu.memory_space<vmem>>, vector<1x1x32x32xf32>,
    %c0_35 = arith.constant 0 : index
    %c0_36 = arith.constant 0 : index
    %34 = vector.load %arg3[%c0_35, %c0_36] : memref<32x64xf32, #tpu.memory_space<vmem>>, vector<32x64xf32>
    %35 = vector.extract_strided_slice %3 {offsets = [320, 0], sizes = [64, 32], strides = [1, 1]} : vector<1024x32xf32> to vector<64x32xf32>
    %cst_37 = arith.constant dense<0.000000e+00> : vector<32x32xf32>
    %36 = tpu.matmul %34, %35, %cst_37 {dimension_numbers = #tpu.dot_dimension_numbers<[1], [0], [0], [1], [0, 0, 1, 1], [], []>} : vector<32x64xf32>, vector<64x32xf32>, vector<32x32xf32> -> vector<32x32xf32>
    %c0_38 = arith.constant 0 : index
    %c5 = arith.constant 5 : index
    %c0_39 = arith.constant 0 : index
    %c0_40 = arith.constant 0 : index
    %37 = vector.load %arg4[%c0_38, %c5, %c0_39, %c0_40] : memref<1x16x32x32xf32, #tpu.memory_space<vmem>>, vector<1x1x32x32xf32>
    %38 = vector.shape_cast %37 : vector<1x1x32x32xf32> to vector<32x32xf32>
    %39 = vector.shape_cast %36 : vector<32x32xf32> to vector<1x1x32x32xf32>
    tpu.vector_store %arg4[%c0_38, %c5, %c0_39, %c0_40], %39 {strides = array<i32>} : memref<1x16x32x32xf32, #tpu.memory_space<vmem>>, vector<1x1x32x32xf32>,
    %c0_41 = arith.constant 0 : index
    %c0_42 = arith.constant 0 : index
    %40 = vector.load %arg3[%c0_41, %c0_42] : memref<32x64xf32, #tpu.memory_space<vmem>>, vector<32x64xf32>
    %41 = vector.extract_strided_slice %3 {offsets = [384, 0], sizes = [64, 32], strides = [1, 1]} : vector<1024x32xf32> to vector<64x32xf32>
    %cst_43 = arith.constant dense<0.000000e+00> : vector<32x32xf32>
    %42 = tpu.matmul %40, %41, %cst_43 {dimension_numbers = #tpu.dot_dimension_numbers<[1], [0], [0], [1], [0, 0, 1, 1], [], []>} : vector<32x64xf32>, vector<64x32xf32>, vector<32x32xf32> -> vector<32x32xf32>
    %c0_44 = arith.constant 0 : index
    %c6 = arith.constant 6 : index
    %c0_45 = arith.constant 0 : index
    %c0_46 = arith.constant 0 : index
    %43 = vector.load %arg4[%c0_44, %c6, %c0_45, %c0_46] : memref<1x16x32x32xf32, #tpu.memory_space<vmem>>, vector<1x1x32x32xf32>
    %44 = vector.shape_cast %43 : vector<1x1x32x32xf32> to vector<32x32xf32>
    %45 = vector.shape_cast %42 : vector<32x32xf32> to vector<1x1x32x32xf32>
    tpu.vector_store %arg4[%c0_44, %c6, %c0_45, %c0_46], %45 {strides = array<i32>} : memref<1x16x32x32xf32, #tpu.memory_space<vmem>>, vector<1x1x32x32xf32>,
    %c0_47 = arith.constant 0 : index
    %c0_48 = arith.constant 0 : index
    %46 = vector.load %arg3[%c0_47, %c0_48] : memref<32x64xf32, #tpu.memory_space<vmem>>, vector<32x64xf32>
    %47 = vector.extract_strided_slice %3 {offsets = [448, 0], sizes = [64, 32], strides = [1, 1]} : vector<1024x32xf32> to vector<64x32xf32>
    %cst_49 = arith.constant dense<0.000000e+00> : vector<32x32xf32>
    %48 = tpu.matmul %46, %47, %cst_49 {dimension_numbers = #tpu.dot_dimension_numbers<[1], [0], [0], [1], [0, 0, 1, 1], [], []>} : vector<32x64xf32>, vector<64x32xf32>, vector<32x32xf32> -> vector<32x32xf32>
    %c0_50 = arith.constant 0 : index
    %c7 = arith.constant 7 : index
    %c0_51 = arith.constant 0 : index
    %c0_52 = arith.constant 0 : index
    %49 = vector.load %arg4[%c0_50, %c7, %c0_51, %c0_52] : memref<1x16x32x32xf32, #tpu.memory_space<vmem>>, vector<1x1x32x32xf32>
    %50 = vector.shape_cast %49 : vector<1x1x32x32xf32> to vector<32x32xf32>
    %51 = vector.shape_cast %48 : vector<32x32xf32> to vector<1x1x32x32xf32>
    tpu.vector_store %arg4[%c0_50, %c7, %c0_51, %c0_52], %51 {strides = array<i32>} : memref<1x16x32x32xf32, #tpu.memory_space<vmem>>, vector<1x1x32x32xf32>,
    %c0_53 = arith.constant 0 : index
    %c0_54 = arith.constant 0 : index
    %52 = vector.load %arg3[%c0_53, %c0_54] : memref<32x64xf32, #tpu.memory_space<vmem>>, vector<32x64xf32>
    %53 = vector.extract_strided_slice %3 {offsets = [512, 0], sizes = [64, 32], strides = [1, 1]} : vector<1024x32xf32> to vector<64x32xf32>
    %cst_55 = arith.constant dense<0.000000e+00> : vector<32x32xf32>
    %54 = tpu.matmul %52, %53, %cst_55 {dimension_numbers = #tpu.dot_dimension_numbers<[1], [0], [0], [1], [0, 0, 1, 1], [], []>} : vector<32x64xf32>, vector<64x32xf32>, vector<32x32xf32> -> vector<32x32xf32>
    %c0_56 = arith.constant 0 : index
    %c8 = arith.constant 8 : index
    %c0_57 = arith.constant 0 : index
    %c0_58 = arith.constant 0 : index
    %55 = vector.load %arg4[%c0_56, %c8, %c0_57, %c0_58] : memref<1x16x32x32xf32, #tpu.memory_space<vmem>>, vector<1x1x32x32xf32>
    %56 = vector.shape_cast %55 : vector<1x1x32x32xf32> to vector<32x32xf32>
    %57 = vector.shape_cast %54 : vector<32x32xf32> to vector<1x1x32x32xf32>
    tpu.vector_store %arg4[%c0_56, %c8, %c0_57, %c0_58], %57 {strides = array<i32>} : memref<1x16x32x32xf32, #tpu.memory_space<vmem>>, vector<1x1x32x32xf32>,
    %c0_59 = arith.constant 0 : index
    %c0_60 = arith.constant 0 : index
    %58 = vector.load %arg3[%c0_59, %c0_60] : memref<32x64xf32, #tpu.memory_space<vmem>>, vector<32x64xf32>
    %59 = vector.extract_strided_slice %3 {offsets = [576, 0], sizes = [64, 32], strides = [1, 1]} : vector<1024x32xf32> to vector<64x32xf32>
    %cst_61 = arith.constant dense<0.000000e+00> : vector<32x32xf32>
    %60 = tpu.matmul %58, %59, %cst_61 {dimension_numbers = #tpu.dot_dimension_numbers<[1], [0], [0], [1], [0, 0, 1, 1], [], []>} : vector<32x64xf32>, vector<64x32xf32>, vector<32x32xf32> -> vector<32x32xf32>
    %c0_62 = arith.constant 0 : index
    %c9 = arith.constant 9 : index
    %c0_63 = arith.constant 0 : index
    %c0_64 = arith.constant 0 : index
    %61 = vector.load %arg4[%c0_62, %c9, %c0_63, %c0_64] : memref<1x16x32x32xf32, #tpu.memory_space<vmem>>, vector<1x1x32x32xf32>
    %62 = vector.shape_cast %61 : vector<1x1x32x32xf32> to vector<32x32xf32>
    %63 = vector.shape_cast %60 : vector<32x32xf32> to vector<1x1x32x32xf32>
    tpu.vector_store %arg4[%c0_62, %c9, %c0_63, %c0_64], %63 {strides = array<i32>} : memref<1x16x32x32xf32, #tpu.memory_space<vmem>>, vector<1x1x32x32xf32>,
    %c0_65 = arith.constant 0 : index
    %c0_66 = arith.constant 0 : index
    %64 = vector.load %arg3[%c0_65, %c0_66] : memref<32x64xf32, #tpu.memory_space<vmem>>, vector<32x64xf32>
    %65 = vector.extract_strided_slice %3 {offsets = [640, 0], sizes = [64, 32], strides = [1, 1]} : vector<1024x32xf32> to vector<64x32xf32>
    %cst_67 = arith.constant dense<0.000000e+00> : vector<32x32xf32>
    %66 = tpu.matmul %64, %65, %cst_67 {dimension_numbers = #tpu.dot_dimension_numbers<[1], [0], [0], [1], [0, 0, 1, 1], [], []>} : vector<32x64xf32>, vector<64x32xf32>, vector<32x32xf32> -> vector<32x32xf32>
    %c0_68 = arith.constant 0 : index
    %c10 = arith.constant 10 : index
    %c0_69 = arith.constant 0 : index
    %c0_70 = arith.constant 0 : index
    %67 = vector.load %arg4[%c0_68, %c10, %c0_69, %c0_70] : memref<1x16x32x32xf32, #tpu.memory_space<vmem>>, vector<1x1x32x32xf32>
    %68 = vector.shape_cast %67 : vector<1x1x32x32xf32> to vector<32x32xf32>
    %69 = vector.shape_cast %66 : vector<32x32xf32> to vector<1x1x32x32xf32>
    tpu.vector_store %arg4[%c0_68, %c10, %c0_69, %c0_70], %69 {strides = array<i32>} : memref<1x16x32x32xf32, #tpu.memory_space<vmem>>, vector<1x1x32x32xf32>,
    %c0_71 = arith.constant 0 : index
    %c0_72 = arith.constant 0 : index
    %70 = vector.load %arg3[%c0_71, %c0_72] : memref<32x64xf32, #tpu.memory_space<vmem>>, vector<32x64xf32>
    %71 = vector.extract_strided_slice %3 {offsets = [704, 0], sizes = [64, 32], strides = [1, 1]} : vector<1024x32xf32> to vector<64x32xf32>
    %cst_73 = arith.constant dense<0.000000e+00> : vector<32x32xf32>
    %72 = tpu.matmul %70, %71, %cst_73 {dimension_numbers = #tpu.dot_dimension_numbers<[1], [0], [0], [1], [0, 0, 1, 1], [], []>} : vector<32x64xf32>, vector<64x32xf32>, vector<32x32xf32> -> vector<32x32xf32>
    %c0_74 = arith.constant 0 : index
    %c11 = arith.constant 11 : index
    %c0_75 = arith.constant 0 : index
    %c0_76 = arith.constant 0 : index
    %73 = vector.load %arg4[%c0_74, %c11, %c0_75, %c0_76] : memref<1x16x32x32xf32, #tpu.memory_space<vmem>>, vector<1x1x32x32xf32>
    %74 = vector.shape_cast %73 : vector<1x1x32x32xf32> to vector<32x32xf32>
    %75 = vector.shape_cast %72 : vector<32x32xf32> to vector<1x1x32x32xf32>
    tpu.vector_store %arg4[%c0_74, %c11, %c0_75, %c0_76], %75 {strides = array<i32>} : memref<1x16x32x32xf32, #tpu.memory_space<vmem>>, vector<1x1x32x32xf32>,
    %c0_77 = arith.constant 0 : index
    %c0_78 = arith.constant 0 : index
    %76 = vector.load %arg3[%c0_77, %c0_78] : memref<32x64xf32, #tpu.memory_space<vmem>>, vector<32x64xf32>
    %77 = vector.extract_strided_slice %3 {offsets = [768, 0], sizes = [64, 32], strides = [1, 1]} : vector<1024x32xf32> to vector<64x32xf32>
    %cst_79 = arith.constant dense<0.000000e+00> : vector<32x32xf32>
    %78 = tpu.matmul %76, %77, %cst_79 {dimension_numbers = #tpu.dot_dimension_numbers<[1], [0], [0], [1], [0, 0, 1, 1], [], []>} : vector<32x64xf32>, vector<64x32xf32>, vector<32x32xf32> -> vector<32x32xf32>
    %c0_80 = arith.constant 0 : index
    %c12 = arith.constant 12 : index
    %c0_81 = arith.constant 0 : index
    %c0_82 = arith.constant 0 : index
    %79 = vector.load %arg4[%c0_80, %c12, %c0_81, %c0_82] : memref<1x16x32x32xf32, #tpu.memory_space<vmem>>, vector<1x1x32x32xf32>
    %80 = vector.shape_cast %79 : vector<1x1x32x32xf32> to vector<32x32xf32>
    %81 = vector.shape_cast %78 : vector<32x32xf32> to vector<1x1x32x32xf32>
    tpu.vector_store %arg4[%c0_80, %c12, %c0_81, %c0_82], %81 {strides = array<i32>} : memref<1x16x32x32xf32, #tpu.memory_space<vmem>>, vector<1x1x32x32xf32>,
    %c0_83 = arith.constant 0 : index
    %c0_84 = arith.constant 0 : index
    %82 = vector.load %arg3[%c0_83, %c0_84] : memref<32x64xf32, #tpu.memory_space<vmem>>, vector<32x64xf32>
    %83 = vector.extract_strided_slice %3 {offsets = [832, 0], sizes = [64, 32], strides = [1, 1]} : vector<1024x32xf32> to vector<64x32xf32>
    %cst_85 = arith.constant dense<0.000000e+00> : vector<32x32xf32>
    %84 = tpu.matmul %82, %83, %cst_85 {dimension_numbers = #tpu.dot_dimension_numbers<[1], [0], [0], [1], [0, 0, 1, 1], [], []>} : vector<32x64xf32>, vector<64x32xf32>, vector<32x32xf32> -> vector<32x32xf32>
    %c0_86 = arith.constant 0 : index
    %c13 = arith.constant 13 : index
    %c0_87 = arith.constant 0 : index
    %c0_88 = arith.constant 0 : index
    %85 = vector.load %arg4[%c0_86, %c13, %c0_87, %c0_88] : memref<1x16x32x32xf32, #tpu.memory_space<vmem>>, vector<1x1x32x32xf32>
    %86 = vector.shape_cast %85 : vector<1x1x32x32xf32> to vector<32x32xf32>
    %87 = vector.shape_cast %84 : vector<32x32xf32> to vector<1x1x32x32xf32>
    tpu.vector_store %arg4[%c0_86, %c13, %c0_87, %c0_88], %87 {strides = array<i32>} : memref<1x16x32x32xf32, #tpu.memory_space<vmem>>, vector<1x1x32x32xf32>,
    %c0_89 = arith.constant 0 : index
    %c0_90 = arith.constant 0 : index
    %88 = vector.load %arg3[%c0_89, %c0_90] : memref<32x64xf32, #tpu.memory_space<vmem>>, vector<32x64xf32>
    %89 = vector.extract_strided_slice %3 {offsets = [896, 0], sizes = [64, 32], strides = [1, 1]} : vector<1024x32xf32> to vector<64x32xf32>
    %cst_91 = arith.constant dense<0.000000e+00> : vector<32x32xf32>
    %90 = tpu.matmul %88, %89, %cst_91 {dimension_numbers = #tpu.dot_dimension_numbers<[1], [0], [0], [1], [0, 0, 1, 1], [], []>} : vector<32x64xf32>, vector<64x32xf32>, vector<32x32xf32> -> vector<32x32xf32>
    %c0_92 = arith.constant 0 : index
    %c14 = arith.constant 14 : index
    %c0_93 = arith.constant 0 : index
    %c0_94 = arith.constant 0 : index
    %91 = vector.load %arg4[%c0_92, %c14, %c0_93, %c0_94] : memref<1x16x32x32xf32, #tpu.memory_space<vmem>>, vector<1x1x32x32xf32>
    %92 = vector.shape_cast %91 : vector<1x1x32x32xf32> to vector<32x32xf32>
    %93 = vector.shape_cast %90 : vector<32x32xf32> to vector<1x1x32x32xf32>
    tpu.vector_store %arg4[%c0_92, %c14, %c0_93, %c0_94], %93 {strides = array<i32>} : memref<1x16x32x32xf32, #tpu.memory_space<vmem>>, vector<1x1x32x32xf32>,
    %c0_95 = arith.constant 0 : index
    %c0_96 = arith.constant 0 : index
    %94 = vector.load %arg3[%c0_95, %c0_96] : memref<32x64xf32, #tpu.memory_space<vmem>>, vector<32x64xf32>
    %95 = vector.extract_strided_slice %3 {offsets = [960, 0], sizes = [64, 32], strides = [1, 1]} : vector<1024x32xf32> to vector<64x32xf32>
    %cst_97 = arith.constant dense<0.000000e+00> : vector<32x32xf32>
    %96 = tpu.matmul %94, %95, %cst_97 {dimension_numbers = #tpu.dot_dimension_numbers<[1], [0], [0], [1], [0, 0, 1, 1], [], []>} : vector<32x64xf32>, vector<64x32xf32>, vector<32x32xf32> -> vector<32x32xf32>
    %c0_98 = arith.constant 0 : index
    %c15 = arith.constant 15 : index
    %c0_99 = arith.constant 0 : index
    %c0_100 = arith.constant 0 : index
    %97 = vector.load %arg4[%c0_98, %c15, %c0_99, %c0_100] : memref<1x16x32x32xf32, #tpu.memory_space<vmem>>, vector<1x1x32x32xf32>
    %98 = vector.shape_cast %97 : vector<1x1x32x32xf32> to vector<32x32xf32>
    %99 = vector.shape_cast %96 : vector<32x32xf32> to vector<1x1x32x32xf32>
    tpu.vector_store %arg4[%c0_98, %c15, %c0_99, %c0_100], %99 {strides = array<i32>} : memref<1x16x32x32xf32, #tpu.memory_space<vmem>>, vector<1x1x32x32xf32>,
    return
  }
  func.func @transform_0(%arg0: i32) -> (i32, i32, i32) {
    %c0_i32 = arith.constant 0 : i32
    %c0_i32_0 = arith.constant 0 : i32
    %c0_i32_1 = arith.constant 0 : i32
    return %arg0, %c0_i32, %c0_i32_0 : i32, i32, i32
  }
  func.func @transform_1(%arg0: i32) -> (i32, i32) {
    %c0_i32 = arith.constant 0 : i32
    %c0_i32_0 = arith.constant 0 : i32
    %c0_i32_1 = arith.constant 0 : i32
    return %c0_i32, %c0_i32_0 : i32, i32
  }
  func.func @transform_2(%arg0: i32) -> (i32, i32) {
    %c0_i32 = arith.constant 0 : i32
    %c0_i32_0 = arith.constant 0 : i32
    %c0_i32_1 = arith.constant 0 : i32
    return %c0_i32, %c0_i32_0 : i32, i32
  }
  func.func @transform_3(%arg0: i32) -> (i32, i32, i32, i32) {
    %c0_i32 = arith.constant 0 : i32
    %c0_i32_0 = arith.constant 0 : i32
    %c0_i32_1 = arith.constant 0 : i32
    %c0_i32_2 = arith.constant 0 : i32
    return %arg0, %c0_i32, %c0_i32_0, %c0_i32_1 : i32, i32, i32, i32
  }
}

module attributes {stable_mosaic.version = 11 : i64} {
  func.func @_attn_kernel(%arg0: i32, %arg1: i32, %arg2: memref<1x16x1024xf32, #tpu.memory_space<vmem>>, %arg3: memref<1x16x256xf32, #tpu.memory_space<vmem>>, %arg4: memref<4x4x16xbf16, #tpu.memory_space<vmem>>, %arg5: memref<4x4x16xbf16, #tpu.memory_space<vmem>>, %arg6: memref<4x4x16xbf16, #tpu.memory_space<vmem>>, %arg7: memref<4x4x1xf32, #tpu.memory_space<vmem>>, %arg8: memref<4x4x1xf32, #tpu.memory_space<vmem>>, %arg9: memref<4x4x1xf32, #tpu.memory_space<vmem>>, %arg10: memref<4x16x4xbf16, #tpu.memory_space<vmem>>, %arg11: memref<16x1xf32, #tpu.memory_space<vmem>>, %arg12: memref<1x16x256xf32, #tpu.memory_space<vmem>>) attributes {dimension_semantics = [#tpu.dimension_semantics<parallel>, #tpu.dimension_semantics<arbitrary>], iteration_bounds = array<i64: 2, 4>, scalar_prefetch = 0 : i64, scratch_operands = 0 : i64, tpu.core_type = #tpu.core_type<tc>, window_params = [{transform_indices = @transform_0, window_bounds = array<i64: 1, 16, 1024>}, {transform_indices = @transform_1, window_bounds = array<i64: 1, 16, 256>}, {pipeline_mode = #tpu.pipeline_mode<synchronous>, transform_indices = @transform_2, window_bounds = array<i64: 4, 4, 16>}, {pipeline_mode = #tpu.pipeline_mode<synchronous>, transform_indices = @transform_3, window_bounds = array<i64: 4, 4, 16>}, {pipeline_mode = #tpu.pipeline_mode<synchronous>, transform_indices = @transform_4, window_bounds = array<i64: 4, 4, 16>}, {pipeline_mode = #tpu.pipeline_mode<synchronous>, transform_indices = @transform_5, window_bounds = array<i64: 4, 4, 1>}, {pipeline_mode = #tpu.pipeline_mode<synchronous>, transform_indices = @transform_6, window_bounds = array<i64: 4, 4, 1>}, {pipeline_mode = #tpu.pipeline_mode<synchronous>, transform_indices = @transform_7, window_bounds = array<i64: 4, 4, 1>}, {pipeline_mode = #tpu.pipeline_mode<synchronous>, transform_indices = @transform_8, window_bounds = array<i64: 4, 16, 4>}, {pipeline_mode = #tpu.pipeline_mode<synchronous>, transform_indices = @transform_9, window_bounds = array<i64: 16, 1>}, {transform_indices = @transform_10, window_bounds = array<i64: 1, 16, 256>}]} {
    %c0 = arith.constant 0 : index
    %c0_0 = arith.constant 0 : index
    %c0_1 = arith.constant 0 : index
    %0 = vector.load %arg2[%c0, %c0_0, %c0_1] : memref<1x16x1024xf32, #tpu.memory_space<vmem>>, vector<1x16x1024xf32>
    %1 = vector.shape_cast %0 : vector<1x16x1024xf32> to vector<16x1024xf32>
    %2 = arith.truncf %1 : vector<16x1024xf32> to vector<16x1024xbf16>
    %c0_2 = arith.constant 0 : index
    %c0_3 = arith.constant 0 : index
    %c0_4 = arith.constant 0 : index
    %3 = vector.load %arg3[%c0_2, %c0_3, %c0_4] : memref<1x16x256xf32, #tpu.memory_space<vmem>>, vector<1x16x256xf32>
    %4 = vector.shape_cast %3 : vector<1x16x256xf32> to vector<16x256xf32>
    %5 = arith.truncf %4 : vector<16x256xf32> to vector<16x256xbf16>
    %cst = arith.constant 0.000000e+00 : f32
    %6 = vector.broadcast %cst : f32 to vector<16x256xf32>
    %c0_i32 = arith.constant 0 : i32
    %c4_i32 = arith.constant 4 : i32
    %7 = arith.addi %c0_i32, %c4_i32 : i32
    %c1_i32 = arith.constant 1 : i32
    %8 = scf.for %arg13 = %c0_i32 to %7 step %c1_i32 iter_args(%arg14 = %6) -> (vector<16x256xf32>)  : i32 {
      %14 = arith.index_cast %arg13 : i32 to index
      %c0_11 = arith.constant 0 : index
      %c0_12 = arith.constant 0 : index
      %15 = vector.load %arg4[%14, %c0_11, %c0_12] : memref<4x4x16xbf16, #tpu.memory_space<vmem>>, vector<1x4x16xbf16>
      %16 = vector.shape_cast %15 : vector<1x4x16xbf16> to vector<4x16xbf16>
      %cst_13 = arith.constant dense<0.000000e+00> : vector<4x256xf32>
      %17 = tpu.matmul %16, %5, %cst_13 {dimension_numbers = #tpu.dot_dimension_numbers<[1], [0], [0], [1], [0, 0, 1, 1], [], []>} : vector<4x16xbf16>, vector<16x256xbf16>, vector<4x256xf32> -> vector<4x256xf32>
      %18 = arith.index_cast %arg13 : i32 to index
      %c0_14 = arith.constant 0 : index
      %c0_15 = arith.constant 0 : index
      %19 = vector.load %arg7[%18, %c0_14, %c0_15] : memref<4x4x1xf32, #tpu.memory_space<vmem>>, vector<1x4x1xf32>
      %20 = vector.shape_cast %19 : vector<1x4x1xf32> to vector<4x1xf32>
      %21 = vector.broadcast %20 : vector<4x1xf32> to vector<4x256xf32>
      %22 = arith.addf %17, %21 : vector<4x256xf32>
      %23 = arith.index_cast %arg13 : i32 to index
      %c0_16 = arith.constant 0 : index
      %c0_17 = arith.constant 0 : index
      %24 = vector.load %arg5[%23, %c0_16, %c0_17] : memref<4x4x16xbf16, #tpu.memory_space<vmem>>, vector<1x4x16xbf16>
      %25 = vector.shape_cast %24 : vector<1x4x16xbf16> to vector<4x16xbf16>
      %cst_18 = arith.constant dense<0.000000e+00> : vector<4x1024xf32>
      %26 = tpu.matmul %25, %2, %cst_18 {dimension_numbers = #tpu.dot_dimension_numbers<[1], [0], [0], [1], [0, 0, 1, 1], [], []>} : vector<4x16xbf16>, vector<16x1024xbf16>, vector<4x1024xf32> -> vector<4x1024xf32>
      %27 = arith.index_cast %arg13 : i32 to index
      %c0_19 = arith.constant 0 : index
      %c0_20 = arith.constant 0 : index
      %28 = vector.load %arg8[%27, %c0_19, %c0_20] : memref<4x4x1xf32, #tpu.memory_space<vmem>>, vector<1x4x1xf32>
      %29 = vector.shape_cast %28 : vector<1x4x1xf32> to vector<4x1xf32>
      %30 = vector.broadcast %29 : vector<4x1xf32> to vector<4x1024xf32>
      %31 = arith.addf %26, %30 : vector<4x1024xf32>
      %32 = arith.index_cast %arg13 : i32 to index
      %c0_21 = arith.constant 0 : index
      %c0_22 = arith.constant 0 : index
      %33 = vector.load %arg6[%32, %c0_21, %c0_22] : memref<4x4x16xbf16, #tpu.memory_space<vmem>>, vector<1x4x16xbf16>
      %34 = vector.shape_cast %33 : vector<1x4x16xbf16> to vector<4x16xbf16>
      %cst_23 = arith.constant dense<0.000000e+00> : vector<4x1024xf32>
      %35 = tpu.matmul %34, %2, %cst_23 {dimension_numbers = #tpu.dot_dimension_numbers<[1], [0], [0], [1], [0, 0, 1, 1], [], []>} : vector<4x16xbf16>, vector<16x1024xbf16>, vector<4x1024xf32> -> vector<4x1024xf32>
      %36 = arith.index_cast %arg13 : i32 to index
      %c0_24 = arith.constant 0 : index
      %c0_25 = arith.constant 0 : index
      %37 = vector.load %arg9[%36, %c0_24, %c0_25] : memref<4x4x1xf32, #tpu.memory_space<vmem>>, vector<1x4x1xf32>
      %38 = vector.shape_cast %37 : vector<1x4x1xf32> to vector<4x1xf32>
      %39 = vector.broadcast %38 : vector<4x1xf32> to vector<4x1024xf32>
      %40 = arith.addf %35, %39 : vector<4x1024xf32>
      %cst_26 = arith.constant 5.000000e-01 : f32
      %41 = vector.broadcast %cst_26 : f32 to vector<4x256xf32>
      %42 = arith.mulf %22, %41 : vector<4x256xf32>
      %43 = arith.truncf %42 : vector<4x256xf32> to vector<4x256xbf16>
      %44 = arith.truncf %31 : vector<4x1024xf32> to vector<4x1024xbf16>
      %cst_27 = arith.constant dense<0.000000e+00> : vector<256x1024xf32>
      %45 = tpu.matmul %43, %44, %cst_27 {dimension_numbers = #tpu.dot_dimension_numbers<[0], [0], [1], [1], [0, 1, 1, 1], [], []>} : vector<4x256xbf16>, vector<4x1024xbf16>, vector<256x1024xf32> -> vector<256x1024xf32>
      %cst_28 = arith.constant dense<0xFF800000> : vector<256xf32>
      %46 = vector.multi_reduction <maximumf>, %45, %cst_28 [1] : vector<256x1024xf32> to vector<256xf32>
      %47 = vector.shape_cast %46 : vector<256xf32> to vector<256x1xf32>
      %48 = vector.broadcast %47 : vector<256x1xf32> to vector<256x1024xf32>
      %49 = arith.subf %45, %48 : vector<256x1024xf32>
      %50 = math.exp %49 : vector<256x1024xf32>
      %cst_29 = arith.constant dense<0.000000e+00> : vector<256xf32>
      %51 = vector.multi_reduction <add>, %50, %cst_29 [1] : vector<256x1024xf32> to vector<256xf32>
      %52 = vector.shape_cast %51 : vector<256xf32> to vector<256x1xf32>
      %53 = tpu.reciprocal %52 {approx = true} : vector<256x1xf32> -> vector<256x1xf32>
      %54 = vector.broadcast %53 : vector<256x1xf32> to vector<256x1024xf32>
      %55 = arith.mulf %50, %54 : vector<256x1024xf32>
      %56 = arith.truncf %55 : vector<256x1024xf32> to vector<256x1024xbf16>
      %57 = arith.truncf %40 : vector<4x1024xf32> to vector<4x1024xbf16>
      %cst_30 = arith.constant dense<0.000000e+00> : vector<4x256xf32>
      %58 = tpu.matmul %57, %56, %cst_30 {dimension_numbers = #tpu.dot_dimension_numbers<[1], [1], [0], [0], [0, 0, 1, 0], [], []>} : vector<4x1024xbf16>, vector<256x1024xbf16>, vector<4x256xf32> -> vector<4x256xf32>
      %59 = arith.index_cast %arg13 : i32 to index
      %c0_31 = arith.constant 0 : index
      %c0_32 = arith.constant 0 : index
      %60 = vector.load %arg10[%59, %c0_31, %c0_32] : memref<4x16x4xbf16, #tpu.memory_space<vmem>>, vector<1x16x4xbf16>
      %61 = vector.shape_cast %60 : vector<1x16x4xbf16> to vector<16x4xbf16>
      %62 = arith.truncf %58 : vector<4x256xf32> to vector<4x256xbf16>
      %cst_33 = arith.constant dense<0.000000e+00> : vector<16x256xf32>
      %63 = tpu.matmul %61, %62, %cst_33 {dimension_numbers = #tpu.dot_dimension_numbers<[1], [0], [0], [1], [0, 0, 1, 1], [], []>} : vector<16x4xbf16>, vector<4x256xbf16>, vector<16x256xf32> -> vector<16x256xf32>
      %64 = arith.addf %arg14, %63 : vector<16x256xf32>
      scf.yield %64 : vector<16x256xf32>
    }
    %c4_i32_5 = arith.constant 4 : i32
    %c0_6 = arith.constant 0 : index
    %c0_7 = arith.constant 0 : index
    %9 = vector.load %arg11[%c0_6, %c0_7] : memref<16x1xf32, #tpu.memory_space<vmem>>, vector<16x1xf32>
    %10 = vector.broadcast %9 : vector<16x1xf32> to vector<16x256xf32>
    %11 = arith.addf %8, %10 : vector<16x256xf32>
    %12 = vector.shape_cast %11 : vector<16x256xf32> to vector<1x16x256xf32>
    %c0_8 = arith.constant 0 : index
    %c0_9 = arith.constant 0 : index
    %c0_10 = arith.constant 0 : index
    %13 = vector.load %arg12[%c0_8, %c0_9, %c0_10] : memref<1x16x256xf32, #tpu.memory_space<vmem>>, vector<1x16x256xf32>
    tpu.vector_store %arg12[%c0_8, %c0_9, %c0_10], %12 {strides = array<i32>} : memref<1x16x256xf32, #tpu.memory_space<vmem>>, vector<1x16x256xf32>,
    return
  }
  func.func @transform_0(%arg0: i32, %arg1: i32) -> (i32, i32, i32) {
    %c0_i32 = arith.constant 0 : i32
    %c0_i32_0 = arith.constant 0 : i32
    %c0_i32_1 = arith.constant 0 : i32
    return %arg0, %c0_i32, %c0_i32_0 : i32, i32, i32
  }
  func.func @transform_1(%arg0: i32, %arg1: i32) -> (i32, i32, i32) {
    %c0_i32 = arith.constant 0 : i32
    %c0_i32_0 = arith.constant 0 : i32
    return %arg0, %c0_i32, %arg1 : i32, i32, i32
  }
  func.func @transform_2(%arg0: i32, %arg1: i32) -> (i32, i32, i32) {
    %c0_i32 = arith.constant 0 : i32
    %c0_i32_0 = arith.constant 0 : i32
    %c0_i32_1 = arith.constant 0 : i32
    %c0_i32_2 = arith.constant 0 : i32
    return %c0_i32, %c0_i32_0, %c0_i32_1 : i32, i32, i32
  }
  func.func @transform_3(%arg0: i32, %arg1: i32) -> (i32, i32, i32) {
    %c0_i32 = arith.constant 0 : i32
    %c0_i32_0 = arith.constant 0 : i32
    %c0_i32_1 = arith.constant 0 : i32
    %c0_i32_2 = arith.constant 0 : i32
    return %c0_i32, %c0_i32_0, %c0_i32_1 : i32, i32, i32
  }
  func.func @transform_4(%arg0: i32, %arg1: i32) -> (i32, i32, i32) {
    %c0_i32 = arith.constant 0 : i32
    %c0_i32_0 = arith.constant 0 : i32
    %c0_i32_1 = arith.constant 0 : i32
    %c0_i32_2 = arith.constant 0 : i32
    return %c0_i32, %c0_i32_0, %c0_i32_1 : i32, i32, i32
  }
  func.func @transform_5(%arg0: i32, %arg1: i32) -> (i32, i32, i32) {
    %c0_i32 = arith.constant 0 : i32
    %c0_i32_0 = arith.constant 0 : i32
    %c0_i32_1 = arith.constant 0 : i32
    %c0_i32_2 = arith.constant 0 : i32
    return %c0_i32, %c0_i32_0, %c0_i32_1 : i32, i32, i32
  }
  func.func @transform_6(%arg0: i32, %arg1: i32) -> (i32, i32, i32) {
    %c0_i32 = arith.constant 0 : i32
    %c0_i32_0 = arith.constant 0 : i32
    %c0_i32_1 = arith.constant 0 : i32
    %c0_i32_2 = arith.constant 0 : i32
    return %c0_i32, %c0_i32_0, %c0_i32_1 : i32, i32, i32
  }
  func.func @transform_7(%arg0: i32, %arg1: i32) -> (i32, i32, i32) {
    %c0_i32 = arith.constant 0 : i32
    %c0_i32_0 = arith.constant 0 : i32
    %c0_i32_1 = arith.constant 0 : i32
    %c0_i32_2 = arith.constant 0 : i32
    return %c0_i32, %c0_i32_0, %c0_i32_1 : i32, i32, i32
  }
  func.func @transform_8(%arg0: i32, %arg1: i32) -> (i32, i32, i32) {
    %c0_i32 = arith.constant 0 : i32
    %c0_i32_0 = arith.constant 0 : i32
    %c0_i32_1 = arith.constant 0 : i32
    %c0_i32_2 = arith.constant 0 : i32
    return %c0_i32, %c0_i32_0, %c0_i32_1 : i32, i32, i32
  }
  func.func @transform_9(%arg0: i32, %arg1: i32) -> (i32, i32) {
    %c0_i32 = arith.constant 0 : i32
    %c0_i32_0 = arith.constant 0 : i32
    %c0_i32_1 = arith.constant 0 : i32
    return %c0_i32, %c0_i32_0 : i32, i32
  }
  func.func @transform_10(%arg0: i32, %arg1: i32) -> (i32, i32, i32) {
    %c0_i32 = arith.constant 0 : i32
    %c0_i32_0 = arith.constant 0 : i32
    return %arg0, %c0_i32, %arg1 : i32, i32, i32
  }
}

</mosaic_0001>

<llo_original>
// kernel: spectral_attention_pallas.2
$region0: #{spectral_attention_pallas.2}
  #allocation0 [shape = 'u32[]', space=smem, size = 0x4, offset = 0x4, fixed_abs, tag = 'smem constant byte address 0x4 - core index']
  #allocation1 [shape = 'u32[144,128]{1,0:T(1,128)}', space=vmem, size = 0x12000, scoped, tag = 'internal scratch']
  %s0 = inlined_call_operand.hbm [shape: f32[2,1024,64], index: 0, kind: input, shape index: {}]
  %s1 = inlined_call_operand.vmem [shape: f32[64,32], index: 1, kind: input, shape index: {}]
  %s2 = inlined_call_operand.vmem [shape: f32[32,64], index: 2, kind: input, shape index: {}]
  %s3 = inlined_call_operand.vmem [shape: f32[2,16,32,32], index: 3, kind: output, shape index: {}]
  %s4 = sld [smem:[#allocation0]]
  $region49: #{spectral_attention_pallas.2} parent=0
    _
  %s6 = ssub.s32 1, %s4
  %s7 = scalar_select 0, %s6, %s4
  $region1: #{spectral_attention_pallas.2} parent=0
    #allocation2 [shape = 'u8[1048576]{0}', space=vmem, size = 0x100000, scoped, tag = 'input window, operand 0']
    #allocation3 [shape = 's32[2]{0}', space=sflag, size = 0x8, scoped, tag = 'scoped memory for spectral_attention_pallas.2']
    %8 = vsyncpa [#allocation3], 0
    %s9 = scalar_lea.sflag [#allocation3], 1
    %10 = vsyncpa %s9, 0
    loop: start=0, step=1, limit=4
    $region2: #{spectral_attention_pallas.2} parent=1 // loop_pre_header
      _
    $region3: #{spectral_attention_pallas.2} parent=1 // loop_header
      %s12 = sphi 0, %s16
      %p13 = scmp.ge.s32.totalorder %s12, 4
      %s22 = sphi 0, %s24
      %s25 = sphi 0, %s22
      %s26 = sphi 0, %s25
      %s42 = sphi 0, %s26
      %s46 = sphi 0, %s46
      %s48 = sphi 0, %s46
      %s49 = sphi 0, %s48
      %s63 = sphi 0, %s49
      %s67 = sphi 0, %s67
      %s69 = sphi 0, %s67
      %s70 = sphi 0, %s69
      %s84 = sphi 0, %s70
      %s90 = sphi 0, %s92
      %s93 = sphi 0, %s90
      %s94 = sphi 0, %s93
      %s110 = sphi 0, %s94
    $region4: #{spectral_attention_pallas.2} parent=1 // loop_header_branch
      %15 = sbr.rel (%p13) target = $region8
    $region5: #{spectral_attention_pallas.2} parent=1 // loop_body
      %s17 = ssub.s32 %s12, 1
      %s18 = ssub.s32 %s12, 2
      %s19 = sadd.s32 %s12, 1
      %s20 = ssub.s32 %s12, %s19
      %p21 = scmp.eq.s32.totalorder %s20, 0
      %s23 = sadd.s32 %s22, 1
      %s24 = scalar_select %p21, %s22, %s23
      %p27 = pneg %p21
      %p28 = scmp.eq.s32.totalorder %s12, 1
      %p29 = por %p27, %p28
      %p30 = scmp.ne.s32.totalorder %s22, %s25
      %p31 = scmp.eq.s32.totalorder %s12, 0
      %p32 = por %p30, %p31
      %p33 = scmp.ne.s32.totalorder %s22, %s25
      %p34 = scmp.eq.s32.totalorder %s17, 1
      %p35 = por %p33, %p34
      %p36 = scmp.ne.s32.totalorder %s25, %s26
      %p37 = scmp.eq.s32.totalorder %s17, 0
      %p38 = por %p36, %p37
      %p39 = scmp.ne.s32.totalorder %s25, %s26
      %p40 = scmp.eq.s32.totalorder %s18, 1
      %p41 = por %p39, %p40
      %p43 = scmp.ne.s32.totalorder %s26, %s42
      %p44 = scmp.eq.s32.totalorder %s18, 0
      %p45 = por %p43, %p44
      %s47 = sadd.s32 %s46, 1
      %p50 = scmp.eq.s32.totalorder %s12, 1
      %p51 = scmp.ne.s32.totalorder %s46, %s48
      %p52 = scmp.eq.s32.totalorder %s12, 0
      %p53 = por %p51, %p52
      %p54 = scmp.ne.s32.totalorder %s46, %s48
      %p55 = scmp.eq.s32.totalorder %s17, 1
      %p56 = por %p54, %p55
      %p57 = scmp.ne.s32.totalorder %s48, %s49
      %p58 = scmp.eq.s32.totalorder %s17, 0
      %p59 = por %p57, %p58
      %p60 = scmp.ne.s32.totalorder %s48, %s49
      %p61 = scmp.eq.s32.totalorder %s18, 1
      %p62 = por %p60, %p61
      %p64 = scmp.ne.s32.totalorder %s49, %s63
      %p65 = scmp.eq.s32.totalorder %s18, 0
      %p66 = por %p64, %p65
      %s68 = sadd.s32 %s67, 1
      %p71 = scmp.eq.s32.totalorder %s12, 1
      %p72 = scmp.ne.s32.totalorder %s67, %s69
      %p73 = scmp.eq.s32.totalorder %s12, 0
      %p74 = por %p72, %p73
      %p75 = scmp.ne.s32.totalorder %s67, %s69
      %p76 = scmp.eq.s32.totalorder %s17, 1
      %p77 = por %p75, %p76
      %p78 = scmp.ne.s32.totalorder %s69, %s70
      %p79 = scmp.eq.s32.totalorder %s17, 0
      %p80 = por %p78, %p79
      %p81 = scmp.ne.s32.totalorder %s69, %s70
      %p82 = scmp.eq.s32.totalorder %s18, 1
      %p83 = por %p81, %p82
      %p85 = scmp.ne.s32.totalorder %s70, %s84
      %p86 = scmp.eq.s32.totalorder %s18, 0
      %p87 = por %p85, %p86
      %s88 = ssub.s32 %s12, %s19
      %p89 = scmp.eq.s32.totalorder %s88, 0
      %s91 = sadd.s32 %s90, 1
      %s92 = scalar_select %p89, %s90, %s91
      %p95 = pneg %p89
      %p96 = scmp.eq.s32.totalorder %s12, 1
      %p97 = por %p95, %p96
      %p98 = scmp.ne.s32.totalorder %s90, %s93
      %p99 = scmp.eq.s32.totalorder %s12, 0
      %p100 = por %p98, %p99
      %p101 = scmp.ne.s32.totalorder %s90, %s93
      %p102 = scmp.eq.s32.totalorder %s17, 1
      %p103 = por %p101, %p102
      %p104 = scmp.ne.s32.totalorder %s93, %s94
      %p105 = scmp.eq.s32.totalorder %s17, 0
      %p106 = por %p104, %p105
      %p107 = scmp.ne.s32.totalorder %s93, %s94
      %p108 = scmp.eq.s32.totalorder %s18, 1
      %p109 = por %p107, %p108
      %p111 = scmp.ne.s32.totalorder %s94, %s110
      %p112 = scmp.eq.s32.totalorder %s18, 0
      %p113 = por %p111, %p112
      %p114 = scmp.le.s32.totalorder 1, %s12
      %p115 = scmp.lt.s32.totalorder %s12, 3
      %p116 = pnand %p114, %p115
      %p117 = pneg %p116
      // Predicated region
      $region9: #{spectral_attention_pallas.2} parent=5 // pred_check
        _
      $region10: #{spectral_attention_pallas.2} parent=5 // pred_check_branch
        %119 = sbr.rel (%p116) target = $region12
      $region11: #{spectral_attention_pallas.2} parent=5 // pred_region
        %s120 = ssub.s32 %s12, 1
        // Predicated region
        $region13: #{spectral_attention_pallas.2} parent=11 // pred_check
          %p121 = pneg %p59
        $region14: #{spectral_attention_pallas.2} parent=11 // pred_check_branch
          %123 = sbr.rel (%p121) target = $region16
        $region15: #{spectral_attention_pallas.2} parent=11 // pred_region
          _
        $region16: #{spectral_attention_pallas.2} parent=11 // pred_fallthru
          _
        // Predicated region
        $region17: #{spectral_attention_pallas.2} parent=11 // pred_check
          %p124 = pneg %p80
        $region18: #{spectral_attention_pallas.2} parent=11 // pred_check_branch
          %126 = sbr.rel (%p124) target = $region20
        $region19: #{spectral_attention_pallas.2} parent=11 // pred_region
          _
        $region20: #{spectral_attention_pallas.2} parent=11 // pred_fallthru
          _
      $region12: #{spectral_attention_pallas.2} parent=5 // pred_fallthru
        _
      %p127 = scmp.lt.s32.totalorder %s12, 2
      // Predicated region
      $region21: #{spectral_attention_pallas.2} parent=5 // pred_check
        %p128 = pneg %p127
      $region22: #{spectral_attention_pallas.2} parent=5 // pred_check_branch
        %130 = sbr.rel (%p128) target = $region24
      $region23: #{spectral_attention_pallas.2} parent=5 // pred_region
        // Predicated region
        $region25: #{spectral_attention_pallas.2} parent=23 // pred_check
          %p131 = pneg %p32
        $region26: #{spectral_attention_pallas.2} parent=23 // pred_check_branch
          %133 = sbr.rel (%p131) target = $region28
        $region27: #{spectral_attention_pallas.2} parent=23 // pred_region
          %s134 = sand.u32 %s22, 1
          %s135 = scalar_lea.sflag [#allocation3], %s134
          %s136 = sand.u32 %s22, 1
          %s137 = smul.addr %s136, 1024
          %s138 = scalar_lea.vmem [#allocation2], %s137
          %s140 = ssub.s32 16384, 16384
          %141 = vsyncadd %s135, %s140
          %s142 = smul.addr %s12, 128
          %s143 = smul.addr %s142, 128
          %s144 = scalar_lea.hbm %s0, %s143
          %s145 = sshll.u32 %s138, 4
          %s146 = int_to_ptr.vmem [resolvable:$true] %s145
          %151 = dma.hbm_to_vmem [thread:$0]  %s144, 16384, %s146, %s135, 128, 128, 8
        $region28: #{spectral_attention_pallas.2} parent=23 // pred_fallthru
          _
      $region24: #{spectral_attention_pallas.2} parent=5 // pred_fallthru
        _
      %p152 = scmp.le.s32.totalorder 1, %s12
      %p153 = scmp.lt.s32.totalorder %s12, 3
      %p154 = pnand %p152, %p153
      %p155 = pneg %p154
      // Predicated region
      $region29: #{spectral_attention_pallas.2} parent=5 // pred_check
        _
      $region30: #{spectral_attention_pallas.2} parent=5 // pred_check_branch
        %157 = sbr.rel (%p154) target = $region32
      $region31: #{spectral_attention_pallas.2} parent=5 // pred_region
        %s158 = ssub.s32 %s12, 1
        %s159 = sand.u32 %s25, 1
        %s160 = scalar_lea.sflag [#allocation3], %s159
        %s161 = sand.u32 %s25, 1
        %s162 = smul.addr %s161, 1024
        %s163 = scalar_lea.vmem [#allocation2], %s162
        // Predicated region
        $region33: #{spectral_attention_pallas.2} parent=31 // pred_check
          %p164 = pneg %p38
        $region34: #{spectral_attention_pallas.2} parent=31 // pred_check_branch
          %166 = sbr.rel (%p164) target = $region36
        $region35: #{spectral_attention_pallas.2} parent=31 // pred_region
          %167 = dma.done %s160, 16384
        $region36: #{spectral_attention_pallas.2} parent=31 // pred_fallthru
          _
        %s168 = sand.u32 %s25, 1
        %s169 = scalar_lea.sflag [#allocation3], %s168
        %s170 = sand.u32 %s25, 1
        %s171 = smul.addr %s170, 1024
        %s172 = scalar_lea.vmem [#allocation2], %s171
        %p173 = pneg %p38
        %p174 = pneg %p35
        %p175 = pneg %p59
        %p176 = pneg %p56
        %p177 = pneg %p80
        %p178 = pneg %p77
        %p179 = pneg %p106
        %p180 = pneg %p103
        %p181 = scmp.lt.s32.totalorder %s17, 1
        %s182 = scalar_select %p181, %s17, 1
        %s183 = smul.addr %s182, 64
        %s184 = smul.addr %s183, 8
        %s185 = scalar_lea.vmem %s3, %s184
        %p186 = scmp.lt.s32.totalorder %s17, 1
        %s187 = scalar_select %p186, %s17, 1
        %s188 = smul.addr %s187, 64
        %s189 = smul.addr %s188, 8
        %s190 = scalar_lea.vmem %s3, %s189
        %v191 = vld [vmem:[%s163] sm:$0xff]
        %v192 = vld [vmem:[%s163 + $0x8] sm:$0xff]
        %v193 = vld [vmem:[%s163 + $0x10] sm:$0xff]
        %v194 = vld [vmem:[%s163 + $0x18] sm:$0xff]
        %v195 = vld [vmem:[%s163 + $0x20] sm:$0xff]
        %v196 = vld [vmem:[%s163 + $0x28] sm:$0xff]
        %v197 = vld [vmem:[%s163 + $0x30] sm:$0xff]
        %v198 = vld [vmem:[%s163 + $0x38] sm:$0xff]
        %v199 = vld [vmem:[%s163 + $0x40] sm:$0xff]
        %v200 = vld [vmem:[%s163 + $0x48] sm:$0xff]
        %v201 = vld [vmem:[%s163 + $0x50] sm:$0xff]
        %v202 = vld [vmem:[%s163 + $0x58] sm:$0xff]
        %v203 = vld [vmem:[%s163 + $0x60] sm:$0xff]
        %v204 = vld [vmem:[%s163 + $0x68] sm:$0xff]
        %v205 = vld [vmem:[%s163 + $0x70] sm:$0xff]
        %v206 = vld [vmem:[%s163 + $0x78] sm:$0xff]
        %v207 = vld [vmem:[%s163 + $0x80] sm:$0xff]
        %v208 = vld [vmem:[%s163 + $0x88] sm:$0xff]
        %v209 = vld [vmem:[%s163 + $0x90] sm:$0xff]
        %v210 = vld [vmem:[%s163 + $0x98] sm:$0xff]
        %v211 = vld [vmem:[%s163 + $0xa0] sm:$0xff]
        %v212 = vld [vmem:[%s163 + $0xa8] sm:$0xff]
        %v213 = vld [vmem:[%s163 + $0xb0] sm:$0xff]
        %v214 = vld [vmem:[%s163 + $0xb8] sm:$0xff]
        %v215 = vld [vmem:[%s163 + $0xc0] sm:$0xff]
        %v216 = vld [vmem:[%s163 + $0xc8] sm:$0xff]
        %v217 = vld [vmem:[%s163 + $0xd0] sm:$0xff]
        %v218 = vld [vmem:[%s163 + $0xd8] sm:$0xff]
        %v219 = vld [vmem:[%s163 + $0xe0] sm:$0xff]
        %v220 = vld [vmem:[%s163 + $0xe8] sm:$0xff]
        %v221 = vld [vmem:[%s163 + $0xf0] sm:$0xff]
        %v222 = vld [vmem:[%s163 + $0xf8] sm:$0xff]
        %v223 = vld [vmem:[%s163 + $0x100] sm:$0xff]
        %v224 = vld [vmem:[%s163 + $0x108] sm:$0xff]
        %v225 = vld [vmem:[%s163 + $0x110] sm:$0xff]
        %v226 = vld [vmem:[%s163 + $0x118] sm:$0xff]
        %v227 = vld [vmem:[%s163 + $0x120] sm:$0xff]
        %v228 = vld [vmem:[%s163 + $0x128] sm:$0xff]
        %v229 = vld [vmem:[%s163 + $0x130] sm:$0xff]
        %v230 = vld [vmem:[%s163 + $0x138] sm:$0xff]
        %v231 = vld [vmem:[%s163 + $0x140] sm:$0xff]
        %v232 = vld [vmem:[%s163 + $0x148] sm:$0xff]
        %v233 = vld [vmem:[%s163 + $0x150] sm:$0xff]
        %v234 = vld [vmem:[%s163 + $0x158] sm:$0xff]
        %v235 = vld [vmem:[%s163 + $0x160] sm:$0xff]
        %v236 = vld [vmem:[%s163 + $0x168] sm:$0xff]
        %v237 = vld [vmem:[%s163 + $0x170] sm:$0xff]
        %v238 = vld [vmem:[%s163 + $0x178] sm:$0xff]
        %v239 = vld [vmem:[%s163 + $0x180] sm:$0xff]
        %v240 = vld [vmem:[%s163 + $0x188] sm:$0xff]
        %v241 = vld [vmem:[%s163 + $0x190] sm:$0xff]
        %v242 = vld [vmem:[%s163 + $0x198] sm:$0xff]
        %v243 = vld [vmem:[%s163 + $0x1a0] sm:$0xff]
        %v244 = vld [vmem:[%s163 + $0x1a8] sm:$0xff]
        %v245 = vld [vmem:[%s163 + $0x1b0] sm:$0xff]
        %v246 = vld [vmem:[%s163 + $0x1b8] sm:$0xff]
        %v247 = vld [vmem:[%s163 + $0x1c0] sm:$0xff]
        %v248 = vld [vmem:[%s163 + $0x1c8] sm:$0xff]
        %v249 = vld [vmem:[%s163 + $0x1d0] sm:$0xff]
        %v250 = vld [vmem:[%s163 + $0x1d8] sm:$0xff]
        %v251 = vld [vmem:[%s163 + $0x1e0] sm:$0xff]
        %v252 = vld [vmem:[%s163 + $0x1e8] sm:$0xff]
        %v253 = vld [vmem:[%s163 + $0x1f0] sm:$0xff]
        %v254 = vld [vmem:[%s163 + $0x1f8] sm:$0xff]
        %v255 = vld [vmem:[%s163 + $0x200] sm:$0xff]
        %v256 = vld [vmem:[%s163 + $0x208] sm:$0xff]
        %v257 = vld [vmem:[%s163 + $0x210] sm:$0xff]
        %v258 = vld [vmem:[%s163 + $0x218] sm:$0xff]
        %v259 = vld [vmem:[%s163 + $0x220] sm:$0xff]
        %v260 = vld [vmem:[%s163 + $0x228] sm:$0xff]
        %v261 = vld [vmem:[%s163 + $0x230] sm:$0xff]
        %v262 = vld [vmem:[%s163 + $0x238] sm:$0xff]
        %v263 = vld [vmem:[%s163 + $0x240] sm:$0xff]
        %v264 = vld [vmem:[%s163 + $0x248] sm:$0xff]
        %v265 = vld [vmem:[%s163 + $0x250] sm:$0xff]
        %v266 = vld [vmem:[%s163 + $0x258] sm:$0xff]
        %v267 = vld [vmem:[%s163 + $0x260] sm:$0xff]
        %v268 = vld [vmem:[%s163 + $0x268] sm:$0xff]
        %v269 = vld [vmem:[%s163 + $0x270] sm:$0xff]
        %v270 = vld [vmem:[%s163 + $0x278] sm:$0xff]
        %v271 = vld [vmem:[%s163 + $0x280] sm:$0xff]
        %v272 = vld [vmem:[%s163 + $0x288] sm:$0xff]
        %v273 = vld [vmem:[%s163 + $0x290] sm:$0xff]
        %v274 = vld [vmem:[%s163 + $0x298] sm:$0xff]
        %v275 = vld [vmem:[%s163 + $0x2a0] sm:$0xff]
        %v276 = vld [vmem:[%s163 + $0x2a8] sm:$0xff]
        %v277 = vld [vmem:[%s163 + $0x2b0] sm:$0xff]
        %v278 = vld [vmem:[%s163 + $0x2b8] sm:$0xff]
        %v279 = vld [vmem:[%s163 + $0x2c0] sm:$0xff]
        %v280 = vld [vmem:[%s163 + $0x2c8] sm:$0xff]
        %v281 = vld [vmem:[%s163 + $0x2d0] sm:$0xff]
        %v282 = vld [vmem:[%s163 + $0x2d8] sm:$0xff]
        %v283 = vld [vmem:[%s163 + $0x2e0] sm:$0xff]
        %v284 = vld [vmem:[%s163 + $0x2e8] sm:$0xff]
        %v285 = vld [vmem:[%s163 + $0x2f0] sm:$0xff]
        %v286 = vld [vmem:[%s163 + $0x2f8] sm:$0xff]
        %v287 = vld [vmem:[%s163 + $0x300] sm:$0xff]
        %v288 = vld [vmem:[%s163 + $0x308] sm:$0xff]
        %v289 = vld [vmem:[%s163 + $0x310] sm:$0xff]
        %v290 = vld [vmem:[%s163 + $0x318] sm:$0xff]
        %v291 = vld [vmem:[%s163 + $0x320] sm:$0xff]
        %v292 = vld [vmem:[%s163 + $0x328] sm:$0xff]
        %v293 = vld [vmem:[%s163 + $0x330] sm:$0xff]
        %v294 = vld [vmem:[%s163 + $0x338] sm:$0xff]
        %v295 = vld [vmem:[%s163 + $0x340] sm:$0xff]
        %v296 = vld [vmem:[%s163 + $0x348] sm:$0xff]
        %v297 = vld [vmem:[%s163 + $0x350] sm:$0xff]
        %v298 = vld [vmem:[%s163 + $0x358] sm:$0xff]
        %v299 = vld [vmem:[%s163 + $0x360] sm:$0xff]
        %v300 = vld [vmem:[%s163 + $0x368] sm:$0xff]
        %v301 = vld [vmem:[%s163 + $0x370] sm:$0xff]
        %v302 = vld [vmem:[%s163 + $0x378] sm:$0xff]
        %v303 = vld [vmem:[%s163 + $0x380] sm:$0xff]
        %v304 = vld [vmem:[%s163 + $0x388] sm:$0xff]
        %v305 = vld [vmem:[%s163 + $0x390] sm:$0xff]
        %v306 = vld [vmem:[%s163 + $0x398] sm:$0xff]
        %v307 = vld [vmem:[%s163 + $0x3a0] sm:$0xff]
        %v308 = vld [vmem:[%s163 + $0x3a8] sm:$0xff]
        %v309 = vld [vmem:[%s163 + $0x3b0] sm:$0xff]
        %v310 = vld [vmem:[%s163 + $0x3b8] sm:$0xff]
        %v311 = vld [vmem:[%s163 + $0x3c0] sm:$0xff]
        %v312 = vld [vmem:[%s163 + $0x3c8] sm:$0xff]
        %v313 = vld [vmem:[%s163 + $0x3d0] sm:$0xff]
        %v314 = vld [vmem:[%s163 + $0x3d8] sm:$0xff]
        %v315 = vld [vmem:[%s163 + $0x3e0] sm:$0xff]
        %v316 = vld [vmem:[%s163 + $0x3e8] sm:$0xff]
        %v317 = vld [vmem:[%s163 + $0x3f0] sm:$0xff]
        %v318 = vld [vmem:[%s163 + $0x3f8] sm:$0xff]
        %v319 = vld [vmem:[%s1] sm:$0xff]
        %v320 = vld [vmem:[%s1 + $0x8] sm:$0xff]
        %v321 = vld [vmem:[%s1 + $0x10] sm:$0xff]
        %v322 = vld [vmem:[%s1 + $0x18] sm:$0xff]
        %v323 = vld [vmem:[%s1 + $0x20] sm:$0xff]
        %v324 = vld [vmem:[%s1 + $0x28] sm:$0xff]
        %v325 = vld [vmem:[%s1 + $0x30] sm:$0xff]
        %v326 = vld [vmem:[%s1 + $0x38] sm:$0xff]
        %vm327 = vcmask 523264
        %v329 = vsel %vm327, %v191, 0
        %v332 = vsel %vm327, %v192, 0
        %v335 = vsel %vm327, %v193, 0
        %v338 = vsel %vm327, %v194, 0
        %v341 = vsel %vm327, %v195, 0
        %v344 = vsel %vm327, %v196, 0
        %v347 = vsel %vm327, %v197, 0
        %v350 = vsel %vm327, %v198, 0
        %v353 = vsel %vm327, %v199, 0
        %v356 = vsel %vm327, %v200, 0
        %v359 = vsel %vm327, %v201, 0
        %v362 = vsel %vm327, %v202, 0
        %v365 = vsel %vm327, %v203, 0
        %v368 = vsel %vm327, %v204, 0
        %v371 = vsel %vm327, %v205, 0
        %v374 = vsel %vm327, %v206, 0
        %v377 = vsel %vm327, %v207, 0
        %v380 = vsel %vm327, %v208, 0
        %v383 = vsel %vm327, %v209, 0
        %v386 = vsel %vm327, %v210, 0
        %v389 = vsel %vm327, %v211, 0
        %v392 = vsel %vm327, %v212, 0
        %v395 = vsel %vm327, %v213, 0
        %v398 = vsel %vm327, %v214, 0
        %v401 = vsel %vm327, %v215, 0
        %v404 = vsel %vm327, %v216, 0
        %v407 = vsel %vm327, %v217, 0
        %v410 = vsel %vm327, %v218, 0
        %v413 = vsel %vm327, %v219, 0
        %v416 = vsel %vm327, %v220, 0
        %v419 = vsel %vm327, %v221, 0
        %v422 = vsel %vm327, %v222, 0
        %v425 = vsel %vm327, %v223, 0
        %v428 = vsel %vm327, %v224, 0
        %v431 = vsel %vm327, %v225, 0
        %v434 = vsel %vm327, %v226, 0
        %v437 = vsel %vm327, %v227, 0
        %v440 = vsel %vm327, %v228, 0
        %v443 = vsel %vm327, %v229, 0
        %v446 = vsel %vm327, %v230, 0
        %v449 = vsel %vm327, %v231, 0
        %v452 = vsel %vm327, %v232, 0
        %v455 = vsel %vm327, %v233, 0
        %v458 = vsel %vm327, %v234, 0
        %v461 = vsel %vm327, %v235, 0
        %v464 = vsel %vm327, %v236, 0
        %v467 = vsel %vm327, %v237, 0
        %v470 = vsel %vm327, %v238, 0
        %v473 = vsel %vm327, %v239, 0
        %v476 = vsel %vm327, %v240, 0
        %v479 = vsel %vm327, %v241, 0
        %v482 = vsel %vm327, %v242, 0
        %v485 = vsel %vm327, %v243, 0
        %v488 = vsel %vm327, %v244, 0
        %v491 = vsel %vm327, %v245, 0
        %v494 = vsel %vm327, %v246, 0
        %v497 = vsel %vm327, %v247, 0
        %v500 = vsel %vm327, %v248, 0
        %v503 = vsel %vm327, %v249, 0
        %v506 = vsel %vm327, %v250, 0
        %v509 = vsel %vm327, %v251, 0
        %v512 = vsel %vm327, %v252, 0
        %v515 = vsel %vm327, %v253, 0
        %v518 = vsel %vm327, %v254, 0
        %v521 = vsel %vm327, %v255, 0
        %v524 = vsel %vm327, %v256, 0
        %v527 = vsel %vm327, %v257, 0
        %v530 = vsel %vm327, %v258, 0
        %v533 = vsel %vm327, %v259, 0
        %v536 = vsel %vm327, %v260, 0
        %v539 = vsel %vm327, %v261, 0
        %v542 = vsel %vm327, %v262, 0
        %v545 = vsel %vm327, %v263, 0
        %v548 = vsel %vm327, %v264, 0
        %v551 = vsel %vm327, %v265, 0
        %v554 = vsel %vm327, %v266, 0
        %v557 = vsel %vm327, %v267, 0
        %v560 = vsel %vm327, %v268, 0
        %v563 = vsel %vm327, %v269, 0
        %v566 = vsel %vm327, %v270, 0
        %v569 = vsel %vm327, %v271, 0
        %v572 = vsel %vm327, %v272, 0
        %v575 = vsel %vm327, %v273, 0
        %v578 = vsel %vm327, %v274, 0
        %v581 = vsel %vm327, %v275, 0
        %v584 = vsel %vm327, %v276, 0
        %v587 = vsel %vm327, %v277, 0
        %v590 = vsel %vm327, %v278, 0
        %v593 = vsel %vm327, %v279, 0
        %v596 = vsel %vm327, %v280, 0
        %v599 = vsel %vm327, %v281, 0
        %v602 = vsel %vm327, %v282, 0
        %v605 = vsel %vm327, %v283, 0
        %v608 = vsel %vm327, %v284, 0
        %v611 = vsel %vm327, %v285, 0
        %v614 = vsel %vm327, %v286, 0
        %v617 = vsel %vm327, %v287, 0
        %v620 = vsel %vm327, %v288, 0
        %v623 = vsel %vm327, %v289, 0
        %v626 = vsel %vm327, %v290, 0
        %v629 = vsel %vm327, %v291, 0
        %v632 = vsel %vm327, %v292, 0
        %v635 = vsel %vm327, %v293, 0
        %v638 = vsel %vm327, %v294, 0
        %v641 = vsel %vm327, %v295, 0
        %v644 = vsel %vm327, %v296, 0
        %v647 = vsel %vm327, %v297, 0
        %v650 = vsel %vm327, %v298, 0
        %v653 = vsel %vm327, %v299, 0
        %v656 = vsel %vm327, %v300, 0
        %v659 = vsel %vm327, %v301, 0
        %v662 = vsel %vm327, %v302, 0
        %v665 = vsel %vm327, %v303, 0
        %v668 = vsel %vm327, %v304, 0
        %v671 = vsel %vm327, %v305, 0
        %v674 = vsel %vm327, %v306, 0
        %v677 = vsel %vm327, %v307, 0
        %v680 = vsel %vm327, %v308, 0
        %v683 = vsel %vm327, %v309, 0
        %v686 = vsel %vm327, %v310, 0
        %v689 = vsel %vm327, %v311, 0
        %v692 = vsel %vm327, %v312, 0
        %v695 = vsel %vm327, %v313, 0
        %v698 = vsel %vm327, %v314, 0
        %v701 = vsel %vm327, %v315, 0
        %v704 = vsel %vm327, %v316, 0
        %v707 = vsel %vm327, %v317, 0
        %v710 = vsel %vm327, %v318, 0
        %712 = vmatprep.subr.mxu0 0.0
        %713 = vmatpush1.msra.mxu0 0.0
        %714 = vmatprep.subr.mxu0 0.0
        %715 = vmatpush1.msra.mxu0 0.0
        %716 = vmatprep.subr.mxu0 0.0
        %717 = vmatpush1.msra.mxu0 0.0
        %718 = vmatprep.subr.mxu0 0.0
        %719 = vmatpush1.msra.mxu0 0.0
        %720 = vmatprep.subr.mxu0 0.0
        %721 = vmatpush1.msra.mxu0 0.0
        %722 = vmatprep.subr.mxu0 0.0
        %723 = vmatpush1.msra.mxu0 0.0
        %724 = vmatprep.subr.mxu0 0.0
        %725 = vmatpush1.msra.mxu0 0.0
        %726 = vmatprep.subr.mxu0 0.0
        %727 = vmatpush1.msra.mxu0 0.0
        %728 = vmatprep.subr.mxu0 0.0
        %729 = vmatpush1.msra.mxu0 %v326
        %730 = vmatprep.subr.mxu0 0.0
        %731 = vmatpush1.msra.mxu0 %v325
        %732 = vmatprep.subr.mxu0 0.0
        %733 = vmatpush1.msra.mxu0 %v324
        %734 = vmatprep.subr.mxu0 0.0
        %735 = vmatpush1.msra.mxu0 %v323
        %736 = vmatprep.subr.mxu0 0.0
        %737 = vmatpush1.msra.mxu0 %v322
        %738 = vmatprep.subr.mxu0 0.0
        %739 = vmatpush1.msra.mxu0 %v321
        %740 = vmatprep.subr.mxu0 0.0
        %741 = vmatpush1.msra.mxu0 %v320
        %742 = vmatprep.subr.mxu0 0.0
        %743 = vmatpush1.msra.mxu0 %v319
        %744 = vmatprep.subr.mxu0 0.0
        %745 = vmatpush2.msra.mxu0 0.0
        %746 = vmatprep.subr.mxu0 0.0
        %747 = vmatpush2.msra.mxu0 0.0
        %748 = vmatprep.subr.mxu0 0.0
        %749 = vmatpush2.msra.mxu0 0.0
        %750 = vmatprep.subr.mxu0 0.0
        %751 = vmatpush2.msra.mxu0 0.0
        %752 = vmatprep.subr.mxu0 0.0
        %753 = vmatpush2.msra.mxu0 0.0
        %754 = vmatprep.subr.mxu0 0.0
        %755 = vmatpush2.msra.mxu0 0.0
        %756 = vmatprep.subr.mxu0 0.0
        %757 = vmatpush2.msra.mxu0 0.0
        %758 = vmatprep.subr.mxu0 0.0
        %759 = vmatpush2.msra.mxu0 0.0
        %760 = vmatprep.subr.mxu0 0.0
        %761 = vmatpush2.msra.mxu0 0.0
        %762 = vmatprep.subr.mxu0 0.0
        %763 = vmatpush2.msra.mxu0 0.0
        %764 = vmatprep.subr.mxu0 0.0
        %765 = vmatpush2.msra.mxu0 0.0
        %766 = vmatprep.subr.mxu0 0.0
        %767 = vmatpush2.msra.mxu0 0.0
        %768 = vmatprep.subr.mxu0 0.0
        %769 = vmatpush2.msra.mxu0 0.0
        %770 = vmatprep.subr.mxu0 0.0
        %771 = vmatpush2.msra.mxu0 0.0
        %772 = vmatprep.subr.mxu0 0.0
        %773 = vmatpush2.msra.mxu0 0.0
        %774 = vmatprep.subr.mxu0 0.0
        %775 = vmatpush2.msra.mxu0 0.0
        %776 = vmatprep.mubr.f32.mxu0 0.0
        %777 = vmatmul.mubr.f32.gmra.mxu0 %v329
        %v778 = vpop.f32.mrf.mxu0
        %v779 = vadd.f32 0.0, %v778
        %v780 = vpop.f32.mrf.mxu0
        %781 = vmatprep.mubr.f32.mxu0 0.0
        %782 = vmatmul.mubr.f32.gmra.mxu0 %v332
        %v783 = vpop.f32.mrf.mxu0
        %v784 = vadd.f32 0.0, %v783
        %v785 = vpop.f32.mrf.mxu0
        %786 = vmatprep.mubr.f32.mxu0 0.0
        %787 = vmatmul.mubr.f32.gmra.mxu0 %v335
        %v788 = vpop.f32.mrf.mxu0
        %v789 = vadd.f32 0.0, %v788
        %v790 = vpop.f32.mrf.mxu0
        %791 = vmatprep.mubr.f32.mxu0 0.0
        %792 = vmatmul.mubr.f32.gmra.mxu0 %v338
        %v793 = vpop.f32.mrf.mxu0
        %v794 = vadd.f32 0.0, %v793
        %v795 = vpop.f32.mrf.mxu0
        %796 = vmatprep.mubr.f32.mxu0 0.0
        %797 = vmatmul.mubr.f32.gmra.mxu0 %v341
        %v798 = vpop.f32.mrf.mxu0
        %v799 = vadd.f32 0.0, %v798
        %v800 = vpop.f32.mrf.mxu0
        %801 = vmatprep.mubr.f32.mxu0 0.0
        %802 = vmatmul.mubr.f32.gmra.mxu0 %v344
        %v803 = vpop.f32.mrf.mxu0
        %v804 = vadd.f32 0.0, %v803
        %v805 = vpop.f32.mrf.mxu0
        %806 = vmatprep.mubr.f32.mxu0 0.0
        %807 = vmatmul.mubr.f32.gmra.mxu0 %v347
        %v808 = vpop.f32.mrf.mxu0
        %v809 = vadd.f32 0.0, %v808
        %v810 = vpop.f32.mrf.mxu0
        %811 = vmatprep.mubr.f32.mxu0 0.0
        %812 = vmatmul.mubr.f32.gmra.mxu0 %v350
        %v813 = vpop.f32.mrf.mxu0
        %v814 = vadd.f32 0.0, %v813
        %v815 = vpop.f32.mrf.mxu0
        %816 = vmatprep.mubr.f32.mxu0 0.0
        %817 = vmatmul.mubr.f32.gmra.mxu0 %v353
        %v818 = vpop.f32.mrf.mxu0
        %v819 = vadd.f32 0.0, %v818
        %v820 = vpop.f32.mrf.mxu0
        %821 = vmatprep.mubr.f32.mxu0 0.0
        %822 = vmatmul.mubr.f32.gmra.mxu0 %v356
        %v823 = vpop.f32.mrf.mxu0
        %v824 = vadd.f32 0.0, %v823
        %v825 = vpop.f32.mrf.mxu0
        %826 = vmatprep.mubr.f32.mxu0 0.0
        %827 = vmatmul.mubr.f32.gmra.mxu0 %v359
        %v828 = vpop.f32.mrf.mxu0
        %v829 = vadd.f32 0.0, %v828
        %v830 = vpop.f32.mrf.mxu0
        %831 = vmatprep.mubr.f32.mxu0 0.0
        %832 = vmatmul.mubr.f32.gmra.mxu0 %v362
        %v833 = vpop.f32.mrf.mxu0
        %v834 = vadd.f32 0.0, %v833
        %v835 = vpop.f32.mrf.mxu0
        %836 = vmatprep.mubr.f32.mxu0 0.0
        %837 = vmatmul.mubr.f32.gmra.mxu0 %v365
        %v838 = vpop.f32.mrf.mxu0
        %v839 = vadd.f32 0.0, %v838
        %v840 = vpop.f32.mrf.mxu0
        %841 = vmatprep.mubr.f32.mxu0 0.0
        %842 = vmatmul.mubr.f32.gmra.mxu0 %v368
        %v843 = vpop.f32.mrf.mxu0
        %v844 = vadd.f32 0.0, %v843
        %v845 = vpop.f32.mrf.mxu0
        %846 = vmatprep.mubr.f32.mxu0 0.0
        %847 = vmatmul.mubr.f32.gmra.mxu0 %v371
        %v848 = vpop.f32.mrf.mxu0
        %v849 = vadd.f32 0.0, %v848
        %v850 = vpop.f32.mrf.mxu0
        %851 = vmatprep.mubr.f32.mxu0 0.0
        %852 = vmatmul.mubr.f32.gmra.mxu0 %v374
        %v853 = vpop.f32.mrf.mxu0
        %v854 = vadd.f32 0.0, %v853
        %v855 = vpop.f32.mrf.mxu0
        %856 = vmatprep.mubr.f32.mxu0 0.0
        %857 = vmatmul.mubr.f32.gmra.mxu0 %v377
        %v858 = vpop.f32.mrf.mxu0
        %v859 = vadd.f32 0.0, %v858
        %v860 = vpop.f32.mrf.mxu0
        %861 = vmatprep.mubr.f32.mxu0 0.0
        %862 = vmatmul.mubr.f32.gmra.mxu0 %v380
        %v863 = vpop.f32.mrf.mxu0
        %v864 = vadd.f32 0.0, %v863
        %v865 = vpop.f32.mrf.mxu0
        %866 = vmatprep.mubr.f32.mxu0 0.0
        %867 = vmatmul.mubr.f32.gmra.mxu0 %v383
        %v868 = vpop.f32.mrf.mxu0
        %v869 = vadd.f32 0.0, %v868
        %v870 = vpop.f32.mrf.mxu0
        %871 = vmatprep.mubr.f32.mxu0 0.0
        %872 = vmatmul.mubr.f32.gmra.mxu0 %v386
        %v873 = vpop.f32.mrf.mxu0
        %v874 = vadd.f32 0.0, %v873
        %v875 = vpop.f32.mrf.mxu0
        %876 = vmatprep.mubr.f32.mxu0 0.0
        %877 = vmatmul.mubr.f32.gmra.mxu0 %v389
        %v878 = vpop.f32.mrf.mxu0
        %v879 = vadd.f32 0.0, %v878
        %v880 = vpop.f32.mrf.mxu0
        %881 = vmatprep.mubr.f32.mxu0 0.0
        %882 = vmatmul.mubr.f32.gmra.mxu0 %v392
        %v883 = vpop.f32.mrf.mxu0
        %v884 = vadd.f32 0.0, %v883
        %v885 = vpop.f32.mrf.mxu0
        %886 = vmatprep.mubr.f32.mxu0 0.0
        %887 = vmatmul.mubr.f32.gmra.mxu0 %v395
        %v888 = vpop.f32.mrf.mxu0
        %v889 = vadd.f32 0.0, %v888
        %v890 = vpop.f32.mrf.mxu0
        %891 = vmatprep.mubr.f32.mxu0 0.0
        %892 = vmatmul.mubr.f32.gmra.mxu0 %v398
        %v893 = vpop.f32.mrf.mxu0
        %v894 = vadd.f32 0.0, %v893
        %v895 = vpop.f32.mrf.mxu0
        %896 = vmatprep.mubr.f32.mxu0 0.0
        %897 = vmatmul.mubr.f32.gmra.mxu0 %v401
        %v898 = vpop.f32.mrf.mxu0
        %v899 = vadd.f32 0.0, %v898
        %v900 = vpop.f32.mrf.mxu0
        %901 = vmatprep.mubr.f32.mxu0 0.0
        %902 = vmatmul.mubr.f32.gmra.mxu0 %v404
        %v903 = vpop.f32.mrf.mxu0
        %v904 = vadd.f32 0.0, %v903
        %v905 = vpop.f32.mrf.mxu0
        %906 = vmatprep.mubr.f32.mxu0 0.0
        %907 = vmatmul.mubr.f32.gmra.mxu0 %v407
        %v908 = vpop.f32.mrf.mxu0
        %v909 = vadd.f32 0.0, %v908
        %v910 = vpop.f32.mrf.mxu0
        %911 = vmatprep.mubr.f32.mxu0 0.0
        %912 = vmatmul.mubr.f32.gmra.mxu0 %v410
        %v913 = vpop.f32.mrf.mxu0
        %v914 = vadd.f32 0.0, %v913
        %v915 = vpop.f32.mrf.mxu0
        %916 = vmatprep.mubr.f32.mxu0 0.0
        %917 = vmatmul.mubr.f32.gmra.mxu0 %v413
        %v918 = vpop.f32.mrf.mxu0
        %v919 = vadd.f32 0.0, %v918
        %v920 = vpop.f32.mrf.mxu0
        %921 = vmatprep.mubr.f32.mxu0 0.0
        %922 = vmatmul.mubr.f32.gmra.mxu0 %v416
        %v923 = vpop.f32.mrf.mxu0
        %v924 = vadd.f32 0.0, %v923
        %v925 = vpop.f32.mrf.mxu0
        %926 = vmatprep.mubr.f32.mxu0 0.0
        %927 = vmatmul.mubr.f32.gmra.mxu0 %v419
        %v928 = vpop.f32.mrf.mxu0
        %v929 = vadd.f32 0.0, %v928
        %v930 = vpop.f32.mrf.mxu0
        %931 = vmatprep.mubr.f32.mxu0 0.0
        %932 = vmatmul.mubr.f32.gmra.mxu0 %v422
        %v933 = vpop.f32.mrf.mxu0
        %v934 = vadd.f32 0.0, %v933
        %v935 = vpop.f32.mrf.mxu0
        %936 = vmatprep.mubr.f32.mxu0 0.0
        %937 = vmatmul.mubr.f32.gmra.mxu0 %v425
        %v938 = vpop.f32.mrf.mxu0
        %v939 = vadd.f32 0.0, %v938
        %v940 = vpop.f32.mrf.mxu0
        %941 = vmatprep.mubr.f32.mxu0 0.0
        %942 = vmatmul.mubr.f32.gmra.mxu0 %v428
        %v943 = vpop.f32.mrf.mxu0
        %v944 = vadd.f32 0.0, %v943
        %v945 = vpop.f32.mrf.mxu0
        %946 = vmatprep.mubr.f32.mxu0 0.0
        %947 = vmatmul.mubr.f32.gmra.mxu0 %v431
        %v948 = vpop.f32.mrf.mxu0
        %v949 = vadd.f32 0.0, %v948
        %v950 = vpop.f32.mrf.mxu0
        %951 = vmatprep.mubr.f32.mxu0 0.0
        %952 = vmatmul.mubr.f32.gmra.mxu0 %v434
        %v953 = vpop.f32.mrf.mxu0
        %v954 = vadd.f32 0.0, %v953
        %v955 = vpop.f32.mrf.mxu0
        %956 = vmatprep.mubr.f32.mxu0 0.0
        %957 = vmatmul.mubr.f32.gmra.mxu0 %v437
        %v958 = vpop.f32.mrf.mxu0
        %v959 = vadd.f32 0.0, %v958
        %v960 = vpop.f32.mrf.mxu0
        %961 = vmatprep.mubr.f32.mxu0 0.0
        %962 = vmatmul.mubr.f32.gmra.mxu0 %v440
        %v963 = vpop.f32.mrf.mxu0
        %v964 = vadd.f32 0.0, %v963
        %v965 = vpop.f32.mrf.mxu0
        %966 = vmatprep.mubr.f32.mxu0 0.0
        %967 = vmatmul.mubr.f32.gmra.mxu0 %v443
        %v968 = vpop.f32.mrf.mxu0
        %v969 = vadd.f32 0.0, %v968
        %v970 = vpop.f32.mrf.mxu0
        %971 = vmatprep.mubr.f32.mxu0 0.0
        %972 = vmatmul.mubr.f32.gmra.mxu0 %v446
        %v973 = vpop.f32.mrf.mxu0
        %v974 = vadd.f32 0.0, %v973
        %v975 = vpop.f32.mrf.mxu0
        %976 = vmatprep.mubr.f32.mxu0 0.0
        %977 = vmatmul.mubr.f32.gmra.mxu0 %v449
        %v978 = vpop.f32.mrf.mxu0
        %v979 = vadd.f32 0.0, %v978
        %v980 = vpop.f32.mrf.mxu0
        %981 = vmatprep.mubr.f32.mxu0 0.0
        %982 = vmatmul.mubr.f32.gmra.mxu0 %v452
        %v983 = vpop.f32.mrf.mxu0
        %v984 = vadd.f32 0.0, %v983
        %v985 = vpop.f32.mrf.mxu0
        %986 = vmatprep.mubr.f32.mxu0 0.0
        %987 = vmatmul.mubr.f32.gmra.mxu0 %v455
        %v988 = vpop.f32.mrf.mxu0
        %v989 = vadd.f32 0.0, %v988
        %v990 = vpop.f32.mrf.mxu0
        %991 = vmatprep.mubr.f32.mxu0 0.0
        %992 = vmatmul.mubr.f32.gmra.mxu0 %v458
        %v993 = vpop.f32.mrf.mxu0
        %v994 = vadd.f32 0.0, %v993
        %v995 = vpop.f32.mrf.mxu0
        %996 = vmatprep.mubr.f32.mxu0 0.0
        %997 = vmatmul.mubr.f32.gmra.mxu0 %v461
        %v998 = vpop.f32.mrf.mxu0
        %v999 = vadd.f32 0.0, %v998
        %v1000 = vpop.f32.mrf.mxu0
        %1001 = vmatprep.mubr.f32.mxu0 0.0
        %1002 = vmatmul.mubr.f32.gmra.mxu0 %v464
        %v1003 = vpop.f32.mrf.mxu0
        %v1004 = vadd.f32 0.0, %v1003
        %v1005 = vpop.f32.mrf.mxu0
        %1006 = vmatprep.mubr.f32.mxu0 0.0
        %1007 = vmatmul.mubr.f32.gmra.mxu0 %v467
        %v1008 = vpop.f32.mrf.mxu0
        %v1009 = vadd.f32 0.0, %v1008
        %v1010 = vpop.f32.mrf.mxu0
        %1011 = vmatprep.mubr.f32.mxu0 0.0
        %1012 = vmatmul.mubr.f32.gmra.mxu0 %v470
        %v1013 = vpop.f32.mrf.mxu0
        %v1014 = vadd.f32 0.0, %v1013
        %v1015 = vpop.f32.mrf.mxu0
        %1016 = vmatprep.mubr.f32.mxu0 0.0
        %1017 = vmatmul.mubr.f32.gmra.mxu0 %v473
        %v1018 = vpop.f32.mrf.mxu0
        %v1019 = vadd.f32 0.0, %v1018
        %v1020 = vpop.f32.mrf.mxu0
        %1021 = vmatprep.mubr.f32.mxu0 0.0
        %1022 = vmatmul.mubr.f32.gmra.mxu0 %v476
        %v1023 = vpop.f32.mrf.mxu0
        %v1024 = vadd.f32 0.0, %v1023
        %v1025 = vpop.f32.mrf.mxu0
        %1026 = vmatprep.mubr.f32.mxu0 0.0
        %1027 = vmatmul.mubr.f32.gmra.mxu0 %v479
        %v1028 = vpop.f32.mrf.mxu0
        %v1029 = vadd.f32 0.0, %v1028
        %v1030 = vpop.f32.mrf.mxu0
        %1031 = vmatprep.mubr.f32.mxu0 0.0
        %1032 = vmatmul.mubr.f32.gmra.mxu0 %v482
        %v1033 = vpop.f32.mrf.mxu0
        %v1034 = vadd.f32 0.0, %v1033
        %v1035 = vpop.f32.mrf.mxu0
        %1036 = vmatprep.mubr.f32.mxu0 0.0
        %1037 = vmatmul.mubr.f32.gmra.mxu0 %v485
        %v1038 = vpop.f32.mrf.mxu0
        %v1039 = vadd.f32 0.0, %v1038
        %v1040 = vpop.f32.mrf.mxu0
        %1041 = vmatprep.mubr.f32.mxu0 0.0
        %1042 = vmatmul.mubr.f32.gmra.mxu0 %v488
        %v1043 = vpop.f32.mrf.mxu0
        %v1044 = vadd.f32 0.0, %v1043
        %v1045 = vpop.f32.mrf.mxu0
        %1046 = vmatprep.mubr.f32.mxu0 0.0
        %1047 = vmatmul.mubr.f32.gmra.mxu0 %v491
        %v1048 = vpop.f32.mrf.mxu0
        %v1049 = vadd.f32 0.0, %v1048
        %v1050 = vpop.f32.mrf.mxu0
        %1051 = vmatprep.mubr.f32.mxu0 0.0
        %1052 = vmatmul.mubr.f32.gmra.mxu0 %v494
        %v1053 = vpop.f32.mrf.mxu0
        %v1054 = vadd.f32 0.0, %v1053
        %v1055 = vpop.f32.mrf.mxu0
        %1056 = vmatprep.mubr.f32.mxu0 0.0
        %1057 = vmatmul.mubr.f32.gmra.mxu0 %v497
        %v1058 = vpop.f32.mrf.mxu0
        %v1059 = vadd.f32 0.0, %v1058
        %v1060 = vpop.f32.mrf.mxu0
        %1061 = vmatprep.mubr.f32.mxu0 0.0
        %1062 = vmatmul.mubr.f32.gmra.mxu0 %v500
        %v1063 = vpop.f32.mrf.mxu0
        %v1064 = vadd.f32 0.0, %v1063
        %v1065 = vpop.f32.mrf.mxu0
        %1066 = vmatprep.mubr.f32.mxu0 0.0
        %1067 = vmatmul.mubr.f32.gmra.mxu0 %v503
        %v1068 = vpop.f32.mrf.mxu0
        %v1069 = vadd.f32 0.0, %v1068
        %v1070 = vpop.f32.mrf.mxu0
        %1071 = vmatprep.mubr.f32.mxu0 0.0
        %1072 = vmatmul.mubr.f32.gmra.mxu0 %v506
        %v1073 = vpop.f32.mrf.mxu0
        %v1074 = vadd.f32 0.0, %v1073
        %v1075 = vpop.f32.mrf.mxu0
        %1076 = vmatprep.mubr.f32.mxu0 0.0
        %1077 = vmatmul.mubr.f32.gmra.mxu0 %v509
        %v1078 = vpop.f32.mrf.mxu0
        %v1079 = vadd.f32 0.0, %v1078
        %v1080 = vpop.f32.mrf.mxu0
        %1081 = vmatprep.mubr.f32.mxu0 0.0
        %1082 = vmatmul.mubr.f32.gmra.mxu0 %v512
        %v1083 = vpop.f32.mrf.mxu0
        %v1084 = vadd.f32 0.0, %v1083
        %v1085 = vpop.f32.mrf.mxu0
        %1086 = vmatprep.mubr.f32.mxu0 0.0
        %1087 = vmatmul.mubr.f32.gmra.mxu0 %v515
        %v1088 = vpop.f32.mrf.mxu0
        %v1089 = vadd.f32 0.0, %v1088
        %v1090 = vpop.f32.mrf.mxu0
        %1091 = vmatprep.mubr.f32.mxu0 0.0
        %1092 = vmatmul.mubr.f32.gmra.mxu0 %v518
        %v1093 = vpop.f32.mrf.mxu0
        %v1094 = vadd.f32 0.0, %v1093
        %v1095 = vpop.f32.mrf.mxu0
        %1096 = vmatprep.mubr.f32.mxu0 0.0
        %1097 = vmatmul.mubr.f32.gmra.mxu0 %v521
        %v1098 = vpop.f32.mrf.mxu0
        %v1099 = vadd.f32 0.0, %v1098
        %v1100 = vpop.f32.mrf.mxu0
        %1101 = vmatprep.mubr.f32.mxu0 0.0
        %1102 = vmatmul.mubr.f32.gmra.mxu0 %v524
        %v1103 = vpop.f32.mrf.mxu0
        %v1104 = vadd.f32 0.0, %v1103
        %v1105 = vpop.f32.mrf.mxu0
        %1106 = vmatprep.mubr.f32.mxu0 0.0
        %1107 = vmatmul.mubr.f32.gmra.mxu0 %v527
        %v1108 = vpop.f32.mrf.mxu0
        %v1109 = vadd.f32 0.0, %v1108
        %v1110 = vpop.f32.mrf.mxu0
        %1111 = vmatprep.mubr.f32.mxu0 0.0
        %1112 = vmatmul.mubr.f32.gmra.mxu0 %v530
        %v1113 = vpop.f32.mrf.mxu0
        %v1114 = vadd.f32 0.0, %v1113
        %v1115 = vpop.f32.mrf.mxu0
        %1116 = vmatprep.mubr.f32.mxu0 0.0
        %1117 = vmatmul.mubr.f32.gmra.mxu0 %v533
        %v1118 = vpop.f32.mrf.mxu0
        %v1119 = vadd.f32 0.0, %v1118
        %v1120 = vpop.f32.mrf.mxu0
        %1121 = vmatprep.mubr.f32.mxu0 0.0
        %1122 = vmatmul.mubr.f32.gmra.mxu0 %v536
        %v1123 = vpop.f32.mrf.mxu0
        %v1124 = vadd.f32 0.0, %v1123
        %v1125 = vpop.f32.mrf.mxu0
        %1126 = vmatprep.mubr.f32.mxu0 0.0
        %1127 = vmatmul.mubr.f32.gmra.mxu0 %v539
        %v1128 = vpop.f32.mrf.mxu0
        %v1129 = vadd.f32 0.0, %v1128
        %v1130 = vpop.f32.mrf.mxu0
        %1131 = vmatprep.mubr.f32.mxu0 0.0
        %1132 = vmatmul.mubr.f32.gmra.mxu0 %v542
        %v1133 = vpop.f32.mrf.mxu0
        %v1134 = vadd.f32 0.0, %v1133
        %v1135 = vpop.f32.mrf.mxu0
        %1136 = vmatprep.mubr.f32.mxu0 0.0
        %1137 = vmatmul.mubr.f32.gmra.mxu0 %v545
        %v1138 = vpop.f32.mrf.mxu0
        %v1139 = vadd.f32 0.0, %v1138
        %v1140 = vpop.f32.mrf.mxu0
        %1141 = vmatprep.mubr.f32.mxu0 0.0
        %1142 = vmatmul.mubr.f32.gmra.mxu0 %v548
        %v1143 = vpop.f32.mrf.mxu0
        %v1144 = vadd.f32 0.0, %v1143
        %v1145 = vpop.f32.mrf.mxu0
        %1146 = vmatprep.mubr.f32.mxu0 0.0
        %1147 = vmatmul.mubr.f32.gmra.mxu0 %v551
        %v1148 = vpop.f32.mrf.mxu0
        %v1149 = vadd.f32 0.0, %v1148
        %v1150 = vpop.f32.mrf.mxu0
        %1151 = vmatprep.mubr.f32.mxu0 0.0
        %1152 = vmatmul.mubr.f32.gmra.mxu0 %v554
        %v1153 = vpop.f32.mrf.mxu0
        %v1154 = vadd.f32 0.0, %v1153
        %v1155 = vpop.f32.mrf.mxu0
        %1156 = vmatprep.mubr.f32.mxu0 0.0
        %1157 = vmatmul.mubr.f32.gmra.mxu0 %v557
        %v1158 = vpop.f32.mrf.mxu0
        %v1159 = vadd.f32 0.0, %v1158
        %v1160 = vpop.f32.mrf.mxu0
        %1161 = vmatprep.mubr.f32.mxu0 0.0
        %1162 = vmatmul.mubr.f32.gmra.mxu0 %v560
        %v1163 = vpop.f32.mrf.mxu0
        %v1164 = vadd.f32 0.0, %v1163
        %v1165 = vpop.f32.mrf.mxu0
        %1166 = vmatprep.mubr.f32.mxu0 0.0
        %1167 = vmatmul.mubr.f32.gmra.mxu0 %v563
        %v1168 = vpop.f32.mrf.mxu0
        %v1169 = vadd.f32 0.0, %v1168
        %v1170 = vpop.f32.mrf.mxu0
        %1171 = vmatprep.mubr.f32.mxu0 0.0
        %1172 = vmatmul.mubr.f32.gmra.mxu0 %v566
        %v1173 = vpop.f32.mrf.mxu0
        %v1174 = vadd.f32 0.0, %v1173
        %v1175 = vpop.f32.mrf.mxu0
        %1176 = vmatprep.mubr.f32.mxu0 0.0
        %1177 = vmatmul.mubr.f32.gmra.mxu0 %v569
        %v1178 = vpop.f32.mrf.mxu0
        %v1179 = vadd.f32 0.0, %v1178
        %v1180 = vpop.f32.mrf.mxu0
        %1181 = vmatprep.mubr.f32.mxu0 0.0
        %1182 = vmatmul.mubr.f32.gmra.mxu0 %v572
        %v1183 = vpop.f32.mrf.mxu0
        %v1184 = vadd.f32 0.0, %v1183
        %v1185 = vpop.f32.mrf.mxu0
        %1186 = vmatprep.mubr.f32.mxu0 0.0
        %1187 = vmatmul.mubr.f32.gmra.mxu0 %v575
        %v1188 = vpop.f32.mrf.mxu0
        %v1189 = vadd.f32 0.0, %v1188
        %v1190 = vpop.f32.mrf.mxu0
        %1191 = vmatprep.mubr.f32.mxu0 0.0
        %1192 = vmatmul.mubr.f32.gmra.mxu0 %v578
        %v1193 = vpop.f32.mrf.mxu0
        %v1194 = vadd.f32 0.0, %v1193
        %v1195 = vpop.f32.mrf.mxu0
        %1196 = vmatprep.mubr.f32.mxu0 0.0
        %1197 = vmatmul.mubr.f32.gmra.mxu0 %v581
        %v1198 = vpop.f32.mrf.mxu0
        %v1199 = vadd.f32 0.0, %v1198
        %v1200 = vpop.f32.mrf.mxu0
        %1201 = vmatprep.mubr.f32.mxu0 0.0
        %1202 = vmatmul.mubr.f32.gmra.mxu0 %v584
        %v1203 = vpop.f32.mrf.mxu0
        %v1204 = vadd.f32 0.0, %v1203
        %v1205 = vpop.f32.mrf.mxu0
        %1206 = vmatprep.mubr.f32.mxu0 0.0
        %1207 = vmatmul.mubr.f32.gmra.mxu0 %v587
        %v1208 = vpop.f32.mrf.mxu0
        %v1209 = vadd.f32 0.0, %v1208
        %v1210 = vpop.f32.mrf.mxu0
        %1211 = vmatprep.mubr.f32.mxu0 0.0
        %1212 = vmatmul.mubr.f32.gmra.mxu0 %v590
        %v1213 = vpop.f32.mrf.mxu0
        %v1214 = vadd.f32 0.0, %v1213
        %v1215 = vpop.f32.mrf.mxu0
        %1216 = vmatprep.mubr.f32.mxu0 0.0
        %1217 = vmatmul.mubr.f32.gmra.mxu0 %v593
        %v1218 = vpop.f32.mrf.mxu0
        %v1219 = vadd.f32 0.0, %v1218
        %v1220 = vpop.f32.mrf.mxu0
        %1221 = vmatprep.mubr.f32.mxu0 0.0
        %1222 = vmatmul.mubr.f32.gmra.mxu0 %v596
        %v1223 = vpop.f32.mrf.mxu0
        %v1224 = vadd.f32 0.0, %v1223
        %v1225 = vpop.f32.mrf.mxu0
        %1226 = vmatprep.mubr.f32.mxu0 0.0
        %1227 = vmatmul.mubr.f32.gmra.mxu0 %v599
        %v1228 = vpop.f32.mrf.mxu0
        %v1229 = vadd.f32 0.0, %v1228
        %v1230 = vpop.f32.mrf.mxu0
        %1231 = vmatprep.mubr.f32.mxu0 0.0
        %1232 = vmatmul.mubr.f32.gmra.mxu0 %v602
        %v1233 = vpop.f32.mrf.mxu0
        %v1234 = vadd.f32 0.0, %v1233
        %v1235 = vpop.f32.mrf.mxu0
        %1236 = vmatprep.mubr.f32.mxu0 0.0
        %1237 = vmatmul.mubr.f32.gmra.mxu0 %v605
        %v1238 = vpop.f32.mrf.mxu0
        %v1239 = vadd.f32 0.0, %v1238
        %v1240 = vpop.f32.mrf.mxu0
        %1241 = vmatprep.mubr.f32.mxu0 0.0
        %1242 = vmatmul.mubr.f32.gmra.mxu0 %v608
        %v1243 = vpop.f32.mrf.mxu0
        %v1244 = vadd.f32 0.0, %v1243
        %v1245 = vpop.f32.mrf.mxu0
        %1246 = vmatprep.mubr.f32.mxu0 0.0
        %1247 = vmatmul.mubr.f32.gmra.mxu0 %v611
        %v1248 = vpop.f32.mrf.mxu0
        %v1249 = vadd.f32 0.0, %v1248
        %v1250 = vpop.f32.mrf.mxu0
        %1251 = vmatprep.mubr.f32.mxu0 0.0
        %1252 = vmatmul.mubr.f32.gmra.mxu0 %v614
        %v1253 = vpop.f32.mrf.mxu0
        %v1254 = vadd.f32 0.0, %v1253
        %v1255 = vpop.f32.mrf.mxu0
        %1256 = vmatprep.mubr.f32.mxu0 0.0
        %1257 = vmatmul.mubr.f32.gmra.mxu0 %v617
        %v1258 = vpop.f32.mrf.mxu0
        %v1259 = vadd.f32 0.0, %v1258
        %v1260 = vpop.f32.mrf.mxu0
        %1261 = vmatprep.mubr.f32.mxu0 0.0
        %1262 = vmatmul.mubr.f32.gmra.mxu0 %v620
        %v1263 = vpop.f32.mrf.mxu0
        %v1264 = vadd.f32 0.0, %v1263
        %v1265 = vpop.f32.mrf.mxu0
        %1266 = vmatprep.mubr.f32.mxu0 0.0
        %1267 = vmatmul.mubr.f32.gmra.mxu0 %v623
        %v1268 = vpop.f32.mrf.mxu0
        %v1269 = vadd.f32 0.0, %v1268
        %v1270 = vpop.f32.mrf.mxu0
        %1271 = vmatprep.mubr.f32.mxu0 0.0
        %1272 = vmatmul.mubr.f32.gmra.mxu0 %v626
        %v1273 = vpop.f32.mrf.mxu0
        %v1274 = vadd.f32 0.0, %v1273
        %v1275 = vpop.f32.mrf.mxu0
        %1276 = vmatprep.mubr.f32.mxu0 0.0
        %1277 = vmatmul.mubr.f32.gmra.mxu0 %v629
        %v1278 = vpop.f32.mrf.mxu0
        %v1279 = vadd.f32 0.0, %v1278
        %v1280 = vpop.f32.mrf.mxu0
        %1281 = vmatprep.mubr.f32.mxu0 0.0
        %1282 = vmatmul.mubr.f32.gmra.mxu0 %v632
        %v1283 = vpop.f32.mrf.mxu0
        %v1284 = vadd.f32 0.0, %v1283
        %v1285 = vpop.f32.mrf.mxu0
        %1286 = vmatprep.mubr.f32.mxu0 0.0
        %1287 = vmatmul.mubr.f32.gmra.mxu0 %v635
        %v1288 = vpop.f32.mrf.mxu0
        %v1289 = vadd.f32 0.0, %v1288
        %v1290 = vpop.f32.mrf.mxu0
        %1291 = vmatprep.mubr.f32.mxu0 0.0
        %1292 = vmatmul.mubr.f32.gmra.mxu0 %v638
        %v1293 = vpop.f32.mrf.mxu0
        %v1294 = vadd.f32 0.0, %v1293
        %v1295 = vpop.f32.mrf.mxu0
        %1296 = vmatprep.mubr.f32.mxu0 0.0
        %1297 = vmatmul.mubr.f32.gmra.mxu0 %v641
        %v1298 = vpop.f32.mrf.mxu0
        %v1299 = vadd.f32 0.0, %v1298
        %v1300 = vpop.f32.mrf.mxu0
        %1301 = vmatprep.mubr.f32.mxu0 0.0
        %1302 = vmatmul.mubr.f32.gmra.mxu0 %v644
        %v1303 = vpop.f32.mrf.mxu0
        %v1304 = vadd.f32 0.0, %v1303
        %v1305 = vpop.f32.mrf.mxu0
        %1306 = vmatprep.mubr.f32.mxu0 0.0
        %1307 = vmatmul.mubr.f32.gmra.mxu0 %v647
        %v1308 = vpop.f32.mrf.mxu0
        %v1309 = vadd.f32 0.0, %v1308
        %v1310 = vpop.f32.mrf.mxu0
        %1311 = vmatprep.mubr.f32.mxu0 0.0
        %1312 = vmatmul.mubr.f32.gmra.mxu0 %v650
        %v1313 = vpop.f32.mrf.mxu0
        %v1314 = vadd.f32 0.0, %v1313
        %v1315 = vpop.f32.mrf.mxu0
        %1316 = vmatprep.mubr.f32.mxu0 0.0
        %1317 = vmatmul.mubr.f32.gmra.mxu0 %v653
        %v1318 = vpop.f32.mrf.mxu0
        %v1319 = vadd.f32 0.0, %v1318
        %v1320 = vpop.f32.mrf.mxu0
        %1321 = vmatprep.mubr.f32.mxu0 0.0
        %1322 = vmatmul.mubr.f32.gmra.mxu0 %v656
        %v1323 = vpop.f32.mrf.mxu0
        %v1324 = vadd.f32 0.0, %v1323
        %v1325 = vpop.f32.mrf.mxu0
        %1326 = vmatprep.mubr.f32.mxu0 0.0
        %1327 = vmatmul.mubr.f32.gmra.mxu0 %v659
        %v1328 = vpop.f32.mrf.mxu0
        %v1329 = vadd.f32 0.0, %v1328
        %v1330 = vpop.f32.mrf.mxu0
        %1331 = vmatprep.mubr.f32.mxu0 0.0
        %1332 = vmatmul.mubr.f32.gmra.mxu0 %v662
        %v1333 = vpop.f32.mrf.mxu0
        %v1334 = vadd.f32 0.0, %v1333
        %v1335 = vpop.f32.mrf.mxu0
        %1336 = vmatprep.mubr.f32.mxu0 0.0
        %1337 = vmatmul.mubr.f32.gmra.mxu0 %v665
        %v1338 = vpop.f32.mrf.mxu0
        %v1339 = vadd.f32 0.0, %v1338
        %v1340 = vpop.f32.mrf.mxu0
        %1341 = vmatprep.mubr.f32.mxu0 0.0
        %1342 = vmatmul.mubr.f32.gmra.mxu0 %v668
        %v1343 = vpop.f32.mrf.mxu0
        %v1344 = vadd.f32 0.0, %v1343
        %v1345 = vpop.f32.mrf.mxu0
        %1346 = vmatprep.mubr.f32.mxu0 0.0
        %1347 = vmatmul.mubr.f32.gmra.mxu0 %v671
        %v1348 = vpop.f32.mrf.mxu0
        %v1349 = vadd.f32 0.0, %v1348
        %v1350 = vpop.f32.mrf.mxu0
        %1351 = vmatprep.mubr.f32.mxu0 0.0
        %1352 = vmatmul.mubr.f32.gmra.mxu0 %v674
        %v1353 = vpop.f32.mrf.mxu0
        %v1354 = vadd.f32 0.0, %v1353
        %v1355 = vpop.f32.mrf.mxu0
        %1356 = vmatprep.mubr.f32.mxu0 0.0
        %1357 = vmatmul.mubr.f32.gmra.mxu0 %v677
        %v1358 = vpop.f32.mrf.mxu0
        %v1359 = vadd.f32 0.0, %v1358
        %v1360 = vpop.f32.mrf.mxu0
        %1361 = vmatprep.mubr.f32.mxu0 0.0
        %1362 = vmatmul.mubr.f32.gmra.mxu0 %v680
        %v1363 = vpop.f32.mrf.mxu0
        %v1364 = vadd.f32 0.0, %v1363
        %v1365 = vpop.f32.mrf.mxu0
        %1366 = vmatprep.mubr.f32.mxu0 0.0
        %1367 = vmatmul.mubr.f32.gmra.mxu0 %v683
        %v1368 = vpop.f32.mrf.mxu0
        %v1369 = vadd.f32 0.0, %v1368
        %v1370 = vpop.f32.mrf.mxu0
        %1371 = vmatprep.mubr.f32.mxu0 0.0
        %1372 = vmatmul.mubr.f32.gmra.mxu0 %v686
        %v1373 = vpop.f32.mrf.mxu0
        %v1374 = vadd.f32 0.0, %v1373
        %v1375 = vpop.f32.mrf.mxu0
        %1376 = vmatprep.mubr.f32.mxu0 0.0
        %1377 = vmatmul.mubr.f32.gmra.mxu0 %v689
        %v1378 = vpop.f32.mrf.mxu0
        %v1379 = vadd.f32 0.0, %v1378
        %v1380 = vpop.f32.mrf.mxu0
        %1381 = vmatprep.mubr.f32.mxu0 0.0
        %1382 = vmatmul.mubr.f32.gmra.mxu0 %v692
        %v1383 = vpop.f32.mrf.mxu0
        %v1384 = vadd.f32 0.0, %v1383
        %v1385 = vpop.f32.mrf.mxu0
        %1386 = vmatprep.mubr.f32.mxu0 0.0
        %1387 = vmatmul.mubr.f32.gmra.mxu0 %v695
        %v1388 = vpop.f32.mrf.mxu0
        %v1389 = vadd.f32 0.0, %v1388
        %v1390 = vpop.f32.mrf.mxu0
        %1391 = vmatprep.mubr.f32.mxu0 0.0
        %1392 = vmatmul.mubr.f32.gmra.mxu0 %v698
        %v1393 = vpop.f32.mrf.mxu0
        %v1394 = vadd.f32 0.0, %v1393
        %v1395 = vpop.f32.mrf.mxu0
        %1396 = vmatprep.mubr.f32.mxu0 0.0
        %1397 = vmatmul.mubr.f32.gmra.mxu0 %v701
        %v1398 = vpop.f32.mrf.mxu0
        %v1399 = vadd.f32 0.0, %v1398
        %v1400 = vpop.f32.mrf.mxu0
        %1401 = vmatprep.mubr.f32.mxu0 0.0
        %1402 = vmatmul.mubr.f32.gmra.mxu0 %v704
        %v1403 = vpop.f32.mrf.mxu0
        %v1404 = vadd.f32 0.0, %v1403
        %v1405 = vpop.f32.mrf.mxu0
        %1406 = vmatprep.mubr.f32.mxu0 0.0
        %1407 = vmatmul.mubr.f32.gmra.mxu0 %v707
        %v1408 = vpop.f32.mrf.mxu0
        %v1409 = vadd.f32 0.0, %v1408
        %v1410 = vpop.f32.mrf.mxu0
        %1411 = vmatprep.mubr.f32.mxu0 0.0
        %1412 = vmatmul.mubr.f32.gmra.mxu0 %v710
        %v1413 = vpop.f32.mrf.mxu0
        %v1414 = vadd.f32 0.0, %v1413
        %v1415 = vpop.f32.mrf.mxu0
        %1416 = vdwg.mxu0
        %v1417 = vld [vmem:[%s2] sm:$0xff]
        %v1418 = vld [vmem:[%s2 + $0x8] sm:$0xff]
        %v1419 = vld [vmem:[%s2 + $0x10] sm:$0xff]
        %v1420 = vld [vmem:[%s2 + $0x18] sm:$0xff]
        %v1422 = vsel %vm327, %v1417, 0
        %v1425 = vsel %vm327, %v1418, 0
        %v1428 = vsel %vm327, %v1419, 0
        %v1431 = vsel %vm327, %v1420, 0
        %1433 = vmatprep.subr.mxu0 0.0
        %1434 = vmatpush1.msra.mxu0 0.0
        %1435 = vmatprep.subr.mxu0 0.0
        %1436 = vmatpush1.msra.mxu0 0.0
        %1437 = vmatprep.subr.mxu0 0.0
        %1438 = vmatpush1.msra.mxu0 0.0
        %1439 = vmatprep.subr.mxu0 0.0
        %1440 = vmatpush1.msra.mxu0 0.0
        %1441 = vmatprep.subr.mxu0 0.0
        %1442 = vmatpush1.msra.mxu0 0.0
        %1443 = vmatprep.subr.mxu0 0.0
        %1444 = vmatpush1.msra.mxu0 0.0
        %1445 = vmatprep.subr.mxu0 0.0
        %1446 = vmatpush1.msra.mxu0 0.0
        %1447 = vmatprep.subr.mxu0 0.0
        %1448 = vmatpush1.msra.mxu0 0.0
        %1449 = vmatprep.subr.mxu0 0.0
        %1450 = vmatpush1.msra.mxu0 %v814
        %1451 = vmatprep.subr.mxu0 0.0
        %1452 = vmatpush1.msra.mxu0 %v809
        %1453 = vmatprep.subr.mxu0 0.0
        %1454 = vmatpush1.msra.mxu0 %v804
        %1455 = vmatprep.subr.mxu0 0.0
        %1456 = vmatpush1.msra.mxu0 %v799
        %1457 = vmatprep.subr.mxu0 0.0
        %1458 = vmatpush1.msra.mxu0 %v794
        %1459 = vmatprep.subr.mxu0 0.0
        %1460 = vmatpush1.msra.mxu0 %v789
        %1461 = vmatprep.subr.mxu0 0.0
        %1462 = vmatpush1.msra.mxu0 %v784
        %1463 = vmatprep.subr.mxu0 0.0
        %1464 = vmatpush1.msra.mxu0 %v779
        %1465 = vmatprep.subr.mxu0 0.0
        %1466 = vmatpush2.msra.mxu0 0.0
        %1467 = vmatprep.subr.mxu0 0.0
        %1468 = vmatpush2.msra.mxu0 0.0
        %1469 = vmatprep.subr.mxu0 0.0
        %1470 = vmatpush2.msra.mxu0 0.0
        %1471 = vmatprep.subr.mxu0 0.0
        %1472 = vmatpush2.msra.mxu0 0.0
        %1473 = vmatprep.subr.mxu0 0.0
        %1474 = vmatpush2.msra.mxu0 0.0
        %1475 = vmatprep.subr.mxu0 0.0
        %1476 = vmatpush2.msra.mxu0 0.0
        %1477 = vmatprep.subr.mxu0 0.0
        %1478 = vmatpush2.msra.mxu0 0.0
        %1479 = vmatprep.subr.mxu0 0.0
        %1480 = vmatpush2.msra.mxu0 0.0
        %1481 = vmatprep.subr.mxu0 0.0
        %1482 = vmatpush2.msra.mxu0 0.0
        %1483 = vmatprep.subr.mxu0 0.0
        %1484 = vmatpush2.msra.mxu0 0.0
        %1485 = vmatprep.subr.mxu0 0.0
        %1486 = vmatpush2.msra.mxu0 0.0
        %1487 = vmatprep.subr.mxu0 0.0
        %1488 = vmatpush2.msra.mxu0 0.0
        %1489 = vmatprep.subr.mxu0 0.0
        %1490 = vmatpush2.msra.mxu0 0.0
        %1491 = vmatprep.subr.mxu0 0.0
        %1492 = vmatpush2.msra.mxu0 0.0
        %1493 = vmatprep.subr.mxu0 0.0
        %1494 = vmatpush2.msra.mxu0 0.0
        %1495 = vmatprep.subr.mxu0 0.0
        %1496 = vmatpush2.msra.mxu0 0.0
        %1497 = vmatprep.mubr.f32.mxu0 0.0
        %1498 = vmatmul.mubr.f32.gmra.mxu0 %v1422
        %v1499 = vpop.f32.mrf.mxu0
        %v1500 = vadd.f32 0.0, %v1499
        %v1501 = vpop.f32.mrf.mxu0
        %1502 = vmatprep.mubr.f32.mxu0 0.0
        %1503 = vmatmul.mubr.f32.gmra.mxu0 %v1425
        %v1504 = vpop.f32.mrf.mxu0
        %v1505 = vadd.f32 0.0, %v1504
        %v1506 = vpop.f32.mrf.mxu0
        %1507 = vmatprep.mubr.f32.mxu0 0.0
        %1508 = vmatmul.mubr.f32.gmra.mxu0 %v1428
        %v1509 = vpop.f32.mrf.mxu0
        %v1510 = vadd.f32 0.0, %v1509
        %v1511 = vpop.f32.mrf.mxu0
        %1512 = vmatprep.mubr.f32.mxu0 0.0
        %1513 = vmatmul.mubr.f32.gmra.mxu0 %v1431
        %v1514 = vpop.f32.mrf.mxu0
        %v1515 = vadd.f32 0.0, %v1514
        %v1516 = vpop.f32.mrf.mxu0
        %1517 = vdwg.mxu0
        %vm1518 = vcmask 261120
        %1519 = vst.msk [vmem:[%s190] sm:$0xff] %vm1518, %v1500
        %1520 = vst.msk [vmem:[%s190 + $0x8] sm:$0xff] %vm1518, %v1505
        %1521 = vst.msk [vmem:[%s190 + $0x10] sm:$0xff] %vm1518, %v1510
        %1522 = vst.msk [vmem:[%s190 + $0x18] sm:$0xff] %vm1518, %v1515
        %v1523 = vld [vmem:[%s2] sm:$0xff]
        %v1524 = vld [vmem:[%s2 + $0x8] sm:$0xff]
        %v1525 = vld [vmem:[%s2 + $0x10] sm:$0xff]
        %v1526 = vld [vmem:[%s2 + $0x18] sm:$0xff]
        %v1528 = vsel %vm327, %v1523, 0
        %v1531 = vsel %vm327, %v1524, 0
        %v1534 = vsel %vm327, %v1525, 0
        %v1537 = vsel %vm327, %v1526, 0
        %1539 = vmatprep.subr.mxu0 0.0
        %1540 = vmatpush1.msra.mxu0 0.0
        %1541 = vmatprep.subr.mxu0 0.0
        %1542 = vmatpush1.msra.mxu0 0.0
        %1543 = vmatprep.subr.mxu0 0.0
        %1544 = vmatpush1.msra.mxu0 0.0
        %1545 = vmatprep.subr.mxu0 0.0
        %1546 = vmatpush1.msra.mxu0 0.0
        %1547 = vmatprep.subr.mxu0 0.0
        %1548 = vmatpush1.msra.mxu0 0.0
        %1549 = vmatprep.subr.mxu0 0.0
        %1550 = vmatpush1.msra.mxu0 0.0
        %1551 = vmatprep.subr.mxu0 0.0
        %1552 = vmatpush1.msra.mxu0 0.0
        %1553 = vmatprep.subr.mxu0 0.0
        %1554 = vmatpush1.msra.mxu0 0.0
        %1555 = vmatprep.subr.mxu0 0.0
        %1556 = vmatpush1.msra.mxu0 %v854
        %1557 = vmatprep.subr.mxu0 0.0
        %1558 = vmatpush1.msra.mxu0 %v849
        %1559 = vmatprep.subr.mxu0 0.0
        %1560 = vmatpush1.msra.mxu0 %v844
        %1561 = vmatprep.subr.mxu0 0.0
        %1562 = vmatpush1.msra.mxu0 %v839
        %1563 = vmatprep.subr.mxu0 0.0
        %1564 = vmatpush1.msra.mxu0 %v834
        %1565 = vmatprep.subr.mxu0 0.0
        %1566 = vmatpush1.msra.mxu0 %v829
        %1567 = vmatprep.subr.mxu0 0.0
        %1568 = vmatpush1.msra.mxu0 %v824
        %1569 = vmatprep.subr.mxu0 0.0
        %1570 = vmatpush1.msra.mxu0 %v819
        %1571 = vmatprep.subr.mxu0 0.0
        %1572 = vmatpush2.msra.mxu0 0.0
        %1573 = vmatprep.subr.mxu0 0.0
        %1574 = vmatpush2.msra.mxu0 0.0
        %1575 = vmatprep.subr.mxu0 0.0
        %1576 = vmatpush2.msra.mxu0 0.0
        %1577 = vmatprep.subr.mxu0 0.0
        %1578 = vmatpush2.msra.mxu0 0.0
        %1579 = vmatprep.subr.mxu0 0.0
        %1580 = vmatpush2.msra.mxu0 0.0
        %1581 = vmatprep.subr.mxu0 0.0
        %1582 = vmatpush2.msra.mxu0 0.0
        %1583 = vmatprep.subr.mxu0 0.0
        %1584 = vmatpush2.msra.mxu0 0.0
        %1585 = vmatprep.subr.mxu0 0.0
        %1586 = vmatpush2.msra.mxu0 0.0
        %1587 = vmatprep.subr.mxu0 0.0
        %1588 = vmatpush2.msra.mxu0 0.0
        %1589 = vmatprep.subr.mxu0 0.0
        %1590 = vmatpush2.msra.mxu0 0.0
        %1591 = vmatprep.subr.mxu0 0.0
        %1592 = vmatpush2.msra.mxu0 0.0
        %1593 = vmatprep.subr.mxu0 0.0
        %1594 = vmatpush2.msra.mxu0 0.0
        %1595 = vmatprep.subr.mxu0 0.0
        %1596 = vmatpush2.msra.mxu0 0.0
        %1597 = vmatprep.subr.mxu0 0.0
        %1598 = vmatpush2.msra.mxu0 0.0
        %1599 = vmatprep.subr.mxu0 0.0
        %1600 = vmatpush2.msra.mxu0 0.0
        %1601 = vmatprep.subr.mxu0 0.0
        %1602 = vmatpush2.msra.mxu0 0.0
        %1603 = vmatprep.mubr.f32.mxu0 0.0
        %1604 = vmatmul.mubr.f32.gmra.mxu0 %v1528
        %v1605 = vpop.f32.mrf.mxu0
        %v1606 = vadd.f32 0.0, %v1605
        %v1607 = vpop.f32.mrf.mxu0
        %1608 = vmatprep.mubr.f32.mxu0 0.0
        %1609 = vmatmul.mubr.f32.gmra.mxu0 %v1531
        %v1610 = vpop.f32.mrf.mxu0
        %v1611 = vadd.f32 0.0, %v1610
        %v1612 = vpop.f32.mrf.mxu0
        %1613 = vmatprep.mubr.f32.mxu0 0.0
        %1614 = vmatmul.mubr.f32.gmra.mxu0 %v1534
        %v1615 = vpop.f32.mrf.mxu0
        %v1616 = vadd.f32 0.0, %v1615
        %v1617 = vpop.f32.mrf.mxu0
        %1618 = vmatprep.mubr.f32.mxu0 0.0
        %1619 = vmatmul.mubr.f32.gmra.mxu0 %v1537
        %v1620 = vpop.f32.mrf.mxu0
        %v1621 = vadd.f32 0.0, %v1620
        %v1622 = vpop.f32.mrf.mxu0
        %1623 = vdwg.mxu0
        %s1624 = scalar_lea.vmem %s190, 32
        %1625 = vst.msk [vmem:[%s1624] sm:$0xff] %vm1518, %v1606
        %1626 = vst.msk [vmem:[%s1624 + $0x8] sm:$0xff] %vm1518, %v1611
        %1627 = vst.msk [vmem:[%s1624 + $0x10] sm:$0xff] %vm1518, %v1616
        %1628 = vst.msk [vmem:[%s1624 + $0x18] sm:$0xff] %vm1518, %v1621
        %v1629 = vld [vmem:[%s2] sm:$0xff]
        %v1630 = vld [vmem:[%s2 + $0x8] sm:$0xff]
        %v1631 = vld [vmem:[%s2 + $0x10] sm:$0xff]
        %v1632 = vld [vmem:[%s2 + $0x18] sm:$0xff]
        %v1634 = vsel %vm327, %v1629, 0
        %v1637 = vsel %vm327, %v1630, 0
        %v1640 = vsel %vm327, %v1631, 0
        %v1643 = vsel %vm327, %v1632, 0
        %1645 = vmatprep.subr.mxu0 0.0
        %1646 = vmatpush1.msra.mxu0 0.0
        %1647 = vmatprep.subr.mxu0 0.0
        %1648 = vmatpush1.msra.mxu0 0.0
        %1649 = vmatprep.subr.mxu0 0.0
        %1650 = vmatpush1.msra.mxu0 0.0
        %1651 = vmatprep.subr.mxu0 0.0
        %1652 = vmatpush1.msra.mxu0 0.0
        %1653 = vmatprep.subr.mxu0 0.0
        %1654 = vmatpush1.msra.mxu0 0.0
        %1655 = vmatprep.subr.mxu0 0.0
        %1656 = vmatpush1.msra.mxu0 0.0
        %1657 = vmatprep.subr.mxu0 0.0
        %1658 = vmatpush1.msra.mxu0 0.0
        %1659 = vmatprep.subr.mxu0 0.0
        %1660 = vmatpush1.msra.mxu0 0.0
        %1661 = vmatprep.subr.mxu0 0.0
        %1662 = vmatpush1.msra.mxu0 %v894
        %1663 = vmatprep.subr.mxu0 0.0
        %1664 = vmatpush1.msra.mxu0 %v889
        %1665 = vmatprep.subr.mxu0 0.0
        %1666 = vmatpush1.msra.mxu0 %v884
        %1667 = vmatprep.subr.mxu0 0.0
        %1668 = vmatpush1.msra.mxu0 %v879
        %1669 = vmatprep.subr.mxu0 0.0
        %1670 = vmatpush1.msra.mxu0 %v874
        %1671 = vmatprep.subr.mxu0 0.0
        %1672 = vmatpush1.msra.mxu0 %v869
        %1673 = vmatprep.subr.mxu0 0.0
        %1674 = vmatpush1.msra.mxu0 %v864
        %1675 = vmatprep.subr.mxu0 0.0
        %1676 = vmatpush1.msra.mxu0 %v859
        %1677 = vmatprep.subr.mxu0 0.0
        %1678 = vmatpush2.msra.mxu0 0.0
        %1679 = vmatprep.subr.mxu0 0.0
        %1680 = vmatpush2.msra.mxu0 0.0
        %1681 = vmatprep.subr.mxu0 0.0
        %1682 = vmatpush2.msra.mxu0 0.0
        %1683 = vmatprep.subr.mxu0 0.0
        %1684 = vmatpush2.msra.mxu0 0.0
        %1685 = vmatprep.subr.mxu0 0.0
        %1686 = vmatpush2.msra.mxu0 0.0
        %1687 = vmatprep.subr.mxu0 0.0
        %1688 = vmatpush2.msra.mxu0 0.0
        %1689 = vmatprep.subr.mxu0 0.0
        %1690 = vmatpush2.msra.mxu0 0.0
        %1691 = vmatprep.subr.mxu0 0.0
        %1692 = vmatpush2.msra.mxu0 0.0
        %1693 = vmatprep.subr.mxu0 0.0
        %1694 = vmatpush2.msra.mxu0 0.0
        %1695 = vmatprep.subr.mxu0 0.0
        %1696 = vmatpush2.msra.mxu0 0.0
        %1697 = vmatprep.subr.mxu0 0.0
        %1698 = vmatpush2.msra.mxu0 0.0
        %1699 = vmatprep.subr.mxu0 0.0
        %1700 = vmatpush2.msra.mxu0 0.0
        %1701 = vmatprep.subr.mxu0 0.0
        %1702 = vmatpush2.msra.mxu0 0.0
        %1703 = vmatprep.subr.mxu0 0.0
        %1704 = vmatpush2.msra.mxu0 0.0
        %1705 = vmatprep.subr.mxu0 0.0
        %1706 = vmatpush2.msra.mxu0 0.0
        %1707 = vmatprep.subr.mxu0 0.0
        %1708 = vmatpush2.msra.mxu0 0.0
        %1709 = vmatprep.mubr.f32.mxu0 0.0
        %1710 = vmatmul.mubr.f32.gmra.mxu0 %v1634
        %v1711 = vpop.f32.mrf.mxu0
        %v1712 = vadd.f32 0.0, %v1711
        %v1713 = vpop.f32.mrf.mxu0
        %1714 = vmatprep.mubr.f32.mxu0 0.0
        %1715 = vmatmul.mubr.f32.gmra.mxu0 %v1637
        %v1716 = vpop.f32.mrf.mxu0
        %v1717 = vadd.f32 0.0, %v1716
        %v1718 = vpop.f32.mrf.mxu0
        %1719 = vmatprep.mubr.f32.mxu0 0.0
        %1720 = vmatmul.mubr.f32.gmra.mxu0 %v1640
        %v1721 = vpop.f32.mrf.mxu0
        %v1722 = vadd.f32 0.0, %v1721
        %v1723 = vpop.f32.mrf.mxu0
        %1724 = vmatprep.mubr.f32.mxu0 0.0
        %1725 = vmatmul.mubr.f32.gmra.mxu0 %v1643
        %v1726 = vpop.f32.mrf.mxu0
        %v1727 = vadd.f32 0.0, %v1726
        %v1728 = vpop.f32.mrf.mxu0
        %1729 = vdwg.mxu0
        %s1730 = scalar_lea.vmem %s190, 64
        %1731 = vst.msk [vmem:[%s1730] sm:$0xff] %vm1518, %v1712
        %1732 = vst.msk [vmem:[%s1730 + $0x8] sm:$0xff] %vm1518, %v1717
        %1733 = vst.msk [vmem:[%s1730 + $0x10] sm:$0xff] %vm1518, %v1722
        %1734 = vst.msk [vmem:[%s1730 + $0x18] sm:$0xff] %vm1518, %v1727
        %v1735 = vld [vmem:[%s2] sm:$0xff]
        %v1736 = vld [vmem:[%s2 + $0x8] sm:$0xff]
        %v1737 = vld [vmem:[%s2 + $0x10] sm:$0xff]
        %v1738 = vld [vmem:[%s2 + $0x18] sm:$0xff]
        %v1740 = vsel %vm327, %v1735, 0
        %v1743 = vsel %vm327, %v1736, 0
        %v1746 = vsel %vm327, %v1737, 0
        %v1749 = vsel %vm327, %v1738, 0
        %1751 = vmatprep.subr.mxu0 0.0
        %1752 = vmatpush1.msra.mxu0 0.0
        %1753 = vmatprep.subr.mxu0 0.0
        %1754 = vmatpush1.msra.mxu0 0.0
        %1755 = vmatprep.subr.mxu0 0.0
        %1756 = vmatpush1.msra.mxu0 0.0
        %1757 = vmatprep.subr.mxu0 0.0
        %1758 = vmatpush1.msra.mxu0 0.0
        %1759 = vmatprep.subr.mxu0 0.0
        %1760 = vmatpush1.msra.mxu0 0.0
        %1761 = vmatprep.subr.mxu0 0.0
        %1762 = vmatpush1.msra.mxu0 0.0
        %1763 = vmatprep.subr.mxu0 0.0
        %1764 = vmatpush1.msra.mxu0 0.0
        %1765 = vmatprep.subr.mxu0 0.0
        %1766 = vmatpush1.msra.mxu0 0.0
        %1767 = vmatprep.subr.mxu0 0.0
        %1768 = vmatpush1.msra.mxu0 %v934
        %1769 = vmatprep.subr.mxu0 0.0
        %1770 = vmatpush1.msra.mxu0 %v929
        %1771 = vmatprep.subr.mxu0 0.0
        %1772 = vmatpush1.msra.mxu0 %v924
        %1773 = vmatprep.subr.mxu0 0.0
        %1774 = vmatpush1.msra.mxu0 %v919
        %1775 = vmatprep.subr.mxu0 0.0
        %1776 = vmatpush1.msra.mxu0 %v914
        %1777 = vmatprep.subr.mxu0 0.0
        %1778 = vmatpush1.msra.mxu0 %v909
        %1779 = vmatprep.subr.mxu0 0.0
        %1780 = vmatpush1.msra.mxu0 %v904
        %1781 = vmatprep.subr.mxu0 0.0
        %1782 = vmatpush1.msra.mxu0 %v899
        %1783 = vmatprep.subr.mxu0 0.0
        %1784 = vmatpush2.msra.mxu0 0.0
        %1785 = vmatprep.subr.mxu0 0.0
        %1786 = vmatpush2.msra.mxu0 0.0
        %1787 = vmatprep.subr.mxu0 0.0
        %1788 = vmatpush2.msra.mxu0 0.0
        %1789 = vmatprep.subr.mxu0 0.0
        %1790 = vmatpush2.msra.mxu0 0.0
        %1791 = vmatprep.subr.mxu0 0.0
        %1792 = vmatpush2.msra.mxu0 0.0
        %1793 = vmatprep.subr.mxu0 0.0
        %1794 = vmatpush2.msra.mxu0 0.0
        %1795 = vmatprep.subr.mxu0 0.0
        %1796 = vmatpush2.msra.mxu0 0.0
        %1797 = vmatprep.subr.mxu0 0.0
        %1798 = vmatpush2.msra.mxu0 0.0
        %1799 = vmatprep.subr.mxu0 0.0
        %1800 = vmatpush2.msra.mxu0 0.0
        %1801 = vmatprep.subr.mxu0 0.0
        %1802 = vmatpush2.msra.mxu0 0.0
        %1803 = vmatprep.subr.mxu0 0.0
        %1804 = vmatpush2.msra.mxu0 0.0
        %1805 = vmatprep.subr.mxu0 0.0
        %1806 = vmatpush2.msra.mxu0 0.0
        %1807 = vmatprep.subr.mxu0 0.0
        %1808 = vmatpush2.msra.mxu0 0.0
        %1809 = vmatprep.subr.mxu0 0.0
        %1810 = vmatpush2.msra.mxu0 0.0
        %1811 = vmatprep.subr.mxu0 0.0
        %1812 = vmatpush2.msra.mxu0 0.0
        %1813 = vmatprep.subr.mxu0 0.0
        %1814 = vmatpush2.msra.mxu0 0.0
        %1815 = vmatprep.mubr.f32.mxu0 0.0
        %1816 = vmatmul.mubr.f32.gmra.mxu0 %v1740
        %v1817 = vpop.f32.mrf.mxu0
        %v1818 = vadd.f32 0.0, %v1817
        %v1819 = vpop.f32.mrf.mxu0
        %1820 = vmatprep.mubr.f32.mxu0 0.0
        %1821 = vmatmul.mubr.f32.gmra.mxu0 %v1743
        %v1822 = vpop.f32.mrf.mxu0
        %v1823 = vadd.f32 0.0, %v1822
        %v1824 = vpop.f32.mrf.mxu0
        %1825 = vmatprep.mubr.f32.mxu0 0.0
        %1826 = vmatmul.mubr.f32.gmra.mxu0 %v1746
        %v1827 = vpop.f32.mrf.mxu0
        %v1828 = vadd.f32 0.0, %v1827
        %v1829 = vpop.f32.mrf.mxu0
        %1830 = vmatprep.mubr.f32.mxu0 0.0
        %1831 = vmatmul.mubr.f32.gmra.mxu0 %v1749
        %v1832 = vpop.f32.mrf.mxu0
        %v1833 = vadd.f32 0.0, %v1832
        %v1834 = vpop.f32.mrf.mxu0
        %1835 = vdwg.mxu0
        %s1836 = scalar_lea.vmem %s190, 96
        %1837 = vst.msk [vmem:[%s1836] sm:$0xff] %vm1518, %v1818
        %1838 = vst.msk [vmem:[%s1836 + $0x8] sm:$0xff] %vm1518, %v1823
        %1839 = vst.msk [vmem:[%s1836 + $0x10] sm:$0xff] %vm1518, %v1828
        %1840 = vst.msk [vmem:[%s1836 + $0x18] sm:$0xff] %vm1518, %v1833
        %v1841 = vld [vmem:[%s2] sm:$0xff]
        %v1842 = vld [vmem:[%s2 + $0x8] sm:$0xff]
        %v1843 = vld [vmem:[%s2 + $0x10] sm:$0xff]
        %v1844 = vld [vmem:[%s2 + $0x18] sm:$0xff]
        %v1846 = vsel %vm327, %v1841, 0
        %v1849 = vsel %vm327, %v1842, 0
        %v1852 = vsel %vm327, %v1843, 0
        %v1855 = vsel %vm327, %v1844, 0
        %1857 = vmatprep.subr.mxu0 0.0
        %1858 = vmatpush1.msra.mxu0 0.0
        %1859 = vmatprep.subr.mxu0 0.0
        %1860 = vmatpush1.msra.mxu0 0.0
        %1861 = vmatprep.subr.mxu0 0.0
        %1862 = vmatpush1.msra.mxu0 0.0
        %1863 = vmatprep.subr.mxu0 0.0
        %1864 = vmatpush1.msra.mxu0 0.0
        %1865 = vmatprep.subr.mxu0 0.0
        %1866 = vmatpush1.msra.mxu0 0.0
        %1867 = vmatprep.subr.mxu0 0.0
        %1868 = vmatpush1.msra.mxu0 0.0
        %1869 = vmatprep.subr.mxu0 0.0
        %1870 = vmatpush1.msra.mxu0 0.0
        %1871 = vmatprep.subr.mxu0 0.0
        %1872 = vmatpush1.msra.mxu0 0.0
        %1873 = vmatprep.subr.mxu0 0.0
        %1874 = vmatpush1.msra.mxu0 %v974
        %1875 = vmatprep.subr.mxu0 0.0
        %1876 = vmatpush1.msra.mxu0 %v969
        %1877 = vmatprep.subr.mxu0 0.0
        %1878 = vmatpush1.msra.mxu0 %v964
        %1879 = vmatprep.subr.mxu0 0.0
        %1880 = vmatpush1.msra.mxu0 %v959
        %1881 = vmatprep.subr.mxu0 0.0
        %1882 = vmatpush1.msra.mxu0 %v954
        %1883 = vmatprep.subr.mxu0 0.0
        %1884 = vmatpush1.msra.mxu0 %v949
        %1885 = vmatprep.subr.mxu0 0.0
        %1886 = vmatpush1.msra.mxu0 %v944
        %1887 = vmatprep.subr.mxu0 0.0
        %1888 = vmatpush1.msra.mxu0 %v939
        %1889 = vmatprep.subr.mxu0 0.0
        %1890 = vmatpush2.msra.mxu0 0.0
        %1891 = vmatprep.subr.mxu0 0.0
        %1892 = vmatpush2.msra.mxu0 0.0
        %1893 = vmatprep.subr.mxu0 0.0
        %1894 = vmatpush2.msra.mxu0 0.0
        %1895 = vmatprep.subr.mxu0 0.0
        %1896 = vmatpush2.msra.mxu0 0.0
        %1897 = vmatprep.subr.mxu0 0.0
        %1898 = vmatpush2.msra.mxu0 0.0
        %1899 = vmatprep.subr.mxu0 0.0
        %1900 = vmatpush2.msra.mxu0 0.0
        %1901 = vmatprep.subr.mxu0 0.0
        %1902 = vmatpush2.msra.mxu0 0.0
        %1903 = vmatprep.subr.mxu0 0.0
        %1904 = vmatpush2.msra.mxu0 0.0
        %1905 = vmatprep.subr.mxu0 0.0
        %1906 = vmatpush2.msra.mxu0 0.0
        %1907 = vmatprep.subr.mxu0 0.0
        %1908 = vmatpush2.msra.mxu0 0.0
        %1909 = vmatprep.subr.mxu0 0.0
        %1910 = vmatpush2.msra.mxu0 0.0
        %1911 = vmatprep.subr.mxu0 0.0
        %1912 = vmatpush2.msra.mxu0 0.0
        %1913 = vmatprep.subr.mxu0 0.0
        %1914 = vmatpush2.msra.mxu0 0.0
        %1915 = vmatprep.subr.mxu0 0.0
        %1916 = vmatpush2.msra.mxu0 0.0
        %1917 = vmatprep.subr.mxu0 0.0
        %1918 = vmatpush2.msra.mxu0 0.0
        %1919 = vmatprep.subr.mxu0 0.0
        %1920 = vmatpush2.msra.mxu0 0.0
        %1921 = vmatprep.mubr.f32.mxu0 0.0
        %1922 = vmatmul.mubr.f32.gmra.mxu0 %v1846
        %v1923 = vpop.f32.mrf.mxu0
        %v1924 = vadd.f32 0.0, %v1923
        %v1925 = vpop.f32.mrf.mxu0
        %1926 = vmatprep.mubr.f32.mxu0 0.0
        %1927 = vmatmul.mubr.f32.gmra.mxu0 %v1849
        %v1928 = vpop.f32.mrf.mxu0
        %v1929 = vadd.f32 0.0, %v1928
        %v1930 = vpop.f32.mrf.mxu0
        %1931 = vmatprep.mubr.f32.mxu0 0.0
        %1932 = vmatmul.mubr.f32.gmra.mxu0 %v1852
        %v1933 = vpop.f32.mrf.mxu0
        %v1934 = vadd.f32 0.0, %v1933
        %v1935 = vpop.f32.mrf.mxu0
        %1936 = vmatprep.mubr.f32.mxu0 0.0
        %1937 = vmatmul.mubr.f32.gmra.mxu0 %v1855
        %v1938 = vpop.f32.mrf.mxu0
        %v1939 = vadd.f32 0.0, %v1938
        %v1940 = vpop.f32.mrf.mxu0
        %1941 = vdwg.mxu0
        %s1942 = scalar_lea.vmem %s190, 128
        %1943 = vst.msk [vmem:[%s1942] sm:$0xff] %vm1518, %v1924
        %1944 = vst.msk [vmem:[%s1942 + $0x8] sm:$0xff] %vm1518, %v1929
        %1945 = vst.msk [vmem:[%s1942 + $0x10] sm:$0xff] %vm1518, %v1934
        %1946 = vst.msk [vmem:[%s1942 + $0x18] sm:$0xff] %vm1518, %v1939
        %v1947 = vld [vmem:[%s2] sm:$0xff]
        %v1948 = vld [vmem:[%s2 + $0x8] sm:$0xff]
        %v1949 = vld [vmem:[%s2 + $0x10] sm:$0xff]
        %v1950 = vld [vmem:[%s2 + $0x18] sm:$0xff]
        %v1952 = vsel %vm327, %v1947, 0
        %v1955 = vsel %vm327, %v1948, 0
        %v1958 = vsel %vm327, %v1949, 0
        %v1961 = vsel %vm327, %v1950, 0
        %1963 = vmatprep.subr.mxu0 0.0
        %1964 = vmatpush1.msra.mxu0 0.0
        %1965 = vmatprep.subr.mxu0 0.0
        %1966 = vmatpush1.msra.mxu0 0.0
        %1967 = vmatprep.subr.mxu0 0.0
        %1968 = vmatpush1.msra.mxu0 0.0
        %1969 = vmatprep.subr.mxu0 0.0
        %1970 = vmatpush1.msra.mxu0 0.0
        %1971 = vmatprep.subr.mxu0 0.0
        %1972 = vmatpush1.msra.mxu0 0.0
        %1973 = vmatprep.subr.mxu0 0.0
        %1974 = vmatpush1.msra.mxu0 0.0
        %1975 = vmatprep.subr.mxu0 0.0
        %1976 = vmatpush1.msra.mxu0 0.0
        %1977 = vmatprep.subr.mxu0 0.0
        %1978 = vmatpush1.msra.mxu0 0.0
        %1979 = vmatprep.subr.mxu0 0.0
        %1980 = vmatpush1.msra.mxu0 %v1014
        %1981 = vmatprep.subr.mxu0 0.0
        %1982 = vmatpush1.msra.mxu0 %v1009
        %1983 = vmatprep.subr.mxu0 0.0
        %1984 = vmatpush1.msra.mxu0 %v1004
        %1985 = vmatprep.subr.mxu0 0.0
        %1986 = vmatpush1.msra.mxu0 %v999
        %1987 = vmatprep.subr.mxu0 0.0
        %1988 = vmatpush1.msra.mxu0 %v994
        %1989 = vmatprep.subr.mxu0 0.0
        %1990 = vmatpush1.msra.mxu0 %v989
        %1991 = vmatprep.subr.mxu0 0.0
        %1992 = vmatpush1.msra.mxu0 %v984
        %1993 = vmatprep.subr.mxu0 0.0
        %1994 = vmatpush1.msra.mxu0 %v979
        %1995 = vmatprep.subr.mxu0 0.0
        %1996 = vmatpush2.msra.mxu0 0.0
        %1997 = vmatprep.subr.mxu0 0.0
        %1998 = vmatpush2.msra.mxu0 0.0
        %1999 = vmatprep.subr.mxu0 0.0
        %2000 = vmatpush2.msra.mxu0 0.0
        %2001 = vmatprep.subr.mxu0 0.0
        %2002 = vmatpush2.msra.mxu0 0.0
        %2003 = vmatprep.subr.mxu0 0.0
        %2004 = vmatpush2.msra.mxu0 0.0
        %2005 = vmatprep.subr.mxu0 0.0
        %2006 = vmatpush2.msra.mxu0 0.0
        %2007 = vmatprep.subr.mxu0 0.0
        %2008 = vmatpush2.msra.mxu0 0.0
        %2009 = vmatprep.subr.mxu0 0.0
        %2010 = vmatpush2.msra.mxu0 0.0
        %2011 = vmatprep.subr.mxu0 0.0
        %2012 = vmatpush2.msra.mxu0 0.0
        %2013 = vmatprep.subr.mxu0 0.0
        %2014 = vmatpush2.msra.mxu0 0.0
        %2015 = vmatprep.subr.mxu0 0.0
        %2016 = vmatpush2.msra.mxu0 0.0
        %2017 = vmatprep.subr.mxu0 0.0
        %2018 = vmatpush2.msra.mxu0 0.0
        %2019 = vmatprep.subr.mxu0 0.0
        %2020 = vmatpush2.msra.mxu0 0.0
        %2021 = vmatprep.subr.mxu0 0.0
        %2022 = vmatpush2.msra.mxu0 0.0
        %2023 = vmatprep.subr.mxu0 0.0
        %2024 = vmatpush2.msra.mxu0 0.0
        %2025 = vmatprep.subr.mxu0 0.0
        %2026 = vmatpush2.msra.mxu0 0.0
        %2027 = vmatprep.mubr.f32.mxu0 0.0
        %2028 = vmatmul.mubr.f32.gmra.mxu0 %v1952
        %v2029 = vpop.f32.mrf.mxu0
        %v2030 = vadd.f32 0.0, %v2029
        %v2031 = vpop.f32.mrf.mxu0
        %2032 = vmatprep.mubr.f32.mxu0 0.0
        %2033 = vmatmul.mubr.f32.gmra.mxu0 %v1955
        %v2034 = vpop.f32.mrf.mxu0
        %v2035 = vadd.f32 0.0, %v2034
        %v2036 = vpop.f32.mrf.mxu0
        %2037 = vmatprep.mubr.f32.mxu0 0.0
        %2038 = vmatmul.mubr.f32.gmra.mxu0 %v1958
        %v2039 = vpop.f32.mrf.mxu0
        %v2040 = vadd.f32 0.0, %v2039
        %v2041 = vpop.f32.mrf.mxu0
        %2042 = vmatprep.mubr.f32.mxu0 0.0
        %2043 = vmatmul.mubr.f32.gmra.mxu0 %v1961
        %v2044 = vpop.f32.mrf.mxu0
        %v2045 = vadd.f32 0.0, %v2044
        %v2046 = vpop.f32.mrf.mxu0
        %2047 = vdwg.mxu0
        %s2048 = scalar_lea.vmem %s190, 160
        %2049 = vst.msk [vmem:[%s2048] sm:$0xff] %vm1518, %v2030
        %2050 = vst.msk [vmem:[%s2048 + $0x8] sm:$0xff] %vm1518, %v2035
        %2051 = vst.msk [vmem:[%s2048 + $0x10] sm:$0xff] %vm1518, %v2040
        %2052 = vst.msk [vmem:[%s2048 + $0x18] sm:$0xff] %vm1518, %v2045
        %v2053 = vld [vmem:[%s2] sm:$0xff]
        %v2054 = vld [vmem:[%s2 + $0x8] sm:$0xff]
        %v2055 = vld [vmem:[%s2 + $0x10] sm:$0xff]
        %v2056 = vld [vmem:[%s2 + $0x18] sm:$0xff]
        %v2058 = vsel %vm327, %v2053, 0
        %v2061 = vsel %vm327, %v2054, 0
        %v2064 = vsel %vm327, %v2055, 0
        %v2067 = vsel %vm327, %v2056, 0
        %2069 = vmatprep.subr.mxu0 0.0
        %2070 = vmatpush1.msra.mxu0 0.0
        %2071 = vmatprep.subr.mxu0 0.0
        %2072 = vmatpush1.msra.mxu0 0.0
        %2073 = vmatprep.subr.mxu0 0.0
        %2074 = vmatpush1.msra.mxu0 0.0
        %2075 = vmatprep.subr.mxu0 0.0
        %2076 = vmatpush1.msra.mxu0 0.0
        %2077 = vmatprep.subr.mxu0 0.0
        %2078 = vmatpush1.msra.mxu0 0.0
        %2079 = vmatprep.subr.mxu0 0.0
        %2080 = vmatpush1.msra.mxu0 0.0
        %2081 = vmatprep.subr.mxu0 0.0
        %2082 = vmatpush1.msra.mxu0 0.0
        %2083 = vmatprep.subr.mxu0 0.0
        %2084 = vmatpush1.msra.mxu0 0.0
        %2085 = vmatprep.subr.mxu0 0.0
        %2086 = vmatpush1.msra.mxu0 %v1054
        %2087 = vmatprep.subr.mxu0 0.0
        %2088 = vmatpush1.msra.mxu0 %v1049
        %2089 = vmatprep.subr.mxu0 0.0
        %2090 = vmatpush1.msra.mxu0 %v1044
        %2091 = vmatprep.subr.mxu0 0.0
        %2092 = vmatpush1.msra.mxu0 %v1039
        %2093 = vmatprep.subr.mxu0 0.0
        %2094 = vmatpush1.msra.mxu0 %v1034
        %2095 = vmatprep.subr.mxu0 0.0
        %2096 = vmatpush1.msra.mxu0 %v1029
        %2097 = vmatprep.subr.mxu0 0.0
        %2098 = vmatpush1.msra.mxu0 %v1024
        %2099 = vmatprep.subr.mxu0 0.0
        %2100 = vmatpush1.msra.mxu0 %v1019
        %2101 = vmatprep.subr.mxu0 0.0
        %2102 = vmatpush2.msra.mxu0 0.0
        %2103 = vmatprep.subr.mxu0 0.0
        %2104 = vmatpush2.msra.mxu0 0.0
        %2105 = vmatprep.subr.mxu0 0.0
        %2106 = vmatpush2.msra.mxu0 0.0
        %2107 = vmatprep.subr.mxu0 0.0
        %2108 = vmatpush2.msra.mxu0 0.0
        %2109 = vmatprep.subr.mxu0 0.0
        %2110 = vmatpush2.msra.mxu0 0.0
        %2111 = vmatprep.subr.mxu0 0.0
        %2112 = vmatpush2.msra.mxu0 0.0
        %2113 = vmatprep.subr.mxu0 0.0
        %2114 = vmatpush2.msra.mxu0 0.0
        %2115 = vmatprep.subr.mxu0 0.0
        %2116 = vmatpush2.msra.mxu0 0.0
        %2117 = vmatprep.subr.mxu0 0.0
        %2118 = vmatpush2.msra.mxu0 0.0
        %2119 = vmatprep.subr.mxu0 0.0
        %2120 = vmatpush2.msra.mxu0 0.0
        %2121 = vmatprep.subr.mxu0 0.0
        %2122 = vmatpush2.msra.mxu0 0.0
        %2123 = vmatprep.subr.mxu0 0.0
        %2124 = vmatpush2.msra.mxu0 0.0
        %2125 = vmatprep.subr.mxu0 0.0
        %2126 = vmatpush2.msra.mxu0 0.0
        %2127 = vmatprep.subr.mxu0 0.0
        %2128 = vmatpush2.msra.mxu0 0.0
        %2129 = vmatprep.subr.mxu0 0.0
        %2130 = vmatpush2.msra.mxu0 0.0
        %2131 = vmatprep.subr.mxu0 0.0
        %2132 = vmatpush2.msra.mxu0 0.0
        %2133 = vmatprep.mubr.f32.mxu0 0.0
        %2134 = vmatmul.mubr.f32.gmra.mxu0 %v2058
        %v2135 = vpop.f32.mrf.mxu0
        %v2136 = vadd.f32 0.0, %v2135
        %v2137 = vpop.f32.mrf.mxu0
        %2138 = vmatprep.mubr.f32.mxu0 0.0
        %2139 = vmatmul.mubr.f32.gmra.mxu0 %v2061
        %v2140 = vpop.f32.mrf.mxu0
        %v2141 = vadd.f32 0.0, %v2140
        %v2142 = vpop.f32.mrf.mxu0
        %2143 = vmatprep.mubr.f32.mxu0 0.0
        %2144 = vmatmul.mubr.f32.gmra.mxu0 %v2064
        %v2145 = vpop.f32.mrf.mxu0
        %v2146 = vadd.f32 0.0, %v2145
        %v2147 = vpop.f32.mrf.mxu0
        %2148 = vmatprep.mubr.f32.mxu0 0.0
        %2149 = vmatmul.mubr.f32.gmra.mxu0 %v2067
        %v2150 = vpop.f32.mrf.mxu0
        %v2151 = vadd.f32 0.0, %v2150
        %v2152 = vpop.f32.mrf.mxu0
        %2153 = vdwg.mxu0
        %s2154 = scalar_lea.vmem %s190, 192
        %2155 = vst.msk [vmem:[%s2154] sm:$0xff] %vm1518, %v2136
        %2156 = vst.msk [vmem:[%s2154 + $0x8] sm:$0xff] %vm1518, %v2141
        %2157 = vst.msk [vmem:[%s2154 + $0x10] sm:$0xff] %vm1518, %v2146
        %2158 = vst.msk [vmem:[%s2154 + $0x18] sm:$0xff] %vm1518, %v2151
        %v2159 = vld [vmem:[%s2] sm:$0xff]
        %v2160 = vld [vmem:[%s2 + $0x8] sm:$0xff]
        %v2161 = vld [vmem:[%s2 + $0x10] sm:$0xff]
        %v2162 = vld [vmem:[%s2 + $0x18] sm:$0xff]
        %v2164 = vsel %vm327, %v2159, 0
        %v2167 = vsel %vm327, %v2160, 0
        %v2170 = vsel %vm327, %v2161, 0
        %v2173 = vsel %vm327, %v2162, 0
        %2175 = vmatprep.subr.mxu0 0.0
        %2176 = vmatpush1.msra.mxu0 0.0
        %2177 = vmatprep.subr.mxu0 0.0
        %2178 = vmatpush1.msra.mxu0 0.0
        %2179 = vmatprep.subr.mxu0 0.0
        %2180 = vmatpush1.msra.mxu0 0.0
        %2181 = vmatprep.subr.mxu0 0.0
        %2182 = vmatpush1.msra.mxu0 0.0
        %2183 = vmatprep.subr.mxu0 0.0
        %2184 = vmatpush1.msra.mxu0 0.0
        %2185 = vmatprep.subr.mxu0 0.0
        %2186 = vmatpush1.msra.mxu0 0.0
        %2187 = vmatprep.subr.mxu0 0.0
        %2188 = vmatpush1.msra.mxu0 0.0
        %2189 = vmatprep.subr.mxu0 0.0
        %2190 = vmatpush1.msra.mxu0 0.0
        %2191 = vmatprep.subr.mxu0 0.0
        %2192 = vmatpush1.msra.mxu0 %v1094
        %2193 = vmatprep.subr.mxu0 0.0
        %2194 = vmatpush1.msra.mxu0 %v1089
        %2195 = vmatprep.subr.mxu0 0.0
        %2196 = vmatpush1.msra.mxu0 %v1084
        %2197 = vmatprep.subr.mxu0 0.0
        %2198 = vmatpush1.msra.mxu0 %v1079
        %2199 = vmatprep.subr.mxu0 0.0
        %2200 = vmatpush1.msra.mxu0 %v1074
        %2201 = vmatprep.subr.mxu0 0.0
        %2202 = vmatpush1.msra.mxu0 %v1069
        %2203 = vmatprep.subr.mxu0 0.0
        %2204 = vmatpush1.msra.mxu0 %v1064
        %2205 = vmatprep.subr.mxu0 0.0
        %2206 = vmatpush1.msra.mxu0 %v1059
        %2207 = vmatprep.subr.mxu0 0.0
        %2208 = vmatpush2.msra.mxu0 0.0
        %2209 = vmatprep.subr.mxu0 0.0
        %2210 = vmatpush2.msra.mxu0 0.0
        %2211 = vmatprep.subr.mxu0 0.0
        %2212 = vmatpush2.msra.mxu0 0.0
        %2213 = vmatprep.subr.mxu0 0.0
        %2214 = vmatpush2.msra.mxu0 0.0
        %2215 = vmatprep.subr.mxu0 0.0
        %2216 = vmatpush2.msra.mxu0 0.0
        %2217 = vmatprep.subr.mxu0 0.0
        %2218 = vmatpush2.msra.mxu0 0.0
        %2219 = vmatprep.subr.mxu0 0.0
        %2220 = vmatpush2.msra.mxu0 0.0
        %2221 = vmatprep.subr.mxu0 0.0
        %2222 = vmatpush2.msra.mxu0 0.0
        %2223 = vmatprep.subr.mxu0 0.0
        %2224 = vmatpush2.msra.mxu0 0.0
        %2225 = vmatprep.subr.mxu0 0.0
        %2226 = vmatpush2.msra.mxu0 0.0
        %2227 = vmatprep.subr.mxu0 0.0
        %2228 = vmatpush2.msra.mxu0 0.0
        %2229 = vmatprep.subr.mxu0 0.0
        %2230 = vmatpush2.msra.mxu0 0.0
        %2231 = vmatprep.subr.mxu0 0.0
        %2232 = vmatpush2.msra.mxu0 0.0
        %2233 = vmatprep.subr.mxu0 0.0
        %2234 = vmatpush2.msra.mxu0 0.0
        %2235 = vmatprep.subr.mxu0 0.0
        %2236 = vmatpush2.msra.mxu0 0.0
        %2237 = vmatprep.subr.mxu0 0.0
        %2238 = vmatpush2.msra.mxu0 0.0
        %2239 = vmatprep.mubr.f32.mxu0 0.0
        %2240 = vmatmul.mubr.f32.gmra.mxu0 %v2164
        %v2241 = vpop.f32.mrf.mxu0
        %v2242 = vadd.f32 0.0, %v2241
        %v2243 = vpop.f32.mrf.mxu0
        %2244 = vmatprep.mubr.f32.mxu0 0.0
        %2245 = vmatmul.mubr.f32.gmra.mxu0 %v2167
        %v2246 = vpop.f32.mrf.mxu0
        %v2247 = vadd.f32 0.0, %v2246
        %v2248 = vpop.f32.mrf.mxu0
        %2249 = vmatprep.mubr.f32.mxu0 0.0
        %2250 = vmatmul.mubr.f32.gmra.mxu0 %v2170
        %v2251 = vpop.f32.mrf.mxu0
        %v2252 = vadd.f32 0.0, %v2251
        %v2253 = vpop.f32.mrf.mxu0
        %2254 = vmatprep.mubr.f32.mxu0 0.0
        %2255 = vmatmul.mubr.f32.gmra.mxu0 %v2173
        %v2256 = vpop.f32.mrf.mxu0
        %v2257 = vadd.f32 0.0, %v2256
        %v2258 = vpop.f32.mrf.mxu0
        %2259 = vdwg.mxu0
        %s2260 = scalar_lea.vmem %s190, 224
        %2261 = vst.msk [vmem:[%s2260] sm:$0xff] %vm1518, %v2242
        %2262 = vst.msk [vmem:[%s2260 + $0x8] sm:$0xff] %vm1518, %v2247
        %2263 = vst.msk [vmem:[%s2260 + $0x10] sm:$0xff] %vm1518, %v2252
        %2264 = vst.msk [vmem:[%s2260 + $0x18] sm:$0xff] %vm1518, %v2257
        %v2265 = vld [vmem:[%s2] sm:$0xff]
        %v2266 = vld [vmem:[%s2 + $0x8] sm:$0xff]
        %v2267 = vld [vmem:[%s2 + $0x10] sm:$0xff]
        %v2268 = vld [vmem:[%s2 + $0x18] sm:$0xff]
        %v2270 = vsel %vm327, %v2265, 0
        %v2273 = vsel %vm327, %v2266, 0
        %v2276 = vsel %vm327, %v2267, 0
        %v2279 = vsel %vm327, %v2268, 0
        %2281 = vmatprep.subr.mxu0 0.0
        %2282 = vmatpush1.msra.mxu0 0.0
        %2283 = vmatprep.subr.mxu0 0.0
        %2284 = vmatpush1.msra.mxu0 0.0
        %2285 = vmatprep.subr.mxu0 0.0
        %2286 = vmatpush1.msra.mxu0 0.0
        %2287 = vmatprep.subr.mxu0 0.0
        %2288 = vmatpush1.msra.mxu0 0.0
        %2289 = vmatprep.subr.mxu0 0.0
        %2290 = vmatpush1.msra.mxu0 0.0
        %2291 = vmatprep.subr.mxu0 0.0
        %2292 = vmatpush1.msra.mxu0 0.0
        %2293 = vmatprep.subr.mxu0 0.0
        %2294 = vmatpush1.msra.mxu0 0.0
        %2295 = vmatprep.subr.mxu0 0.0
        %2296 = vmatpush1.msra.mxu0 0.0
        %2297 = vmatprep.subr.mxu0 0.0
        %2298 = vmatpush1.msra.mxu0 %v1134
        %2299 = vmatprep.subr.mxu0 0.0
        %2300 = vmatpush1.msra.mxu0 %v1129
        %2301 = vmatprep.subr.mxu0 0.0
        %2302 = vmatpush1.msra.mxu0 %v1124
        %2303 = vmatprep.subr.mxu0 0.0
        %2304 = vmatpush1.msra.mxu0 %v1119
        %2305 = vmatprep.subr.mxu0 0.0
        %2306 = vmatpush1.msra.mxu0 %v1114
        %2307 = vmatprep.subr.mxu0 0.0
        %2308 = vmatpush1.msra.mxu0 %v1109
        %2309 = vmatprep.subr.mxu0 0.0
        %2310 = vmatpush1.msra.mxu0 %v1104
        %2311 = vmatprep.subr.mxu0 0.0
        %2312 = vmatpush1.msra.mxu0 %v1099
        %2313 = vmatprep.subr.mxu0 0.0
        %2314 = vmatpush2.msra.mxu0 0.0
        %2315 = vmatprep.subr.mxu0 0.0
        %2316 = vmatpush2.msra.mxu0 0.0
        %2317 = vmatprep.subr.mxu0 0.0
        %2318 = vmatpush2.msra.mxu0 0.0
        %2319 = vmatprep.subr.mxu0 0.0
        %2320 = vmatpush2.msra.mxu0 0.0
        %2321 = vmatprep.subr.mxu0 0.0
        %2322 = vmatpush2.msra.mxu0 0.0
        %2323 = vmatprep.subr.mxu0 0.0
        %2324 = vmatpush2.msra.mxu0 0.0
        %2325 = vmatprep.subr.mxu0 0.0
        %2326 = vmatpush2.msra.mxu0 0.0
        %2327 = vmatprep.subr.mxu0 0.0
        %2328 = vmatpush2.msra.mxu0 0.0
        %2329 = vmatprep.subr.mxu0 0.0
        %2330 = vmatpush2.msra.mxu0 0.0
        %2331 = vmatprep.subr.mxu0 0.0
        %2332 = vmatpush2.msra.mxu0 0.0
        %2333 = vmatprep.subr.mxu0 0.0
        %2334 = vmatpush2.msra.mxu0 0.0
        %2335 = vmatprep.subr.mxu0 0.0
        %2336 = vmatpush2.msra.mxu0 0.0
        %2337 = vmatprep.subr.mxu0 0.0
        %2338 = vmatpush2.msra.mxu0 0.0
        %2339 = vmatprep.subr.mxu0 0.0
        %2340 = vmatpush2.msra.mxu0 0.0
        %2341 = vmatprep.subr.mxu0 0.0
        %2342 = vmatpush2.msra.mxu0 0.0
        %2343 = vmatprep.subr.mxu0 0.0
        %2344 = vmatpush2.msra.mxu0 0.0
        %2345 = vmatprep.mubr.f32.mxu0 0.0
        %2346 = vmatmul.mubr.f32.gmra.mxu0 %v2270
        %v2347 = vpop.f32.mrf.mxu0
        %v2348 = vadd.f32 0.0, %v2347
        %v2349 = vpop.f32.mrf.mxu0
        %2350 = vmatprep.mubr.f32.mxu0 0.0
        %2351 = vmatmul.mubr.f32.gmra.mxu0 %v2273
        %v2352 = vpop.f32.mrf.mxu0
        %v2353 = vadd.f32 0.0, %v2352
        %v2354 = vpop.f32.mrf.mxu0
        %2355 = vmatprep.mubr.f32.mxu0 0.0
        %2356 = vmatmul.mubr.f32.gmra.mxu0 %v2276
        %v2357 = vpop.f32.mrf.mxu0
        %v2358 = vadd.f32 0.0, %v2357
        %v2359 = vpop.f32.mrf.mxu0
        %2360 = vmatprep.mubr.f32.mxu0 0.0
        %2361 = vmatmul.mubr.f32.gmra.mxu0 %v2279
        %v2362 = vpop.f32.mrf.mxu0
        %v2363 = vadd.f32 0.0, %v2362
        %v2364 = vpop.f32.mrf.mxu0
        %2365 = vdwg.mxu0
        %s2366 = scalar_lea.vmem %s190, 256
        %2367 = vst.msk [vmem:[%s2366] sm:$0xff] %vm1518, %v2348
        %2368 = vst.msk [vmem:[%s2366 + $0x8] sm:$0xff] %vm1518, %v2353
        %2369 = vst.msk [vmem:[%s2366 + $0x10] sm:$0xff] %vm1518, %v2358
        %2370 = vst.msk [vmem:[%s2366 + $0x18] sm:$0xff] %vm1518, %v2363
        %v2371 = vld [vmem:[%s2] sm:$0xff]
        %v2372 = vld [vmem:[%s2 + $0x8] sm:$0xff]
        %v2373 = vld [vmem:[%s2 + $0x10] sm:$0xff]
        %v2374 = vld [vmem:[%s2 + $0x18] sm:$0xff]
        %v2376 = vsel %vm327, %v2371, 0
        %v2379 = vsel %vm327, %v2372, 0
        %v2382 = vsel %vm327, %v2373, 0
        %v2385 = vsel %vm327, %v2374, 0
        %2387 = vmatprep.subr.mxu0 0.0
        %2388 = vmatpush1.msra.mxu0 0.0
        %2389 = vmatprep.subr.mxu0 0.0
        %2390 = vmatpush1.msra.mxu0 0.0
        %2391 = vmatprep.subr.mxu0 0.0
        %2392 = vmatpush1.msra.mxu0 0.0
        %2393 = vmatprep.subr.mxu0 0.0
        %2394 = vmatpush1.msra.mxu0 0.0
        %2395 = vmatprep.subr.mxu0 0.0
        %2396 = vmatpush1.msra.mxu0 0.0
        %2397 = vmatprep.subr.mxu0 0.0
        %2398 = vmatpush1.msra.mxu0 0.0
        %2399 = vmatprep.subr.mxu0 0.0
        %2400 = vmatpush1.msra.mxu0 0.0
        %2401 = vmatprep.subr.mxu0 0.0
        %2402 = vmatpush1.msra.mxu0 0.0
        %2403 = vmatprep.subr.mxu0 0.0
        %2404 = vmatpush1.msra.mxu0 %v1174
        %2405 = vmatprep.subr.mxu0 0.0
        %2406 = vmatpush1.msra.mxu0 %v1169
        %2407 = vmatprep.subr.mxu0 0.0
        %2408 = vmatpush1.msra.mxu0 %v1164
        %2409 = vmatprep.subr.mxu0 0.0
        %2410 = vmatpush1.msra.mxu0 %v1159
        %2411 = vmatprep.subr.mxu0 0.0
        %2412 = vmatpush1.msra.mxu0 %v1154
        %2413 = vmatprep.subr.mxu0 0.0
        %2414 = vmatpush1.msra.mxu0 %v1149
        %2415 = vmatprep.subr.mxu0 0.0
        %2416 = vmatpush1.msra.mxu0 %v1144
        %2417 = vmatprep.subr.mxu0 0.0
        %2418 = vmatpush1.msra.mxu0 %v1139
        %2419 = vmatprep.subr.mxu0 0.0
        %2420 = vmatpush2.msra.mxu0 0.0
        %2421 = vmatprep.subr.mxu0 0.0
        %2422 = vmatpush2.msra.mxu0 0.0
        %2423 = vmatprep.subr.mxu0 0.0
        %2424 = vmatpush2.msra.mxu0 0.0
        %2425 = vmatprep.subr.mxu0 0.0
        %2426 = vmatpush2.msra.mxu0 0.0
        %2427 = vmatprep.subr.mxu0 0.0
        %2428 = vmatpush2.msra.mxu0 0.0
        %2429 = vmatprep.subr.mxu0 0.0
        %2430 = vmatpush2.msra.mxu0 0.0
        %2431 = vmatprep.subr.mxu0 0.0
        %2432 = vmatpush2.msra.mxu0 0.0
        %2433 = vmatprep.subr.mxu0 0.0
        %2434 = vmatpush2.msra.mxu0 0.0
        %2435 = vmatprep.subr.mxu0 0.0
        %2436 = vmatpush2.msra.mxu0 0.0
        %2437 = vmatprep.subr.mxu0 0.0
        %2438 = vmatpush2.msra.mxu0 0.0
        %2439 = vmatprep.subr.mxu0 0.0
        %2440 = vmatpush2.msra.mxu0 0.0
        %2441 = vmatprep.subr.mxu0 0.0
        %2442 = vmatpush2.msra.mxu0 0.0
        %2443 = vmatprep.subr.mxu0 0.0
        %2444 = vmatpush2.msra.mxu0 0.0
        %2445 = vmatprep.subr.mxu0 0.0
        %2446 = vmatpush2.msra.mxu0 0.0
        %2447 = vmatprep.subr.mxu0 0.0
        %2448 = vmatpush2.msra.mxu0 0.0
        %2449 = vmatprep.subr.mxu0 0.0
        %2450 = vmatpush2.msra.mxu0 0.0
        %2451 = vmatprep.mubr.f32.mxu0 0.0
        %2452 = vmatmul.mubr.f32.gmra.mxu0 %v2376
        %v2453 = vpop.f32.mrf.mxu0
        %v2454 = vadd.f32 0.0, %v2453
        %v2455 = vpop.f32.mrf.mxu0
        %2456 = vmatprep.mubr.f32.mxu0 0.0
        %2457 = vmatmul.mubr.f32.gmra.mxu0 %v2379
        %v2458 = vpop.f32.mrf.mxu0
        %v2459 = vadd.f32 0.0, %v2458
        %v2460 = vpop.f32.mrf.mxu0
        %2461 = vmatprep.mubr.f32.mxu0 0.0
        %2462 = vmatmul.mubr.f32.gmra.mxu0 %v2382
        %v2463 = vpop.f32.mrf.mxu0
        %v2464 = vadd.f32 0.0, %v2463
        %v2465 = vpop.f32.mrf.mxu0
        %2466 = vmatprep.mubr.f32.mxu0 0.0
        %2467 = vmatmul.mubr.f32.gmra.mxu0 %v2385
        %v2468 = vpop.f32.mrf.mxu0
        %v2469 = vadd.f32 0.0, %v2468
        %v2470 = vpop.f32.mrf.mxu0
        %2471 = vdwg.mxu0
        %s2472 = scalar_lea.vmem %s190, 288
        %2473 = vst.msk [vmem:[%s2472] sm:$0xff] %vm1518, %v2454
        %2474 = vst.msk [vmem:[%s2472 + $0x8] sm:$0xff] %vm1518, %v2459
        %2475 = vst.msk [vmem:[%s2472 + $0x10] sm:$0xff] %vm1518, %v2464
        %2476 = vst.msk [vmem:[%s2472 + $0x18] sm:$0xff] %vm1518, %v2469
        %v2477 = vld [vmem:[%s2] sm:$0xff]
        %v2478 = vld [vmem:[%s2 + $0x8] sm:$0xff]
        %v2479 = vld [vmem:[%s2 + $0x10] sm:$0xff]
        %v2480 = vld [vmem:[%s2 + $0x18] sm:$0xff]
        %v2482 = vsel %vm327, %v2477, 0
        %v2485 = vsel %vm327, %v2478, 0
        %v2488 = vsel %vm327, %v2479, 0
        %v2491 = vsel %vm327, %v2480, 0
        %2493 = vmatprep.subr.mxu0 0.0
        %2494 = vmatpush1.msra.mxu0 0.0
        %2495 = vmatprep.subr.mxu0 0.0
        %2496 = vmatpush1.msra.mxu0 0.0
        %2497 = vmatprep.subr.mxu0 0.0
        %2498 = vmatpush1.msra.mxu0 0.0
        %2499 = vmatprep.subr.mxu0 0.0
        %2500 = vmatpush1.msra.mxu0 0.0
        %2501 = vmatprep.subr.mxu0 0.0
        %2502 = vmatpush1.msra.mxu0 0.0
        %2503 = vmatprep.subr.mxu0 0.0
        %2504 = vmatpush1.msra.mxu0 0.0
        %2505 = vmatprep.subr.mxu0 0.0
        %2506 = vmatpush1.msra.mxu0 0.0
        %2507 = vmatprep.subr.mxu0 0.0
        %2508 = vmatpush1.msra.mxu0 0.0
        %2509 = vmatprep.subr.mxu0 0.0
        %2510 = vmatpush1.msra.mxu0 %v1214
        %2511 = vmatprep.subr.mxu0 0.0
        %2512 = vmatpush1.msra.mxu0 %v1209
        %2513 = vmatprep.subr.mxu0 0.0
        %2514 = vmatpush1.msra.mxu0 %v1204
        %2515 = vmatprep.subr.mxu0 0.0
        %2516 = vmatpush1.msra.mxu0 %v1199
        %2517 = vmatprep.subr.mxu0 0.0
        %2518 = vmatpush1.msra.mxu0 %v1194
        %2519 = vmatprep.subr.mxu0 0.0
        %2520 = vmatpush1.msra.mxu0 %v1189
        %2521 = vmatprep.subr.mxu0 0.0
        %2522 = vmatpush1.msra.mxu0 %v1184
        %2523 = vmatprep.subr.mxu0 0.0
        %2524 = vmatpush1.msra.mxu0 %v1179
        %2525 = vmatprep.subr.mxu0 0.0
        %2526 = vmatpush2.msra.mxu0 0.0
        %2527 = vmatprep.subr.mxu0 0.0
        %2528 = vmatpush2.msra.mxu0 0.0
        %2529 = vmatprep.subr.mxu0 0.0
        %2530 = vmatpush2.msra.mxu0 0.0
        %2531 = vmatprep.subr.mxu0 0.0
        %2532 = vmatpush2.msra.mxu0 0.0
        %2533 = vmatprep.subr.mxu0 0.0
        %2534 = vmatpush2.msra.mxu0 0.0
        %2535 = vmatprep.subr.mxu0 0.0
        %2536 = vmatpush2.msra.mxu0 0.0
        %2537 = vmatprep.subr.mxu0 0.0
        %2538 = vmatpush2.msra.mxu0 0.0
        %2539 = vmatprep.subr.mxu0 0.0
        %2540 = vmatpush2.msra.mxu0 0.0
        %2541 = vmatprep.subr.mxu0 0.0
        %2542 = vmatpush2.msra.mxu0 0.0
        %2543 = vmatprep.subr.mxu0 0.0
        %2544 = vmatpush2.msra.mxu0 0.0
        %2545 = vmatprep.subr.mxu0 0.0
        %2546 = vmatpush2.msra.mxu0 0.0
        %2547 = vmatprep.subr.mxu0 0.0
        %2548 = vmatpush2.msra.mxu0 0.0
        %2549 = vmatprep.subr.mxu0 0.0
        %2550 = vmatpush2.msra.mxu0 0.0
        %2551 = vmatprep.subr.mxu0 0.0
        %2552 = vmatpush2.msra.mxu0 0.0
        %2553 = vmatprep.subr.mxu0 0.0
        %2554 = vmatpush2.msra.mxu0 0.0
        %2555 = vmatprep.subr.mxu0 0.0
        %2556 = vmatpush2.msra.mxu0 0.0
        %2557 = vmatprep.mubr.f32.mxu0 0.0
        %2558 = vmatmul.mubr.f32.gmra.mxu0 %v2482
        %v2559 = vpop.f32.mrf.mxu0
        %v2560 = vadd.f32 0.0, %v2559
        %v2561 = vpop.f32.mrf.mxu0
        %2562 = vmatprep.mubr.f32.mxu0 0.0
        %2563 = vmatmul.mubr.f32.gmra.mxu0 %v2485
        %v2564 = vpop.f32.mrf.mxu0
        %v2565 = vadd.f32 0.0, %v2564
        %v2566 = vpop.f32.mrf.mxu0
        %2567 = vmatprep.mubr.f32.mxu0 0.0
        %2568 = vmatmul.mubr.f32.gmra.mxu0 %v2488
        %v2569 = vpop.f32.mrf.mxu0
        %v2570 = vadd.f32 0.0, %v2569
        %v2571 = vpop.f32.mrf.mxu0
        %2572 = vmatprep.mubr.f32.mxu0 0.0
        %2573 = vmatmul.mubr.f32.gmra.mxu0 %v2491
        %v2574 = vpop.f32.mrf.mxu0
        %v2575 = vadd.f32 0.0, %v2574
        %v2576 = vpop.f32.mrf.mxu0
        %2577 = vdwg.mxu0
        %s2578 = scalar_lea.vmem %s190, 320
        %2579 = vst.msk [vmem:[%s2578] sm:$0xff] %vm1518, %v2560
        %2580 = vst.msk [vmem:[%s2578 + $0x8] sm:$0xff] %vm1518, %v2565
        %2581 = vst.msk [vmem:[%s2578 + $0x10] sm:$0xff] %vm1518, %v2570
        %2582 = vst.msk [vmem:[%s2578 + $0x18] sm:$0xff] %vm1518, %v2575
        %v2583 = vld [vmem:[%s2] sm:$0xff]
        %v2584 = vld [vmem:[%s2 + $0x8] sm:$0xff]
        %v2585 = vld [vmem:[%s2 + $0x10] sm:$0xff]
        %v2586 = vld [vmem:[%s2 + $0x18] sm:$0xff]
        %v2588 = vsel %vm327, %v2583, 0
        %v2591 = vsel %vm327, %v2584, 0
        %v2594 = vsel %vm327, %v2585, 0
        %v2597 = vsel %vm327, %v2586, 0
        %2599 = vmatprep.subr.mxu0 0.0
        %2600 = vmatpush1.msra.mxu0 0.0
        %2601 = vmatprep.subr.mxu0 0.0
        %2602 = vmatpush1.msra.mxu0 0.0
        %2603 = vmatprep.subr.mxu0 0.0
        %2604 = vmatpush1.msra.mxu0 0.0
        %2605 = vmatprep.subr.mxu0 0.0
        %2606 = vmatpush1.msra.mxu0 0.0
        %2607 = vmatprep.subr.mxu0 0.0
        %2608 = vmatpush1.msra.mxu0 0.0
        %2609 = vmatprep.subr.mxu0 0.0
        %2610 = vmatpush1.msra.mxu0 0.0
        %2611 = vmatprep.subr.mxu0 0.0
        %2612 = vmatpush1.msra.mxu0 0.0
        %2613 = vmatprep.subr.mxu0 0.0
        %2614 = vmatpush1.msra.mxu0 0.0
        %2615 = vmatprep.subr.mxu0 0.0
        %2616 = vmatpush1.msra.mxu0 %v1254
        %2617 = vmatprep.subr.mxu0 0.0
        %2618 = vmatpush1.msra.mxu0 %v1249
        %2619 = vmatprep.subr.mxu0 0.0
        %2620 = vmatpush1.msra.mxu0 %v1244
        %2621 = vmatprep.subr.mxu0 0.0
        %2622 = vmatpush1.msra.mxu0 %v1239
        %2623 = vmatprep.subr.mxu0 0.0
        %2624 = vmatpush1.msra.mxu0 %v1234
        %2625 = vmatprep.subr.mxu0 0.0
        %2626 = vmatpush1.msra.mxu0 %v1229
        %2627 = vmatprep.subr.mxu0 0.0
        %2628 = vmatpush1.msra.mxu0 %v1224
        %2629 = vmatprep.subr.mxu0 0.0
        %2630 = vmatpush1.msra.mxu0 %v1219
        %2631 = vmatprep.subr.mxu0 0.0
        %2632 = vmatpush2.msra.mxu0 0.0
        %2633 = vmatprep.subr.mxu0 0.0
        %2634 = vmatpush2.msra.mxu0 0.0
        %2635 = vmatprep.subr.mxu0 0.0
        %2636 = vmatpush2.msra.mxu0 0.0
        %2637 = vmatprep.subr.mxu0 0.0
        %2638 = vmatpush2.msra.mxu0 0.0
        %2639 = vmatprep.subr.mxu0 0.0
        %2640 = vmatpush2.msra.mxu0 0.0
        %2641 = vmatprep.subr.mxu0 0.0
        %2642 = vmatpush2.msra.mxu0 0.0
        %2643 = vmatprep.subr.mxu0 0.0
        %2644 = vmatpush2.msra.mxu0 0.0
        %2645 = vmatprep.subr.mxu0 0.0
        %2646 = vmatpush2.msra.mxu0 0.0
        %2647 = vmatprep.subr.mxu0 0.0
        %2648 = vmatpush2.msra.mxu0 0.0
        %2649 = vmatprep.subr.mxu0 0.0
        %2650 = vmatpush2.msra.mxu0 0.0
        %2651 = vmatprep.subr.mxu0 0.0
        %2652 = vmatpush2.msra.mxu0 0.0
        %2653 = vmatprep.subr.mxu0 0.0
        %2654 = vmatpush2.msra.mxu0 0.0
        %2655 = vmatprep.subr.mxu0 0.0
        %2656 = vmatpush2.msra.mxu0 0.0
        %2657 = vmatprep.subr.mxu0 0.0
        %2658 = vmatpush2.msra.mxu0 0.0
        %2659 = vmatprep.subr.mxu0 0.0
        %2660 = vmatpush2.msra.mxu0 0.0
        %2661 = vmatprep.subr.mxu0 0.0
        %2662 = vmatpush2.msra.mxu0 0.0
        %2663 = vmatprep.mubr.f32.mxu0 0.0
        %2664 = vmatmul.mubr.f32.gmra.mxu0 %v2588
        %v2665 = vpop.f32.mrf.mxu0
        %v2666 = vadd.f32 0.0, %v2665
        %v2667 = vpop.f32.mrf.mxu0
        %2668 = vmatprep.mubr.f32.mxu0 0.0
        %2669 = vmatmul.mubr.f32.gmra.mxu0 %v2591
        %v2670 = vpop.f32.mrf.mxu0
        %v2671 = vadd.f32 0.0, %v2670
        %v2672 = vpop.f32.mrf.mxu0
        %2673 = vmatprep.mubr.f32.mxu0 0.0
        %2674 = vmatmul.mubr.f32.gmra.mxu0 %v2594
        %v2675 = vpop.f32.mrf.mxu0
        %v2676 = vadd.f32 0.0, %v2675
        %v2677 = vpop.f32.mrf.mxu0
        %2678 = vmatprep.mubr.f32.mxu0 0.0
        %2679 = vmatmul.mubr.f32.gmra.mxu0 %v2597
        %v2680 = vpop.f32.mrf.mxu0
        %v2681 = vadd.f32 0.0, %v2680
        %v2682 = vpop.f32.mrf.mxu0
        %2683 = vdwg.mxu0
        %s2684 = scalar_lea.vmem %s190, 352
        %2685 = vst.msk [vmem:[%s2684] sm:$0xff] %vm1518, %v2666
        %2686 = vst.msk [vmem:[%s2684 + $0x8] sm:$0xff] %vm1518, %v2671
        %2687 = vst.msk [vmem:[%s2684 + $0x10] sm:$0xff] %vm1518, %v2676
        %2688 = vst.msk [vmem:[%s2684 + $0x18] sm:$0xff] %vm1518, %v2681
        %v2689 = vld [vmem:[%s2] sm:$0xff]
        %v2690 = vld [vmem:[%s2 + $0x8] sm:$0xff]
        %v2691 = vld [vmem:[%s2 + $0x10] sm:$0xff]
        %v2692 = vld [vmem:[%s2 + $0x18] sm:$0xff]
        %v2694 = vsel %vm327, %v2689, 0
        %v2697 = vsel %vm327, %v2690, 0
        %v2700 = vsel %vm327, %v2691, 0
        %v2703 = vsel %vm327, %v2692, 0
        %2705 = vmatprep.subr.mxu0 0.0
        %2706 = vmatpush1.msra.mxu0 0.0
        %2707 = vmatprep.subr.mxu0 0.0
        %2708 = vmatpush1.msra.mxu0 0.0
        %2709 = vmatprep.subr.mxu0 0.0
        %2710 = vmatpush1.msra.mxu0 0.0
        %2711 = vmatprep.subr.mxu0 0.0
        %2712 = vmatpush1.msra.mxu0 0.0
        %2713 = vmatprep.subr.mxu0 0.0
        %2714 = vmatpush1.msra.mxu0 0.0
        %2715 = vmatprep.subr.mxu0 0.0
        %2716 = vmatpush1.msra.mxu0 0.0
        %2717 = vmatprep.subr.mxu0 0.0
        %2718 = vmatpush1.msra.mxu0 0.0
        %2719 = vmatprep.subr.mxu0 0.0
        %2720 = vmatpush1.msra.mxu0 0.0
        %2721 = vmatprep.subr.mxu0 0.0
        %2722 = vmatpush1.msra.mxu0 %v1294
        %2723 = vmatprep.subr.mxu0 0.0
        %2724 = vmatpush1.msra.mxu0 %v1289
        %2725 = vmatprep.subr.mxu0 0.0
        %2726 = vmatpush1.msra.mxu0 %v1284
        %2727 = vmatprep.subr.mxu0 0.0
        %2728 = vmatpush1.msra.mxu0 %v1279
        %2729 = vmatprep.subr.mxu0 0.0
        %2730 = vmatpush1.msra.mxu0 %v1274
        %2731 = vmatprep.subr.mxu0 0.0
        %2732 = vmatpush1.msra.mxu0 %v1269
        %2733 = vmatprep.subr.mxu0 0.0
        %2734 = vmatpush1.msra.mxu0 %v1264
        %2735 = vmatprep.subr.mxu0 0.0
        %2736 = vmatpush1.msra.mxu0 %v1259
        %2737 = vmatprep.subr.mxu0 0.0
        %2738 = vmatpush2.msra.mxu0 0.0
        %2739 = vmatprep.subr.mxu0 0.0
        %2740 = vmatpush2.msra.mxu0 0.0
        %2741 = vmatprep.subr.mxu0 0.0
        %2742 = vmatpush2.msra.mxu0 0.0
        %2743 = vmatprep.subr.mxu0 0.0
        %2744 = vmatpush2.msra.mxu0 0.0
        %2745 = vmatprep.subr.mxu0 0.0
        %2746 = vmatpush2.msra.mxu0 0.0
        %2747 = vmatprep.subr.mxu0 0.0
        %2748 = vmatpush2.msra.mxu0 0.0
        %2749 = vmatprep.subr.mxu0 0.0
        %2750 = vmatpush2.msra.mxu0 0.0
        %2751 = vmatprep.subr.mxu0 0.0
        %2752 = vmatpush2.msra.mxu0 0.0
        %2753 = vmatprep.subr.mxu0 0.0
        %2754 = vmatpush2.msra.mxu0 0.0
        %2755 = vmatprep.subr.mxu0 0.0
        %2756 = vmatpush2.msra.mxu0 0.0
        %2757 = vmatprep.subr.mxu0 0.0
        %2758 = vmatpush2.msra.mxu0 0.0
        %2759 = vmatprep.subr.mxu0 0.0
        %2760 = vmatpush2.msra.mxu0 0.0
        %2761 = vmatprep.subr.mxu0 0.0
        %2762 = vmatpush2.msra.mxu0 0.0
        %2763 = vmatprep.subr.mxu0 0.0
        %2764 = vmatpush2.msra.mxu0 0.0
        %2765 = vmatprep.subr.mxu0 0.0
        %2766 = vmatpush2.msra.mxu0 0.0
        %2767 = vmatprep.subr.mxu0 0.0
        %2768 = vmatpush2.msra.mxu0 0.0
        %2769 = vmatprep.mubr.f32.mxu0 0.0
        %2770 = vmatmul.mubr.f32.gmra.mxu0 %v2694
        %v2771 = vpop.f32.mrf.mxu0
        %v2772 = vadd.f32 0.0, %v2771
        %v2773 = vpop.f32.mrf.mxu0
        %2774 = vmatprep.mubr.f32.mxu0 0.0
        %2775 = vmatmul.mubr.f32.gmra.mxu0 %v2697
        %v2776 = vpop.f32.mrf.mxu0
        %v2777 = vadd.f32 0.0, %v2776
        %v2778 = vpop.f32.mrf.mxu0
        %2779 = vmatprep.mubr.f32.mxu0 0.0
        %2780 = vmatmul.mubr.f32.gmra.mxu0 %v2700
        %v2781 = vpop.f32.mrf.mxu0
        %v2782 = vadd.f32 0.0, %v2781
        %v2783 = vpop.f32.mrf.mxu0
        %2784 = vmatprep.mubr.f32.mxu0 0.0
        %2785 = vmatmul.mubr.f32.gmra.mxu0 %v2703
        %v2786 = vpop.f32.mrf.mxu0
        %v2787 = vadd.f32 0.0, %v2786
        %v2788 = vpop.f32.mrf.mxu0
        %2789 = vdwg.mxu0
        %s2790 = scalar_lea.vmem %s190, 384
        %2791 = vst.msk [vmem:[%s2790] sm:$0xff] %vm1518, %v2772
        %2792 = vst.msk [vmem:[%s2790 + $0x8] sm:$0xff] %vm1518, %v2777
        %2793 = vst.msk [vmem:[%s2790 + $0x10] sm:$0xff] %vm1518, %v2782
        %2794 = vst.msk [vmem:[%s2790 + $0x18] sm:$0xff] %vm1518, %v2787
        %v2795 = vld [vmem:[%s2] sm:$0xff]
        %v2796 = vld [vmem:[%s2 + $0x8] sm:$0xff]
        %v2797 = vld [vmem:[%s2 + $0x10] sm:$0xff]
        %v2798 = vld [vmem:[%s2 + $0x18] sm:$0xff]
        %v2800 = vsel %vm327, %v2795, 0
        %v2803 = vsel %vm327, %v2796, 0
        %v2806 = vsel %vm327, %v2797, 0
        %v2809 = vsel %vm327, %v2798, 0
        %2811 = vmatprep.subr.mxu0 0.0
        %2812 = vmatpush1.msra.mxu0 0.0
        %2813 = vmatprep.subr.mxu0 0.0
        %2814 = vmatpush1.msra.mxu0 0.0
        %2815 = vmatprep.subr.mxu0 0.0
        %2816 = vmatpush1.msra.mxu0 0.0
        %2817 = vmatprep.subr.mxu0 0.0
        %2818 = vmatpush1.msra.mxu0 0.0
        %2819 = vmatprep.subr.mxu0 0.0
        %2820 = vmatpush1.msra.mxu0 0.0
        %2821 = vmatprep.subr.mxu0 0.0
        %2822 = vmatpush1.msra.mxu0 0.0
        %2823 = vmatprep.subr.mxu0 0.0
        %2824 = vmatpush1.msra.mxu0 0.0
        %2825 = vmatprep.subr.mxu0 0.0
        %2826 = vmatpush1.msra.mxu0 0.0
        %2827 = vmatprep.subr.mxu0 0.0
        %2828 = vmatpush1.msra.mxu0 %v1334
        %2829 = vmatprep.subr.mxu0 0.0
        %2830 = vmatpush1.msra.mxu0 %v1329
        %2831 = vmatprep.subr.mxu0 0.0
        %2832 = vmatpush1.msra.mxu0 %v1324
        %2833 = vmatprep.subr.mxu0 0.0
        %2834 = vmatpush1.msra.mxu0 %v1319
        %2835 = vmatprep.subr.mxu0 0.0
        %2836 = vmatpush1.msra.mxu0 %v1314
        %2837 = vmatprep.subr.mxu0 0.0
        %2838 = vmatpush1.msra.mxu0 %v1309
        %2839 = vmatprep.subr.mxu0 0.0
        %2840 = vmatpush1.msra.mxu0 %v1304
        %2841 = vmatprep.subr.mxu0 0.0
        %2842 = vmatpush1.msra.mxu0 %v1299
        %2843 = vmatprep.subr.mxu0 0.0
        %2844 = vmatpush2.msra.mxu0 0.0
        %2845 = vmatprep.subr.mxu0 0.0
        %2846 = vmatpush2.msra.mxu0 0.0
        %2847 = vmatprep.subr.mxu0 0.0
        %2848 = vmatpush2.msra.mxu0 0.0
        %2849 = vmatprep.subr.mxu0 0.0
        %2850 = vmatpush2.msra.mxu0 0.0
        %2851 = vmatprep.subr.mxu0 0.0
        %2852 = vmatpush2.msra.mxu0 0.0
        %2853 = vmatprep.subr.mxu0 0.0
        %2854 = vmatpush2.msra.mxu0 0.0
        %2855 = vmatprep.subr.mxu0 0.0
        %2856 = vmatpush2.msra.mxu0 0.0
        %2857 = vmatprep.subr.mxu0 0.0
        %2858 = vmatpush2.msra.mxu0 0.0
        %2859 = vmatprep.subr.mxu0 0.0
        %2860 = vmatpush2.msra.mxu0 0.0
        %2861 = vmatprep.subr.mxu0 0.0
        %2862 = vmatpush2.msra.mxu0 0.0
        %2863 = vmatprep.subr.mxu0 0.0
        %2864 = vmatpush2.msra.mxu0 0.0
        %2865 = vmatprep.subr.mxu0 0.0
        %2866 = vmatpush2.msra.mxu0 0.0
        %2867 = vmatprep.subr.mxu0 0.0
        %2868 = vmatpush2.msra.mxu0 0.0
        %2869 = vmatprep.subr.mxu0 0.0
        %2870 = vmatpush2.msra.mxu0 0.0
        %2871 = vmatprep.subr.mxu0 0.0
        %2872 = vmatpush2.msra.mxu0 0.0
        %2873 = vmatprep.subr.mxu0 0.0
        %2874 = vmatpush2.msra.mxu0 0.0
        %2875 = vmatprep.mubr.f32.mxu0 0.0
        %2876 = vmatmul.mubr.f32.gmra.mxu0 %v2800
        %v2877 = vpop.f32.mrf.mxu0
        %v2878 = vadd.f32 0.0, %v2877
        %v2879 = vpop.f32.mrf.mxu0
        %2880 = vmatprep.mubr.f32.mxu0 0.0
        %2881 = vmatmul.mubr.f32.gmra.mxu0 %v2803
        %v2882 = vpop.f32.mrf.mxu0
        %v2883 = vadd.f32 0.0, %v2882
        %v2884 = vpop.f32.mrf.mxu0
        %2885 = vmatprep.mubr.f32.mxu0 0.0
        %2886 = vmatmul.mubr.f32.gmra.mxu0 %v2806
        %v2887 = vpop.f32.mrf.mxu0
        %v2888 = vadd.f32 0.0, %v2887
        %v2889 = vpop.f32.mrf.mxu0
        %2890 = vmatprep.mubr.f32.mxu0 0.0
        %2891 = vmatmul.mubr.f32.gmra.mxu0 %v2809
        %v2892 = vpop.f32.mrf.mxu0
        %v2893 = vadd.f32 0.0, %v2892
        %v2894 = vpop.f32.mrf.mxu0
        %2895 = vdwg.mxu0
        %s2896 = scalar_lea.vmem %s190, 416
        %2897 = vst.msk [vmem:[%s2896] sm:$0xff] %vm1518, %v2878
        %2898 = vst.msk [vmem:[%s2896 + $0x8] sm:$0xff] %vm1518, %v2883
        %2899 = vst.msk [vmem:[%s2896 + $0x10] sm:$0xff] %vm1518, %v2888
        %2900 = vst.msk [vmem:[%s2896 + $0x18] sm:$0xff] %vm1518, %v2893
        %v2901 = vld [vmem:[%s2] sm:$0xff]
        %v2902 = vld [vmem:[%s2 + $0x8] sm:$0xff]
        %v2903 = vld [vmem:[%s2 + $0x10] sm:$0xff]
        %v2904 = vld [vmem:[%s2 + $0x18] sm:$0xff]
        %v2906 = vsel %vm327, %v2901, 0
        %v2909 = vsel %vm327, %v2902, 0
        %v2912 = vsel %vm327, %v2903, 0
        %v2915 = vsel %vm327, %v2904, 0
        %2917 = vmatprep.subr.mxu0 0.0
        %2918 = vmatpush1.msra.mxu0 0.0
        %2919 = vmatprep.subr.mxu0 0.0
        %2920 = vmatpush1.msra.mxu0 0.0
        %2921 = vmatprep.subr.mxu0 0.0
        %2922 = vmatpush1.msra.mxu0 0.0
        %2923 = vmatprep.subr.mxu0 0.0
        %2924 = vmatpush1.msra.mxu0 0.0
        %2925 = vmatprep.subr.mxu0 0.0
        %2926 = vmatpush1.msra.mxu0 0.0
        %2927 = vmatprep.subr.mxu0 0.0
        %2928 = vmatpush1.msra.mxu0 0.0
        %2929 = vmatprep.subr.mxu0 0.0
        %2930 = vmatpush1.msra.mxu0 0.0
        %2931 = vmatprep.subr.mxu0 0.0
        %2932 = vmatpush1.msra.mxu0 0.0
        %2933 = vmatprep.subr.mxu0 0.0
        %2934 = vmatpush1.msra.mxu0 %v1374
        %2935 = vmatprep.subr.mxu0 0.0
        %2936 = vmatpush1.msra.mxu0 %v1369
        %2937 = vmatprep.subr.mxu0 0.0
        %2938 = vmatpush1.msra.mxu0 %v1364
        %2939 = vmatprep.subr.mxu0 0.0
        %2940 = vmatpush1.msra.mxu0 %v1359
        %2941 = vmatprep.subr.mxu0 0.0
        %2942 = vmatpush1.msra.mxu0 %v1354
        %2943 = vmatprep.subr.mxu0 0.0
        %2944 = vmatpush1.msra.mxu0 %v1349
        %2945 = vmatprep.subr.mxu0 0.0
        %2946 = vmatpush1.msra.mxu0 %v1344
        %2947 = vmatprep.subr.mxu0 0.0
        %2948 = vmatpush1.msra.mxu0 %v1339
        %2949 = vmatprep.subr.mxu0 0.0
        %2950 = vmatpush2.msra.mxu0 0.0
        %2951 = vmatprep.subr.mxu0 0.0
        %2952 = vmatpush2.msra.mxu0 0.0
        %2953 = vmatprep.subr.mxu0 0.0
        %2954 = vmatpush2.msra.mxu0 0.0
        %2955 = vmatprep.subr.mxu0 0.0
        %2956 = vmatpush2.msra.mxu0 0.0
        %2957 = vmatprep.subr.mxu0 0.0
        %2958 = vmatpush2.msra.mxu0 0.0
        %2959 = vmatprep.subr.mxu0 0.0
        %2960 = vmatpush2.msra.mxu0 0.0
        %2961 = vmatprep.subr.mxu0 0.0
        %2962 = vmatpush2.msra.mxu0 0.0
        %2963 = vmatprep.subr.mxu0 0.0
        %2964 = vmatpush2.msra.mxu0 0.0
        %2965 = vmatprep.subr.mxu0 0.0
        %2966 = vmatpush2.msra.mxu0 0.0
        %2967 = vmatprep.subr.mxu0 0.0
        %2968 = vmatpush2.msra.mxu0 0.0
        %2969 = vmatprep.subr.mxu0 0.0
        %2970 = vmatpush2.msra.mxu0 0.0
        %2971 = vmatprep.subr.mxu0 0.0
        %2972 = vmatpush2.msra.mxu0 0.0
        %2973 = vmatprep.subr.mxu0 0.0
        %2974 = vmatpush2.msra.mxu0 0.0
        %2975 = vmatprep.subr.mxu0 0.0
        %2976 = vmatpush2.msra.mxu0 0.0
        %2977 = vmatprep.subr.mxu0 0.0
        %2978 = vmatpush2.msra.mxu0 0.0
        %2979 = vmatprep.subr.mxu0 0.0
        %2980 = vmatpush2.msra.mxu0 0.0
        %2981 = vmatprep.mubr.f32.mxu0 0.0
        %2982 = vmatmul.mubr.f32.gmra.mxu0 %v2906
        %v2983 = vpop.f32.mrf.mxu0
        %v2984 = vadd.f32 0.0, %v2983
        %v2985 = vpop.f32.mrf.mxu0
        %2986 = vmatprep.mubr.f32.mxu0 0.0
        %2987 = vmatmul.mubr.f32.gmra.mxu0 %v2909
        %v2988 = vpop.f32.mrf.mxu0
        %v2989 = vadd.f32 0.0, %v2988
        %v2990 = vpop.f32.mrf.mxu0
        %2991 = vmatprep.mubr.f32.mxu0 0.0
        %2992 = vmatmul.mubr.f32.gmra.mxu0 %v2912
        %v2993 = vpop.f32.mrf.mxu0
        %v2994 = vadd.f32 0.0, %v2993
        %v2995 = vpop.f32.mrf.mxu0
        %2996 = vmatprep.mubr.f32.mxu0 0.0
        %2997 = vmatmul.mubr.f32.gmra.mxu0 %v2915
        %v2998 = vpop.f32.mrf.mxu0
        %v2999 = vadd.f32 0.0, %v2998
        %v3000 = vpop.f32.mrf.mxu0
        %3001 = vdwg.mxu0
        %s3002 = scalar_lea.vmem %s190, 448
        %3003 = vst.msk [vmem:[%s3002] sm:$0xff] %vm1518, %v2984
        %3004 = vst.msk [vmem:[%s3002 + $0x8] sm:$0xff] %vm1518, %v2989
        %3005 = vst.msk [vmem:[%s3002 + $0x10] sm:$0xff] %vm1518, %v2994
        %3006 = vst.msk [vmem:[%s3002 + $0x18] sm:$0xff] %vm1518, %v2999
        %v3007 = vld [vmem:[%s2] sm:$0xff]
        %v3008 = vld [vmem:[%s2 + $0x8] sm:$0xff]
        %v3009 = vld [vmem:[%s2 + $0x10] sm:$0xff]
        %v3010 = vld [vmem:[%s2 + $0x18] sm:$0xff]
        %v3012 = vsel %vm327, %v3007, 0
        %v3015 = vsel %vm327, %v3008, 0
        %v3018 = vsel %vm327, %v3009, 0
        %v3021 = vsel %vm327, %v3010, 0
        %3023 = vmatprep.subr.mxu0 0.0
        %3024 = vmatpush1.msra.mxu0 0.0
        %3025 = vmatprep.subr.mxu0 0.0
        %3026 = vmatpush1.msra.mxu0 0.0
        %3027 = vmatprep.subr.mxu0 0.0
        %3028 = vmatpush1.msra.mxu0 0.0
        %3029 = vmatprep.subr.mxu0 0.0
        %3030 = vmatpush1.msra.mxu0 0.0
        %3031 = vmatprep.subr.mxu0 0.0
        %3032 = vmatpush1.msra.mxu0 0.0
        %3033 = vmatprep.subr.mxu0 0.0
        %3034 = vmatpush1.msra.mxu0 0.0
        %3035 = vmatprep.subr.mxu0 0.0
        %3036 = vmatpush1.msra.mxu0 0.0
        %3037 = vmatprep.subr.mxu0 0.0
        %3038 = vmatpush1.msra.mxu0 0.0
        %3039 = vmatprep.subr.mxu0 0.0
        %3040 = vmatpush1.msra.mxu0 %v1414
        %3041 = vmatprep.subr.mxu0 0.0
        %3042 = vmatpush1.msra.mxu0 %v1409
        %3043 = vmatprep.subr.mxu0 0.0
        %3044 = vmatpush1.msra.mxu0 %v1404
        %3045 = vmatprep.subr.mxu0 0.0
        %3046 = vmatpush1.msra.mxu0 %v1399
        %3047 = vmatprep.subr.mxu0 0.0
        %3048 = vmatpush1.msra.mxu0 %v1394
        %3049 = vmatprep.subr.mxu0 0.0
        %3050 = vmatpush1.msra.mxu0 %v1389
        %3051 = vmatprep.subr.mxu0 0.0
        %3052 = vmatpush1.msra.mxu0 %v1384
        %3053 = vmatprep.subr.mxu0 0.0
        %3054 = vmatpush1.msra.mxu0 %v1379
        %3055 = vmatprep.subr.mxu0 0.0
        %3056 = vmatpush2.msra.mxu0 0.0
        %3057 = vmatprep.subr.mxu0 0.0
        %3058 = vmatpush2.msra.mxu0 0.0
        %3059 = vmatprep.subr.mxu0 0.0
        %3060 = vmatpush2.msra.mxu0 0.0
        %3061 = vmatprep.subr.mxu0 0.0
        %3062 = vmatpush2.msra.mxu0 0.0
        %3063 = vmatprep.subr.mxu0 0.0
        %3064 = vmatpush2.msra.mxu0 0.0
        %3065 = vmatprep.subr.mxu0 0.0
        %3066 = vmatpush2.msra.mxu0 0.0
        %3067 = vmatprep.subr.mxu0 0.0
        %3068 = vmatpush2.msra.mxu0 0.0
        %3069 = vmatprep.subr.mxu0 0.0
        %3070 = vmatpush2.msra.mxu0 0.0
        %3071 = vmatprep.subr.mxu0 0.0
        %3072 = vmatpush2.msra.mxu0 0.0
        %3073 = vmatprep.subr.mxu0 0.0
        %3074 = vmatpush2.msra.mxu0 0.0
        %3075 = vmatprep.subr.mxu0 0.0
        %3076 = vmatpush2.msra.mxu0 0.0
        %3077 = vmatprep.subr.mxu0 0.0
        %3078 = vmatpush2.msra.mxu0 0.0
        %3079 = vmatprep.subr.mxu0 0.0
        %3080 = vmatpush2.msra.mxu0 0.0
        %3081 = vmatprep.subr.mxu0 0.0
        %3082 = vmatpush2.msra.mxu0 0.0
        %3083 = vmatprep.subr.mxu0 0.0
        %3084 = vmatpush2.msra.mxu0 0.0
        %3085 = vmatprep.subr.mxu0 0.0
        %3086 = vmatpush2.msra.mxu0 0.0
        %3087 = vmatprep.mubr.f32.mxu0 0.0
        %3088 = vmatmul.mubr.f32.gmra.mxu0 %v3012
        %v3089 = vpop.f32.mrf.mxu0
        %v3090 = vadd.f32 0.0, %v3089
        %v3091 = vpop.f32.mrf.mxu0
        %3092 = vmatprep.mubr.f32.mxu0 0.0
        %3093 = vmatmul.mubr.f32.gmra.mxu0 %v3015
        %v3094 = vpop.f32.mrf.mxu0
        %v3095 = vadd.f32 0.0, %v3094
        %v3096 = vpop.f32.mrf.mxu0
        %3097 = vmatprep.mubr.f32.mxu0 0.0
        %3098 = vmatmul.mubr.f32.gmra.mxu0 %v3018
        %v3099 = vpop.f32.mrf.mxu0
        %v3100 = vadd.f32 0.0, %v3099
        %v3101 = vpop.f32.mrf.mxu0
        %3102 = vmatprep.mubr.f32.mxu0 0.0
        %3103 = vmatmul.mubr.f32.gmra.mxu0 %v3021
        %v3104 = vpop.f32.mrf.mxu0
        %v3105 = vadd.f32 0.0, %v3104
        %v3106 = vpop.f32.mrf.mxu0
        %3107 = vdwg.mxu0
        %s3108 = scalar_lea.vmem %s190, 480
        %3109 = vst.msk [vmem:[%s3108] sm:$0xff] %vm1518, %v3090
        %3110 = vst.msk [vmem:[%s3108 + $0x8] sm:$0xff] %vm1518, %v3095
        %3111 = vst.msk [vmem:[%s3108 + $0x10] sm:$0xff] %vm1518, %v3100
        %3112 = vst.msk [vmem:[%s3108 + $0x18] sm:$0xff] %vm1518, %v3105
        %p3113 = scmp.lt.s32.totalorder %s17, 1
        %s3114 = scalar_select %p3113, %s17, 1
        %s3115 = smul.addr %s3114, 64
        %s3116 = smul.addr %s3115, 8
        %s3117 = scalar_lea.vmem %s3, %s3116
        // Predicated region
        $region37: #{spectral_attention_pallas.2} parent=31 // pred_check
          %p3118 = pneg %p103
        $region38: #{spectral_attention_pallas.2} parent=31 // pred_check_branch
          %3120 = sbr.rel (%p3118) target = $region40
        $region39: #{spectral_attention_pallas.2} parent=31 // pred_region
          _
        $region40: #{spectral_attention_pallas.2} parent=31 // pred_fallthru
          _
      $region32: #{spectral_attention_pallas.2} parent=5 // pred_fallthru
        _
      %p3121 = scmp.le.s32.totalorder 2, %s12
      // Predicated region
      $region41: #{spectral_attention_pallas.2} parent=5 // pred_check
        %p3122 = pneg %p3121
      $region42: #{spectral_attention_pallas.2} parent=5 // pred_check_branch
        %3124 = sbr.rel (%p3122) target = $region44
      $region43: #{spectral_attention_pallas.2} parent=5 // pred_region
        %s3125 = ssub.s32 %s12, 2
        // Predicated region
        $region45: #{spectral_attention_pallas.2} parent=43 // pred_check
          %p3126 = pneg %p109
        $region46: #{spectral_attention_pallas.2} parent=43 // pred_check_branch
          %3128 = sbr.rel (%p3126) target = $region48
        $region47: #{spectral_attention_pallas.2} parent=43 // pred_region
          %p3129 = scmp.lt.s32.totalorder %s18, 1
          %s3130 = scalar_select %p3129, %s18, 1
          %s3131 = smul.addr %s3130, 64
          %s3132 = smul.addr %s3131, 8
          %s3133 = scalar_lea.vmem %s3, %s3132
        $region48: #{spectral_attention_pallas.2} parent=43 // pred_fallthru
          _
      $region44: #{spectral_attention_pallas.2} parent=5 // pred_fallthru
        _
    $region6: #{spectral_attention_pallas.2} parent=1 // loop_footer
      %s16 = sadd.s32 1, %s12
    $region7: #{spectral_attention_pallas.2} parent=1 // loop_footer_branch
      %11 = sbr.rel target = $region3
    $region8: #{spectral_attention_pallas.2} parent=1 // loop_exit
      _
    %3134 = vsyncpa [#allocation3], 1
    %s3135 = scalar_lea.sflag [#allocation3], 1
    %3136 = vsyncpa %s3135, 1

// kernel: spectral_attention_pallas.3
$region0: #{spectral_attention_pallas.3}
  #allocation0 [shape = 'u32[]', space=smem, size = 0x4, offset = 0x4, fixed_abs, tag = 'smem constant byte address 0x4 - core index']
  #allocation1 [shape = 'u32[144,128]{1,0:T(1,128)}', space=vmem, size = 0x12000, scoped, tag = 'internal scratch']
  %s0 = inlined_call_operand.vmem [shape: f32[2,16,1024], index: 0, kind: input, shape index: {}, may-alias: {0,1}]
  %s1 = inlined_call_operand.vmem [shape: f32[2,16,1024], index: 1, kind: input, shape index: {}, may-alias: {0,1}]
  %s2 = inlined_call_operand.vmem [shape: bf16[4,4,16], index: 2, kind: input, shape index: {}]
  %s3 = inlined_call_operand.vmem [shape: bf16[4,4,16], index: 3, kind: input, shape index: {}]
  %s4 = inlined_call_operand.vmem [shape: bf16[4,4,16], index: 4, kind: input, shape index: {}]
  %s5 = inlined_call_operand.vmem [shape: f32[4,4,1], index: 5, kind: input, shape index: {}]
  %s6 = inlined_call_operand.vmem [shape: f32[4,4,1], index: 6, kind: input, shape index: {}]
  %s7 = inlined_call_operand.vmem [shape: f32[4,4,1], index: 7, kind: input, shape index: {}]
  %s8 = inlined_call_operand.vmem [shape: bf16[4,16,4], index: 8, kind: input, shape index: {}]
  %s9 = inlined_call_operand.vmem [shape: f32[16,1], index: 9, kind: input, shape index: {}]
  %s10 = inlined_call_operand.vmem [shape: f32[2,16,1024], index: 10, kind: output, shape index: {}]
  %s11 = sld [smem:[#allocation0]]
  $region122: #{spectral_attention_pallas.3} parent=0
    _
  %s13 = ssub.s32 1, %s11
  %s14 = scalar_select 0, %s13, %s11
  $region1: #{spectral_attention_pallas.3} parent=0
    #allocation2 [shape = 'u8[32768]{0}', space=vmem, size = 0x8000, scoped, tag = 'input window, operand 1']
    #allocation3 [shape = 'u8[32768]{0}', space=vmem, size = 0x8000, scoped, tag = 'output window, operand 0']
    loop: start=0, step=1, limit=10
    $region2: #{spectral_attention_pallas.3} parent=1 // loop_pre_header
      _
    $region3: #{spectral_attention_pallas.3} parent=1 // loop_header
      %s16 = sphi 0, %s20
      %p17 = scmp.ge.s32.totalorder %s16, 10
      %s23 = sphi 0, %s35
      %s24 = sphi 0, %s31
      %s25 = sphi 0, %s23
      %s26 = sphi 0, %s24
      %s27 = sphi 0, %s25
      %s28 = sphi 0, %s26
      %s38 = sphi 0, %s40
      %s41 = sphi 0, %s38
      %s42 = sphi 0, %s41
      %s58 = sphi 0, %s42
      %s66 = sphi 0, %s68
      %s69 = sphi 0, %s66
      %s70 = sphi 0, %s69
      %s86 = sphi 0, %s70
      %s90 = sphi 0, %s90
      %s92 = sphi 0, %s90
      %s93 = sphi 0, %s92
      %s107 = sphi 0, %s93
      %s111 = sphi 0, %s111
      %s113 = sphi 0, %s111
      %s114 = sphi 0, %s113
      %s128 = sphi 0, %s114
      %s132 = sphi 0, %s132
      %s134 = sphi 0, %s132
      %s135 = sphi 0, %s134
      %s149 = sphi 0, %s135
      %s153 = sphi 0, %s153
      %s155 = sphi 0, %s153
      %s156 = sphi 0, %s155
      %s170 = sphi 0, %s156
      %s174 = sphi 0, %s174
      %s176 = sphi 0, %s174
      %s177 = sphi 0, %s176
      %s191 = sphi 0, %s177
      %s195 = sphi 0, %s195
      %s197 = sphi 0, %s195
      %s198 = sphi 0, %s197
      %s212 = sphi 0, %s198
      %s216 = sphi 0, %s216
      %s218 = sphi 0, %s216
      %s219 = sphi 0, %s218
      %s233 = sphi 0, %s219
      %s237 = sphi 0, %s237
      %s239 = sphi 0, %s237
      %s240 = sphi 0, %s239
      %s254 = sphi 0, %s240
      %s262 = sphi 0, %s264
      %s265 = sphi 0, %s262
      %s266 = sphi 0, %s265
      %s282 = sphi 0, %s266
    $region4: #{spectral_attention_pallas.3} parent=1 // loop_header_branch
      %19 = sbr.rel (%p17) target = $region8
    $region5: #{spectral_attention_pallas.3} parent=1 // loop_body
      %s21 = ssub.s32 %s16, 1
      %s22 = ssub.s32 %s16, 2
      %s29 = sadd.s32 1, %s24
      %p30 = scmp.ge.s32.totalorder %s29, 4
      %s31 = scalar_select %p30, 0, %s29
      %s32 = sadd.s32 1, %s23
      %s33 = scalar_select %p30, %s32, %s23
      %p34 = scmp.ge.s32.totalorder %s33, 2
      %s35 = scalar_select %p34, 0, %s33
      %s36 = ssub.s32 %s23, %s35
      %p37 = scmp.eq.s32.totalorder %s36, 0
      %s39 = sadd.s32 %s38, 1
      %s40 = scalar_select %p37, %s38, %s39
      %p43 = pneg %p37
      %p44 = scmp.eq.s32.totalorder %s16, 7
      %p45 = por %p43, %p44
      %p46 = scmp.ne.s32.totalorder %s38, %s41
      %p47 = scmp.eq.s32.totalorder %s16, 0
      %p48 = por %p46, %p47
      %p49 = scmp.ne.s32.totalorder %s38, %s41
      %p50 = scmp.eq.s32.totalorder %s21, 7
      %p51 = por %p49, %p50
      %p52 = scmp.ne.s32.totalorder %s41, %s42
      %p53 = scmp.eq.s32.totalorder %s21, 0
      %p54 = por %p52, %p53
      %p55 = scmp.ne.s32.totalorder %s41, %s42
      %p56 = scmp.eq.s32.totalorder %s22, 7
      %p57 = por %p55, %p56
      %p59 = scmp.ne.s32.totalorder %s42, %s58
      %p60 = scmp.eq.s32.totalorder %s22, 0
      %p61 = por %p59, %p60
      %s62 = ssub.s32 %s23, %s35
      %s63 = ssub.s32 %s24, %s31
      %s64 = sor.u32 %s62, %s63
      %p65 = scmp.eq.s32.totalorder %s64, 0
      %s67 = sadd.s32 %s66, 1
      %s68 = scalar_select %p65, %s66, %s67
      %p71 = pneg %p65
      %p72 = scmp.eq.s32.totalorder %s16, 7
      %p73 = por %p71, %p72
      %p74 = scmp.ne.s32.totalorder %s66, %s69
      %p75 = scmp.eq.s32.totalorder %s16, 0
      %p76 = por %p74, %p75
      %p77 = scmp.ne.s32.totalorder %s66, %s69
      %p78 = scmp.eq.s32.totalorder %s21, 7
      %p79 = por %p77, %p78
      %p80 = scmp.ne.s32.totalorder %s69, %s70
      %p81 = scmp.eq.s32.totalorder %s21, 0
      %p82 = por %p80, %p81
      %p83 = scmp.ne.s32.totalorder %s69, %s70
      %p84 = scmp.eq.s32.totalorder %s22, 7
      %p85 = por %p83, %p84
      %p87 = scmp.ne.s32.totalorder %s70, %s86
      %p88 = scmp.eq.s32.totalorder %s22, 0
      %p89 = por %p87, %p88
      %s91 = sadd.s32 %s90, 1
      %p94 = scmp.eq.s32.totalorder %s16, 7
      %p95 = scmp.ne.s32.totalorder %s90, %s92
      %p96 = scmp.eq.s32.totalorder %s16, 0
      %p97 = por %p95, %p96
      %p98 = scmp.ne.s32.totalorder %s90, %s92
      %p99 = scmp.eq.s32.totalorder %s21, 7
      %p100 = por %p98, %p99
      %p101 = scmp.ne.s32.totalorder %s92, %s93
      %p102 = scmp.eq.s32.totalorder %s21, 0
      %p103 = por %p101, %p102
      %p104 = scmp.ne.s32.totalorder %s92, %s93
      %p105 = scmp.eq.s32.totalorder %s22, 7
      %p106 = por %p104, %p105
      %p108 = scmp.ne.s32.totalorder %s93, %s107
      %p109 = scmp.eq.s32.totalorder %s22, 0
      %p110 = por %p108, %p109
      %s112 = sadd.s32 %s111, 1
      %p115 = scmp.eq.s32.totalorder %s16, 7
      %p116 = scmp.ne.s32.totalorder %s111, %s113
      %p117 = scmp.eq.s32.totalorder %s16, 0
      %p118 = por %p116, %p117
      %p119 = scmp.ne.s32.totalorder %s111, %s113
      %p120 = scmp.eq.s32.totalorder %s21, 7
      %p121 = por %p119, %p120
      %p122 = scmp.ne.s32.totalorder %s113, %s114
      %p123 = scmp.eq.s32.totalorder %s21, 0
      %p124 = por %p122, %p123
      %p125 = scmp.ne.s32.totalorder %s113, %s114
      %p126 = scmp.eq.s32.totalorder %s22, 7
      %p127 = por %p125, %p126
      %p129 = scmp.ne.s32.totalorder %s114, %s128
      %p130 = scmp.eq.s32.totalorder %s22, 0
      %p131 = por %p129, %p130
      %s133 = sadd.s32 %s132, 1
      %p136 = scmp.eq.s32.totalorder %s16, 7
      %p137 = scmp.ne.s32.totalorder %s132, %s134
      %p138 = scmp.eq.s32.totalorder %s16, 0
      %p139 = por %p137, %p138
      %p140 = scmp.ne.s32.totalorder %s132, %s134
      %p141 = scmp.eq.s32.totalorder %s21, 7
      %p142 = por %p140, %p141
      %p143 = scmp.ne.s32.totalorder %s134, %s135
      %p144 = scmp.eq.s32.totalorder %s21, 0
      %p145 = por %p143, %p144
      %p146 = scmp.ne.s32.totalorder %s134, %s135
      %p147 = scmp.eq.s32.totalorder %s22, 7
      %p148 = por %p146, %p147
      %p150 = scmp.ne.s32.totalorder %s135, %s149
      %p151 = scmp.eq.s32.totalorder %s22, 0
      %p152 = por %p150, %p151
      %s154 = sadd.s32 %s153, 1
      %p157 = scmp.eq.s32.totalorder %s16, 7
      %p158 = scmp.ne.s32.totalorder %s153, %s155
      %p159 = scmp.eq.s32.totalorder %s16, 0
      %p160 = por %p158, %p159
      %p161 = scmp.ne.s32.totalorder %s153, %s155
      %p162 = scmp.eq.s32.totalorder %s21, 7
      %p163 = por %p161, %p162
      %p164 = scmp.ne.s32.totalorder %s155, %s156
      %p165 = scmp.eq.s32.totalorder %s21, 0
      %p166 = por %p164, %p165
      %p167 = scmp.ne.s32.totalorder %s155, %s156
      %p168 = scmp.eq.s32.totalorder %s22, 7
      %p169 = por %p167, %p168
      %p171 = scmp.ne.s32.totalorder %s156, %s170
      %p172 = scmp.eq.s32.totalorder %s22, 0
      %p173 = por %p171, %p172
      %s175 = sadd.s32 %s174, 1
      %p178 = scmp.eq.s32.totalorder %s16, 7
      %p179 = scmp.ne.s32.totalorder %s174, %s176
      %p180 = scmp.eq.s32.totalorder %s16, 0
      %p181 = por %p179, %p180
      %p182 = scmp.ne.s32.totalorder %s174, %s176
      %p183 = scmp.eq.s32.totalorder %s21, 7
      %p184 = por %p182, %p183
      %p185 = scmp.ne.s32.totalorder %s176, %s177
      %p186 = scmp.eq.s32.totalorder %s21, 0
      %p187 = por %p185, %p186
      %p188 = scmp.ne.s32.totalorder %s176, %s177
      %p189 = scmp.eq.s32.totalorder %s22, 7
      %p190 = por %p188, %p189
      %p192 = scmp.ne.s32.totalorder %s177, %s191
      %p193 = scmp.eq.s32.totalorder %s22, 0
      %p194 = por %p192, %p193
      %s196 = sadd.s32 %s195, 1
      %p199 = scmp.eq.s32.totalorder %s16, 7
      %p200 = scmp.ne.s32.totalorder %s195, %s197
      %p201 = scmp.eq.s32.totalorder %s16, 0
      %p202 = por %p200, %p201
      %p203 = scmp.ne.s32.totalorder %s195, %s197
      %p204 = scmp.eq.s32.totalorder %s21, 7
      %p205 = por %p203, %p204
      %p206 = scmp.ne.s32.totalorder %s197, %s198
      %p207 = scmp.eq.s32.totalorder %s21, 0
      %p208 = por %p206, %p207
      %p209 = scmp.ne.s32.totalorder %s197, %s198
      %p210 = scmp.eq.s32.totalorder %s22, 7
      %p211 = por %p209, %p210
      %p213 = scmp.ne.s32.totalorder %s198, %s212
      %p214 = scmp.eq.s32.totalorder %s22, 0
      %p215 = por %p213, %p214
      %s217 = sadd.s32 %s216, 1
      %p220 = scmp.eq.s32.totalorder %s16, 7
      %p221 = scmp.ne.s32.totalorder %s216, %s218
      %p222 = scmp.eq.s32.totalorder %s16, 0
      %p223 = por %p221, %p222
      %p224 = scmp.ne.s32.totalorder %s216, %s218
      %p225 = scmp.eq.s32.totalorder %s21, 7
      %p226 = por %p224, %p225
      %p227 = scmp.ne.s32.totalorder %s218, %s219
      %p228 = scmp.eq.s32.totalorder %s21, 0
      %p229 = por %p227, %p228
      %p230 = scmp.ne.s32.totalorder %s218, %s219
      %p231 = scmp.eq.s32.totalorder %s22, 7
      %p232 = por %p230, %p231
      %p234 = scmp.ne.s32.totalorder %s219, %s233
      %p235 = scmp.eq.s32.totalorder %s22, 0
      %p236 = por %p234, %p235
      %s238 = sadd.s32 %s237, 1
      %p241 = scmp.eq.s32.totalorder %s16, 7
      %p242 = scmp.ne.s32.totalorder %s237, %s239
      %p243 = scmp.eq.s32.totalorder %s16, 0
      %p244 = por %p242, %p243
      %p245 = scmp.ne.s32.totalorder %s237, %s239
      %p246 = scmp.eq.s32.totalorder %s21, 7
      %p247 = por %p245, %p246
      %p248 = scmp.ne.s32.totalorder %s239, %s240
      %p249 = scmp.eq.s32.totalorder %s21, 0
      %p250 = por %p248, %p249
      %p251 = scmp.ne.s32.totalorder %s239, %s240
      %p252 = scmp.eq.s32.totalorder %s22, 7
      %p253 = por %p251, %p252
      %p255 = scmp.ne.s32.totalorder %s240, %s254
      %p256 = scmp.eq.s32.totalorder %s22, 0
      %p257 = por %p255, %p256
      %s258 = ssub.s32 %s23, %s35
      %s259 = ssub.s32 %s24, %s31
      %s260 = sor.u32 %s258, %s259
      %p261 = scmp.eq.s32.totalorder %s260, 0
      %s263 = sadd.s32 %s262, 1
      %s264 = scalar_select %p261, %s262, %s263
      %p267 = pneg %p261
      %p268 = scmp.eq.s32.totalorder %s16, 7
      %p269 = por %p267, %p268
      %p270 = scmp.ne.s32.totalorder %s262, %s265
      %p271 = scmp.eq.s32.totalorder %s16, 0
      %p272 = por %p270, %p271
      %p273 = scmp.ne.s32.totalorder %s262, %s265
      %p274 = scmp.eq.s32.totalorder %s21, 7
      %p275 = por %p273, %p274
      %p276 = scmp.ne.s32.totalorder %s265, %s266
      %p277 = scmp.eq.s32.totalorder %s21, 0
      %p278 = por %p276, %p277
      %p279 = scmp.ne.s32.totalorder %s265, %s266
      %p280 = scmp.eq.s32.totalorder %s22, 7
      %p281 = por %p279, %p280
      %p283 = scmp.ne.s32.totalorder %s266, %s282
      %p284 = scmp.eq.s32.totalorder %s22, 0
      %p285 = por %p283, %p284
      %p286 = scmp.le.s32.totalorder 1, %s16
      %p287 = scmp.lt.s32.totalorder %s16, 9
      %p288 = pnand %p286, %p287
      %p289 = pneg %p288
      // Predicated region
      $region9: #{spectral_attention_pallas.3} parent=5 // pred_check
        _
      $region10: #{spectral_attention_pallas.3} parent=5 // pred_check_branch
        %291 = sbr.rel (%p288) target = $region12
      $region11: #{spectral_attention_pallas.3} parent=5 // pred_region
        %s292 = ssub.s32 %s16, 1
        // Predicated region
        $region13: #{spectral_attention_pallas.3} parent=11 // pred_check
          %p293 = pneg %p103
        $region14: #{spectral_attention_pallas.3} parent=11 // pred_check_branch
          %295 = sbr.rel (%p293) target = $region16
        $region15: #{spectral_attention_pallas.3} parent=11 // pred_region
          _
        $region16: #{spectral_attention_pallas.3} parent=11 // pred_fallthru
          _
        // Predicated region
        $region17: #{spectral_attention_pallas.3} parent=11 // pred_check
          %p296 = pneg %p124
        $region18: #{spectral_attention_pallas.3} parent=11 // pred_check_branch
          %298 = sbr.rel (%p296) target = $region20
        $region19: #{spectral_attention_pallas.3} parent=11 // pred_region
          _
        $region20: #{spectral_attention_pallas.3} parent=11 // pred_fallthru
          _
        // Predicated region
        $region21: #{spectral_attention_pallas.3} parent=11 // pred_check
          %p299 = pneg %p145
        $region22: #{spectral_attention_pallas.3} parent=11 // pred_check_branch
          %301 = sbr.rel (%p299) target = $region24
        $region23: #{spectral_attention_pallas.3} parent=11 // pred_region
          _
        $region24: #{spectral_attention_pallas.3} parent=11 // pred_fallthru
          _
        // Predicated region
        $region25: #{spectral_attention_pallas.3} parent=11 // pred_check
          %p302 = pneg %p166
        $region26: #{spectral_attention_pallas.3} parent=11 // pred_check_branch
          %304 = sbr.rel (%p302) target = $region28
        $region27: #{spectral_attention_pallas.3} parent=11 // pred_region
          _
        $region28: #{spectral_attention_pallas.3} parent=11 // pred_fallthru
          _
        // Predicated region
        $region29: #{spectral_attention_pallas.3} parent=11 // pred_check
          %p305 = pneg %p187
        $region30: #{spectral_attention_pallas.3} parent=11 // pred_check_branch
          %307 = sbr.rel (%p305) target = $region32
        $region31: #{spectral_attention_pallas.3} parent=11 // pred_region
          _
        $region32: #{spectral_attention_pallas.3} parent=11 // pred_fallthru
          _
        // Predicated region
        $region33: #{spectral_attention_pallas.3} parent=11 // pred_check
          %p308 = pneg %p208
        $region34: #{spectral_attention_pallas.3} parent=11 // pred_check_branch
          %310 = sbr.rel (%p308) target = $region36
        $region35: #{spectral_attention_pallas.3} parent=11 // pred_region
          _
        $region36: #{spectral_attention_pallas.3} parent=11 // pred_fallthru
          _
        // Predicated region
        $region37: #{spectral_attention_pallas.3} parent=11 // pred_check
          %p311 = pneg %p229
        $region38: #{spectral_attention_pallas.3} parent=11 // pred_check_branch
          %313 = sbr.rel (%p311) target = $region40
        $region39: #{spectral_attention_pallas.3} parent=11 // pred_region
          _
        $region40: #{spectral_attention_pallas.3} parent=11 // pred_fallthru
          _
        // Predicated region
        $region41: #{spectral_attention_pallas.3} parent=11 // pred_check
          %p314 = pneg %p250
        $region42: #{spectral_attention_pallas.3} parent=11 // pred_check_branch
          %316 = sbr.rel (%p314) target = $region44
        $region43: #{spectral_attention_pallas.3} parent=11 // pred_region
          _
        $region44: #{spectral_attention_pallas.3} parent=11 // pred_fallthru
          _
      $region12: #{spectral_attention_pallas.3} parent=5 // pred_fallthru
        _
      %p317 = scmp.lt.s32.totalorder %s16, 8
      // Predicated region
      $region45: #{spectral_attention_pallas.3} parent=5 // pred_check
        %p318 = pneg %p317
      $region46: #{spectral_attention_pallas.3} parent=5 // pred_check_branch
        %320 = sbr.rel (%p318) target = $region48
      $region47: #{spectral_attention_pallas.3} parent=5 // pred_region
        // Predicated region
        $region49: #{spectral_attention_pallas.3} parent=47 // pred_check
          %p321 = pneg %p48
        $region50: #{spectral_attention_pallas.3} parent=47 // pred_check_branch
          %323 = sbr.rel (%p321) target = $region52
        $region51: #{spectral_attention_pallas.3} parent=47 // pred_region
          %p324 = scmp.lt.s32.totalorder %s23, 1
          %s325 = scalar_select %p324, %s23, 1
          %s326 = smul.addr %s325, 16
          %s327 = smul.addr %s326, 8
          %s328 = scalar_lea.vmem %s0, %s327
        $region52: #{spectral_attention_pallas.3} parent=47 // pred_fallthru
          _
        // Predicated region
        $region53: #{spectral_attention_pallas.3} parent=47 // pred_check
          %p329 = pneg %p76
        $region54: #{spectral_attention_pallas.3} parent=47 // pred_check_branch
          %331 = sbr.rel (%p329) target = $region56
        $region55: #{spectral_attention_pallas.3} parent=47 // pred_region
          %s332 = sand.u32 %s66, 1
          %s333 = sand.u32 %s66, 1
          %s334 = smul.addr %s333, 32
          %s335 = scalar_lea.vmem [#allocation2], %s334
          %s336 = smul.u32 2, %s24
          %s337 = smul.addr %s23, 16
          %s338 = sadd.s32 %s336, %s337
          %s339 = smul.addr %s338, 8
          %s340 = scalar_lea.vmem %s1, %s339
          // Predicated region
          $region57: #{spectral_attention_pallas.3} parent=55 // pred_check
            _
          $region58: #{spectral_attention_pallas.3} parent=55 // pred_check_branch
            %342 = sbr.rel (0) target = $region60
          $region59: #{spectral_attention_pallas.3} parent=55 // pred_region
            // Predicated region
            $region61: #{spectral_attention_pallas.3} parent=59 // pred_check
              _
            $region62: #{spectral_attention_pallas.3} parent=59 // pred_check_branch
              %344 = sbr.rel (0) target = $region64
            $region63: #{spectral_attention_pallas.3} parent=59 // pred_region
              loop: start=0, step=1, limit=1
              $region65: #{spectral_attention_pallas.3} parent=63 // loop_pre_header
                _
              $region66: #{spectral_attention_pallas.3} parent=63 // loop_header
                %s346 = sphi 0, %s350
                %p347 = scmp.ge.s32.totalorder %s346, 1
                %s351 = sphi %s340, %s340
                %s352 = sphi %s335, %s335
              $region67: #{spectral_attention_pallas.3} parent=63 // loop_header_branch
                %349 = sbr.rel (%p347) target = $region71
              $region68: #{spectral_attention_pallas.3} parent=63 // loop_body
                %v353 = vld [vmem:[%s351] sm:$0xff]
                %354 = vst [vmem:[%s352] sm:$0xff] %v353
                %v355 = vld [vmem:[%s351 + $0x8] sm:$0xff]
                %356 = vst [vmem:[%s352 + $0x8] sm:$0xff] %v355
                %v357 = vld [vmem:[%s351 + $0x40] sm:$0xff]
                %358 = vst [vmem:[%s352 + $0x10] sm:$0xff] %v357
                %v359 = vld [vmem:[%s351 + $0x48] sm:$0xff]
                %360 = vst [vmem:[%s352 + $0x18] sm:$0xff] %v359
              $region69: #{spectral_attention_pallas.3} parent=63 // loop_footer
                %s350 = sadd.s32 1, %s346
              $region70: #{spectral_attention_pallas.3} parent=63 // loop_footer_branch
                %345 = sbr.rel target = $region66
              $region71: #{spectral_attention_pallas.3} parent=63 // loop_exit
                _
            $region64: #{spectral_attention_pallas.3} parent=59 // pred_fallthru
              _
            // Predicated region
            $region72: #{spectral_attention_pallas.3} parent=59 // pred_check
              _
            $region73: #{spectral_attention_pallas.3} parent=59 // pred_check_branch
              %362 = sbr.rel target = $region75
            $region74: #{spectral_attention_pallas.3} parent=59 // pred_region
              _
            $region75: #{spectral_attention_pallas.3} parent=59 // pred_fallthru
              _
          $region60: #{spectral_attention_pallas.3} parent=55 // pred_fallthru
            _
          %363 = vnop
        $region56: #{spectral_attention_pallas.3} parent=47 // pred_fallthru
          _
      $region48: #{spectral_attention_pallas.3} parent=5 // pred_fallthru
        _
      %p364 = scmp.le.s32.totalorder 1, %s16
      %p365 = scmp.lt.s32.totalorder %s16, 9
      %p366 = pnand %p364, %p365
      %p367 = pneg %p366
      // Predicated region
      $region76: #{spectral_attention_pallas.3} parent=5 // pred_check
        _
      $region77: #{spectral_attention_pallas.3} parent=5 // pred_check_branch
        %369 = sbr.rel (%p366) target = $region79
      $region78: #{spectral_attention_pallas.3} parent=5 // pred_region
        %s370 = ssub.s32 %s16, 1
        %s371 = sand.u32 %s69, 1
        %s372 = sand.u32 %s69, 1
        %s373 = smul.addr %s372, 32
        %s374 = scalar_lea.vmem [#allocation2], %s373
        // Predicated region
        $region80: #{spectral_attention_pallas.3} parent=78 // pred_check
          %p375 = pneg %p82
        $region81: #{spectral_attention_pallas.3} parent=78 // pred_check_branch
          %377 = sbr.rel (%p375) target = $region83
        $region82: #{spectral_attention_pallas.3} parent=78 // pred_region
          _
        $region83: #{spectral_attention_pallas.3} parent=78 // pred_fallthru
          _
        %p378 = scmp.lt.s32.totalorder %s25, 1
        %s379 = scalar_select %p378, %s25, 1
        %s380 = smul.addr %s379, 16
        %s381 = smul.addr %s380, 8
        %s382 = scalar_lea.vmem %s0, %s381
        %p383 = pneg %p54
        %p384 = pneg %p51
        %s385 = sand.u32 %s69, 1
        %s386 = sand.u32 %s69, 1
        %s387 = smul.addr %s386, 32
        %s388 = scalar_lea.vmem [#allocation2], %s387
        %p389 = pneg %p82
        %p390 = pneg %p79
        %p391 = pneg %p103
        %p392 = pneg %p100
        %p393 = pneg %p124
        %p394 = pneg %p121
        %p395 = pneg %p145
        %p396 = pneg %p142
        %p397 = pneg %p166
        %p398 = pneg %p163
        %p399 = pneg %p187
        %p400 = pneg %p184
        %p401 = pneg %p208
        %p402 = pneg %p205
        %p403 = pneg %p229
        %p404 = pneg %p226
        %p405 = pneg %p250
        %p406 = pneg %p247
        %p407 = pneg %p278
        %p408 = pneg %p275
        %s409 = sand.u32 %s265, 1
        %s410 = sand.u32 %s265, 1
        %s411 = smul.addr %s410, 32
        %s412 = scalar_lea.vmem [#allocation3], %s411
        %p413 = scmp.lt.s32.totalorder %s25, 1
        %s414 = scalar_select %p413, %s25, 1
        %s415 = smul.addr %s414, 16
        %s416 = smul.addr %s415, 8
        %s417 = scalar_lea.vmem %s0, %s416
        %s418 = smul.u32 2, %s26
        %s419 = smul.u32 2, %s26
        %v421 = vld [vmem:[%s417] sm:$0xff]
        %v422 = vld [vmem:[%s417 + $0x8] sm:$0xff]
        %v423 = vld [vmem:[%s417 + $0x10] sm:$0xff]
        %v424 = vld [vmem:[%s417 + $0x18] sm:$0xff]
        %v425 = vld [vmem:[%s417 + $0x20] sm:$0xff]
        %v426 = vld [vmem:[%s417 + $0x28] sm:$0xff]
        %v427 = vld [vmem:[%s417 + $0x30] sm:$0xff]
        %v428 = vld [vmem:[%s417 + $0x38] sm:$0xff]
        %v429 = vld [vmem:[%s417 + $0x40] sm:$0xff]
        %v430 = vld [vmem:[%s417 + $0x48] sm:$0xff]
        %v431 = vld [vmem:[%s417 + $0x50] sm:$0xff]
        %v432 = vld [vmem:[%s417 + $0x58] sm:$0xff]
        %v433 = vld [vmem:[%s417 + $0x60] sm:$0xff]
        %v434 = vld [vmem:[%s417 + $0x68] sm:$0xff]
        %v435 = vld [vmem:[%s417 + $0x70] sm:$0xff]
        %v436 = vld [vmem:[%s417 + $0x78] sm:$0xff]
        %v437 = vpack.c.bf16 %v429, %v421
        %v438 = vpack.c.bf16 %v430, %v422
        %v439 = vpack.c.bf16 %v431, %v423
        %v440 = vpack.c.bf16 %v432, %v424
        %v441 = vpack.c.bf16 %v433, %v425
        %v442 = vpack.c.bf16 %v434, %v426
        %v443 = vpack.c.bf16 %v435, %v427
        %v444 = vpack.c.bf16 %v436, %v428
        %v445 = vld [vmem:[%s374] sm:$0xff]
        %v446 = vld [vmem:[%s374 + $0x8] sm:$0xff]
        %v447 = vld [vmem:[%s374 + $0x10] sm:$0xff]
        %v448 = vld [vmem:[%s374 + $0x18] sm:$0xff]
        %v449 = vpack.c.bf16 %v447, %v445
        %v450 = vpack.c.bf16 %v448, %v446
        loop: start=0, step=1, limit=4
        $region84: #{spectral_attention_pallas.3} parent=78 // loop_pre_header
          _
        $region85: #{spectral_attention_pallas.3} parent=78 // loop_header
          %s452 = sphi 0, %s456
          %p453 = scmp.ge.s32.totalorder %s452, 4
          %v457 = vphi 0.0, %v3757
          %v458 = vphi 0.0, %v3758
          %v459 = vphi 0.0, %v3759
          %v460 = vphi 0.0, %v3760
        $region86: #{spectral_attention_pallas.3} parent=78 // loop_header_branch
          %455 = sbr.rel (%p453) target = $region90
        $region87: #{spectral_attention_pallas.3} parent=78 // loop_body
          %s461 = smul.addr %s452, 2
          %s462 = scalar_lea.vmem %s2, %s461
          %v463 = vld [vmem:[%s462] sm:$0x3]
          %s464 = smul.u32 %s452, 4
          %s465 = scalar_lea.vmem %s5, %s464
          %v466 = vld [vmem:[%s465] sm:$0xf]
          %468 = vset.pattern.permute.xlu0 0
          %469 = vperm.xlu0 %468, %v466
          %v470 = vpop.permute.xlu0 %469
          %vm472 = vcmask 130048
          %v474 = vsel %vm472, %v463, 0
          %476 = vmatprep.subr.bf16.mxu0 0
          %477 = vmatpush1.bf16.msra.mxu0 0
          %478 = vmatprep.subr.bf16.mxu0 0
          %479 = vmatpush1.bf16.msra.mxu0 0
          %480 = vmatprep.subr.bf16.mxu0 0
          %481 = vmatpush1.bf16.msra.mxu0 0
          %482 = vmatprep.subr.bf16.mxu0 0
          %483 = vmatpush1.bf16.msra.mxu0 0
          %484 = vmatprep.subr.bf16.mxu0 0
          %485 = vmatpush1.bf16.msra.mxu0 0
          %486 = vmatprep.subr.bf16.mxu0 0
          %487 = vmatpush1.bf16.msra.mxu0 0
          %488 = vmatprep.subr.bf16.mxu0 0
          %489 = vmatpush1.bf16.msra.mxu0 0
          %490 = vmatprep.subr.bf16.mxu0 %v450
          %491 = vmatpush1.bf16.msra.mxu0 %v449
          %492 = vmatprep.subr.bf16.mxu0 0
          %493 = vmatpush2.bf16.msra.mxu0 0
          %494 = vmatprep.subr.bf16.mxu0 0
          %495 = vmatpush2.bf16.msra.mxu0 0
          %496 = vmatprep.subr.bf16.mxu0 0
          %497 = vmatpush2.bf16.msra.mxu0 0
          %498 = vmatprep.subr.bf16.mxu0 0
          %499 = vmatpush2.bf16.msra.mxu0 0
          %500 = vmatprep.subr.bf16.mxu0 0
          %501 = vmatpush2.bf16.msra.mxu0 0
          %502 = vmatprep.subr.bf16.mxu0 0
          %503 = vmatpush2.bf16.msra.mxu0 0
          %504 = vmatprep.subr.bf16.mxu0 0
          %505 = vmatpush2.bf16.msra.mxu0 0
          %506 = vmatprep.subr.bf16.mxu0 0
          %507 = vmatpush2.bf16.msra.mxu0 0
          %508 = vmatprep.mubr.bf16.mxu0 0
          %509 = vmatmul.mubr.bf16.gmra.mxu0 %v474
          %v510 = vpop.f32.mrf.mxu0
          %v511 = vadd.f32 %v470, %v510
          %v512 = vpop.f32.mrf.mxu0
          %v513 = vadd.f32 %v470, %v512
          %v514 = vpop.f32.mrf.mxu0
          %v515 = vpop.f32.mrf.mxu0
          %516 = vdwg.mxu0
          %s517 = smul.addr %s452, 2
          %s518 = scalar_lea.vmem %s3, %s517
          %v519 = vld [vmem:[%s518] sm:$0x3]
          %s520 = scalar_lea.vmem %s6, %s464
          %v521 = vld [vmem:[%s520] sm:$0xf]
          %523 = vset.pattern.permute.xlu0 0
          %524 = vperm.xlu0 %523, %v521
          %v525 = vpop.permute.xlu0 %524
          %v528 = vsel %vm472, %v519, 0
          %530 = vmatprep.subr.bf16.mxu0 0
          %531 = vmatpush1.bf16.msra.mxu0 0
          %532 = vmatprep.subr.bf16.mxu0 0
          %533 = vmatpush1.bf16.msra.mxu0 0
          %534 = vmatprep.subr.bf16.mxu0 0
          %535 = vmatpush1.bf16.msra.mxu0 0
          %536 = vmatprep.subr.bf16.mxu0 0
          %537 = vmatpush1.bf16.msra.mxu0 0
          %538 = vmatprep.subr.bf16.mxu0 0
          %539 = vmatpush1.bf16.msra.mxu0 0
          %540 = vmatprep.subr.bf16.mxu0 0
          %541 = vmatpush1.bf16.msra.mxu0 0
          %542 = vmatprep.subr.bf16.mxu0 0
          %543 = vmatpush1.bf16.msra.mxu0 0
          %544 = vmatprep.subr.bf16.mxu0 %v438
          %545 = vmatpush1.bf16.msra.mxu0 %v437
          %546 = vmatprep.subr.bf16.mxu0 0
          %547 = vmatpush2.bf16.msra.mxu0 0
          %548 = vmatprep.subr.bf16.mxu0 0
          %549 = vmatpush2.bf16.msra.mxu0 0
          %550 = vmatprep.subr.bf16.mxu0 0
          %551 = vmatpush2.bf16.msra.mxu0 0
          %552 = vmatprep.subr.bf16.mxu0 0
          %553 = vmatpush2.bf16.msra.mxu0 0
          %554 = vmatprep.subr.bf16.mxu0 0
          %555 = vmatpush2.bf16.msra.mxu0 0
          %556 = vmatprep.subr.bf16.mxu0 0
          %557 = vmatpush2.bf16.msra.mxu0 0
          %558 = vmatprep.subr.bf16.mxu0 0
          %559 = vmatpush2.bf16.msra.mxu0 0
          %560 = vmatprep.subr.bf16.mxu0 0
          %561 = vmatpush2.bf16.msra.mxu0 0
          %562 = vmatprep.mubr.bf16.mxu0 0
          %563 = vmatmul.mubr.bf16.gmra.mxu0 %v528
          %v564 = vpop.f32.mrf.mxu0
          %v565 = vadd.f32 %v525, %v564
          %v566 = vpop.f32.mrf.mxu0
          %v567 = vadd.f32 %v525, %v566
          %v568 = vpop.f32.mrf.mxu0
          %v569 = vpop.f32.mrf.mxu0
          %570 = vdwg.mxu0
          %571 = vmatprep.subr.bf16.mxu0 0
          %572 = vmatpush1.bf16.msra.mxu0 0
          %573 = vmatprep.subr.bf16.mxu0 0
          %574 = vmatpush1.bf16.msra.mxu0 0
          %575 = vmatprep.subr.bf16.mxu0 0
          %576 = vmatpush1.bf16.msra.mxu0 0
          %577 = vmatprep.subr.bf16.mxu0 0
          %578 = vmatpush1.bf16.msra.mxu0 0
          %579 = vmatprep.subr.bf16.mxu0 0
          %580 = vmatpush1.bf16.msra.mxu0 0
          %581 = vmatprep.subr.bf16.mxu0 0
          %582 = vmatpush1.bf16.msra.mxu0 0
          %583 = vmatprep.subr.bf16.mxu0 0
          %584 = vmatpush1.bf16.msra.mxu0 0
          %585 = vmatprep.subr.bf16.mxu0 %v440
          %586 = vmatpush1.bf16.msra.mxu0 %v439
          %587 = vmatprep.subr.bf16.mxu0 0
          %588 = vmatpush2.bf16.msra.mxu0 0
          %589 = vmatprep.subr.bf16.mxu0 0
          %590 = vmatpush2.bf16.msra.mxu0 0
          %591 = vmatprep.subr.bf16.mxu0 0
          %592 = vmatpush2.bf16.msra.mxu0 0
          %593 = vmatprep.subr.bf16.mxu0 0
          %594 = vmatpush2.bf16.msra.mxu0 0
          %595 = vmatprep.subr.bf16.mxu0 0
          %596 = vmatpush2.bf16.msra.mxu0 0
          %597 = vmatprep.subr.bf16.mxu0 0
          %598 = vmatpush2.bf16.msra.mxu0 0
          %599 = vmatprep.subr.bf16.mxu0 0
          %600 = vmatpush2.bf16.msra.mxu0 0
          %601 = vmatprep.subr.bf16.mxu0 0
          %602 = vmatpush2.bf16.msra.mxu0 0
          %603 = vmatprep.mubr.bf16.mxu0 0
          %604 = vmatmul.mubr.bf16.gmra.mxu0 %v528
          %v605 = vpop.f32.mrf.mxu0
          %v606 = vadd.f32 %v525, %v605
          %v607 = vpop.f32.mrf.mxu0
          %v608 = vadd.f32 %v525, %v607
          %v609 = vpop.f32.mrf.mxu0
          %v610 = vpop.f32.mrf.mxu0
          %611 = vdwg.mxu0
          %612 = vmatprep.subr.bf16.mxu0 0
          %613 = vmatpush1.bf16.msra.mxu0 0
          %614 = vmatprep.subr.bf16.mxu0 0
          %615 = vmatpush1.bf16.msra.mxu0 0
          %616 = vmatprep.subr.bf16.mxu0 0
          %617 = vmatpush1.bf16.msra.mxu0 0
          %618 = vmatprep.subr.bf16.mxu0 0
          %619 = vmatpush1.bf16.msra.mxu0 0
          %620 = vmatprep.subr.bf16.mxu0 0
          %621 = vmatpush1.bf16.msra.mxu0 0
          %622 = vmatprep.subr.bf16.mxu0 0
          %623 = vmatpush1.bf16.msra.mxu0 0
          %624 = vmatprep.subr.bf16.mxu0 0
          %625 = vmatpush1.bf16.msra.mxu0 0
          %626 = vmatprep.subr.bf16.mxu0 %v442
          %627 = vmatpush1.bf16.msra.mxu0 %v441
          %628 = vmatprep.subr.bf16.mxu0 0
          %629 = vmatpush2.bf16.msra.mxu0 0
          %630 = vmatprep.subr.bf16.mxu0 0
          %631 = vmatpush2.bf16.msra.mxu0 0
          %632 = vmatprep.subr.bf16.mxu0 0
          %633 = vmatpush2.bf16.msra.mxu0 0
          %634 = vmatprep.subr.bf16.mxu0 0
          %635 = vmatpush2.bf16.msra.mxu0 0
          %636 = vmatprep.subr.bf16.mxu0 0
          %637 = vmatpush2.bf16.msra.mxu0 0
          %638 = vmatprep.subr.bf16.mxu0 0
          %639 = vmatpush2.bf16.msra.mxu0 0
          %640 = vmatprep.subr.bf16.mxu0 0
          %641 = vmatpush2.bf16.msra.mxu0 0
          %642 = vmatprep.subr.bf16.mxu0 0
          %643 = vmatpush2.bf16.msra.mxu0 0
          %644 = vmatprep.mubr.bf16.mxu0 0
          %645 = vmatmul.mubr.bf16.gmra.mxu0 %v528
          %v646 = vpop.f32.mrf.mxu0
          %v647 = vadd.f32 %v525, %v646
          %v648 = vpop.f32.mrf.mxu0
          %v649 = vadd.f32 %v525, %v648
          %v650 = vpop.f32.mrf.mxu0
          %v651 = vpop.f32.mrf.mxu0
          %652 = vdwg.mxu0
          %653 = vmatprep.subr.bf16.mxu0 0
          %654 = vmatpush1.bf16.msra.mxu0 0
          %655 = vmatprep.subr.bf16.mxu0 0
          %656 = vmatpush1.bf16.msra.mxu0 0
          %657 = vmatprep.subr.bf16.mxu0 0
          %658 = vmatpush1.bf16.msra.mxu0 0
          %659 = vmatprep.subr.bf16.mxu0 0
          %660 = vmatpush1.bf16.msra.mxu0 0
          %661 = vmatprep.subr.bf16.mxu0 0
          %662 = vmatpush1.bf16.msra.mxu0 0
          %663 = vmatprep.subr.bf16.mxu0 0
          %664 = vmatpush1.bf16.msra.mxu0 0
          %665 = vmatprep.subr.bf16.mxu0 0
          %666 = vmatpush1.bf16.msra.mxu0 0
          %667 = vmatprep.subr.bf16.mxu0 %v444
          %668 = vmatpush1.bf16.msra.mxu0 %v443
          %669 = vmatprep.subr.bf16.mxu0 0
          %670 = vmatpush2.bf16.msra.mxu0 0
          %671 = vmatprep.subr.bf16.mxu0 0
          %672 = vmatpush2.bf16.msra.mxu0 0
          %673 = vmatprep.subr.bf16.mxu0 0
          %674 = vmatpush2.bf16.msra.mxu0 0
          %675 = vmatprep.subr.bf16.mxu0 0
          %676 = vmatpush2.bf16.msra.mxu0 0
          %677 = vmatprep.subr.bf16.mxu0 0
          %678 = vmatpush2.bf16.msra.mxu0 0
          %679 = vmatprep.subr.bf16.mxu0 0
          %680 = vmatpush2.bf16.msra.mxu0 0
          %681 = vmatprep.subr.bf16.mxu0 0
          %682 = vmatpush2.bf16.msra.mxu0 0
          %683 = vmatprep.subr.bf16.mxu0 0
          %684 = vmatpush2.bf16.msra.mxu0 0
          %685 = vmatprep.mubr.bf16.mxu0 0
          %686 = vmatmul.mubr.bf16.gmra.mxu0 %v528
          %v687 = vpop.f32.mrf.mxu0
          %v688 = vadd.f32 %v525, %v687
          %v689 = vpop.f32.mrf.mxu0
          %v690 = vadd.f32 %v525, %v689
          %v691 = vpop.f32.mrf.mxu0
          %v692 = vpop.f32.mrf.mxu0
          %693 = vdwg.mxu0
          %s694 = smul.addr %s452, 2
          %s695 = scalar_lea.vmem %s4, %s694
          %v696 = vld [vmem:[%s695] sm:$0x3]
          %s697 = scalar_lea.vmem %s7, %s464
          %v698 = vld [vmem:[%s697] sm:$0xf]
          %700 = vset.pattern.permute.xlu0 0
          %701 = vperm.xlu0 %700, %v698
          %v702 = vpop.permute.xlu0 %701
          %v705 = vsel %vm472, %v696, 0
          %707 = vmatprep.subr.bf16.mxu0 0
          %708 = vmatpush1.bf16.msra.mxu0 0
          %709 = vmatprep.subr.bf16.mxu0 0
          %710 = vmatpush1.bf16.msra.mxu0 0
          %711 = vmatprep.subr.bf16.mxu0 0
          %712 = vmatpush1.bf16.msra.mxu0 0
          %713 = vmatprep.subr.bf16.mxu0 0
          %714 = vmatpush1.bf16.msra.mxu0 0
          %715 = vmatprep.subr.bf16.mxu0 0
          %716 = vmatpush1.bf16.msra.mxu0 0
          %717 = vmatprep.subr.bf16.mxu0 0
          %718 = vmatpush1.bf16.msra.mxu0 0
          %719 = vmatprep.subr.bf16.mxu0 0
          %720 = vmatpush1.bf16.msra.mxu0 0
          %721 = vmatprep.subr.bf16.mxu0 %v438
          %722 = vmatpush1.bf16.msra.mxu0 %v437
          %723 = vmatprep.subr.bf16.mxu0 0
          %724 = vmatpush2.bf16.msra.mxu0 0
          %725 = vmatprep.subr.bf16.mxu0 0
          %726 = vmatpush2.bf16.msra.mxu0 0
          %727 = vmatprep.subr.bf16.mxu0 0
          %728 = vmatpush2.bf16.msra.mxu0 0
          %729 = vmatprep.subr.bf16.mxu0 0
          %730 = vmatpush2.bf16.msra.mxu0 0
          %731 = vmatprep.subr.bf16.mxu0 0
          %732 = vmatpush2.bf16.msra.mxu0 0
          %733 = vmatprep.subr.bf16.mxu0 0
          %734 = vmatpush2.bf16.msra.mxu0 0
          %735 = vmatprep.subr.bf16.mxu0 0
          %736 = vmatpush2.bf16.msra.mxu0 0
          %737 = vmatprep.subr.bf16.mxu0 0
          %738 = vmatpush2.bf16.msra.mxu0 0
          %739 = vmatprep.mubr.bf16.mxu0 0
          %740 = vmatmul.mubr.bf16.gmra.mxu0 %v705
          %v741 = vpop.f32.mrf.mxu0
          %v742 = vadd.f32 %v702, %v741
          %v743 = vpop.f32.mrf.mxu0
          %v744 = vadd.f32 %v702, %v743
          %v745 = vpop.f32.mrf.mxu0
          %v746 = vpop.f32.mrf.mxu0
          %747 = vdwg.mxu0
          %748 = vmatprep.subr.bf16.mxu0 0
          %749 = vmatpush1.bf16.msra.mxu0 0
          %750 = vmatprep.subr.bf16.mxu0 0
          %751 = vmatpush1.bf16.msra.mxu0 0
          %752 = vmatprep.subr.bf16.mxu0 0
          %753 = vmatpush1.bf16.msra.mxu0 0
          %754 = vmatprep.subr.bf16.mxu0 0
          %755 = vmatpush1.bf16.msra.mxu0 0
          %756 = vmatprep.subr.bf16.mxu0 0
          %757 = vmatpush1.bf16.msra.mxu0 0
          %758 = vmatprep.subr.bf16.mxu0 0
          %759 = vmatpush1.bf16.msra.mxu0 0
          %760 = vmatprep.subr.bf16.mxu0 0
          %761 = vmatpush1.bf16.msra.mxu0 0
          %762 = vmatprep.subr.bf16.mxu0 %v440
          %763 = vmatpush1.bf16.msra.mxu0 %v439
          %764 = vmatprep.subr.bf16.mxu0 0
          %765 = vmatpush2.bf16.msra.mxu0 0
          %766 = vmatprep.subr.bf16.mxu0 0
          %767 = vmatpush2.bf16.msra.mxu0 0
          %768 = vmatprep.subr.bf16.mxu0 0
          %769 = vmatpush2.bf16.msra.mxu0 0
          %770 = vmatprep.subr.bf16.mxu0 0
          %771 = vmatpush2.bf16.msra.mxu0 0
          %772 = vmatprep.subr.bf16.mxu0 0
          %773 = vmatpush2.bf16.msra.mxu0 0
          %774 = vmatprep.subr.bf16.mxu0 0
          %775 = vmatpush2.bf16.msra.mxu0 0
          %776 = vmatprep.subr.bf16.mxu0 0
          %777 = vmatpush2.bf16.msra.mxu0 0
          %778 = vmatprep.subr.bf16.mxu0 0
          %779 = vmatpush2.bf16.msra.mxu0 0
          %780 = vmatprep.mubr.bf16.mxu0 0
          %781 = vmatmul.mubr.bf16.gmra.mxu0 %v705
          %v782 = vpop.f32.mrf.mxu0
          %v783 = vadd.f32 %v702, %v782
          %v784 = vpop.f32.mrf.mxu0
          %v785 = vadd.f32 %v702, %v784
          %v786 = vpop.f32.mrf.mxu0
          %v787 = vpop.f32.mrf.mxu0
          %788 = vdwg.mxu0
          %789 = vmatprep.subr.bf16.mxu0 0
          %790 = vmatpush1.bf16.msra.mxu0 0
          %791 = vmatprep.subr.bf16.mxu0 0
          %792 = vmatpush1.bf16.msra.mxu0 0
          %793 = vmatprep.subr.bf16.mxu0 0
          %794 = vmatpush1.bf16.msra.mxu0 0
          %795 = vmatprep.subr.bf16.mxu0 0
          %796 = vmatpush1.bf16.msra.mxu0 0
          %797 = vmatprep.subr.bf16.mxu0 0
          %798 = vmatpush1.bf16.msra.mxu0 0
          %799 = vmatprep.subr.bf16.mxu0 0
          %800 = vmatpush1.bf16.msra.mxu0 0
          %801 = vmatprep.subr.bf16.mxu0 0
          %802 = vmatpush1.bf16.msra.mxu0 0
          %803 = vmatprep.subr.bf16.mxu0 %v442
          %804 = vmatpush1.bf16.msra.mxu0 %v441
          %805 = vmatprep.subr.bf16.mxu0 0
          %806 = vmatpush2.bf16.msra.mxu0 0
          %807 = vmatprep.subr.bf16.mxu0 0
          %808 = vmatpush2.bf16.msra.mxu0 0
          %809 = vmatprep.subr.bf16.mxu0 0
          %810 = vmatpush2.bf16.msra.mxu0 0
          %811 = vmatprep.subr.bf16.mxu0 0
          %812 = vmatpush2.bf16.msra.mxu0 0
          %813 = vmatprep.subr.bf16.mxu0 0
          %814 = vmatpush2.bf16.msra.mxu0 0
          %815 = vmatprep.subr.bf16.mxu0 0
          %816 = vmatpush2.bf16.msra.mxu0 0
          %817 = vmatprep.subr.bf16.mxu0 0
          %818 = vmatpush2.bf16.msra.mxu0 0
          %819 = vmatprep.subr.bf16.mxu0 0
          %820 = vmatpush2.bf16.msra.mxu0 0
          %821 = vmatprep.mubr.bf16.mxu0 0
          %822 = vmatmul.mubr.bf16.gmra.mxu0 %v705
          %v823 = vpop.f32.mrf.mxu0
          %v824 = vadd.f32 %v702, %v823
          %v825 = vpop.f32.mrf.mxu0
          %v826 = vadd.f32 %v702, %v825
          %v827 = vpop.f32.mrf.mxu0
          %v828 = vpop.f32.mrf.mxu0
          %829 = vdwg.mxu0
          %830 = vmatprep.subr.bf16.mxu0 0
          %831 = vmatpush1.bf16.msra.mxu0 0
          %832 = vmatprep.subr.bf16.mxu0 0
          %833 = vmatpush1.bf16.msra.mxu0 0
          %834 = vmatprep.subr.bf16.mxu0 0
          %835 = vmatpush1.bf16.msra.mxu0 0
          %836 = vmatprep.subr.bf16.mxu0 0
          %837 = vmatpush1.bf16.msra.mxu0 0
          %838 = vmatprep.subr.bf16.mxu0 0
          %839 = vmatpush1.bf16.msra.mxu0 0
          %840 = vmatprep.subr.bf16.mxu0 0
          %841 = vmatpush1.bf16.msra.mxu0 0
          %842 = vmatprep.subr.bf16.mxu0 0
          %843 = vmatpush1.bf16.msra.mxu0 0
          %844 = vmatprep.subr.bf16.mxu0 %v444
          %845 = vmatpush1.bf16.msra.mxu0 %v443
          %846 = vmatprep.subr.bf16.mxu0 0
          %847 = vmatpush2.bf16.msra.mxu0 0
          %848 = vmatprep.subr.bf16.mxu0 0
          %849 = vmatpush2.bf16.msra.mxu0 0
          %850 = vmatprep.subr.bf16.mxu0 0
          %851 = vmatpush2.bf16.msra.mxu0 0
          %852 = vmatprep.subr.bf16.mxu0 0
          %853 = vmatpush2.bf16.msra.mxu0 0
          %854 = vmatprep.subr.bf16.mxu0 0
          %855 = vmatpush2.bf16.msra.mxu0 0
          %856 = vmatprep.subr.bf16.mxu0 0
          %857 = vmatpush2.bf16.msra.mxu0 0
          %858 = vmatprep.subr.bf16.mxu0 0
          %859 = vmatpush2.bf16.msra.mxu0 0
          %860 = vmatprep.subr.bf16.mxu0 0
          %861 = vmatpush2.bf16.msra.mxu0 0
          %862 = vmatprep.mubr.bf16.mxu0 0
          %863 = vmatmul.mubr.bf16.gmra.mxu0 %v705
          %v864 = vpop.f32.mrf.mxu0
          %v865 = vadd.f32 %v702, %v864
          %v866 = vpop.f32.mrf.mxu0
          %v867 = vadd.f32 %v702, %v866
          %v868 = vpop.f32.mrf.mxu0
          %v869 = vpop.f32.mrf.mxu0
          %870 = vdwg.mxu0
          %v871 = vmul.f32 %v511, 0.5
          %v872 = vmul.f32 %v513, 0.5
          %v873 = vpack.c.bf16 %v871, %v871
          %v874 = vpack.c.bf16 %v872, %v872
          %v875 = vpack.c.bf16 %v565, %v565
          %v876 = vpack.c.bf16 %v567, %v567
          %v877 = vpack.c.bf16 %v606, %v606
          %v878 = vpack.c.bf16 %v608, %v608
          %v879 = vpack.c.bf16 %v647, %v647
          %v880 = vpack.c.bf16 %v649, %v649
          %v881 = vpack.c.bf16 %v688, %v688
          %v882 = vpack.c.bf16 %v690, %v690
          %883 = vxpose.xlu0.c.b16.start [1/8] %v873, 128
          %884 = vxpose.xlu0.c.b16.cont [2/8] 0, 128
          %885 = vxpose.xlu0.c.b16.cont [3/8] 0, 128
          %886 = vxpose.xlu0.c.b16.cont [4/8] 0, 128
          %887 = vxpose.xlu0.c.b16.cont [5/8] 0, 128
          %888 = vxpose.xlu0.c.b16.cont [6/8] 0, 128
          %889 = vxpose.xlu0.c.b16.cont [7/8] 0, 128
          %890 = vxpose.xlu0.c.b16.end [8/8] 0, 128
          %v891 = vpop.trf.xlu0
          %v892 = vpop.trf.xlu0
          %v893 = vpop.trf.xlu0
          %v894 = vpop.trf.xlu0
          %v895 = vpop.trf.xlu0
          %v896 = vpop.trf.xlu0
          %v897 = vpop.trf.xlu0
          %v898 = vpop.trf.xlu0
          %899 = vxpose.xlu0.c.b16.start [1/8] %v874, 128
          %900 = vxpose.xlu0.c.b16.cont [2/8] 0, 128
          %901 = vxpose.xlu0.c.b16.cont [3/8] 0, 128
          %902 = vxpose.xlu0.c.b16.cont [4/8] 0, 128
          %903 = vxpose.xlu0.c.b16.cont [5/8] 0, 128
          %904 = vxpose.xlu0.c.b16.cont [6/8] 0, 128
          %905 = vxpose.xlu0.c.b16.cont [7/8] 0, 128
          %906 = vxpose.xlu0.c.b16.end [8/8] 0, 128
          %v907 = vpop.trf.xlu0
          %v908 = vpop.trf.xlu0
          %v909 = vpop.trf.xlu0
          %v910 = vpop.trf.xlu0
          %v911 = vpop.trf.xlu0
          %v912 = vpop.trf.xlu0
          %v913 = vpop.trf.xlu0
          %v914 = vpop.trf.xlu0
          %vm915 = vcmask 31744
          %v917 = vsel %vm915, %v891, 0
          %v920 = vsel %vm915, %v892, 0
          %v923 = vsel %vm915, %v893, 0
          %v926 = vsel %vm915, %v894, 0
          %v929 = vsel %vm915, %v895, 0
          %v932 = vsel %vm915, %v896, 0
          %v935 = vsel %vm915, %v897, 0
          %v938 = vsel %vm915, %v898, 0
          %v941 = vsel %vm915, %v907, 0
          %v944 = vsel %vm915, %v908, 0
          %v947 = vsel %vm915, %v909, 0
          %v950 = vsel %vm915, %v910, 0
          %v953 = vsel %vm915, %v911, 0
          %v956 = vsel %vm915, %v912, 0
          %v959 = vsel %vm915, %v913, 0
          %v962 = vsel %vm915, %v914, 0
          %vm964 = vcmask 1041408
          %v966 = vsel %vm964, %v875, 0
          %v969 = vsel %vm964, %v876, 0
          %v972 = vsel %vm964, %v877, 0
          %v975 = vsel %vm964, %v878, 0
          %v978 = vsel %vm964, %v879, 0
          %v981 = vsel %vm964, %v880, 0
          %v984 = vsel %vm964, %v881, 0
          %v987 = vsel %vm964, %v882, 0
          %989 = vmatprep.subr.bf16.mxu0 0
          %990 = vmatpush1.bf16.msra.mxu0 0
          %991 = vmatprep.subr.bf16.mxu0 0
          %992 = vmatpush1.bf16.msra.mxu0 0
          %993 = vmatprep.subr.bf16.mxu0 0
          %994 = vmatpush1.bf16.msra.mxu0 0
          %995 = vmatprep.subr.bf16.mxu0 0
          %996 = vmatpush1.bf16.msra.mxu0 0
          %997 = vmatprep.subr.bf16.mxu0 0
          %998 = vmatpush1.bf16.msra.mxu0 0
          %999 = vmatprep.subr.bf16.mxu0 0
          %1000 = vmatpush1.bf16.msra.mxu0 0
          %1001 = vmatprep.subr.bf16.mxu0 0
          %1002 = vmatpush1.bf16.msra.mxu0 0
          %1003 = vmatprep.subr.bf16.mxu0 %v969
          %1004 = vmatpush1.bf16.msra.mxu0 %v966
          %1005 = vmatprep.subr.bf16.mxu0 0
          %1006 = vmatpush2.bf16.msra.mxu0 0
          %1007 = vmatprep.subr.bf16.mxu0 0
          %1008 = vmatpush2.bf16.msra.mxu0 0
          %1009 = vmatprep.subr.bf16.mxu0 0
          %1010 = vmatpush2.bf16.msra.mxu0 0
          %1011 = vmatprep.subr.bf16.mxu0 0
          %1012 = vmatpush2.bf16.msra.mxu0 0
          %1013 = vmatprep.subr.bf16.mxu0 0
          %1014 = vmatpush2.bf16.msra.mxu0 0
          %1015 = vmatprep.subr.bf16.mxu0 0
          %1016 = vmatpush2.bf16.msra.mxu0 0
          %1017 = vmatprep.subr.bf16.mxu0 0
          %1018 = vmatpush2.bf16.msra.mxu0 0
          %1019 = vmatprep.subr.bf16.mxu0 0
          %1020 = vmatpush2.bf16.msra.mxu0 0
          %1021 = vmatprep.mubr.bf16.mxu0 0
          %1022 = vmatmul.mubr.bf16.gmra.mxu0 %v917
          %v1023 = vpop.f32.mrf.mxu0
          %v1024 = vadd.f32 0.0, %v1023
          %v1025 = vpop.f32.mrf.mxu0
          %v1026 = vadd.f32 0.0, %v1025
          %v1027 = vpop.f32.mrf.mxu0
          %v1028 = vadd.f32 0.0, %v1027
          %v1029 = vpop.f32.mrf.mxu0
          %v1030 = vadd.f32 0.0, %v1029
          %1031 = vmatprep.mubr.bf16.mxu0 0
          %1032 = vmatmul.mubr.bf16.gmra.mxu0 %v920
          %v1033 = vpop.f32.mrf.mxu0
          %v1034 = vadd.f32 0.0, %v1033
          %v1035 = vpop.f32.mrf.mxu0
          %v1036 = vadd.f32 0.0, %v1035
          %v1037 = vpop.f32.mrf.mxu0
          %v1038 = vadd.f32 0.0, %v1037
          %v1039 = vpop.f32.mrf.mxu0
          %v1040 = vadd.f32 0.0, %v1039
          %1041 = vmatprep.mubr.bf16.mxu0 0
          %1042 = vmatmul.mubr.bf16.gmra.mxu0 %v923
          %v1043 = vpop.f32.mrf.mxu0
          %v1044 = vadd.f32 0.0, %v1043
          %v1045 = vpop.f32.mrf.mxu0
          %v1046 = vadd.f32 0.0, %v1045
          %v1047 = vpop.f32.mrf.mxu0
          %v1048 = vadd.f32 0.0, %v1047
          %v1049 = vpop.f32.mrf.mxu0
          %v1050 = vadd.f32 0.0, %v1049
          %1051 = vmatprep.mubr.bf16.mxu0 0
          %1052 = vmatmul.mubr.bf16.gmra.mxu0 %v926
          %v1053 = vpop.f32.mrf.mxu0
          %v1054 = vadd.f32 0.0, %v1053
          %v1055 = vpop.f32.mrf.mxu0
          %v1056 = vadd.f32 0.0, %v1055
          %v1057 = vpop.f32.mrf.mxu0
          %v1058 = vadd.f32 0.0, %v1057
          %v1059 = vpop.f32.mrf.mxu0
          %v1060 = vadd.f32 0.0, %v1059
          %1061 = vmatprep.mubr.bf16.mxu0 0
          %1062 = vmatmul.mubr.bf16.gmra.mxu0 %v929
          %v1063 = vpop.f32.mrf.mxu0
          %v1064 = vadd.f32 0.0, %v1063
          %v1065 = vpop.f32.mrf.mxu0
          %v1066 = vadd.f32 0.0, %v1065
          %v1067 = vpop.f32.mrf.mxu0
          %v1068 = vadd.f32 0.0, %v1067
          %v1069 = vpop.f32.mrf.mxu0
          %v1070 = vadd.f32 0.0, %v1069
          %1071 = vmatprep.mubr.bf16.mxu0 0
          %1072 = vmatmul.mubr.bf16.gmra.mxu0 %v932
          %v1073 = vpop.f32.mrf.mxu0
          %v1074 = vadd.f32 0.0, %v1073
          %v1075 = vpop.f32.mrf.mxu0
          %v1076 = vadd.f32 0.0, %v1075
          %v1077 = vpop.f32.mrf.mxu0
          %v1078 = vadd.f32 0.0, %v1077
          %v1079 = vpop.f32.mrf.mxu0
          %v1080 = vadd.f32 0.0, %v1079
          %1081 = vmatprep.mubr.bf16.mxu0 0
          %1082 = vmatmul.mubr.bf16.gmra.mxu0 %v935
          %v1083 = vpop.f32.mrf.mxu0
          %v1084 = vadd.f32 0.0, %v1083
          %v1085 = vpop.f32.mrf.mxu0
          %v1086 = vadd.f32 0.0, %v1085
          %v1087 = vpop.f32.mrf.mxu0
          %v1088 = vadd.f32 0.0, %v1087
          %v1089 = vpop.f32.mrf.mxu0
          %v1090 = vadd.f32 0.0, %v1089
          %1091 = vmatprep.mubr.bf16.mxu0 0
          %1092 = vmatmul.mubr.bf16.gmra.mxu0 %v938
          %v1093 = vpop.f32.mrf.mxu0
          %v1094 = vadd.f32 0.0, %v1093
          %v1095 = vpop.f32.mrf.mxu0
          %v1096 = vadd.f32 0.0, %v1095
          %v1097 = vpop.f32.mrf.mxu0
          %v1098 = vadd.f32 0.0, %v1097
          %v1099 = vpop.f32.mrf.mxu0
          %v1100 = vadd.f32 0.0, %v1099
          %1101 = vmatprep.mubr.bf16.mxu0 0
          %1102 = vmatmul.mubr.bf16.gmra.mxu0 %v941
          %v1103 = vpop.f32.mrf.mxu0
          %v1104 = vadd.f32 0.0, %v1103
          %v1105 = vpop.f32.mrf.mxu0
          %v1106 = vadd.f32 0.0, %v1105
          %v1107 = vpop.f32.mrf.mxu0
          %v1108 = vadd.f32 0.0, %v1107
          %v1109 = vpop.f32.mrf.mxu0
          %v1110 = vadd.f32 0.0, %v1109
          %1111 = vmatprep.mubr.bf16.mxu0 0
          %1112 = vmatmul.mubr.bf16.gmra.mxu0 %v944
          %v1113 = vpop.f32.mrf.mxu0
          %v1114 = vadd.f32 0.0, %v1113
          %v1115 = vpop.f32.mrf.mxu0
          %v1116 = vadd.f32 0.0, %v1115
          %v1117 = vpop.f32.mrf.mxu0
          %v1118 = vadd.f32 0.0, %v1117
          %v1119 = vpop.f32.mrf.mxu0
          %v1120 = vadd.f32 0.0, %v1119
          %1121 = vmatprep.mubr.bf16.mxu0 0
          %1122 = vmatmul.mubr.bf16.gmra.mxu0 %v947
          %v1123 = vpop.f32.mrf.mxu0
          %v1124 = vadd.f32 0.0, %v1123
          %v1125 = vpop.f32.mrf.mxu0
          %v1126 = vadd.f32 0.0, %v1125
          %v1127 = vpop.f32.mrf.mxu0
          %v1128 = vadd.f32 0.0, %v1127
          %v1129 = vpop.f32.mrf.mxu0
          %v1130 = vadd.f32 0.0, %v1129
          %1131 = vmatprep.mubr.bf16.mxu0 0
          %1132 = vmatmul.mubr.bf16.gmra.mxu0 %v950
          %v1133 = vpop.f32.mrf.mxu0
          %v1134 = vadd.f32 0.0, %v1133
          %v1135 = vpop.f32.mrf.mxu0
          %v1136 = vadd.f32 0.0, %v1135
          %v1137 = vpop.f32.mrf.mxu0
          %v1138 = vadd.f32 0.0, %v1137
          %v1139 = vpop.f32.mrf.mxu0
          %v1140 = vadd.f32 0.0, %v1139
          %1141 = vmatprep.mubr.bf16.mxu0 0
          %1142 = vmatmul.mubr.bf16.gmra.mxu0 %v953
          %v1143 = vpop.f32.mrf.mxu0
          %v1144 = vadd.f32 0.0, %v1143
          %v1145 = vpop.f32.mrf.mxu0
          %v1146 = vadd.f32 0.0, %v1145
          %v1147 = vpop.f32.mrf.mxu0
          %v1148 = vadd.f32 0.0, %v1147
          %v1149 = vpop.f32.mrf.mxu0
          %v1150 = vadd.f32 0.0, %v1149
          %1151 = vmatprep.mubr.bf16.mxu0 0
          %1152 = vmatmul.mubr.bf16.gmra.mxu0 %v956
          %v1153 = vpop.f32.mrf.mxu0
          %v1154 = vadd.f32 0.0, %v1153
          %v1155 = vpop.f32.mrf.mxu0
          %v1156 = vadd.f32 0.0, %v1155
          %v1157 = vpop.f32.mrf.mxu0
          %v1158 = vadd.f32 0.0, %v1157
          %v1159 = vpop.f32.mrf.mxu0
          %v1160 = vadd.f32 0.0, %v1159
          %1161 = vmatprep.mubr.bf16.mxu0 0
          %1162 = vmatmul.mubr.bf16.gmra.mxu0 %v959
          %v1163 = vpop.f32.mrf.mxu0
          %v1164 = vadd.f32 0.0, %v1163
          %v1165 = vpop.f32.mrf.mxu0
          %v1166 = vadd.f32 0.0, %v1165
          %v1167 = vpop.f32.mrf.mxu0
          %v1168 = vadd.f32 0.0, %v1167
          %v1169 = vpop.f32.mrf.mxu0
          %v1170 = vadd.f32 0.0, %v1169
          %1171 = vmatprep.mubr.bf16.mxu0 0
          %1172 = vmatmul.mubr.bf16.gmra.mxu0 %v962
          %v1173 = vpop.f32.mrf.mxu0
          %v1174 = vadd.f32 0.0, %v1173
          %v1175 = vpop.f32.mrf.mxu0
          %v1176 = vadd.f32 0.0, %v1175
          %v1177 = vpop.f32.mrf.mxu0
          %v1178 = vadd.f32 0.0, %v1177
          %v1179 = vpop.f32.mrf.mxu0
          %v1180 = vadd.f32 0.0, %v1179
          %1181 = vdwg.mxu0
          %1182 = vmatprep.subr.bf16.mxu0 0
          %1183 = vmatpush1.bf16.msra.mxu0 0
          %1184 = vmatprep.subr.bf16.mxu0 0
          %1185 = vmatpush1.bf16.msra.mxu0 0
          %1186 = vmatprep.subr.bf16.mxu0 0
          %1187 = vmatpush1.bf16.msra.mxu0 0
          %1188 = vmatprep.subr.bf16.mxu0 0
          %1189 = vmatpush1.bf16.msra.mxu0 0
          %1190 = vmatprep.subr.bf16.mxu0 0
          %1191 = vmatpush1.bf16.msra.mxu0 0
          %1192 = vmatprep.subr.bf16.mxu0 0
          %1193 = vmatpush1.bf16.msra.mxu0 0
          %1194 = vmatprep.subr.bf16.mxu0 0
          %1195 = vmatpush1.bf16.msra.mxu0 0
          %1196 = vmatprep.subr.bf16.mxu0 %v975
          %1197 = vmatpush1.bf16.msra.mxu0 %v972
          %1198 = vmatprep.subr.bf16.mxu0 0
          %1199 = vmatpush2.bf16.msra.mxu0 0
          %1200 = vmatprep.subr.bf16.mxu0 0
          %1201 = vmatpush2.bf16.msra.mxu0 0
          %1202 = vmatprep.subr.bf16.mxu0 0
          %1203 = vmatpush2.bf16.msra.mxu0 0
          %1204 = vmatprep.subr.bf16.mxu0 0
          %1205 = vmatpush2.bf16.msra.mxu0 0
          %1206 = vmatprep.subr.bf16.mxu0 0
          %1207 = vmatpush2.bf16.msra.mxu0 0
          %1208 = vmatprep.subr.bf16.mxu0 0
          %1209 = vmatpush2.bf16.msra.mxu0 0
          %1210 = vmatprep.subr.bf16.mxu0 0
          %1211 = vmatpush2.bf16.msra.mxu0 0
          %1212 = vmatprep.subr.bf16.mxu0 0
          %1213 = vmatpush2.bf16.msra.mxu0 0
          %1214 = vmatprep.mubr.bf16.mxu0 0
          %1215 = vmatmul.mubr.bf16.gmra.mxu0 %v917
          %v1216 = vpop.f32.mrf.mxu0
          %v1217 = vadd.f32 0.0, %v1216
          %v1218 = vpop.f32.mrf.mxu0
          %v1219 = vadd.f32 0.0, %v1218
          %v1220 = vpop.f32.mrf.mxu0
          %v1221 = vadd.f32 0.0, %v1220
          %v1222 = vpop.f32.mrf.mxu0
          %v1223 = vadd.f32 0.0, %v1222
          %1224 = vmatprep.mubr.bf16.mxu0 0
          %1225 = vmatmul.mubr.bf16.gmra.mxu0 %v920
          %v1226 = vpop.f32.mrf.mxu0
          %v1227 = vadd.f32 0.0, %v1226
          %v1228 = vpop.f32.mrf.mxu0
          %v1229 = vadd.f32 0.0, %v1228
          %v1230 = vpop.f32.mrf.mxu0
          %v1231 = vadd.f32 0.0, %v1230
          %v1232 = vpop.f32.mrf.mxu0
          %v1233 = vadd.f32 0.0, %v1232
          %1234 = vmatprep.mubr.bf16.mxu0 0
          %1235 = vmatmul.mubr.bf16.gmra.mxu0 %v923
          %v1236 = vpop.f32.mrf.mxu0
          %v1237 = vadd.f32 0.0, %v1236
          %v1238 = vpop.f32.mrf.mxu0
          %v1239 = vadd.f32 0.0, %v1238
          %v1240 = vpop.f32.mrf.mxu0
          %v1241 = vadd.f32 0.0, %v1240
          %v1242 = vpop.f32.mrf.mxu0
          %v1243 = vadd.f32 0.0, %v1242
          %1244 = vmatprep.mubr.bf16.mxu0 0
          %1245 = vmatmul.mubr.bf16.gmra.mxu0 %v926
          %v1246 = vpop.f32.mrf.mxu0
          %v1247 = vadd.f32 0.0, %v1246
          %v1248 = vpop.f32.mrf.mxu0
          %v1249 = vadd.f32 0.0, %v1248
          %v1250 = vpop.f32.mrf.mxu0
          %v1251 = vadd.f32 0.0, %v1250
          %v1252 = vpop.f32.mrf.mxu0
          %v1253 = vadd.f32 0.0, %v1252
          %1254 = vmatprep.mubr.bf16.mxu0 0
          %1255 = vmatmul.mubr.bf16.gmra.mxu0 %v929
          %v1256 = vpop.f32.mrf.mxu0
          %v1257 = vadd.f32 0.0, %v1256
          %v1258 = vpop.f32.mrf.mxu0
          %v1259 = vadd.f32 0.0, %v1258
          %v1260 = vpop.f32.mrf.mxu0
          %v1261 = vadd.f32 0.0, %v1260
          %v1262 = vpop.f32.mrf.mxu0
          %v1263 = vadd.f32 0.0, %v1262
          %1264 = vmatprep.mubr.bf16.mxu0 0
          %1265 = vmatmul.mubr.bf16.gmra.mxu0 %v932
          %v1266 = vpop.f32.mrf.mxu0
          %v1267 = vadd.f32 0.0, %v1266
          %v1268 = vpop.f32.mrf.mxu0
          %v1269 = vadd.f32 0.0, %v1268
          %v1270 = vpop.f32.mrf.mxu0
          %v1271 = vadd.f32 0.0, %v1270
          %v1272 = vpop.f32.mrf.mxu0
          %v1273 = vadd.f32 0.0, %v1272
          %1274 = vmatprep.mubr.bf16.mxu0 0
          %1275 = vmatmul.mubr.bf16.gmra.mxu0 %v935
          %v1276 = vpop.f32.mrf.mxu0
          %v1277 = vadd.f32 0.0, %v1276
          %v1278 = vpop.f32.mrf.mxu0
          %v1279 = vadd.f32 0.0, %v1278
          %v1280 = vpop.f32.mrf.mxu0
          %v1281 = vadd.f32 0.0, %v1280
          %v1282 = vpop.f32.mrf.mxu0
          %v1283 = vadd.f32 0.0, %v1282
          %1284 = vmatprep.mubr.bf16.mxu0 0
          %1285 = vmatmul.mubr.bf16.gmra.mxu0 %v938
          %v1286 = vpop.f32.mrf.mxu0
          %v1287 = vadd.f32 0.0, %v1286
          %v1288 = vpop.f32.mrf.mxu0
          %v1289 = vadd.f32 0.0, %v1288
          %v1290 = vpop.f32.mrf.mxu0
          %v1291 = vadd.f32 0.0, %v1290
          %v1292 = vpop.f32.mrf.mxu0
          %v1293 = vadd.f32 0.0, %v1292
          %1294 = vmatprep.mubr.bf16.mxu0 0
          %1295 = vmatmul.mubr.bf16.gmra.mxu0 %v941
          %v1296 = vpop.f32.mrf.mxu0
          %v1297 = vadd.f32 0.0, %v1296
          %v1298 = vpop.f32.mrf.mxu0
          %v1299 = vadd.f32 0.0, %v1298
          %v1300 = vpop.f32.mrf.mxu0
          %v1301 = vadd.f32 0.0, %v1300
          %v1302 = vpop.f32.mrf.mxu0
          %v1303 = vadd.f32 0.0, %v1302
          %1304 = vmatprep.mubr.bf16.mxu0 0
          %1305 = vmatmul.mubr.bf16.gmra.mxu0 %v944
          %v1306 = vpop.f32.mrf.mxu0
          %v1307 = vadd.f32 0.0, %v1306
          %v1308 = vpop.f32.mrf.mxu0
          %v1309 = vadd.f32 0.0, %v1308
          %v1310 = vpop.f32.mrf.mxu0
          %v1311 = vadd.f32 0.0, %v1310
          %v1312 = vpop.f32.mrf.mxu0
          %v1313 = vadd.f32 0.0, %v1312
          %1314 = vmatprep.mubr.bf16.mxu0 0
          %1315 = vmatmul.mubr.bf16.gmra.mxu0 %v947
          %v1316 = vpop.f32.mrf.mxu0
          %v1317 = vadd.f32 0.0, %v1316
          %v1318 = vpop.f32.mrf.mxu0
          %v1319 = vadd.f32 0.0, %v1318
          %v1320 = vpop.f32.mrf.mxu0
          %v1321 = vadd.f32 0.0, %v1320
          %v1322 = vpop.f32.mrf.mxu0
          %v1323 = vadd.f32 0.0, %v1322
          %1324 = vmatprep.mubr.bf16.mxu0 0
          %1325 = vmatmul.mubr.bf16.gmra.mxu0 %v950
          %v1326 = vpop.f32.mrf.mxu0
          %v1327 = vadd.f32 0.0, %v1326
          %v1328 = vpop.f32.mrf.mxu0
          %v1329 = vadd.f32 0.0, %v1328
          %v1330 = vpop.f32.mrf.mxu0
          %v1331 = vadd.f32 0.0, %v1330
          %v1332 = vpop.f32.mrf.mxu0
          %v1333 = vadd.f32 0.0, %v1332
          %1334 = vmatprep.mubr.bf16.mxu0 0
          %1335 = vmatmul.mubr.bf16.gmra.mxu0 %v953
          %v1336 = vpop.f32.mrf.mxu0
          %v1337 = vadd.f32 0.0, %v1336
          %v1338 = vpop.f32.mrf.mxu0
          %v1339 = vadd.f32 0.0, %v1338
          %v1340 = vpop.f32.mrf.mxu0
          %v1341 = vadd.f32 0.0, %v1340
          %v1342 = vpop.f32.mrf.mxu0
          %v1343 = vadd.f32 0.0, %v1342
          %1344 = vmatprep.mubr.bf16.mxu0 0
          %1345 = vmatmul.mubr.bf16.gmra.mxu0 %v956
          %v1346 = vpop.f32.mrf.mxu0
          %v1347 = vadd.f32 0.0, %v1346
          %v1348 = vpop.f32.mrf.mxu0
          %v1349 = vadd.f32 0.0, %v1348
          %v1350 = vpop.f32.mrf.mxu0
          %v1351 = vadd.f32 0.0, %v1350
          %v1352 = vpop.f32.mrf.mxu0
          %v1353 = vadd.f32 0.0, %v1352
          %1354 = vmatprep.mubr.bf16.mxu0 0
          %1355 = vmatmul.mubr.bf16.gmra.mxu0 %v959
          %v1356 = vpop.f32.mrf.mxu0
          %v1357 = vadd.f32 0.0, %v1356
          %v1358 = vpop.f32.mrf.mxu0
          %v1359 = vadd.f32 0.0, %v1358
          %v1360 = vpop.f32.mrf.mxu0
          %v1361 = vadd.f32 0.0, %v1360
          %v1362 = vpop.f32.mrf.mxu0
          %v1363 = vadd.f32 0.0, %v1362
          %1364 = vmatprep.mubr.bf16.mxu0 0
          %1365 = vmatmul.mubr.bf16.gmra.mxu0 %v962
          %v1366 = vpop.f32.mrf.mxu0
          %v1367 = vadd.f32 0.0, %v1366
          %v1368 = vpop.f32.mrf.mxu0
          %v1369 = vadd.f32 0.0, %v1368
          %v1370 = vpop.f32.mrf.mxu0
          %v1371 = vadd.f32 0.0, %v1370
          %v1372 = vpop.f32.mrf.mxu0
          %v1373 = vadd.f32 0.0, %v1372
          %1374 = vdwg.mxu0
          %1375 = vmatprep.subr.bf16.mxu0 0
          %1376 = vmatpush1.bf16.msra.mxu0 0
          %1377 = vmatprep.subr.bf16.mxu0 0
          %1378 = vmatpush1.bf16.msra.mxu0 0
          %1379 = vmatprep.subr.bf16.mxu0 0
          %1380 = vmatpush1.bf16.msra.mxu0 0
          %1381 = vmatprep.subr.bf16.mxu0 0
          %1382 = vmatpush1.bf16.msra.mxu0 0
          %1383 = vmatprep.subr.bf16.mxu0 0
          %1384 = vmatpush1.bf16.msra.mxu0 0
          %1385 = vmatprep.subr.bf16.mxu0 0
          %1386 = vmatpush1.bf16.msra.mxu0 0
          %1387 = vmatprep.subr.bf16.mxu0 0
          %1388 = vmatpush1.bf16.msra.mxu0 0
          %1389 = vmatprep.subr.bf16.mxu0 %v981
          %1390 = vmatpush1.bf16.msra.mxu0 %v978
          %1391 = vmatprep.subr.bf16.mxu0 0
          %1392 = vmatpush2.bf16.msra.mxu0 0
          %1393 = vmatprep.subr.bf16.mxu0 0
          %1394 = vmatpush2.bf16.msra.mxu0 0
          %1395 = vmatprep.subr.bf16.mxu0 0
          %1396 = vmatpush2.bf16.msra.mxu0 0
          %1397 = vmatprep.subr.bf16.mxu0 0
          %1398 = vmatpush2.bf16.msra.mxu0 0
          %1399 = vmatprep.subr.bf16.mxu0 0
          %1400 = vmatpush2.bf16.msra.mxu0 0
          %1401 = vmatprep.subr.bf16.mxu0 0
          %1402 = vmatpush2.bf16.msra.mxu0 0
          %1403 = vmatprep.subr.bf16.mxu0 0
          %1404 = vmatpush2.bf16.msra.mxu0 0
          %1405 = vmatprep.subr.bf16.mxu0 0
          %1406 = vmatpush2.bf16.msra.mxu0 0
          %1407 = vmatprep.mubr.bf16.mxu0 0
          %1408 = vmatmul.mubr.bf16.gmra.mxu0 %v917
          %v1409 = vpop.f32.mrf.mxu0
          %v1410 = vadd.f32 0.0, %v1409
          %v1411 = vpop.f32.mrf.mxu0
          %v1412 = vadd.f32 0.0, %v1411
          %v1413 = vpop.f32.mrf.mxu0
          %v1414 = vadd.f32 0.0, %v1413
          %v1415 = vpop.f32.mrf.mxu0
          %v1416 = vadd.f32 0.0, %v1415
          %1417 = vmatprep.mubr.bf16.mxu0 0
          %1418 = vmatmul.mubr.bf16.gmra.mxu0 %v920
          %v1419 = vpop.f32.mrf.mxu0
          %v1420 = vadd.f32 0.0, %v1419
          %v1421 = vpop.f32.mrf.mxu0
          %v1422 = vadd.f32 0.0, %v1421
          %v1423 = vpop.f32.mrf.mxu0
          %v1424 = vadd.f32 0.0, %v1423
          %v1425 = vpop.f32.mrf.mxu0
          %v1426 = vadd.f32 0.0, %v1425
          %1427 = vmatprep.mubr.bf16.mxu0 0
          %1428 = vmatmul.mubr.bf16.gmra.mxu0 %v923
          %v1429 = vpop.f32.mrf.mxu0
          %v1430 = vadd.f32 0.0, %v1429
          %v1431 = vpop.f32.mrf.mxu0
          %v1432 = vadd.f32 0.0, %v1431
          %v1433 = vpop.f32.mrf.mxu0
          %v1434 = vadd.f32 0.0, %v1433
          %v1435 = vpop.f32.mrf.mxu0
          %v1436 = vadd.f32 0.0, %v1435
          %1437 = vmatprep.mubr.bf16.mxu0 0
          %1438 = vmatmul.mubr.bf16.gmra.mxu0 %v926
          %v1439 = vpop.f32.mrf.mxu0
          %v1440 = vadd.f32 0.0, %v1439
          %v1441 = vpop.f32.mrf.mxu0
          %v1442 = vadd.f32 0.0, %v1441
          %v1443 = vpop.f32.mrf.mxu0
          %v1444 = vadd.f32 0.0, %v1443
          %v1445 = vpop.f32.mrf.mxu0
          %v1446 = vadd.f32 0.0, %v1445
          %1447 = vmatprep.mubr.bf16.mxu0 0
          %1448 = vmatmul.mubr.bf16.gmra.mxu0 %v929
          %v1449 = vpop.f32.mrf.mxu0
          %v1450 = vadd.f32 0.0, %v1449
          %v1451 = vpop.f32.mrf.mxu0
          %v1452 = vadd.f32 0.0, %v1451
          %v1453 = vpop.f32.mrf.mxu0
          %v1454 = vadd.f32 0.0, %v1453
          %v1455 = vpop.f32.mrf.mxu0
          %v1456 = vadd.f32 0.0, %v1455
          %1457 = vmatprep.mubr.bf16.mxu0 0
          %1458 = vmatmul.mubr.bf16.gmra.mxu0 %v932
          %v1459 = vpop.f32.mrf.mxu0
          %v1460 = vadd.f32 0.0, %v1459
          %v1461 = vpop.f32.mrf.mxu0
          %v1462 = vadd.f32 0.0, %v1461
          %v1463 = vpop.f32.mrf.mxu0
          %v1464 = vadd.f32 0.0, %v1463
          %v1465 = vpop.f32.mrf.mxu0
          %v1466 = vadd.f32 0.0, %v1465
          %1467 = vmatprep.mubr.bf16.mxu0 0
          %1468 = vmatmul.mubr.bf16.gmra.mxu0 %v935
          %v1469 = vpop.f32.mrf.mxu0
          %v1470 = vadd.f32 0.0, %v1469
          %v1471 = vpop.f32.mrf.mxu0
          %v1472 = vadd.f32 0.0, %v1471
          %v1473 = vpop.f32.mrf.mxu0
          %v1474 = vadd.f32 0.0, %v1473
          %v1475 = vpop.f32.mrf.mxu0
          %v1476 = vadd.f32 0.0, %v1475
          %1477 = vmatprep.mubr.bf16.mxu0 0
          %1478 = vmatmul.mubr.bf16.gmra.mxu0 %v938
          %v1479 = vpop.f32.mrf.mxu0
          %v1480 = vadd.f32 0.0, %v1479
          %v1481 = vpop.f32.mrf.mxu0
          %v1482 = vadd.f32 0.0, %v1481
          %v1483 = vpop.f32.mrf.mxu0
          %v1484 = vadd.f32 0.0, %v1483
          %v1485 = vpop.f32.mrf.mxu0
          %v1486 = vadd.f32 0.0, %v1485
          %1487 = vmatprep.mubr.bf16.mxu0 0
          %1488 = vmatmul.mubr.bf16.gmra.mxu0 %v941
          %v1489 = vpop.f32.mrf.mxu0
          %v1490 = vadd.f32 0.0, %v1489
          %v1491 = vpop.f32.mrf.mxu0
          %v1492 = vadd.f32 0.0, %v1491
          %v1493 = vpop.f32.mrf.mxu0
          %v1494 = vadd.f32 0.0, %v1493
          %v1495 = vpop.f32.mrf.mxu0
          %v1496 = vadd.f32 0.0, %v1495
          %1497 = vmatprep.mubr.bf16.mxu0 0
          %1498 = vmatmul.mubr.bf16.gmra.mxu0 %v944
          %v1499 = vpop.f32.mrf.mxu0
          %v1500 = vadd.f32 0.0, %v1499
          %v1501 = vpop.f32.mrf.mxu0
          %v1502 = vadd.f32 0.0, %v1501
          %v1503 = vpop.f32.mrf.mxu0
          %v1504 = vadd.f32 0.0, %v1503
          %v1505 = vpop.f32.mrf.mxu0
          %v1506 = vadd.f32 0.0, %v1505
          %1507 = vmatprep.mubr.bf16.mxu0 0
          %1508 = vmatmul.mubr.bf16.gmra.mxu0 %v947
          %v1509 = vpop.f32.mrf.mxu0
          %v1510 = vadd.f32 0.0, %v1509
          %v1511 = vpop.f32.mrf.mxu0
          %v1512 = vadd.f32 0.0, %v1511
          %v1513 = vpop.f32.mrf.mxu0
          %v1514 = vadd.f32 0.0, %v1513
          %v1515 = vpop.f32.mrf.mxu0
          %v1516 = vadd.f32 0.0, %v1515
          %1517 = vmatprep.mubr.bf16.mxu0 0
          %1518 = vmatmul.mubr.bf16.gmra.mxu0 %v950
          %v1519 = vpop.f32.mrf.mxu0
          %v1520 = vadd.f32 0.0, %v1519
          %v1521 = vpop.f32.mrf.mxu0
          %v1522 = vadd.f32 0.0, %v1521
          %v1523 = vpop.f32.mrf.mxu0
          %v1524 = vadd.f32 0.0, %v1523
          %v1525 = vpop.f32.mrf.mxu0
          %v1526 = vadd.f32 0.0, %v1525
          %1527 = vmatprep.mubr.bf16.mxu0 0
          %1528 = vmatmul.mubr.bf16.gmra.mxu0 %v953
          %v1529 = vpop.f32.mrf.mxu0
          %v1530 = vadd.f32 0.0, %v1529
          %v1531 = vpop.f32.mrf.mxu0
          %v1532 = vadd.f32 0.0, %v1531
          %v1533 = vpop.f32.mrf.mxu0
          %v1534 = vadd.f32 0.0, %v1533
          %v1535 = vpop.f32.mrf.mxu0
          %v1536 = vadd.f32 0.0, %v1535
          %1537 = vmatprep.mubr.bf16.mxu0 0
          %1538 = vmatmul.mubr.bf16.gmra.mxu0 %v956
          %v1539 = vpop.f32.mrf.mxu0
          %v1540 = vadd.f32 0.0, %v1539
          %v1541 = vpop.f32.mrf.mxu0
          %v1542 = vadd.f32 0.0, %v1541
          %v1543 = vpop.f32.mrf.mxu0
          %v1544 = vadd.f32 0.0, %v1543
          %v1545 = vpop.f32.mrf.mxu0
          %v1546 = vadd.f32 0.0, %v1545
          %1547 = vmatprep.mubr.bf16.mxu0 0
          %1548 = vmatmul.mubr.bf16.gmra.mxu0 %v959
          %v1549 = vpop.f32.mrf.mxu0
          %v1550 = vadd.f32 0.0, %v1549
          %v1551 = vpop.f32.mrf.mxu0
          %v1552 = vadd.f32 0.0, %v1551
          %v1553 = vpop.f32.mrf.mxu0
          %v1554 = vadd.f32 0.0, %v1553
          %v1555 = vpop.f32.mrf.mxu0
          %v1556 = vadd.f32 0.0, %v1555
          %1557 = vmatprep.mubr.bf16.mxu0 0
          %1558 = vmatmul.mubr.bf16.gmra.mxu0 %v962
          %v1559 = vpop.f32.mrf.mxu0
          %v1560 = vadd.f32 0.0, %v1559
          %v1561 = vpop.f32.mrf.mxu0
          %v1562 = vadd.f32 0.0, %v1561
          %v1563 = vpop.f32.mrf.mxu0
          %v1564 = vadd.f32 0.0, %v1563
          %v1565 = vpop.f32.mrf.mxu0
          %v1566 = vadd.f32 0.0, %v1565
          %1567 = vdwg.mxu0
          %1568 = vmatprep.subr.bf16.mxu0 0
          %1569 = vmatpush1.bf16.msra.mxu0 0
          %1570 = vmatprep.subr.bf16.mxu0 0
          %1571 = vmatpush1.bf16.msra.mxu0 0
          %1572 = vmatprep.subr.bf16.mxu0 0
          %1573 = vmatpush1.bf16.msra.mxu0 0
          %1574 = vmatprep.subr.bf16.mxu0 0
          %1575 = vmatpush1.bf16.msra.mxu0 0
          %1576 = vmatprep.subr.bf16.mxu0 0
          %1577 = vmatpush1.bf16.msra.mxu0 0
          %1578 = vmatprep.subr.bf16.mxu0 0
          %1579 = vmatpush1.bf16.msra.mxu0 0
          %1580 = vmatprep.subr.bf16.mxu0 0
          %1581 = vmatpush1.bf16.msra.mxu0 0
          %1582 = vmatprep.subr.bf16.mxu0 %v987
          %1583 = vmatpush1.bf16.msra.mxu0 %v984
          %1584 = vmatprep.subr.bf16.mxu0 0
          %1585 = vmatpush2.bf16.msra.mxu0 0
          %1586 = vmatprep.subr.bf16.mxu0 0
          %1587 = vmatpush2.bf16.msra.mxu0 0
          %1588 = vmatprep.subr.bf16.mxu0 0
          %1589 = vmatpush2.bf16.msra.mxu0 0
          %1590 = vmatprep.subr.bf16.mxu0 0
          %1591 = vmatpush2.bf16.msra.mxu0 0
          %1592 = vmatprep.subr.bf16.mxu0 0
          %1593 = vmatpush2.bf16.msra.mxu0 0
          %1594 = vmatprep.subr.bf16.mxu0 0
          %1595 = vmatpush2.bf16.msra.mxu0 0
          %1596 = vmatprep.subr.bf16.mxu0 0
          %1597 = vmatpush2.bf16.msra.mxu0 0
          %1598 = vmatprep.subr.bf16.mxu0 0
          %1599 = vmatpush2.bf16.msra.mxu0 0
          %1600 = vmatprep.mubr.bf16.mxu0 0
          %1601 = vmatmul.mubr.bf16.gmra.mxu0 %v917
          %v1602 = vpop.f32.mrf.mxu0
          %v1603 = vadd.f32 0.0, %v1602
          %v1604 = vpop.f32.mrf.mxu0
          %v1605 = vadd.f32 0.0, %v1604
          %v1606 = vpop.f32.mrf.mxu0
          %v1607 = vadd.f32 0.0, %v1606
          %v1608 = vpop.f32.mrf.mxu0
          %v1609 = vadd.f32 0.0, %v1608
          %1610 = vmatprep.mubr.bf16.mxu0 0
          %1611 = vmatmul.mubr.bf16.gmra.mxu0 %v920
          %v1612 = vpop.f32.mrf.mxu0
          %v1613 = vadd.f32 0.0, %v1612
          %v1614 = vpop.f32.mrf.mxu0
          %v1615 = vadd.f32 0.0, %v1614
          %v1616 = vpop.f32.mrf.mxu0
          %v1617 = vadd.f32 0.0, %v1616
          %v1618 = vpop.f32.mrf.mxu0
          %v1619 = vadd.f32 0.0, %v1618
          %1620 = vmatprep.mubr.bf16.mxu0 0
          %1621 = vmatmul.mubr.bf16.gmra.mxu0 %v923
          %v1622 = vpop.f32.mrf.mxu0
          %v1623 = vadd.f32 0.0, %v1622
          %v1624 = vpop.f32.mrf.mxu0
          %v1625 = vadd.f32 0.0, %v1624
          %v1626 = vpop.f32.mrf.mxu0
          %v1627 = vadd.f32 0.0, %v1626
          %v1628 = vpop.f32.mrf.mxu0
          %v1629 = vadd.f32 0.0, %v1628
          %1630 = vmatprep.mubr.bf16.mxu0 0
          %1631 = vmatmul.mubr.bf16.gmra.mxu0 %v926
          %v1632 = vpop.f32.mrf.mxu0
          %v1633 = vadd.f32 0.0, %v1632
          %v1634 = vpop.f32.mrf.mxu0
          %v1635 = vadd.f32 0.0, %v1634
          %v1636 = vpop.f32.mrf.mxu0
          %v1637 = vadd.f32 0.0, %v1636
          %v1638 = vpop.f32.mrf.mxu0
          %v1639 = vadd.f32 0.0, %v1638
          %1640 = vmatprep.mubr.bf16.mxu0 0
          %1641 = vmatmul.mubr.bf16.gmra.mxu0 %v929
          %v1642 = vpop.f32.mrf.mxu0
          %v1643 = vadd.f32 0.0, %v1642
          %v1644 = vpop.f32.mrf.mxu0
          %v1645 = vadd.f32 0.0, %v1644
          %v1646 = vpop.f32.mrf.mxu0
          %v1647 = vadd.f32 0.0, %v1646
          %v1648 = vpop.f32.mrf.mxu0
          %v1649 = vadd.f32 0.0, %v1648
          %1650 = vmatprep.mubr.bf16.mxu0 0
          %1651 = vmatmul.mubr.bf16.gmra.mxu0 %v932
          %v1652 = vpop.f32.mrf.mxu0
          %v1653 = vadd.f32 0.0, %v1652
          %v1654 = vpop.f32.mrf.mxu0
          %v1655 = vadd.f32 0.0, %v1654
          %v1656 = vpop.f32.mrf.mxu0
          %v1657 = vadd.f32 0.0, %v1656
          %v1658 = vpop.f32.mrf.mxu0
          %v1659 = vadd.f32 0.0, %v1658
          %1660 = vmatprep.mubr.bf16.mxu0 0
          %1661 = vmatmul.mubr.bf16.gmra.mxu0 %v935
          %v1662 = vpop.f32.mrf.mxu0
          %v1663 = vadd.f32 0.0, %v1662
          %v1664 = vpop.f32.mrf.mxu0
          %v1665 = vadd.f32 0.0, %v1664
          %v1666 = vpop.f32.mrf.mxu0
          %v1667 = vadd.f32 0.0, %v1666
          %v1668 = vpop.f32.mrf.mxu0
          %v1669 = vadd.f32 0.0, %v1668
          %1670 = vmatprep.mubr.bf16.mxu0 0
          %1671 = vmatmul.mubr.bf16.gmra.mxu0 %v938
          %v1672 = vpop.f32.mrf.mxu0
          %v1673 = vadd.f32 0.0, %v1672
          %v1674 = vpop.f32.mrf.mxu0
          %v1675 = vadd.f32 0.0, %v1674
          %v1676 = vpop.f32.mrf.mxu0
          %v1677 = vadd.f32 0.0, %v1676
          %v1678 = vpop.f32.mrf.mxu0
          %v1679 = vadd.f32 0.0, %v1678
          %1680 = vmatprep.mubr.bf16.mxu0 0
          %1681 = vmatmul.mubr.bf16.gmra.mxu0 %v941
          %v1682 = vpop.f32.mrf.mxu0
          %v1683 = vadd.f32 0.0, %v1682
          %v1684 = vpop.f32.mrf.mxu0
          %v1685 = vadd.f32 0.0, %v1684
          %v1686 = vpop.f32.mrf.mxu0
          %v1687 = vadd.f32 0.0, %v1686
          %v1688 = vpop.f32.mrf.mxu0
          %v1689 = vadd.f32 0.0, %v1688
          %1690 = vmatprep.mubr.bf16.mxu0 0
          %1691 = vmatmul.mubr.bf16.gmra.mxu0 %v944
          %v1692 = vpop.f32.mrf.mxu0
          %v1693 = vadd.f32 0.0, %v1692
          %v1694 = vpop.f32.mrf.mxu0
          %v1695 = vadd.f32 0.0, %v1694
          %v1696 = vpop.f32.mrf.mxu0
          %v1697 = vadd.f32 0.0, %v1696
          %v1698 = vpop.f32.mrf.mxu0
          %v1699 = vadd.f32 0.0, %v1698
          %1700 = vmatprep.mubr.bf16.mxu0 0
          %1701 = vmatmul.mubr.bf16.gmra.mxu0 %v947
          %v1702 = vpop.f32.mrf.mxu0
          %v1703 = vadd.f32 0.0, %v1702
          %v1704 = vpop.f32.mrf.mxu0
          %v1705 = vadd.f32 0.0, %v1704
          %v1706 = vpop.f32.mrf.mxu0
          %v1707 = vadd.f32 0.0, %v1706
          %v1708 = vpop.f32.mrf.mxu0
          %v1709 = vadd.f32 0.0, %v1708
          %1710 = vmatprep.mubr.bf16.mxu0 0
          %1711 = vmatmul.mubr.bf16.gmra.mxu0 %v950
          %v1712 = vpop.f32.mrf.mxu0
          %v1713 = vadd.f32 0.0, %v1712
          %v1714 = vpop.f32.mrf.mxu0
          %v1715 = vadd.f32 0.0, %v1714
          %v1716 = vpop.f32.mrf.mxu0
          %v1717 = vadd.f32 0.0, %v1716
          %v1718 = vpop.f32.mrf.mxu0
          %v1719 = vadd.f32 0.0, %v1718
          %1720 = vmatprep.mubr.bf16.mxu0 0
          %1721 = vmatmul.mubr.bf16.gmra.mxu0 %v953
          %v1722 = vpop.f32.mrf.mxu0
          %v1723 = vadd.f32 0.0, %v1722
          %v1724 = vpop.f32.mrf.mxu0
          %v1725 = vadd.f32 0.0, %v1724
          %v1726 = vpop.f32.mrf.mxu0
          %v1727 = vadd.f32 0.0, %v1726
          %v1728 = vpop.f32.mrf.mxu0
          %v1729 = vadd.f32 0.0, %v1728
          %1730 = vmatprep.mubr.bf16.mxu0 0
          %1731 = vmatmul.mubr.bf16.gmra.mxu0 %v956
          %v1732 = vpop.f32.mrf.mxu0
          %v1733 = vadd.f32 0.0, %v1732
          %v1734 = vpop.f32.mrf.mxu0
          %v1735 = vadd.f32 0.0, %v1734
          %v1736 = vpop.f32.mrf.mxu0
          %v1737 = vadd.f32 0.0, %v1736
          %v1738 = vpop.f32.mrf.mxu0
          %v1739 = vadd.f32 0.0, %v1738
          %1740 = vmatprep.mubr.bf16.mxu0 0
          %1741 = vmatmul.mubr.bf16.gmra.mxu0 %v959
          %v1742 = vpop.f32.mrf.mxu0
          %v1743 = vadd.f32 0.0, %v1742
          %v1744 = vpop.f32.mrf.mxu0
          %v1745 = vadd.f32 0.0, %v1744
          %v1746 = vpop.f32.mrf.mxu0
          %v1747 = vadd.f32 0.0, %v1746
          %v1748 = vpop.f32.mrf.mxu0
          %v1749 = vadd.f32 0.0, %v1748
          %1750 = vmatprep.mubr.bf16.mxu0 0
          %1751 = vmatmul.mubr.bf16.gmra.mxu0 %v962
          %v1752 = vpop.f32.mrf.mxu0
          %v1753 = vadd.f32 0.0, %v1752
          %v1754 = vpop.f32.mrf.mxu0
          %v1755 = vadd.f32 0.0, %v1754
          %v1756 = vpop.f32.mrf.mxu0
          %v1757 = vadd.f32 0.0, %v1756
          %v1758 = vpop.f32.mrf.mxu0
          %v1759 = vadd.f32 0.0, %v1758
          %1760 = vdwg.mxu0
          %v1761 = vmax.f32 %v1024, %v1026
          %v1762 = vmax.f32 %v1761, %v1217
          %v1763 = vmax.f32 %v1762, %v1219
          %v1764 = vmax.f32 %v1763, %v1410
          %v1765 = vmax.f32 %v1764, %v1412
          %v1766 = vmax.f32 %v1765, %v1603
          %v1767 = vmax.f32 %v1766, %v1605
          %1768 = vmax.xlane.f32.xlu0 %v1767
          %v1769 = vpop.xlane.xlu0 %1768
          %v1770 = vmax.f32 %v1028, %v1030
          %v1771 = vmax.f32 %v1770, %v1221
          %v1772 = vmax.f32 %v1771, %v1223
          %v1773 = vmax.f32 %v1772, %v1414
          %v1774 = vmax.f32 %v1773, %v1416
          %v1775 = vmax.f32 %v1774, %v1607
          %v1776 = vmax.f32 %v1775, %v1609
          %1777 = vmax.xlane.f32.xlu0 %v1776
          %v1778 = vpop.xlane.xlu0 %1777
          %v1779 = vmax.f32 %v1034, %v1036
          %v1780 = vmax.f32 %v1779, %v1227
          %v1781 = vmax.f32 %v1780, %v1229
          %v1782 = vmax.f32 %v1781, %v1420
          %v1783 = vmax.f32 %v1782, %v1422
          %v1784 = vmax.f32 %v1783, %v1613
          %v1785 = vmax.f32 %v1784, %v1615
          %1786 = vmax.xlane.f32.xlu0 %v1785
          %v1787 = vpop.xlane.xlu0 %1786
          %v1788 = vmax.f32 %v1038, %v1040
          %v1789 = vmax.f32 %v1788, %v1231
          %v1790 = vmax.f32 %v1789, %v1233
          %v1791 = vmax.f32 %v1790, %v1424
          %v1792 = vmax.f32 %v1791, %v1426
          %v1793 = vmax.f32 %v1792, %v1617
          %v1794 = vmax.f32 %v1793, %v1619
          %1795 = vmax.xlane.f32.xlu0 %v1794
          %v1796 = vpop.xlane.xlu0 %1795
          %v1797 = vmax.f32 %v1044, %v1046
          %v1798 = vmax.f32 %v1797, %v1237
          %v1799 = vmax.f32 %v1798, %v1239
          %v1800 = vmax.f32 %v1799, %v1430
          %v1801 = vmax.f32 %v1800, %v1432
          %v1802 = vmax.f32 %v1801, %v1623
          %v1803 = vmax.f32 %v1802, %v1625
          %1804 = vmax.xlane.f32.xlu0 %v1803
          %v1805 = vpop.xlane.xlu0 %1804
          %v1806 = vmax.f32 %v1048, %v1050
          %v1807 = vmax.f32 %v1806, %v1241
          %v1808 = vmax.f32 %v1807, %v1243
          %v1809 = vmax.f32 %v1808, %v1434
          %v1810 = vmax.f32 %v1809, %v1436
          %v1811 = vmax.f32 %v1810, %v1627
          %v1812 = vmax.f32 %v1811, %v1629
          %1813 = vmax.xlane.f32.xlu0 %v1812
          %v1814 = vpop.xlane.xlu0 %1813
          %v1815 = vmax.f32 %v1054, %v1056
          %v1816 = vmax.f32 %v1815, %v1247
          %v1817 = vmax.f32 %v1816, %v1249
          %v1818 = vmax.f32 %v1817, %v1440
          %v1819 = vmax.f32 %v1818, %v1442
          %v1820 = vmax.f32 %v1819, %v1633
          %v1821 = vmax.f32 %v1820, %v1635
          %1822 = vmax.xlane.f32.xlu0 %v1821
          %v1823 = vpop.xlane.xlu0 %1822
          %v1824 = vmax.f32 %v1058, %v1060
          %v1825 = vmax.f32 %v1824, %v1251
          %v1826 = vmax.f32 %v1825, %v1253
          %v1827 = vmax.f32 %v1826, %v1444
          %v1828 = vmax.f32 %v1827, %v1446
          %v1829 = vmax.f32 %v1828, %v1637
          %v1830 = vmax.f32 %v1829, %v1639
          %1831 = vmax.xlane.f32.xlu0 %v1830
          %v1832 = vpop.xlane.xlu0 %1831
          %v1833 = vmax.f32 %v1064, %v1066
          %v1834 = vmax.f32 %v1833, %v1257
          %v1835 = vmax.f32 %v1834, %v1259
          %v1836 = vmax.f32 %v1835, %v1450
          %v1837 = vmax.f32 %v1836, %v1452
          %v1838 = vmax.f32 %v1837, %v1643
          %v1839 = vmax.f32 %v1838, %v1645
          %1840 = vmax.xlane.f32.xlu0 %v1839
          %v1841 = vpop.xlane.xlu0 %1840
          %v1842 = vmax.f32 %v1068, %v1070
          %v1843 = vmax.f32 %v1842, %v1261
          %v1844 = vmax.f32 %v1843, %v1263
          %v1845 = vmax.f32 %v1844, %v1454
          %v1846 = vmax.f32 %v1845, %v1456
          %v1847 = vmax.f32 %v1846, %v1647
          %v1848 = vmax.f32 %v1847, %v1649
          %1849 = vmax.xlane.f32.xlu0 %v1848
          %v1850 = vpop.xlane.xlu0 %1849
          %v1851 = vmax.f32 %v1074, %v1076
          %v1852 = vmax.f32 %v1851, %v1267
          %v1853 = vmax.f32 %v1852, %v1269
          %v1854 = vmax.f32 %v1853, %v1460
          %v1855 = vmax.f32 %v1854, %v1462
          %v1856 = vmax.f32 %v1855, %v1653
          %v1857 = vmax.f32 %v1856, %v1655
          %1858 = vmax.xlane.f32.xlu0 %v1857
          %v1859 = vpop.xlane.xlu0 %1858
          %v1860 = vmax.f32 %v1078, %v1080
          %v1861 = vmax.f32 %v1860, %v1271
          %v1862 = vmax.f32 %v1861, %v1273
          %v1863 = vmax.f32 %v1862, %v1464
          %v1864 = vmax.f32 %v1863, %v1466
          %v1865 = vmax.f32 %v1864, %v1657
          %v1866 = vmax.f32 %v1865, %v1659
          %1867 = vmax.xlane.f32.xlu0 %v1866
          %v1868 = vpop.xlane.xlu0 %1867
          %v1869 = vmax.f32 %v1084, %v1086
          %v1870 = vmax.f32 %v1869, %v1277
          %v1871 = vmax.f32 %v1870, %v1279
          %v1872 = vmax.f32 %v1871, %v1470
          %v1873 = vmax.f32 %v1872, %v1472
          %v1874 = vmax.f32 %v1873, %v1663
          %v1875 = vmax.f32 %v1874, %v1665
          %1876 = vmax.xlane.f32.xlu0 %v1875
          %v1877 = vpop.xlane.xlu0 %1876
          %v1878 = vmax.f32 %v1088, %v1090
          %v1879 = vmax.f32 %v1878, %v1281
          %v1880 = vmax.f32 %v1879, %v1283
          %v1881 = vmax.f32 %v1880, %v1474
          %v1882 = vmax.f32 %v1881, %v1476
          %v1883 = vmax.f32 %v1882, %v1667
          %v1884 = vmax.f32 %v1883, %v1669
          %1885 = vmax.xlane.f32.xlu0 %v1884
          %v1886 = vpop.xlane.xlu0 %1885
          %v1887 = vmax.f32 %v1094, %v1096
          %v1888 = vmax.f32 %v1887, %v1287
          %v1889 = vmax.f32 %v1888, %v1289
          %v1890 = vmax.f32 %v1889, %v1480
          %v1891 = vmax.f32 %v1890, %v1482
          %v1892 = vmax.f32 %v1891, %v1673
          %v1893 = vmax.f32 %v1892, %v1675
          %1894 = vmax.xlane.f32.xlu0 %v1893
          %v1895 = vpop.xlane.xlu0 %1894
          %v1896 = vmax.f32 %v1098, %v1100
          %v1897 = vmax.f32 %v1896, %v1291
          %v1898 = vmax.f32 %v1897, %v1293
          %v1899 = vmax.f32 %v1898, %v1484
          %v1900 = vmax.f32 %v1899, %v1486
          %v1901 = vmax.f32 %v1900, %v1677
          %v1902 = vmax.f32 %v1901, %v1679
          %1903 = vmax.xlane.f32.xlu0 %v1902
          %v1904 = vpop.xlane.xlu0 %1903
          %v1905 = vmax.f32 %v1104, %v1106
          %v1906 = vmax.f32 %v1905, %v1297
          %v1907 = vmax.f32 %v1906, %v1299
          %v1908 = vmax.f32 %v1907, %v1490
          %v1909 = vmax.f32 %v1908, %v1492
          %v1910 = vmax.f32 %v1909, %v1683
          %v1911 = vmax.f32 %v1910, %v1685
          %1912 = vmax.xlane.f32.xlu0 %v1911
          %v1913 = vpop.xlane.xlu0 %1912
          %v1914 = vmax.f32 %v1108, %v1110
          %v1915 = vmax.f32 %v1914, %v1301
          %v1916 = vmax.f32 %v1915, %v1303
          %v1917 = vmax.f32 %v1916, %v1494
          %v1918 = vmax.f32 %v1917, %v1496
          %v1919 = vmax.f32 %v1918, %v1687
          %v1920 = vmax.f32 %v1919, %v1689
          %1921 = vmax.xlane.f32.xlu0 %v1920
          %v1922 = vpop.xlane.xlu0 %1921
          %v1923 = vmax.f32 %v1114, %v1116
          %v1924 = vmax.f32 %v1923, %v1307
          %v1925 = vmax.f32 %v1924, %v1309
          %v1926 = vmax.f32 %v1925, %v1500
          %v1927 = vmax.f32 %v1926, %v1502
          %v1928 = vmax.f32 %v1927, %v1693
          %v1929 = vmax.f32 %v1928, %v1695
          %1930 = vmax.xlane.f32.xlu0 %v1929
          %v1931 = vpop.xlane.xlu0 %1930
          %v1932 = vmax.f32 %v1118, %v1120
          %v1933 = vmax.f32 %v1932, %v1311
          %v1934 = vmax.f32 %v1933, %v1313
          %v1935 = vmax.f32 %v1934, %v1504
          %v1936 = vmax.f32 %v1935, %v1506
          %v1937 = vmax.f32 %v1936, %v1697
          %v1938 = vmax.f32 %v1937, %v1699
          %1939 = vmax.xlane.f32.xlu0 %v1938
          %v1940 = vpop.xlane.xlu0 %1939
          %v1941 = vmax.f32 %v1124, %v1126
          %v1942 = vmax.f32 %v1941, %v1317
          %v1943 = vmax.f32 %v1942, %v1319
          %v1944 = vmax.f32 %v1943, %v1510
          %v1945 = vmax.f32 %v1944, %v1512
          %v1946 = vmax.f32 %v1945, %v1703
          %v1947 = vmax.f32 %v1946, %v1705
          %1948 = vmax.xlane.f32.xlu0 %v1947
          %v1949 = vpop.xlane.xlu0 %1948
          %v1950 = vmax.f32 %v1128, %v1130
          %v1951 = vmax.f32 %v1950, %v1321
          %v1952 = vmax.f32 %v1951, %v1323
          %v1953 = vmax.f32 %v1952, %v1514
          %v1954 = vmax.f32 %v1953, %v1516
          %v1955 = vmax.f32 %v1954, %v1707
          %v1956 = vmax.f32 %v1955, %v1709
          %1957 = vmax.xlane.f32.xlu0 %v1956
          %v1958 = vpop.xlane.xlu0 %1957
          %v1959 = vmax.f32 %v1134, %v1136
          %v1960 = vmax.f32 %v1959, %v1327
          %v1961 = vmax.f32 %v1960, %v1329
          %v1962 = vmax.f32 %v1961, %v1520
          %v1963 = vmax.f32 %v1962, %v1522
          %v1964 = vmax.f32 %v1963, %v1713
          %v1965 = vmax.f32 %v1964, %v1715
          %1966 = vmax.xlane.f32.xlu0 %v1965
          %v1967 = vpop.xlane.xlu0 %1966
          %v1968 = vmax.f32 %v1138, %v1140
          %v1969 = vmax.f32 %v1968, %v1331
          %v1970 = vmax.f32 %v1969, %v1333
          %v1971 = vmax.f32 %v1970, %v1524
          %v1972 = vmax.f32 %v1971, %v1526
          %v1973 = vmax.f32 %v1972, %v1717
          %v1974 = vmax.f32 %v1973, %v1719
          %1975 = vmax.xlane.f32.xlu0 %v1974
          %v1976 = vpop.xlane.xlu0 %1975
          %v1977 = vmax.f32 %v1144, %v1146
          %v1978 = vmax.f32 %v1977, %v1337
          %v1979 = vmax.f32 %v1978, %v1339
          %v1980 = vmax.f32 %v1979, %v1530
          %v1981 = vmax.f32 %v1980, %v1532
          %v1982 = vmax.f32 %v1981, %v1723
          %v1983 = vmax.f32 %v1982, %v1725
          %1984 = vmax.xlane.f32.xlu0 %v1983
          %v1985 = vpop.xlane.xlu0 %1984
          %v1986 = vmax.f32 %v1148, %v1150
          %v1987 = vmax.f32 %v1986, %v1341
          %v1988 = vmax.f32 %v1987, %v1343
          %v1989 = vmax.f32 %v1988, %v1534
          %v1990 = vmax.f32 %v1989, %v1536
          %v1991 = vmax.f32 %v1990, %v1727
          %v1992 = vmax.f32 %v1991, %v1729
          %1993 = vmax.xlane.f32.xlu0 %v1992
          %v1994 = vpop.xlane.xlu0 %1993
          %v1995 = vmax.f32 %v1154, %v1156
          %v1996 = vmax.f32 %v1995, %v1347
          %v1997 = vmax.f32 %v1996, %v1349
          %v1998 = vmax.f32 %v1997, %v1540
          %v1999 = vmax.f32 %v1998, %v1542
          %v2000 = vmax.f32 %v1999, %v1733
          %v2001 = vmax.f32 %v2000, %v1735
          %2002 = vmax.xlane.f32.xlu0 %v2001
          %v2003 = vpop.xlane.xlu0 %2002
          %v2004 = vmax.f32 %v1158, %v1160
          %v2005 = vmax.f32 %v2004, %v1351
          %v2006 = vmax.f32 %v2005, %v1353
          %v2007 = vmax.f32 %v2006, %v1544
          %v2008 = vmax.f32 %v2007, %v1546
          %v2009 = vmax.f32 %v2008, %v1737
          %v2010 = vmax.f32 %v2009, %v1739
          %2011 = vmax.xlane.f32.xlu0 %v2010
          %v2012 = vpop.xlane.xlu0 %2011
          %v2013 = vmax.f32 %v1164, %v1166
          %v2014 = vmax.f32 %v2013, %v1357
          %v2015 = vmax.f32 %v2014, %v1359
          %v2016 = vmax.f32 %v2015, %v1550
          %v2017 = vmax.f32 %v2016, %v1552
          %v2018 = vmax.f32 %v2017, %v1743
          %v2019 = vmax.f32 %v2018, %v1745
          %2020 = vmax.xlane.f32.xlu0 %v2019
          %v2021 = vpop.xlane.xlu0 %2020
          %v2022 = vmax.f32 %v1168, %v1170
          %v2023 = vmax.f32 %v2022, %v1361
          %v2024 = vmax.f32 %v2023, %v1363
          %v2025 = vmax.f32 %v2024, %v1554
          %v2026 = vmax.f32 %v2025, %v1556
          %v2027 = vmax.f32 %v2026, %v1747
          %v2028 = vmax.f32 %v2027, %v1749
          %2029 = vmax.xlane.f32.xlu0 %v2028
          %v2030 = vpop.xlane.xlu0 %2029
          %v2031 = vmax.f32 %v1174, %v1176
          %v2032 = vmax.f32 %v2031, %v1367
          %v2033 = vmax.f32 %v2032, %v1369
          %v2034 = vmax.f32 %v2033, %v1560
          %v2035 = vmax.f32 %v2034, %v1562
          %v2036 = vmax.f32 %v2035, %v1753
          %v2037 = vmax.f32 %v2036, %v1755
          %2038 = vmax.xlane.f32.xlu0 %v2037
          %v2039 = vpop.xlane.xlu0 %2038
          %v2040 = vmax.f32 %v1178, %v1180
          %v2041 = vmax.f32 %v2040, %v1371
          %v2042 = vmax.f32 %v2041, %v1373
          %v2043 = vmax.f32 %v2042, %v1564
          %v2044 = vmax.f32 %v2043, %v1566
          %v2045 = vmax.f32 %v2044, %v1757
          %v2046 = vmax.f32 %v2045, %v1759
          %2047 = vmax.xlane.f32.xlu0 %v2046
          %v2048 = vpop.xlane.xlu0 %2047
          %v2049 = vsub.f32 %v1024, %v1769
          %v2050 = vsub.f32 %v1026, %v1769
          %v2051 = vsub.f32 %v1217, %v1769
          %v2052 = vsub.f32 %v1219, %v1769
          %v2053 = vsub.f32 %v1410, %v1769
          %v2054 = vsub.f32 %v1412, %v1769
          %v2055 = vsub.f32 %v1603, %v1769
          %v2056 = vsub.f32 %v1605, %v1769
          %v2057 = vsub.f32 %v1028, %v1778
          %v2058 = vsub.f32 %v1030, %v1778
          %v2059 = vsub.f32 %v1221, %v1778
          %v2060 = vsub.f32 %v1223, %v1778
          %v2061 = vsub.f32 %v1414, %v1778
          %v2062 = vsub.f32 %v1416, %v1778
          %v2063 = vsub.f32 %v1607, %v1778
          %v2064 = vsub.f32 %v1609, %v1778
          %v2065 = vsub.f32 %v1034, %v1787
          %v2066 = vsub.f32 %v1036, %v1787
          %v2067 = vsub.f32 %v1227, %v1787
          %v2068 = vsub.f32 %v1229, %v1787
          %v2069 = vsub.f32 %v1420, %v1787
          %v2070 = vsub.f32 %v1422, %v1787
          %v2071 = vsub.f32 %v1613, %v1787
          %v2072 = vsub.f32 %v1615, %v1787
          %v2073 = vsub.f32 %v1038, %v1796
          %v2074 = vsub.f32 %v1040, %v1796
          %v2075 = vsub.f32 %v1231, %v1796
          %v2076 = vsub.f32 %v1233, %v1796
          %v2077 = vsub.f32 %v1424, %v1796
          %v2078 = vsub.f32 %v1426, %v1796
          %v2079 = vsub.f32 %v1617, %v1796
          %v2080 = vsub.f32 %v1619, %v1796
          %v2081 = vsub.f32 %v1044, %v1805
          %v2082 = vsub.f32 %v1046, %v1805
          %v2083 = vsub.f32 %v1237, %v1805
          %v2084 = vsub.f32 %v1239, %v1805
          %v2085 = vsub.f32 %v1430, %v1805
          %v2086 = vsub.f32 %v1432, %v1805
          %v2087 = vsub.f32 %v1623, %v1805
          %v2088 = vsub.f32 %v1625, %v1805
          %v2089 = vsub.f32 %v1048, %v1814
          %v2090 = vsub.f32 %v1050, %v1814
          %v2091 = vsub.f32 %v1241, %v1814
          %v2092 = vsub.f32 %v1243, %v1814
          %v2093 = vsub.f32 %v1434, %v1814
          %v2094 = vsub.f32 %v1436, %v1814
          %v2095 = vsub.f32 %v1627, %v1814
          %v2096 = vsub.f32 %v1629, %v1814
          %v2097 = vsub.f32 %v1054, %v1823
          %v2098 = vsub.f32 %v1056, %v1823
          %v2099 = vsub.f32 %v1247, %v1823
          %v2100 = vsub.f32 %v1249, %v1823
          %v2101 = vsub.f32 %v1440, %v1823
          %v2102 = vsub.f32 %v1442, %v1823
          %v2103 = vsub.f32 %v1633, %v1823
          %v2104 = vsub.f32 %v1635, %v1823
          %v2105 = vsub.f32 %v1058, %v1832
          %v2106 = vsub.f32 %v1060, %v1832
          %v2107 = vsub.f32 %v1251, %v1832
          %v2108 = vsub.f32 %v1253, %v1832
          %v2109 = vsub.f32 %v1444, %v1832
          %v2110 = vsub.f32 %v1446, %v1832
          %v2111 = vsub.f32 %v1637, %v1832
          %v2112 = vsub.f32 %v1639, %v1832
          %v2113 = vsub.f32 %v1064, %v1841
          %v2114 = vsub.f32 %v1066, %v1841
          %v2115 = vsub.f32 %v1257, %v1841
          %v2116 = vsub.f32 %v1259, %v1841
          %v2117 = vsub.f32 %v1450, %v1841
          %v2118 = vsub.f32 %v1452, %v1841
          %v2119 = vsub.f32 %v1643, %v1841
          %v2120 = vsub.f32 %v1645, %v1841
          %v2121 = vsub.f32 %v1068, %v1850
          %v2122 = vsub.f32 %v1070, %v1850
          %v2123 = vsub.f32 %v1261, %v1850
          %v2124 = vsub.f32 %v1263, %v1850
          %v2125 = vsub.f32 %v1454, %v1850
          %v2126 = vsub.f32 %v1456, %v1850
          %v2127 = vsub.f32 %v1647, %v1850
          %v2128 = vsub.f32 %v1649, %v1850
          %v2129 = vsub.f32 %v1074, %v1859
          %v2130 = vsub.f32 %v1076, %v1859
          %v2131 = vsub.f32 %v1267, %v1859
          %v2132 = vsub.f32 %v1269, %v1859
          %v2133 = vsub.f32 %v1460, %v1859
          %v2134 = vsub.f32 %v1462, %v1859
          %v2135 = vsub.f32 %v1653, %v1859
          %v2136 = vsub.f32 %v1655, %v1859
          %v2137 = vsub.f32 %v1078, %v1868
          %v2138 = vsub.f32 %v1080, %v1868
          %v2139 = vsub.f32 %v1271, %v1868
          %v2140 = vsub.f32 %v1273, %v1868
          %v2141 = vsub.f32 %v1464, %v1868
          %v2142 = vsub.f32 %v1466, %v1868
          %v2143 = vsub.f32 %v1657, %v1868
          %v2144 = vsub.f32 %v1659, %v1868
          %v2145 = vsub.f32 %v1084, %v1877
          %v2146 = vsub.f32 %v1086, %v1877
          %v2147 = vsub.f32 %v1277, %v1877
          %v2148 = vsub.f32 %v1279, %v1877
          %v2149 = vsub.f32 %v1470, %v1877
          %v2150 = vsub.f32 %v1472, %v1877
          %v2151 = vsub.f32 %v1663, %v1877
          %v2152 = vsub.f32 %v1665, %v1877
          %v2153 = vsub.f32 %v1088, %v1886
          %v2154 = vsub.f32 %v1090, %v1886
          %v2155 = vsub.f32 %v1281, %v1886
          %v2156 = vsub.f32 %v1283, %v1886
          %v2157 = vsub.f32 %v1474, %v1886
          %v2158 = vsub.f32 %v1476, %v1886
          %v2159 = vsub.f32 %v1667, %v1886
          %v2160 = vsub.f32 %v1669, %v1886
          %v2161 = vsub.f32 %v1094, %v1895
          %v2162 = vsub.f32 %v1096, %v1895
          %v2163 = vsub.f32 %v1287, %v1895
          %v2164 = vsub.f32 %v1289, %v1895
          %v2165 = vsub.f32 %v1480, %v1895
          %v2166 = vsub.f32 %v1482, %v1895
          %v2167 = vsub.f32 %v1673, %v1895
          %v2168 = vsub.f32 %v1675, %v1895
          %v2169 = vsub.f32 %v1098, %v1904
          %v2170 = vsub.f32 %v1100, %v1904
          %v2171 = vsub.f32 %v1291, %v1904
          %v2172 = vsub.f32 %v1293, %v1904
          %v2173 = vsub.f32 %v1484, %v1904
          %v2174 = vsub.f32 %v1486, %v1904
          %v2175 = vsub.f32 %v1677, %v1904
          %v2176 = vsub.f32 %v1679, %v1904
          %v2177 = vsub.f32 %v1104, %v1913
          %v2178 = vsub.f32 %v1106, %v1913
          %v2179 = vsub.f32 %v1297, %v1913
          %v2180 = vsub.f32 %v1299, %v1913
          %v2181 = vsub.f32 %v1490, %v1913
          %v2182 = vsub.f32 %v1492, %v1913
          %v2183 = vsub.f32 %v1683, %v1913
          %v2184 = vsub.f32 %v1685, %v1913
          %v2185 = vsub.f32 %v1108, %v1922
          %v2186 = vsub.f32 %v1110, %v1922
          %v2187 = vsub.f32 %v1301, %v1922
          %v2188 = vsub.f32 %v1303, %v1922
          %v2189 = vsub.f32 %v1494, %v1922
          %v2190 = vsub.f32 %v1496, %v1922
          %v2191 = vsub.f32 %v1687, %v1922
          %v2192 = vsub.f32 %v1689, %v1922
          %v2193 = vsub.f32 %v1114, %v1931
          %v2194 = vsub.f32 %v1116, %v1931
          %v2195 = vsub.f32 %v1307, %v1931
          %v2196 = vsub.f32 %v1309, %v1931
          %v2197 = vsub.f32 %v1500, %v1931
          %v2198 = vsub.f32 %v1502, %v1931
          %v2199 = vsub.f32 %v1693, %v1931
          %v2200 = vsub.f32 %v1695, %v1931
          %v2201 = vsub.f32 %v1118, %v1940
          %v2202 = vsub.f32 %v1120, %v1940
          %v2203 = vsub.f32 %v1311, %v1940
          %v2204 = vsub.f32 %v1313, %v1940
          %v2205 = vsub.f32 %v1504, %v1940
          %v2206 = vsub.f32 %v1506, %v1940
          %v2207 = vsub.f32 %v1697, %v1940
          %v2208 = vsub.f32 %v1699, %v1940
          %v2209 = vsub.f32 %v1124, %v1949
          %v2210 = vsub.f32 %v1126, %v1949
          %v2211 = vsub.f32 %v1317, %v1949
          %v2212 = vsub.f32 %v1319, %v1949
          %v2213 = vsub.f32 %v1510, %v1949
          %v2214 = vsub.f32 %v1512, %v1949
          %v2215 = vsub.f32 %v1703, %v1949
          %v2216 = vsub.f32 %v1705, %v1949
          %v2217 = vsub.f32 %v1128, %v1958
          %v2218 = vsub.f32 %v1130, %v1958
          %v2219 = vsub.f32 %v1321, %v1958
          %v2220 = vsub.f32 %v1323, %v1958
          %v2221 = vsub.f32 %v1514, %v1958
          %v2222 = vsub.f32 %v1516, %v1958
          %v2223 = vsub.f32 %v1707, %v1958
          %v2224 = vsub.f32 %v1709, %v1958
          %v2225 = vsub.f32 %v1134, %v1967
          %v2226 = vsub.f32 %v1136, %v1967
          %v2227 = vsub.f32 %v1327, %v1967
          %v2228 = vsub.f32 %v1329, %v1967
          %v2229 = vsub.f32 %v1520, %v1967
          %v2230 = vsub.f32 %v1522, %v1967
          %v2231 = vsub.f32 %v1713, %v1967
          %v2232 = vsub.f32 %v1715, %v1967
          %v2233 = vsub.f32 %v1138, %v1976
          %v2234 = vsub.f32 %v1140, %v1976
          %v2235 = vsub.f32 %v1331, %v1976
          %v2236 = vsub.f32 %v1333, %v1976
          %v2237 = vsub.f32 %v1524, %v1976
          %v2238 = vsub.f32 %v1526, %v1976
          %v2239 = vsub.f32 %v1717, %v1976
          %v2240 = vsub.f32 %v1719, %v1976
          %v2241 = vsub.f32 %v1144, %v1985
          %v2242 = vsub.f32 %v1146, %v1985
          %v2243 = vsub.f32 %v1337, %v1985
          %v2244 = vsub.f32 %v1339, %v1985
          %v2245 = vsub.f32 %v1530, %v1985
          %v2246 = vsub.f32 %v1532, %v1985
          %v2247 = vsub.f32 %v1723, %v1985
          %v2248 = vsub.f32 %v1725, %v1985
          %v2249 = vsub.f32 %v1148, %v1994
          %v2250 = vsub.f32 %v1150, %v1994
          %v2251 = vsub.f32 %v1341, %v1994
          %v2252 = vsub.f32 %v1343, %v1994
          %v2253 = vsub.f32 %v1534, %v1994
          %v2254 = vsub.f32 %v1536, %v1994
          %v2255 = vsub.f32 %v1727, %v1994
          %v2256 = vsub.f32 %v1729, %v1994
          %v2257 = vsub.f32 %v1154, %v2003
          %v2258 = vsub.f32 %v1156, %v2003
          %v2259 = vsub.f32 %v1347, %v2003
          %v2260 = vsub.f32 %v1349, %v2003
          %v2261 = vsub.f32 %v1540, %v2003
          %v2262 = vsub.f32 %v1542, %v2003
          %v2263 = vsub.f32 %v1733, %v2003
          %v2264 = vsub.f32 %v1735, %v2003
          %v2265 = vsub.f32 %v1158, %v2012
          %v2266 = vsub.f32 %v1160, %v2012
          %v2267 = vsub.f32 %v1351, %v2012
          %v2268 = vsub.f32 %v1353, %v2012
          %v2269 = vsub.f32 %v1544, %v2012
          %v2270 = vsub.f32 %v1546, %v2012
          %v2271 = vsub.f32 %v1737, %v2012
          %v2272 = vsub.f32 %v1739, %v2012
          %v2273 = vsub.f32 %v1164, %v2021
          %v2274 = vsub.f32 %v1166, %v2021
          %v2275 = vsub.f32 %v1357, %v2021
          %v2276 = vsub.f32 %v1359, %v2021
          %v2277 = vsub.f32 %v1550, %v2021
          %v2278 = vsub.f32 %v1552, %v2021
          %v2279 = vsub.f32 %v1743, %v2021
          %v2280 = vsub.f32 %v1745, %v2021
          %v2281 = vsub.f32 %v1168, %v2030
          %v2282 = vsub.f32 %v1170, %v2030
          %v2283 = vsub.f32 %v1361, %v2030
          %v2284 = vsub.f32 %v1363, %v2030
          %v2285 = vsub.f32 %v1554, %v2030
          %v2286 = vsub.f32 %v1556, %v2030
          %v2287 = vsub.f32 %v1747, %v2030
          %v2288 = vsub.f32 %v1749, %v2030
          %v2289 = vsub.f32 %v1174, %v2039
          %v2290 = vsub.f32 %v1176, %v2039
          %v2291 = vsub.f32 %v1367, %v2039
          %v2292 = vsub.f32 %v1369, %v2039
          %v2293 = vsub.f32 %v1560, %v2039
          %v2294 = vsub.f32 %v1562, %v2039
          %v2295 = vsub.f32 %v1753, %v2039
          %v2296 = vsub.f32 %v1755, %v2039
          %v2297 = vsub.f32 %v1178, %v2048
          %v2298 = vsub.f32 %v1180, %v2048
          %v2299 = vsub.f32 %v1371, %v2048
          %v2300 = vsub.f32 %v1373, %v2048
          %v2301 = vsub.f32 %v1564, %v2048
          %v2302 = vsub.f32 %v1566, %v2048
          %v2303 = vsub.f32 %v1757, %v2048
          %v2304 = vsub.f32 %v1759, %v2048
          %v2305 = vmul.f32 %v2049, 1.442695
          %v2306 = vpow.pop %v2305
          %v2307 = vmul.f32 %v2050, 1.442695
          %v2308 = vpow.pop %v2307
          %v2309 = vmul.f32 %v2051, 1.442695
          %v2310 = vpow.pop %v2309
          %v2311 = vmul.f32 %v2052, 1.442695
          %v2312 = vpow.pop %v2311
          %v2313 = vmul.f32 %v2053, 1.442695
          %v2314 = vpow.pop %v2313
          %v2315 = vmul.f32 %v2054, 1.442695
          %v2316 = vpow.pop %v2315
          %v2317 = vmul.f32 %v2055, 1.442695
          %v2318 = vpow.pop %v2317
          %v2319 = vmul.f32 %v2056, 1.442695
          %v2320 = vpow.pop %v2319
          %v2321 = vmul.f32 %v2057, 1.442695
          %v2322 = vpow.pop %v2321
          %v2323 = vmul.f32 %v2058, 1.442695
          %v2324 = vpow.pop %v2323
          %v2325 = vmul.f32 %v2059, 1.442695
          %v2326 = vpow.pop %v2325
          %v2327 = vmul.f32 %v2060, 1.442695
          %v2328 = vpow.pop %v2327
          %v2329 = vmul.f32 %v2061, 1.442695
          %v2330 = vpow.pop %v2329
          %v2331 = vmul.f32 %v2062, 1.442695
          %v2332 = vpow.pop %v2331
          %v2333 = vmul.f32 %v2063, 1.442695
          %v2334 = vpow.pop %v2333
          %v2335 = vmul.f32 %v2064, 1.442695
          %v2336 = vpow.pop %v2335
          %v2337 = vmul.f32 %v2065, 1.442695
          %v2338 = vpow.pop %v2337
          %v2339 = vmul.f32 %v2066, 1.442695
          %v2340 = vpow.pop %v2339
          %v2341 = vmul.f32 %v2067, 1.442695
          %v2342 = vpow.pop %v2341
          %v2343 = vmul.f32 %v2068, 1.442695
          %v2344 = vpow.pop %v2343
          %v2345 = vmul.f32 %v2069, 1.442695
          %v2346 = vpow.pop %v2345
          %v2347 = vmul.f32 %v2070, 1.442695
          %v2348 = vpow.pop %v2347
          %v2349 = vmul.f32 %v2071, 1.442695
          %v2350 = vpow.pop %v2349
          %v2351 = vmul.f32 %v2072, 1.442695
          %v2352 = vpow.pop %v2351
          %v2353 = vmul.f32 %v2073, 1.442695
          %v2354 = vpow.pop %v2353
          %v2355 = vmul.f32 %v2074, 1.442695
          %v2356 = vpow.pop %v2355
          %v2357 = vmul.f32 %v2075, 1.442695
          %v2358 = vpow.pop %v2357
          %v2359 = vmul.f32 %v2076, 1.442695
          %v2360 = vpow.pop %v2359
          %v2361 = vmul.f32 %v2077, 1.442695
          %v2362 = vpow.pop %v2361
          %v2363 = vmul.f32 %v2078, 1.442695
          %v2364 = vpow.pop %v2363
          %v2365 = vmul.f32 %v2079, 1.442695
          %v2366 = vpow.pop %v2365
          %v2367 = vmul.f32 %v2080, 1.442695
          %v2368 = vpow.pop %v2367
          %v2369 = vmul.f32 %v2081, 1.442695
          %v2370 = vpow.pop %v2369
          %v2371 = vmul.f32 %v2082, 1.442695
          %v2372 = vpow.pop %v2371
          %v2373 = vmul.f32 %v2083, 1.442695
          %v2374 = vpow.pop %v2373
          %v2375 = vmul.f32 %v2084, 1.442695
          %v2376 = vpow.pop %v2375
          %v2377 = vmul.f32 %v2085, 1.442695
          %v2378 = vpow.pop %v2377
          %v2379 = vmul.f32 %v2086, 1.442695
          %v2380 = vpow.pop %v2379
          %v2381 = vmul.f32 %v2087, 1.442695
          %v2382 = vpow.pop %v2381
          %v2383 = vmul.f32 %v2088, 1.442695
          %v2384 = vpow.pop %v2383
          %v2385 = vmul.f32 %v2089, 1.442695
          %v2386 = vpow.pop %v2385
          %v2387 = vmul.f32 %v2090, 1.442695
          %v2388 = vpow.pop %v2387
          %v2389 = vmul.f32 %v2091, 1.442695
          %v2390 = vpow.pop %v2389
          %v2391 = vmul.f32 %v2092, 1.442695
          %v2392 = vpow.pop %v2391
          %v2393 = vmul.f32 %v2093, 1.442695
          %v2394 = vpow.pop %v2393
          %v2395 = vmul.f32 %v2094, 1.442695
          %v2396 = vpow.pop %v2395
          %v2397 = vmul.f32 %v2095, 1.442695
          %v2398 = vpow.pop %v2397
          %v2399 = vmul.f32 %v2096, 1.442695
          %v2400 = vpow.pop %v2399
          %v2401 = vmul.f32 %v2097, 1.442695
          %v2402 = vpow.pop %v2401
          %v2403 = vmul.f32 %v2098, 1.442695
          %v2404 = vpow.pop %v2403
          %v2405 = vmul.f32 %v2099, 1.442695
          %v2406 = vpow.pop %v2405
          %v2407 = vmul.f32 %v2100, 1.442695
          %v2408 = vpow.pop %v2407
          %v2409 = vmul.f32 %v2101, 1.442695
          %v2410 = vpow.pop %v2409
          %v2411 = vmul.f32 %v2102, 1.442695
          %v2412 = vpow.pop %v2411
          %v2413 = vmul.f32 %v2103, 1.442695
          %v2414 = vpow.pop %v2413
          %v2415 = vmul.f32 %v2104, 1.442695
          %v2416 = vpow.pop %v2415
          %v2417 = vmul.f32 %v2105, 1.442695
          %v2418 = vpow.pop %v2417
          %v2419 = vmul.f32 %v2106, 1.442695
          %v2420 = vpow.pop %v2419
          %v2421 = vmul.f32 %v2107, 1.442695
          %v2422 = vpow.pop %v2421
          %v2423 = vmul.f32 %v2108, 1.442695
          %v2424 = vpow.pop %v2423
          %v2425 = vmul.f32 %v2109, 1.442695
          %v2426 = vpow.pop %v2425
          %v2427 = vmul.f32 %v2110, 1.442695
          %v2428 = vpow.pop %v2427
          %v2429 = vmul.f32 %v2111, 1.442695
          %v2430 = vpow.pop %v2429
          %v2431 = vmul.f32 %v2112, 1.442695
          %v2432 = vpow.pop %v2431
          %v2433 = vmul.f32 %v2113, 1.442695
          %v2434 = vpow.pop %v2433
          %v2435 = vmul.f32 %v2114, 1.442695
          %v2436 = vpow.pop %v2435
          %v2437 = vmul.f32 %v2115, 1.442695
          %v2438 = vpow.pop %v2437
          %v2439 = vmul.f32 %v2116, 1.442695
          %v2440 = vpow.pop %v2439
          %v2441 = vmul.f32 %v2117, 1.442695
          %v2442 = vpow.pop %v2441
          %v2443 = vmul.f32 %v2118, 1.442695
          %v2444 = vpow.pop %v2443
          %v2445 = vmul.f32 %v2119, 1.442695
          %v2446 = vpow.pop %v2445
          %v2447 = vmul.f32 %v2120, 1.442695
          %v2448 = vpow.pop %v2447
          %v2449 = vmul.f32 %v2121, 1.442695
          %v2450 = vpow.pop %v2449
          %v2451 = vmul.f32 %v2122, 1.442695
          %v2452 = vpow.pop %v2451
          %v2453 = vmul.f32 %v2123, 1.442695
          %v2454 = vpow.pop %v2453
          %v2455 = vmul.f32 %v2124, 1.442695
          %v2456 = vpow.pop %v2455
          %v2457 = vmul.f32 %v2125, 1.442695
          %v2458 = vpow.pop %v2457
          %v2459 = vmul.f32 %v2126, 1.442695
          %v2460 = vpow.pop %v2459
          %v2461 = vmul.f32 %v2127, 1.442695
          %v2462 = vpow.pop %v2461
          %v2463 = vmul.f32 %v2128, 1.442695
          %v2464 = vpow.pop %v2463
          %v2465 = vmul.f32 %v2129, 1.442695
          %v2466 = vpow.pop %v2465
          %v2467 = vmul.f32 %v2130, 1.442695
          %v2468 = vpow.pop %v2467
          %v2469 = vmul.f32 %v2131, 1.442695
          %v2470 = vpow.pop %v2469
          %v2471 = vmul.f32 %v2132, 1.442695
          %v2472 = vpow.pop %v2471
          %v2473 = vmul.f32 %v2133, 1.442695
          %v2474 = vpow.pop %v2473
          %v2475 = vmul.f32 %v2134, 1.442695
          %v2476 = vpow.pop %v2475
          %v2477 = vmul.f32 %v2135, 1.442695
          %v2478 = vpow.pop %v2477
          %v2479 = vmul.f32 %v2136, 1.442695
          %v2480 = vpow.pop %v2479
          %v2481 = vmul.f32 %v2137, 1.442695
          %v2482 = vpow.pop %v2481
          %v2483 = vmul.f32 %v2138, 1.442695
          %v2484 = vpow.pop %v2483
          %v2485 = vmul.f32 %v2139, 1.442695
          %v2486 = vpow.pop %v2485
          %v2487 = vmul.f32 %v2140, 1.442695
          %v2488 = vpow.pop %v2487
          %v2489 = vmul.f32 %v2141, 1.442695
          %v2490 = vpow.pop %v2489
          %v2491 = vmul.f32 %v2142, 1.442695
          %v2492 = vpow.pop %v2491
          %v2493 = vmul.f32 %v2143, 1.442695
          %v2494 = vpow.pop %v2493
          %v2495 = vmul.f32 %v2144, 1.442695
          %v2496 = vpow.pop %v2495
          %v2497 = vmul.f32 %v2145, 1.442695
          %v2498 = vpow.pop %v2497
          %v2499 = vmul.f32 %v2146, 1.442695
          %v2500 = vpow.pop %v2499
          %v2501 = vmul.f32 %v2147, 1.442695
          %v2502 = vpow.pop %v2501
          %v2503 = vmul.f32 %v2148, 1.442695
          %v2504 = vpow.pop %v2503
          %v2505 = vmul.f32 %v2149, 1.442695
          %v2506 = vpow.pop %v2505
          %v2507 = vmul.f32 %v2150, 1.442695
          %v2508 = vpow.pop %v2507
          %v2509 = vmul.f32 %v2151, 1.442695
          %v2510 = vpow.pop %v2509
          %v2511 = vmul.f32 %v2152, 1.442695
          %v2512 = vpow.pop %v2511
          %v2513 = vmul.f32 %v2153, 1.442695
          %v2514 = vpow.pop %v2513
          %v2515 = vmul.f32 %v2154, 1.442695
          %v2516 = vpow.pop %v2515
          %v2517 = vmul.f32 %v2155, 1.442695
          %v2518 = vpow.pop %v2517
          %v2519 = vmul.f32 %v2156, 1.442695
          %v2520 = vpow.pop %v2519
          %v2521 = vmul.f32 %v2157, 1.442695
          %v2522 = vpow.pop %v2521
          %v2523 = vmul.f32 %v2158, 1.442695
          %v2524 = vpow.pop %v2523
          %v2525 = vmul.f32 %v2159, 1.442695
          %v2526 = vpow.pop %v2525
          %v2527 = vmul.f32 %v2160, 1.442695
          %v2528 = vpow.pop %v2527
          %v2529 = vmul.f32 %v2161, 1.442695
          %v2530 = vpow.pop %v2529
          %v2531 = vmul.f32 %v2162, 1.442695
          %v2532 = vpow.pop %v2531
          %v2533 = vmul.f32 %v2163, 1.442695
          %v2534 = vpow.pop %v2533
          %v2535 = vmul.f32 %v2164, 1.442695
          %v2536 = vpow.pop %v2535
          %v2537 = vmul.f32 %v2165, 1.442695
          %v2538 = vpow.pop %v2537
          %v2539 = vmul.f32 %v2166, 1.442695
          %v2540 = vpow.pop %v2539
          %v2541 = vmul.f32 %v2167, 1.442695
          %v2542 = vpow.pop %v2541
          %v2543 = vmul.f32 %v2168, 1.442695
          %v2544 = vpow.pop %v2543
          %v2545 = vmul.f32 %v2169, 1.442695
          %v2546 = vpow.pop %v2545
          %v2547 = vmul.f32 %v2170, 1.442695
          %v2548 = vpow.pop %v2547
          %v2549 = vmul.f32 %v2171, 1.442695
          %v2550 = vpow.pop %v2549
          %v2551 = vmul.f32 %v2172, 1.442695
          %v2552 = vpow.pop %v2551
          %v2553 = vmul.f32 %v2173, 1.442695
          %v2554 = vpow.pop %v2553
          %v2555 = vmul.f32 %v2174, 1.442695
          %v2556 = vpow.pop %v2555
          %v2557 = vmul.f32 %v2175, 1.442695
          %v2558 = vpow.pop %v2557
          %v2559 = vmul.f32 %v2176, 1.442695
          %v2560 = vpow.pop %v2559
          %v2561 = vmul.f32 %v2177, 1.442695
          %v2562 = vpow.pop %v2561
          %v2563 = vmul.f32 %v2178, 1.442695
          %v2564 = vpow.pop %v2563
          %v2565 = vmul.f32 %v2179, 1.442695
          %v2566 = vpow.pop %v2565
          %v2567 = vmul.f32 %v2180, 1.442695
          %v2568 = vpow.pop %v2567
          %v2569 = vmul.f32 %v2181, 1.442695
          %v2570 = vpow.pop %v2569
          %v2571 = vmul.f32 %v2182, 1.442695
          %v2572 = vpow.pop %v2571
          %v2573 = vmul.f32 %v2183, 1.442695
          %v2574 = vpow.pop %v2573
          %v2575 = vmul.f32 %v2184, 1.442695
          %v2576 = vpow.pop %v2575
          %v2577 = vmul.f32 %v2185, 1.442695
          %v2578 = vpow.pop %v2577
          %v2579 = vmul.f32 %v2186, 1.442695
          %v2580 = vpow.pop %v2579
          %v2581 = vmul.f32 %v2187, 1.442695
          %v2582 = vpow.pop %v2581
          %v2583 = vmul.f32 %v2188, 1.442695
          %v2584 = vpow.pop %v2583
          %v2585 = vmul.f32 %v2189, 1.442695
          %v2586 = vpow.pop %v2585
          %v2587 = vmul.f32 %v2190, 1.442695
          %v2588 = vpow.pop %v2587
          %v2589 = vmul.f32 %v2191, 1.442695
          %v2590 = vpow.pop %v2589
          %v2591 = vmul.f32 %v2192, 1.442695
          %v2592 = vpow.pop %v2591
          %v2593 = vmul.f32 %v2193, 1.442695
          %v2594 = vpow.pop %v2593
          %v2595 = vmul.f32 %v2194, 1.442695
          %v2596 = vpow.pop %v2595
          %v2597 = vmul.f32 %v2195, 1.442695
          %v2598 = vpow.pop %v2597
          %v2599 = vmul.f32 %v2196, 1.442695
          %v2600 = vpow.pop %v2599
          %v2601 = vmul.f32 %v2197, 1.442695
          %v2602 = vpow.pop %v2601
          %v2603 = vmul.f32 %v2198, 1.442695
          %v2604 = vpow.pop %v2603
          %v2605 = vmul.f32 %v2199, 1.442695
          %v2606 = vpow.pop %v2605
          %v2607 = vmul.f32 %v2200, 1.442695
          %v2608 = vpow.pop %v2607
          %v2609 = vmul.f32 %v2201, 1.442695
          %v2610 = vpow.pop %v2609
          %v2611 = vmul.f32 %v2202, 1.442695
          %v2612 = vpow.pop %v2611
          %v2613 = vmul.f32 %v2203, 1.442695
          %v2614 = vpow.pop %v2613
          %v2615 = vmul.f32 %v2204, 1.442695
          %v2616 = vpow.pop %v2615
          %v2617 = vmul.f32 %v2205, 1.442695
          %v2618 = vpow.pop %v2617
          %v2619 = vmul.f32 %v2206, 1.442695
          %v2620 = vpow.pop %v2619
          %v2621 = vmul.f32 %v2207, 1.442695
          %v2622 = vpow.pop %v2621
          %v2623 = vmul.f32 %v2208, 1.442695
          %v2624 = vpow.pop %v2623
          %v2625 = vmul.f32 %v2209, 1.442695
          %v2626 = vpow.pop %v2625
          %v2627 = vmul.f32 %v2210, 1.442695
          %v2628 = vpow.pop %v2627
          %v2629 = vmul.f32 %v2211, 1.442695
          %v2630 = vpow.pop %v2629
          %v2631 = vmul.f32 %v2212, 1.442695
          %v2632 = vpow.pop %v2631
          %v2633 = vmul.f32 %v2213, 1.442695
          %v2634 = vpow.pop %v2633
          %v2635 = vmul.f32 %v2214, 1.442695
          %v2636 = vpow.pop %v2635
          %v2637 = vmul.f32 %v2215, 1.442695
          %v2638 = vpow.pop %v2637
          %v2639 = vmul.f32 %v2216, 1.442695
          %v2640 = vpow.pop %v2639
          %v2641 = vmul.f32 %v2217, 1.442695
          %v2642 = vpow.pop %v2641
          %v2643 = vmul.f32 %v2218, 1.442695
          %v2644 = vpow.pop %v2643
          %v2645 = vmul.f32 %v2219, 1.442695
          %v2646 = vpow.pop %v2645
          %v2647 = vmul.f32 %v2220, 1.442695
          %v2648 = vpow.pop %v2647
          %v2649 = vmul.f32 %v2221, 1.442695
          %v2650 = vpow.pop %v2649
          %v2651 = vmul.f32 %v2222, 1.442695
          %v2652 = vpow.pop %v2651
          %v2653 = vmul.f32 %v2223, 1.442695
          %v2654 = vpow.pop %v2653
          %v2655 = vmul.f32 %v2224, 1.442695
          %v2656 = vpow.pop %v2655
          %v2657 = vmul.f32 %v2225, 1.442695
          %v2658 = vpow.pop %v2657
          %v2659 = vmul.f32 %v2226, 1.442695
          %v2660 = vpow.pop %v2659
          %v2661 = vmul.f32 %v2227, 1.442695
          %v2662 = vpow.pop %v2661
          %v2663 = vmul.f32 %v2228, 1.442695
          %v2664 = vpow.pop %v2663
          %v2665 = vmul.f32 %v2229, 1.442695
          %v2666 = vpow.pop %v2665
          %v2667 = vmul.f32 %v2230, 1.442695
          %v2668 = vpow.pop %v2667
          %v2669 = vmul.f32 %v2231, 1.442695
          %v2670 = vpow.pop %v2669
          %v2671 = vmul.f32 %v2232, 1.442695
          %v2672 = vpow.pop %v2671
          %v2673 = vmul.f32 %v2233, 1.442695
          %v2674 = vpow.pop %v2673
          %v2675 = vmul.f32 %v2234, 1.442695
          %v2676 = vpow.pop %v2675
          %v2677 = vmul.f32 %v2235, 1.442695
          %v2678 = vpow.pop %v2677
          %v2679 = vmul.f32 %v2236, 1.442695
          %v2680 = vpow.pop %v2679
          %v2681 = vmul.f32 %v2237, 1.442695
          %v2682 = vpow.pop %v2681
          %v2683 = vmul.f32 %v2238, 1.442695
          %v2684 = vpow.pop %v2683
          %v2685 = vmul.f32 %v2239, 1.442695
          %v2686 = vpow.pop %v2685
          %v2687 = vmul.f32 %v2240, 1.442695
          %v2688 = vpow.pop %v2687
          %v2689 = vmul.f32 %v2241, 1.442695
          %v2690 = vpow.pop %v2689
          %v2691 = vmul.f32 %v2242, 1.442695
          %v2692 = vpow.pop %v2691
          %v2693 = vmul.f32 %v2243, 1.442695
          %v2694 = vpow.pop %v2693
          %v2695 = vmul.f32 %v2244, 1.442695
          %v2696 = vpow.pop %v2695
          %v2697 = vmul.f32 %v2245, 1.442695
          %v2698 = vpow.pop %v2697
          %v2699 = vmul.f32 %v2246, 1.442695
          %v2700 = vpow.pop %v2699
          %v2701 = vmul.f32 %v2247, 1.442695
          %v2702 = vpow.pop %v2701
          %v2703 = vmul.f32 %v2248, 1.442695
          %v2704 = vpow.pop %v2703
          %v2705 = vmul.f32 %v2249, 1.442695
          %v2706 = vpow.pop %v2705
          %v2707 = vmul.f32 %v2250, 1.442695
          %v2708 = vpow.pop %v2707
          %v2709 = vmul.f32 %v2251, 1.442695
          %v2710 = vpow.pop %v2709
          %v2711 = vmul.f32 %v2252, 1.442695
          %v2712 = vpow.pop %v2711
          %v2713 = vmul.f32 %v2253, 1.442695
          %v2714 = vpow.pop %v2713
          %v2715 = vmul.f32 %v2254, 1.442695
          %v2716 = vpow.pop %v2715
          %v2717 = vmul.f32 %v2255, 1.442695
          %v2718 = vpow.pop %v2717
          %v2719 = vmul.f32 %v2256, 1.442695
          %v2720 = vpow.pop %v2719
          %v2721 = vmul.f32 %v2257, 1.442695
          %v2722 = vpow.pop %v2721
          %v2723 = vmul.f32 %v2258, 1.442695
          %v2724 = vpow.pop %v2723
          %v2725 = vmul.f32 %v2259, 1.442695
          %v2726 = vpow.pop %v2725
          %v2727 = vmul.f32 %v2260, 1.442695
          %v2728 = vpow.pop %v2727
          %v2729 = vmul.f32 %v2261, 1.442695
          %v2730 = vpow.pop %v2729
          %v2731 = vmul.f32 %v2262, 1.442695
          %v2732 = vpow.pop %v2731
          %v2733 = vmul.f32 %v2263, 1.442695
          %v2734 = vpow.pop %v2733
          %v2735 = vmul.f32 %v2264, 1.442695
          %v2736 = vpow.pop %v2735
          %v2737 = vmul.f32 %v2265, 1.442695
          %v2738 = vpow.pop %v2737
          %v2739 = vmul.f32 %v2266, 1.442695
          %v2740 = vpow.pop %v2739
          %v2741 = vmul.f32 %v2267, 1.442695
          %v2742 = vpow.pop %v2741
          %v2743 = vmul.f32 %v2268, 1.442695
          %v2744 = vpow.pop %v2743
          %v2745 = vmul.f32 %v2269, 1.442695
          %v2746 = vpow.pop %v2745
          %v2747 = vmul.f32 %v2270, 1.442695
          %v2748 = vpow.pop %v2747
          %v2749 = vmul.f32 %v2271, 1.442695
          %v2750 = vpow.pop %v2749
          %v2751 = vmul.f32 %v2272, 1.442695
          %v2752 = vpow.pop %v2751
          %v2753 = vmul.f32 %v2273, 1.442695
          %v2754 = vpow.pop %v2753
          %v2755 = vmul.f32 %v2274, 1.442695
          %v2756 = vpow.pop %v2755
          %v2757 = vmul.f32 %v2275, 1.442695
          %v2758 = vpow.pop %v2757
          %v2759 = vmul.f32 %v2276, 1.442695
          %v2760 = vpow.pop %v2759
          %v2761 = vmul.f32 %v2277, 1.442695
          %v2762 = vpow.pop %v2761
          %v2763 = vmul.f32 %v2278, 1.442695
          %v2764 = vpow.pop %v2763
          %v2765 = vmul.f32 %v2279, 1.442695
          %v2766 = vpow.pop %v2765
          %v2767 = vmul.f32 %v2280, 1.442695
          %v2768 = vpow.pop %v2767
          %v2769 = vmul.f32 %v2281, 1.442695
          %v2770 = vpow.pop %v2769
          %v2771 = vmul.f32 %v2282, 1.442695
          %v2772 = vpow.pop %v2771
          %v2773 = vmul.f32 %v2283, 1.442695
          %v2774 = vpow.pop %v2773
          %v2775 = vmul.f32 %v2284, 1.442695
          %v2776 = vpow.pop %v2775
          %v2777 = vmul.f32 %v2285, 1.442695
          %v2778 = vpow.pop %v2777
          %v2779 = vmul.f32 %v2286, 1.442695
          %v2780 = vpow.pop %v2779
          %v2781 = vmul.f32 %v2287, 1.442695
          %v2782 = vpow.pop %v2781
          %v2783 = vmul.f32 %v2288, 1.442695
          %v2784 = vpow.pop %v2783
          %v2785 = vmul.f32 %v2289, 1.442695
          %v2786 = vpow.pop %v2785
          %v2787 = vmul.f32 %v2290, 1.442695
          %v2788 = vpow.pop %v2787
          %v2789 = vmul.f32 %v2291, 1.442695
          %v2790 = vpow.pop %v2789
          %v2791 = vmul.f32 %v2292, 1.442695
          %v2792 = vpow.pop %v2791
          %v2793 = vmul.f32 %v2293, 1.442695
          %v2794 = vpow.pop %v2793
          %v2795 = vmul.f32 %v2294, 1.442695
          %v2796 = vpow.pop %v2795
          %v2797 = vmul.f32 %v2295, 1.442695
          %v2798 = vpow.pop %v2797
          %v2799 = vmul.f32 %v2296, 1.442695
          %v2800 = vpow.pop %v2799
          %v2801 = vmul.f32 %v2297, 1.442695
          %v2802 = vpow.pop %v2801
          %v2803 = vmul.f32 %v2298, 1.442695
          %v2804 = vpow.pop %v2803
          %v2805 = vmul.f32 %v2299, 1.442695
          %v2806 = vpow.pop %v2805
          %v2807 = vmul.f32 %v2300, 1.442695
          %v2808 = vpow.pop %v2807
          %v2809 = vmul.f32 %v2301, 1.442695
          %v2810 = vpow.pop %v2809
          %v2811 = vmul.f32 %v2302, 1.442695
          %v2812 = vpow.pop %v2811
          %v2813 = vmul.f32 %v2303, 1.442695
          %v2814 = vpow.pop %v2813
          %v2815 = vmul.f32 %v2304, 1.442695
          %v2816 = vpow.pop %v2815
          %v2817 = vadd.f32 %v2306, %v2308
          %v2818 = vadd.f32 %v2817, %v2310
          %v2819 = vadd.f32 %v2818, %v2312
          %v2820 = vadd.f32 %v2819, %v2314
          %v2821 = vadd.f32 %v2820, %v2316
          %v2822 = vadd.f32 %v2821, %v2318
          %v2823 = vadd.f32 %v2822, %v2320
          %2824 = vadd.xlane.f32.xlu0 %v2823
          %v2825 = vpop.xlane.xlu0 %2824
          %v2826 = vadd.f32 %v2322, %v2324
          %v2827 = vadd.f32 %v2826, %v2326
          %v2828 = vadd.f32 %v2827, %v2328
          %v2829 = vadd.f32 %v2828, %v2330
          %v2830 = vadd.f32 %v2829, %v2332
          %v2831 = vadd.f32 %v2830, %v2334
          %v2832 = vadd.f32 %v2831, %v2336
          %2833 = vadd.xlane.f32.xlu0 %v2832
          %v2834 = vpop.xlane.xlu0 %2833
          %v2835 = vadd.f32 %v2338, %v2340
          %v2836 = vadd.f32 %v2835, %v2342
          %v2837 = vadd.f32 %v2836, %v2344
          %v2838 = vadd.f32 %v2837, %v2346
          %v2839 = vadd.f32 %v2838, %v2348
          %v2840 = vadd.f32 %v2839, %v2350
          %v2841 = vadd.f32 %v2840, %v2352
          %2842 = vadd.xlane.f32.xlu0 %v2841
          %v2843 = vpop.xlane.xlu0 %2842
          %v2844 = vadd.f32 %v2354, %v2356
          %v2845 = vadd.f32 %v2844, %v2358
          %v2846 = vadd.f32 %v2845, %v2360
          %v2847 = vadd.f32 %v2846, %v2362
          %v2848 = vadd.f32 %v2847, %v2364
          %v2849 = vadd.f32 %v2848, %v2366
          %v2850 = vadd.f32 %v2849, %v2368
          %2851 = vadd.xlane.f32.xlu0 %v2850
          %v2852 = vpop.xlane.xlu0 %2851
          %v2853 = vadd.f32 %v2370, %v2372
          %v2854 = vadd.f32 %v2853, %v2374
          %v2855 = vadd.f32 %v2854, %v2376
          %v2856 = vadd.f32 %v2855, %v2378
          %v2857 = vadd.f32 %v2856, %v2380
          %v2858 = vadd.f32 %v2857, %v2382
          %v2859 = vadd.f32 %v2858, %v2384
          %2860 = vadd.xlane.f32.xlu0 %v2859
          %v2861 = vpop.xlane.xlu0 %2860
          %v2862 = vadd.f32 %v2386, %v2388
          %v2863 = vadd.f32 %v2862, %v2390
          %v2864 = vadd.f32 %v2863, %v2392
          %v2865 = vadd.f32 %v2864, %v2394
          %v2866 = vadd.f32 %v2865, %v2396
          %v2867 = vadd.f32 %v2866, %v2398
          %v2868 = vadd.f32 %v2867, %v2400
          %2869 = vadd.xlane.f32.xlu0 %v2868
          %v2870 = vpop.xlane.xlu0 %2869
          %v2871 = vadd.f32 %v2402, %v2404
          %v2872 = vadd.f32 %v2871, %v2406
          %v2873 = vadd.f32 %v2872, %v2408
          %v2874 = vadd.f32 %v2873, %v2410
          %v2875 = vadd.f32 %v2874, %v2412
          %v2876 = vadd.f32 %v2875, %v2414
          %v2877 = vadd.f32 %v2876, %v2416
          %2878 = vadd.xlane.f32.xlu0 %v2877
          %v2879 = vpop.xlane.xlu0 %2878
          %v2880 = vadd.f32 %v2418, %v2420
          %v2881 = vadd.f32 %v2880, %v2422
          %v2882 = vadd.f32 %v2881, %v2424
          %v2883 = vadd.f32 %v2882, %v2426
          %v2884 = vadd.f32 %v2883, %v2428
          %v2885 = vadd.f32 %v2884, %v2430
          %v2886 = vadd.f32 %v2885, %v2432
          %2887 = vadd.xlane.f32.xlu0 %v2886
          %v2888 = vpop.xlane.xlu0 %2887
          %v2889 = vadd.f32 %v2434, %v2436
          %v2890 = vadd.f32 %v2889, %v2438
          %v2891 = vadd.f32 %v2890, %v2440
          %v2892 = vadd.f32 %v2891, %v2442
          %v2893 = vadd.f32 %v2892, %v2444
          %v2894 = vadd.f32 %v2893, %v2446
          %v2895 = vadd.f32 %v2894, %v2448
          %2896 = vadd.xlane.f32.xlu0 %v2895
          %v2897 = vpop.xlane.xlu0 %2896
          %v2898 = vadd.f32 %v2450, %v2452
          %v2899 = vadd.f32 %v2898, %v2454
          %v2900 = vadd.f32 %v2899, %v2456
          %v2901 = vadd.f32 %v2900, %v2458
          %v2902 = vadd.f32 %v2901, %v2460
          %v2903 = vadd.f32 %v2902, %v2462
          %v2904 = vadd.f32 %v2903, %v2464
          %2905 = vadd.xlane.f32.xlu0 %v2904
          %v2906 = vpop.xlane.xlu0 %2905
          %v2907 = vadd.f32 %v2466, %v2468
          %v2908 = vadd.f32 %v2907, %v2470
          %v2909 = vadd.f32 %v2908, %v2472
          %v2910 = vadd.f32 %v2909, %v2474
          %v2911 = vadd.f32 %v2910, %v2476
          %v2912 = vadd.f32 %v2911, %v2478
          %v2913 = vadd.f32 %v2912, %v2480
          %2914 = vadd.xlane.f32.xlu0 %v2913
          %v2915 = vpop.xlane.xlu0 %2914
          %v2916 = vadd.f32 %v2482, %v2484
          %v2917 = vadd.f32 %v2916, %v2486
          %v2918 = vadd.f32 %v2917, %v2488
          %v2919 = vadd.f32 %v2918, %v2490
          %v2920 = vadd.f32 %v2919, %v2492
          %v2921 = vadd.f32 %v2920, %v2494
          %v2922 = vadd.f32 %v2921, %v2496
          %2923 = vadd.xlane.f32.xlu0 %v2922
          %v2924 = vpop.xlane.xlu0 %2923
          %v2925 = vadd.f32 %v2498, %v2500
          %v2926 = vadd.f32 %v2925, %v2502
          %v2927 = vadd.f32 %v2926, %v2504
          %v2928 = vadd.f32 %v2927, %v2506
          %v2929 = vadd.f32 %v2928, %v2508
          %v2930 = vadd.f32 %v2929, %v2510
          %v2931 = vadd.f32 %v2930, %v2512
          %2932 = vadd.xlane.f32.xlu0 %v2931
          %v2933 = vpop.xlane.xlu0 %2932
          %v2934 = vadd.f32 %v2514, %v2516
          %v2935 = vadd.f32 %v2934, %v2518
          %v2936 = vadd.f32 %v2935, %v2520
          %v2937 = vadd.f32 %v2936, %v2522
          %v2938 = vadd.f32 %v2937, %v2524
          %v2939 = vadd.f32 %v2938, %v2526
          %v2940 = vadd.f32 %v2939, %v2528
          %2941 = vadd.xlane.f32.xlu0 %v2940
          %v2942 = vpop.xlane.xlu0 %2941
          %v2943 = vadd.f32 %v2530, %v2532
          %v2944 = vadd.f32 %v2943, %v2534
          %v2945 = vadd.f32 %v2944, %v2536
          %v2946 = vadd.f32 %v2945, %v2538
          %v2947 = vadd.f32 %v2946, %v2540
          %v2948 = vadd.f32 %v2947, %v2542
          %v2949 = vadd.f32 %v2948, %v2544
          %2950 = vadd.xlane.f32.xlu0 %v2949
          %v2951 = vpop.xlane.xlu0 %2950
          %v2952 = vadd.f32 %v2546, %v2548
          %v2953 = vadd.f32 %v2952, %v2550
          %v2954 = vadd.f32 %v2953, %v2552
          %v2955 = vadd.f32 %v2954, %v2554
          %v2956 = vadd.f32 %v2955, %v2556
          %v2957 = vadd.f32 %v2956, %v2558
          %v2958 = vadd.f32 %v2957, %v2560
          %2959 = vadd.xlane.f32.xlu0 %v2958
          %v2960 = vpop.xlane.xlu0 %2959
          %v2961 = vadd.f32 %v2562, %v2564
          %v2962 = vadd.f32 %v2961, %v2566
          %v2963 = vadd.f32 %v2962, %v2568
          %v2964 = vadd.f32 %v2963, %v2570
          %v2965 = vadd.f32 %v2964, %v2572
          %v2966 = vadd.f32 %v2965, %v2574
          %v2967 = vadd.f32 %v2966, %v2576
          %2968 = vadd.xlane.f32.xlu0 %v2967
          %v2969 = vpop.xlane.xlu0 %2968
          %v2970 = vadd.f32 %v2578, %v2580
          %v2971 = vadd.f32 %v2970, %v2582
          %v2972 = vadd.f32 %v2971, %v2584
          %v2973 = vadd.f32 %v2972, %v2586
          %v2974 = vadd.f32 %v2973, %v2588
          %v2975 = vadd.f32 %v2974, %v2590
          %v2976 = vadd.f32 %v2975, %v2592
          %2977 = vadd.xlane.f32.xlu0 %v2976
          %v2978 = vpop.xlane.xlu0 %2977
          %v2979 = vadd.f32 %v2594, %v2596
          %v2980 = vadd.f32 %v2979, %v2598
          %v2981 = vadd.f32 %v2980, %v2600
          %v2982 = vadd.f32 %v2981, %v2602
          %v2983 = vadd.f32 %v2982, %v2604
          %v2984 = vadd.f32 %v2983, %v2606
          %v2985 = vadd.f32 %v2984, %v2608
          %2986 = vadd.xlane.f32.xlu0 %v2985
          %v2987 = vpop.xlane.xlu0 %2986
          %v2988 = vadd.f32 %v2610, %v2612
          %v2989 = vadd.f32 %v2988, %v2614
          %v2990 = vadd.f32 %v2989, %v2616
          %v2991 = vadd.f32 %v2990, %v2618
          %v2992 = vadd.f32 %v2991, %v2620
          %v2993 = vadd.f32 %v2992, %v2622
          %v2994 = vadd.f32 %v2993, %v2624
          %2995 = vadd.xlane.f32.xlu0 %v2994
          %v2996 = vpop.xlane.xlu0 %2995
          %v2997 = vadd.f32 %v2626, %v2628
          %v2998 = vadd.f32 %v2997, %v2630
          %v2999 = vadd.f32 %v2998, %v2632
          %v3000 = vadd.f32 %v2999, %v2634
          %v3001 = vadd.f32 %v3000, %v2636
          %v3002 = vadd.f32 %v3001, %v2638
          %v3003 = vadd.f32 %v3002, %v2640
          %3004 = vadd.xlane.f32.xlu0 %v3003
          %v3005 = vpop.xlane.xlu0 %3004
          %v3006 = vadd.f32 %v2642, %v2644
          %v3007 = vadd.f32 %v3006, %v2646
          %v3008 = vadd.f32 %v3007, %v2648
          %v3009 = vadd.f32 %v3008, %v2650
          %v3010 = vadd.f32 %v3009, %v2652
          %v3011 = vadd.f32 %v3010, %v2654
          %v3012 = vadd.f32 %v3011, %v2656
          %3013 = vadd.xlane.f32.xlu0 %v3012
          %v3014 = vpop.xlane.xlu0 %3013
          %v3015 = vadd.f32 %v2658, %v2660
          %v3016 = vadd.f32 %v3015, %v2662
          %v3017 = vadd.f32 %v3016, %v2664
          %v3018 = vadd.f32 %v3017, %v2666
          %v3019 = vadd.f32 %v3018, %v2668
          %v3020 = vadd.f32 %v3019, %v2670
          %v3021 = vadd.f32 %v3020, %v2672
          %3022 = vadd.xlane.f32.xlu0 %v3021
          %v3023 = vpop.xlane.xlu0 %3022
          %v3024 = vadd.f32 %v2674, %v2676
          %v3025 = vadd.f32 %v3024, %v2678
          %v3026 = vadd.f32 %v3025, %v2680
          %v3027 = vadd.f32 %v3026, %v2682
          %v3028 = vadd.f32 %v3027, %v2684
          %v3029 = vadd.f32 %v3028, %v2686
          %v3030 = vadd.f32 %v3029, %v2688
          %3031 = vadd.xlane.f32.xlu0 %v3030
          %v3032 = vpop.xlane.xlu0 %3031
          %v3033 = vadd.f32 %v2690, %v2692
          %v3034 = vadd.f32 %v3033, %v2694
          %v3035 = vadd.f32 %v3034, %v2696
          %v3036 = vadd.f32 %v3035, %v2698
          %v3037 = vadd.f32 %v3036, %v2700
          %v3038 = vadd.f32 %v3037, %v2702
          %v3039 = vadd.f32 %v3038, %v2704
          %3040 = vadd.xlane.f32.xlu0 %v3039
          %v3041 = vpop.xlane.xlu0 %3040
          %v3042 = vadd.f32 %v2706, %v2708
          %v3043 = vadd.f32 %v3042, %v2710
          %v3044 = vadd.f32 %v3043, %v2712
          %v3045 = vadd.f32 %v3044, %v2714
          %v3046 = vadd.f32 %v3045, %v2716
          %v3047 = vadd.f32 %v3046, %v2718
          %v3048 = vadd.f32 %v3047, %v2720
          %3049 = vadd.xlane.f32.xlu0 %v3048
          %v3050 = vpop.xlane.xlu0 %3049
          %v3051 = vadd.f32 %v2722, %v2724
          %v3052 = vadd.f32 %v3051, %v2726
          %v3053 = vadd.f32 %v3052, %v2728
          %v3054 = vadd.f32 %v3053, %v2730
          %v3055 = vadd.f32 %v3054, %v2732
          %v3056 = vadd.f32 %v3055, %v2734
          %v3057 = vadd.f32 %v3056, %v2736
          %3058 = vadd.xlane.f32.xlu0 %v3057
          %v3059 = vpop.xlane.xlu0 %3058
          %v3060 = vadd.f32 %v2738, %v2740
          %v3061 = vadd.f32 %v3060, %v2742
          %v3062 = vadd.f32 %v3061, %v2744
          %v3063 = vadd.f32 %v3062, %v2746
          %v3064 = vadd.f32 %v3063, %v2748
          %v3065 = vadd.f32 %v3064, %v2750
          %v3066 = vadd.f32 %v3065, %v2752
          %3067 = vadd.xlane.f32.xlu0 %v3066
          %v3068 = vpop.xlane.xlu0 %3067
          %v3069 = vadd.f32 %v2754, %v2756
          %v3070 = vadd.f32 %v3069, %v2758
          %v3071 = vadd.f32 %v3070, %v2760
          %v3072 = vadd.f32 %v3071, %v2762
          %v3073 = vadd.f32 %v3072, %v2764
          %v3074 = vadd.f32 %v3073, %v2766
          %v3075 = vadd.f32 %v3074, %v2768
          %3076 = vadd.xlane.f32.xlu0 %v3075
          %v3077 = vpop.xlane.xlu0 %3076
          %v3078 = vadd.f32 %v2770, %v2772
          %v3079 = vadd.f32 %v3078, %v2774
          %v3080 = vadd.f32 %v3079, %v2776
          %v3081 = vadd.f32 %v3080, %v2778
          %v3082 = vadd.f32 %v3081, %v2780
          %v3083 = vadd.f32 %v3082, %v2782
          %v3084 = vadd.f32 %v3083, %v2784
          %3085 = vadd.xlane.f32.xlu0 %v3084
          %v3086 = vpop.xlane.xlu0 %3085
          %v3087 = vadd.f32 %v2786, %v2788
          %v3088 = vadd.f32 %v3087, %v2790
          %v3089 = vadd.f32 %v3088, %v2792
          %v3090 = vadd.f32 %v3089, %v2794
          %v3091 = vadd.f32 %v3090, %v2796
          %v3092 = vadd.f32 %v3091, %v2798
          %v3093 = vadd.f32 %v3092, %v2800
          %3094 = vadd.xlane.f32.xlu0 %v3093
          %v3095 = vpop.xlane.xlu0 %3094
          %v3096 = vadd.f32 %v2802, %v2804
          %v3097 = vadd.f32 %v3096, %v2806
          %v3098 = vadd.f32 %v3097, %v2808
          %v3099 = vadd.f32 %v3098, %v2810
          %v3100 = vadd.f32 %v3099, %v2812
          %v3101 = vadd.f32 %v3100, %v2814
          %v3102 = vadd.f32 %v3101, %v2816
          %3103 = vadd.xlane.f32.xlu0 %v3102
          %v3104 = vpop.xlane.xlu0 %3103
          %v3105 = vrcp.pop %v2825
          %v3106 = vrcp.pop %v2834
          %v3107 = vrcp.pop %v2843
          %v3108 = vrcp.pop %v2852
          %v3109 = vrcp.pop %v2861
          %v3110 = vrcp.pop %v2870
          %v3111 = vrcp.pop %v2879
          %v3112 = vrcp.pop %v2888
          %v3113 = vrcp.pop %v2897
          %v3114 = vrcp.pop %v2906
          %v3115 = vrcp.pop %v2915
          %v3116 = vrcp.pop %v2924
          %v3117 = vrcp.pop %v2933
          %v3118 = vrcp.pop %v2942
          %v3119 = vrcp.pop %v2951
          %v3120 = vrcp.pop %v2960
          %v3121 = vrcp.pop %v2969
          %v3122 = vrcp.pop %v2978
          %v3123 = vrcp.pop %v2987
          %v3124 = vrcp.pop %v2996
          %v3125 = vrcp.pop %v3005
          %v3126 = vrcp.pop %v3014
          %v3127 = vrcp.pop %v3023
          %v3128 = vrcp.pop %v3032
          %v3129 = vrcp.pop %v3041
          %v3130 = vrcp.pop %v3050
          %v3131 = vrcp.pop %v3059
          %v3132 = vrcp.pop %v3068
          %v3133 = vrcp.pop %v3077
          %v3134 = vrcp.pop %v3086
          %v3135 = vrcp.pop %v3095
          %v3136 = vrcp.pop %v3104
          %v3137 = vmul.f32 %v2306, %v3105
          %v3138 = vmul.f32 %v2308, %v3105
          %v3139 = vmul.f32 %v2310, %v3105
          %v3140 = vmul.f32 %v2312, %v3105
          %v3141 = vmul.f32 %v2314, %v3105
          %v3142 = vmul.f32 %v2316, %v3105
          %v3143 = vmul.f32 %v2318, %v3105
          %v3144 = vmul.f32 %v2320, %v3105
          %v3145 = vmul.f32 %v2322, %v3106
          %v3146 = vmul.f32 %v2324, %v3106
          %v3147 = vmul.f32 %v2326, %v3106
          %v3148 = vmul.f32 %v2328, %v3106
          %v3149 = vmul.f32 %v2330, %v3106
          %v3150 = vmul.f32 %v2332, %v3106
          %v3151 = vmul.f32 %v2334, %v3106
          %v3152 = vmul.f32 %v2336, %v3106
          %v3153 = vmul.f32 %v2338, %v3107
          %v3154 = vmul.f32 %v2340, %v3107
          %v3155 = vmul.f32 %v2342, %v3107
          %v3156 = vmul.f32 %v2344, %v3107
          %v3157 = vmul.f32 %v2346, %v3107
          %v3158 = vmul.f32 %v2348, %v3107
          %v3159 = vmul.f32 %v2350, %v3107
          %v3160 = vmul.f32 %v2352, %v3107
          %v3161 = vmul.f32 %v2354, %v3108
          %v3162 = vmul.f32 %v2356, %v3108
          %v3163 = vmul.f32 %v2358, %v3108
          %v3164 = vmul.f32 %v2360, %v3108
          %v3165 = vmul.f32 %v2362, %v3108
          %v3166 = vmul.f32 %v2364, %v3108
          %v3167 = vmul.f32 %v2366, %v3108
          %v3168 = vmul.f32 %v2368, %v3108
          %v3169 = vmul.f32 %v2370, %v3109
          %v3170 = vmul.f32 %v2372, %v3109
          %v3171 = vmul.f32 %v2374, %v3109
          %v3172 = vmul.f32 %v2376, %v3109
          %v3173 = vmul.f32 %v2378, %v3109
          %v3174 = vmul.f32 %v2380, %v3109
          %v3175 = vmul.f32 %v2382, %v3109
          %v3176 = vmul.f32 %v2384, %v3109
          %v3177 = vmul.f32 %v2386, %v3110
          %v3178 = vmul.f32 %v2388, %v3110
          %v3179 = vmul.f32 %v2390, %v3110
          %v3180 = vmul.f32 %v2392, %v3110
          %v3181 = vmul.f32 %v2394, %v3110
          %v3182 = vmul.f32 %v2396, %v3110
          %v3183 = vmul.f32 %v2398, %v3110
          %v3184 = vmul.f32 %v2400, %v3110
          %v3185 = vmul.f32 %v2402, %v3111
          %v3186 = vmul.f32 %v2404, %v3111
          %v3187 = vmul.f32 %v2406, %v3111
          %v3188 = vmul.f32 %v2408, %v3111
          %v3189 = vmul.f32 %v2410, %v3111
          %v3190 = vmul.f32 %v2412, %v3111
          %v3191 = vmul.f32 %v2414, %v3111
          %v3192 = vmul.f32 %v2416, %v3111
          %v3193 = vmul.f32 %v2418, %v3112
          %v3194 = vmul.f32 %v2420, %v3112
          %v3195 = vmul.f32 %v2422, %v3112
          %v3196 = vmul.f32 %v2424, %v3112
          %v3197 = vmul.f32 %v2426, %v3112
          %v3198 = vmul.f32 %v2428, %v3112
          %v3199 = vmul.f32 %v2430, %v3112
          %v3200 = vmul.f32 %v2432, %v3112
          %v3201 = vmul.f32 %v2434, %v3113
          %v3202 = vmul.f32 %v2436, %v3113
          %v3203 = vmul.f32 %v2438, %v3113
          %v3204 = vmul.f32 %v2440, %v3113
          %v3205 = vmul.f32 %v2442, %v3113
          %v3206 = vmul.f32 %v2444, %v3113
          %v3207 = vmul.f32 %v2446, %v3113
          %v3208 = vmul.f32 %v2448, %v3113
          %v3209 = vmul.f32 %v2450, %v3114
          %v3210 = vmul.f32 %v2452, %v3114
          %v3211 = vmul.f32 %v2454, %v3114
          %v3212 = vmul.f32 %v2456, %v3114
          %v3213 = vmul.f32 %v2458, %v3114
          %v3214 = vmul.f32 %v2460, %v3114
          %v3215 = vmul.f32 %v2462, %v3114
          %v3216 = vmul.f32 %v2464, %v3114
          %v3217 = vmul.f32 %v2466, %v3115
          %v3218 = vmul.f32 %v2468, %v3115
          %v3219 = vmul.f32 %v2470, %v3115
          %v3220 = vmul.f32 %v2472, %v3115
          %v3221 = vmul.f32 %v2474, %v3115
          %v3222 = vmul.f32 %v2476, %v3115
          %v3223 = vmul.f32 %v2478, %v3115
          %v3224 = vmul.f32 %v2480, %v3115
          %v3225 = vmul.f32 %v2482, %v3116
          %v3226 = vmul.f32 %v2484, %v3116
          %v3227 = vmul.f32 %v2486, %v3116
          %v3228 = vmul.f32 %v2488, %v3116
          %v3229 = vmul.f32 %v2490, %v3116
          %v3230 = vmul.f32 %v2492, %v3116
          %v3231 = vmul.f32 %v2494, %v3116
          %v3232 = vmul.f32 %v2496, %v3116
          %v3233 = vmul.f32 %v2498, %v3117
          %v3234 = vmul.f32 %v2500, %v3117
          %v3235 = vmul.f32 %v2502, %v3117
          %v3236 = vmul.f32 %v2504, %v3117
          %v3237 = vmul.f32 %v2506, %v3117
          %v3238 = vmul.f32 %v2508, %v3117
          %v3239 = vmul.f32 %v2510, %v3117
          %v3240 = vmul.f32 %v2512, %v3117
          %v3241 = vmul.f32 %v2514, %v3118
          %v3242 = vmul.f32 %v2516, %v3118
          %v3243 = vmul.f32 %v2518, %v3118
          %v3244 = vmul.f32 %v2520, %v3118
          %v3245 = vmul.f32 %v2522, %v3118
          %v3246 = vmul.f32 %v2524, %v3118
          %v3247 = vmul.f32 %v2526, %v3118
          %v3248 = vmul.f32 %v2528, %v3118
          %v3249 = vmul.f32 %v2530, %v3119
          %v3250 = vmul.f32 %v2532, %v3119
          %v3251 = vmul.f32 %v2534, %v3119
          %v3252 = vmul.f32 %v2536, %v3119
          %v3253 = vmul.f32 %v2538, %v3119
          %v3254 = vmul.f32 %v2540, %v3119
          %v3255 = vmul.f32 %v2542, %v3119
          %v3256 = vmul.f32 %v2544, %v3119
          %v3257 = vmul.f32 %v2546, %v3120
          %v3258 = vmul.f32 %v2548, %v3120
          %v3259 = vmul.f32 %v2550, %v3120
          %v3260 = vmul.f32 %v2552, %v3120
          %v3261 = vmul.f32 %v2554, %v3120
          %v3262 = vmul.f32 %v2556, %v3120
          %v3263 = vmul.f32 %v2558, %v3120
          %v3264 = vmul.f32 %v2560, %v3120
          %v3265 = vmul.f32 %v2562, %v3121
          %v3266 = vmul.f32 %v2564, %v3121
          %v3267 = vmul.f32 %v2566, %v3121
          %v3268 = vmul.f32 %v2568, %v3121
          %v3269 = vmul.f32 %v2570, %v3121
          %v3270 = vmul.f32 %v2572, %v3121
          %v3271 = vmul.f32 %v2574, %v3121
          %v3272 = vmul.f32 %v2576, %v3121
          %v3273 = vmul.f32 %v2578, %v3122
          %v3274 = vmul.f32 %v2580, %v3122
          %v3275 = vmul.f32 %v2582, %v3122
          %v3276 = vmul.f32 %v2584, %v3122
          %v3277 = vmul.f32 %v2586, %v3122
          %v3278 = vmul.f32 %v2588, %v3122
          %v3279 = vmul.f32 %v2590, %v3122
          %v3280 = vmul.f32 %v2592, %v3122
          %v3281 = vmul.f32 %v2594, %v3123
          %v3282 = vmul.f32 %v2596, %v3123
          %v3283 = vmul.f32 %v2598, %v3123
          %v3284 = vmul.f32 %v2600, %v3123
          %v3285 = vmul.f32 %v2602, %v3123
          %v3286 = vmul.f32 %v2604, %v3123
          %v3287 = vmul.f32 %v2606, %v3123
          %v3288 = vmul.f32 %v2608, %v3123
          %v3289 = vmul.f32 %v2610, %v3124
          %v3290 = vmul.f32 %v2612, %v3124
          %v3291 = vmul.f32 %v2614, %v3124
          %v3292 = vmul.f32 %v2616, %v3124
          %v3293 = vmul.f32 %v2618, %v3124
          %v3294 = vmul.f32 %v2620, %v3124
          %v3295 = vmul.f32 %v2622, %v3124
          %v3296 = vmul.f32 %v2624, %v3124
          %v3297 = vmul.f32 %v2626, %v3125
          %v3298 = vmul.f32 %v2628, %v3125
          %v3299 = vmul.f32 %v2630, %v3125
          %v3300 = vmul.f32 %v2632, %v3125
          %v3301 = vmul.f32 %v2634, %v3125
          %v3302 = vmul.f32 %v2636, %v3125
          %v3303 = vmul.f32 %v2638, %v3125
          %v3304 = vmul.f32 %v2640, %v3125
          %v3305 = vmul.f32 %v2642, %v3126
          %v3306 = vmul.f32 %v2644, %v3126
          %v3307 = vmul.f32 %v2646, %v3126
          %v3308 = vmul.f32 %v2648, %v3126
          %v3309 = vmul.f32 %v2650, %v3126
          %v3310 = vmul.f32 %v2652, %v3126
          %v3311 = vmul.f32 %v2654, %v3126
          %v3312 = vmul.f32 %v2656, %v3126
          %v3313 = vmul.f32 %v2658, %v3127
          %v3314 = vmul.f32 %v2660, %v3127
          %v3315 = vmul.f32 %v2662, %v3127
          %v3316 = vmul.f32 %v2664, %v3127
          %v3317 = vmul.f32 %v2666, %v3127
          %v3318 = vmul.f32 %v2668, %v3127
          %v3319 = vmul.f32 %v2670, %v3127
          %v3320 = vmul.f32 %v2672, %v3127
          %v3321 = vmul.f32 %v2674, %v3128
          %v3322 = vmul.f32 %v2676, %v3128
          %v3323 = vmul.f32 %v2678, %v3128
          %v3324 = vmul.f32 %v2680, %v3128
          %v3325 = vmul.f32 %v2682, %v3128
          %v3326 = vmul.f32 %v2684, %v3128
          %v3327 = vmul.f32 %v2686, %v3128
          %v3328 = vmul.f32 %v2688, %v3128
          %v3329 = vmul.f32 %v2690, %v3129
          %v3330 = vmul.f32 %v2692, %v3129
          %v3331 = vmul.f32 %v2694, %v3129
          %v3332 = vmul.f32 %v2696, %v3129
          %v3333 = vmul.f32 %v2698, %v3129
          %v3334 = vmul.f32 %v2700, %v3129
          %v3335 = vmul.f32 %v2702, %v3129
          %v3336 = vmul.f32 %v2704, %v3129
          %v3337 = vmul.f32 %v2706, %v3130
          %v3338 = vmul.f32 %v2708, %v3130
          %v3339 = vmul.f32 %v2710, %v3130
          %v3340 = vmul.f32 %v2712, %v3130
          %v3341 = vmul.f32 %v2714, %v3130
          %v3342 = vmul.f32 %v2716, %v3130
          %v3343 = vmul.f32 %v2718, %v3130
          %v3344 = vmul.f32 %v2720, %v3130
          %v3345 = vmul.f32 %v2722, %v3131
          %v3346 = vmul.f32 %v2724, %v3131
          %v3347 = vmul.f32 %v2726, %v3131
          %v3348 = vmul.f32 %v2728, %v3131
          %v3349 = vmul.f32 %v2730, %v3131
          %v3350 = vmul.f32 %v2732, %v3131
          %v3351 = vmul.f32 %v2734, %v3131
          %v3352 = vmul.f32 %v2736, %v3131
          %v3353 = vmul.f32 %v2738, %v3132
          %v3354 = vmul.f32 %v2740, %v3132
          %v3355 = vmul.f32 %v2742, %v3132
          %v3356 = vmul.f32 %v2744, %v3132
          %v3357 = vmul.f32 %v2746, %v3132
          %v3358 = vmul.f32 %v2748, %v3132
          %v3359 = vmul.f32 %v2750, %v3132
          %v3360 = vmul.f32 %v2752, %v3132
          %v3361 = vmul.f32 %v2754, %v3133
          %v3362 = vmul.f32 %v2756, %v3133
          %v3363 = vmul.f32 %v2758, %v3133
          %v3364 = vmul.f32 %v2760, %v3133
          %v3365 = vmul.f32 %v2762, %v3133
          %v3366 = vmul.f32 %v2764, %v3133
          %v3367 = vmul.f32 %v2766, %v3133
          %v3368 = vmul.f32 %v2768, %v3133
          %v3369 = vmul.f32 %v2770, %v3134
          %v3370 = vmul.f32 %v2772, %v3134
          %v3371 = vmul.f32 %v2774, %v3134
          %v3372 = vmul.f32 %v2776, %v3134
          %v3373 = vmul.f32 %v2778, %v3134
          %v3374 = vmul.f32 %v2780, %v3134
          %v3375 = vmul.f32 %v2782, %v3134
          %v3376 = vmul.f32 %v2784, %v3134
          %v3377 = vmul.f32 %v2786, %v3135
          %v3378 = vmul.f32 %v2788, %v3135
          %v3379 = vmul.f32 %v2790, %v3135
          %v3380 = vmul.f32 %v2792, %v3135
          %v3381 = vmul.f32 %v2794, %v3135
          %v3382 = vmul.f32 %v2796, %v3135
          %v3383 = vmul.f32 %v2798, %v3135
          %v3384 = vmul.f32 %v2800, %v3135
          %v3385 = vmul.f32 %v2802, %v3136
          %v3386 = vmul.f32 %v2804, %v3136
          %v3387 = vmul.f32 %v2806, %v3136
          %v3388 = vmul.f32 %v2808, %v3136
          %v3389 = vmul.f32 %v2810, %v3136
          %v3390 = vmul.f32 %v2812, %v3136
          %v3391 = vmul.f32 %v2814, %v3136
          %v3392 = vmul.f32 %v2816, %v3136
          %v3393 = vpack.c.bf16 %v3145, %v3137
          %v3394 = vpack.c.bf16 %v3146, %v3138
          %v3395 = vpack.c.bf16 %v3147, %v3139
          %v3396 = vpack.c.bf16 %v3148, %v3140
          %v3397 = vpack.c.bf16 %v3149, %v3141
          %v3398 = vpack.c.bf16 %v3150, %v3142
          %v3399 = vpack.c.bf16 %v3151, %v3143
          %v3400 = vpack.c.bf16 %v3152, %v3144
          %v3401 = vpack.c.bf16 %v3161, %v3153
          %v3402 = vpack.c.bf16 %v3162, %v3154
          %v3403 = vpack.c.bf16 %v3163, %v3155
          %v3404 = vpack.c.bf16 %v3164, %v3156
          %v3405 = vpack.c.bf16 %v3165, %v3157
          %v3406 = vpack.c.bf16 %v3166, %v3158
          %v3407 = vpack.c.bf16 %v3167, %v3159
          %v3408 = vpack.c.bf16 %v3168, %v3160
          %v3409 = vpack.c.bf16 %v3177, %v3169
          %v3410 = vpack.c.bf16 %v3178, %v3170
          %v3411 = vpack.c.bf16 %v3179, %v3171
          %v3412 = vpack.c.bf16 %v3180, %v3172
          %v3413 = vpack.c.bf16 %v3181, %v3173
          %v3414 = vpack.c.bf16 %v3182, %v3174
          %v3415 = vpack.c.bf16 %v3183, %v3175
          %v3416 = vpack.c.bf16 %v3184, %v3176
          %v3417 = vpack.c.bf16 %v3193, %v3185
          %v3418 = vpack.c.bf16 %v3194, %v3186
          %v3419 = vpack.c.bf16 %v3195, %v3187
          %v3420 = vpack.c.bf16 %v3196, %v3188
          %v3421 = vpack.c.bf16 %v3197, %v3189
          %v3422 = vpack.c.bf16 %v3198, %v3190
          %v3423 = vpack.c.bf16 %v3199, %v3191
          %v3424 = vpack.c.bf16 %v3200, %v3192
          %v3425 = vpack.c.bf16 %v3209, %v3201
          %v3426 = vpack.c.bf16 %v3210, %v3202
          %v3427 = vpack.c.bf16 %v3211, %v3203
          %v3428 = vpack.c.bf16 %v3212, %v3204
          %v3429 = vpack.c.bf16 %v3213, %v3205
          %v3430 = vpack.c.bf16 %v3214, %v3206
          %v3431 = vpack.c.bf16 %v3215, %v3207
          %v3432 = vpack.c.bf16 %v3216, %v3208
          %v3433 = vpack.c.bf16 %v3225, %v3217
          %v3434 = vpack.c.bf16 %v3226, %v3218
          %v3435 = vpack.c.bf16 %v3227, %v3219
          %v3436 = vpack.c.bf16 %v3228, %v3220
          %v3437 = vpack.c.bf16 %v3229, %v3221
          %v3438 = vpack.c.bf16 %v3230, %v3222
          %v3439 = vpack.c.bf16 %v3231, %v3223
          %v3440 = vpack.c.bf16 %v3232, %v3224
          %v3441 = vpack.c.bf16 %v3241, %v3233
          %v3442 = vpack.c.bf16 %v3242, %v3234
          %v3443 = vpack.c.bf16 %v3243, %v3235
          %v3444 = vpack.c.bf16 %v3244, %v3236
          %v3445 = vpack.c.bf16 %v3245, %v3237
          %v3446 = vpack.c.bf16 %v3246, %v3238
          %v3447 = vpack.c.bf16 %v3247, %v3239
          %v3448 = vpack.c.bf16 %v3248, %v3240
          %v3449 = vpack.c.bf16 %v3257, %v3249
          %v3450 = vpack.c.bf16 %v3258, %v3250
          %v3451 = vpack.c.bf16 %v3259, %v3251
          %v3452 = vpack.c.bf16 %v3260, %v3252
          %v3453 = vpack.c.bf16 %v3261, %v3253
          %v3454 = vpack.c.bf16 %v3262, %v3254
          %v3455 = vpack.c.bf16 %v3263, %v3255
          %v3456 = vpack.c.bf16 %v3264, %v3256
          %v3457 = vpack.c.bf16 %v3273, %v3265
          %v3458 = vpack.c.bf16 %v3274, %v3266
          %v3459 = vpack.c.bf16 %v3275, %v3267
          %v3460 = vpack.c.bf16 %v3276, %v3268
          %v3461 = vpack.c.bf16 %v3277, %v3269
          %v3462 = vpack.c.bf16 %v3278, %v3270
          %v3463 = vpack.c.bf16 %v3279, %v3271
          %v3464 = vpack.c.bf16 %v3280, %v3272
          %v3465 = vpack.c.bf16 %v3289, %v3281
          %v3466 = vpack.c.bf16 %v3290, %v3282
          %v3467 = vpack.c.bf16 %v3291, %v3283
          %v3468 = vpack.c.bf16 %v3292, %v3284
          %v3469 = vpack.c.bf16 %v3293, %v3285
          %v3470 = vpack.c.bf16 %v3294, %v3286
          %v3471 = vpack.c.bf16 %v3295, %v3287
          %v3472 = vpack.c.bf16 %v3296, %v3288
          %v3473 = vpack.c.bf16 %v3305, %v3297
          %v3474 = vpack.c.bf16 %v3306, %v3298
          %v3475 = vpack.c.bf16 %v3307, %v3299
          %v3476 = vpack.c.bf16 %v3308, %v3300
          %v3477 = vpack.c.bf16 %v3309, %v3301
          %v3478 = vpack.c.bf16 %v3310, %v3302
          %v3479 = vpack.c.bf16 %v3311, %v3303
          %v3480 = vpack.c.bf16 %v3312, %v3304
          %v3481 = vpack.c.bf16 %v3321, %v3313
          %v3482 = vpack.c.bf16 %v3322, %v3314
          %v3483 = vpack.c.bf16 %v3323, %v3315
          %v3484 = vpack.c.bf16 %v3324, %v3316
          %v3485 = vpack.c.bf16 %v3325, %v3317
          %v3486 = vpack.c.bf16 %v3326, %v3318
          %v3487 = vpack.c.bf16 %v3327, %v3319
          %v3488 = vpack.c.bf16 %v3328, %v3320
          %v3489 = vpack.c.bf16 %v3337, %v3329
          %v3490 = vpack.c.bf16 %v3338, %v3330
          %v3491 = vpack.c.bf16 %v3339, %v3331
          %v3492 = vpack.c.bf16 %v3340, %v3332
          %v3493 = vpack.c.bf16 %v3341, %v3333
          %v3494 = vpack.c.bf16 %v3342, %v3334
          %v3495 = vpack.c.bf16 %v3343, %v3335
          %v3496 = vpack.c.bf16 %v3344, %v3336
          %v3497 = vpack.c.bf16 %v3353, %v3345
          %v3498 = vpack.c.bf16 %v3354, %v3346
          %v3499 = vpack.c.bf16 %v3355, %v3347
          %v3500 = vpack.c.bf16 %v3356, %v3348
          %v3501 = vpack.c.bf16 %v3357, %v3349
          %v3502 = vpack.c.bf16 %v3358, %v3350
          %v3503 = vpack.c.bf16 %v3359, %v3351
          %v3504 = vpack.c.bf16 %v3360, %v3352
          %v3505 = vpack.c.bf16 %v3369, %v3361
          %v3506 = vpack.c.bf16 %v3370, %v3362
          %v3507 = vpack.c.bf16 %v3371, %v3363
          %v3508 = vpack.c.bf16 %v3372, %v3364
          %v3509 = vpack.c.bf16 %v3373, %v3365
          %v3510 = vpack.c.bf16 %v3374, %v3366
          %v3511 = vpack.c.bf16 %v3375, %v3367
          %v3512 = vpack.c.bf16 %v3376, %v3368
          %v3513 = vpack.c.bf16 %v3385, %v3377
          %v3514 = vpack.c.bf16 %v3386, %v3378
          %v3515 = vpack.c.bf16 %v3387, %v3379
          %v3516 = vpack.c.bf16 %v3388, %v3380
          %v3517 = vpack.c.bf16 %v3389, %v3381
          %v3518 = vpack.c.bf16 %v3390, %v3382
          %v3519 = vpack.c.bf16 %v3391, %v3383
          %v3520 = vpack.c.bf16 %v3392, %v3384
          %v3521 = vpack.c.bf16 %v742, %v742
          %v3522 = vpack.c.bf16 %v744, %v744
          %v3523 = vpack.c.bf16 %v783, %v783
          %v3524 = vpack.c.bf16 %v785, %v785
          %v3525 = vpack.c.bf16 %v824, %v824
          %v3526 = vpack.c.bf16 %v826, %v826
          %v3527 = vpack.c.bf16 %v865, %v865
          %v3528 = vpack.c.bf16 %v867, %v867
          %3529 = vmatprep.subr.bf16.mxu0 %v3450
          %3530 = vmatpush1.bf16.xpose.msra.mxu0 %v3449
          %3531 = vmatprep.subr.bf16.mxu0 %v3442
          %3532 = vmatpush1.bf16.xpose.msra.mxu0 %v3441
          %3533 = vmatprep.subr.bf16.mxu0 %v3434
          %3534 = vmatpush1.bf16.xpose.msra.mxu0 %v3433
          %3535 = vmatprep.subr.bf16.mxu0 %v3426
          %3536 = vmatpush1.bf16.xpose.msra.mxu0 %v3425
          %3537 = vmatprep.subr.bf16.mxu0 %v3418
          %3538 = vmatpush1.bf16.xpose.msra.mxu0 %v3417
          %3539 = vmatprep.subr.bf16.mxu0 %v3410
          %3540 = vmatpush1.bf16.xpose.msra.mxu0 %v3409
          %3541 = vmatprep.subr.bf16.mxu0 %v3402
          %3542 = vmatpush1.bf16.xpose.msra.mxu0 %v3401
          %3543 = vmatprep.subr.bf16.mxu0 %v3394
          %3544 = vmatpush1.bf16.xpose.msra.mxu0 %v3393
          %3545 = vmatprep.subr.bf16.mxu0 %v3514
          %3546 = vmatpush2.bf16.xpose.msra.mxu0 %v3513
          %3547 = vmatprep.subr.bf16.mxu0 %v3506
          %3548 = vmatpush2.bf16.xpose.msra.mxu0 %v3505
          %3549 = vmatprep.subr.bf16.mxu0 %v3498
          %3550 = vmatpush2.bf16.xpose.msra.mxu0 %v3497
          %3551 = vmatprep.subr.bf16.mxu0 %v3490
          %3552 = vmatpush2.bf16.xpose.msra.mxu0 %v3489
          %3553 = vmatprep.subr.bf16.mxu0 %v3482
          %3554 = vmatpush2.bf16.xpose.msra.mxu0 %v3481
          %3555 = vmatprep.subr.bf16.mxu0 %v3474
          %3556 = vmatpush2.bf16.xpose.msra.mxu0 %v3473
          %3557 = vmatprep.subr.bf16.mxu0 %v3466
          %3558 = vmatpush2.bf16.xpose.msra.mxu0 %v3465
          %3559 = vmatprep.subr.bf16.mxu0 %v3458
          %3560 = vmatpush2.bf16.xpose.msra.mxu0 %v3457
          %3561 = vmatprep.mubr.bf16.mxu0 %v3522
          %3562 = vmatmul.mubr.bf16.gmra.mxu0 %v3521
          %v3563 = vpop.f32.mrf.mxu0
          %v3564 = vadd.f32 0.0, %v3563
          %v3565 = vpop.f32.mrf.mxu0
          %v3566 = vadd.f32 0.0, %v3565
          %v3567 = vpop.f32.mrf.mxu0
          %v3568 = vpop.f32.mrf.mxu0
          %3569 = vdwg.mxu0
          %3570 = vmatprep.subr.bf16.mxu0 %v3452
          %3571 = vmatpush1.bf16.xpose.msra.mxu0 %v3451
          %3572 = vmatprep.subr.bf16.mxu0 %v3444
          %3573 = vmatpush1.bf16.xpose.msra.mxu0 %v3443
          %3574 = vmatprep.subr.bf16.mxu0 %v3436
          %3575 = vmatpush1.bf16.xpose.msra.mxu0 %v3435
          %3576 = vmatprep.subr.bf16.mxu0 %v3428
          %3577 = vmatpush1.bf16.xpose.msra.mxu0 %v3427
          %3578 = vmatprep.subr.bf16.mxu0 %v3420
          %3579 = vmatpush1.bf16.xpose.msra.mxu0 %v3419
          %3580 = vmatprep.subr.bf16.mxu0 %v3412
          %3581 = vmatpush1.bf16.xpose.msra.mxu0 %v3411
          %3582 = vmatprep.subr.bf16.mxu0 %v3404
          %3583 = vmatpush1.bf16.xpose.msra.mxu0 %v3403
          %3584 = vmatprep.subr.bf16.mxu0 %v3396
          %3585 = vmatpush1.bf16.xpose.msra.mxu0 %v3395
          %3586 = vmatprep.subr.bf16.mxu0 %v3516
          %3587 = vmatpush2.bf16.xpose.msra.mxu0 %v3515
          %3588 = vmatprep.subr.bf16.mxu0 %v3508
          %3589 = vmatpush2.bf16.xpose.msra.mxu0 %v3507
          %3590 = vmatprep.subr.bf16.mxu0 %v3500
          %3591 = vmatpush2.bf16.xpose.msra.mxu0 %v3499
          %3592 = vmatprep.subr.bf16.mxu0 %v3492
          %3593 = vmatpush2.bf16.xpose.msra.mxu0 %v3491
          %3594 = vmatprep.subr.bf16.mxu0 %v3484
          %3595 = vmatpush2.bf16.xpose.msra.mxu0 %v3483
          %3596 = vmatprep.subr.bf16.mxu0 %v3476
          %3597 = vmatpush2.bf16.xpose.msra.mxu0 %v3475
          %3598 = vmatprep.subr.bf16.mxu0 %v3468
          %3599 = vmatpush2.bf16.xpose.msra.mxu0 %v3467
          %3600 = vmatprep.subr.bf16.mxu0 %v3460
          %3601 = vmatpush2.bf16.xpose.msra.mxu0 %v3459
          %3602 = vmatprep.mubr.bf16.mxu0 %v3524
          %3603 = vmatmul.mubr.bf16.gmra.mxu0 %v3523
          %v3604 = vpop.f32.mrf.mxu0
          %v3605 = vadd.f32 %v3564, %v3604
          %v3606 = vpop.f32.mrf.mxu0
          %v3607 = vadd.f32 %v3566, %v3606
          %v3608 = vpop.f32.mrf.mxu0
          %v3609 = vpop.f32.mrf.mxu0
          %3610 = vdwg.mxu0
          %3611 = vmatprep.subr.bf16.mxu0 %v3454
          %3612 = vmatpush1.bf16.xpose.msra.mxu0 %v3453
          %3613 = vmatprep.subr.bf16.mxu0 %v3446
          %3614 = vmatpush1.bf16.xpose.msra.mxu0 %v3445
          %3615 = vmatprep.subr.bf16.mxu0 %v3438
          %3616 = vmatpush1.bf16.xpose.msra.mxu0 %v3437
          %3617 = vmatprep.subr.bf16.mxu0 %v3430
          %3618 = vmatpush1.bf16.xpose.msra.mxu0 %v3429
          %3619 = vmatprep.subr.bf16.mxu0 %v3422
          %3620 = vmatpush1.bf16.xpose.msra.mxu0 %v3421
          %3621 = vmatprep.subr.bf16.mxu0 %v3414
          %3622 = vmatpush1.bf16.xpose.msra.mxu0 %v3413
          %3623 = vmatprep.subr.bf16.mxu0 %v3406
          %3624 = vmatpush1.bf16.xpose.msra.mxu0 %v3405
          %3625 = vmatprep.subr.bf16.mxu0 %v3398
          %3626 = vmatpush1.bf16.xpose.msra.mxu0 %v3397
          %3627 = vmatprep.subr.bf16.mxu0 %v3518
          %3628 = vmatpush2.bf16.xpose.msra.mxu0 %v3517
          %3629 = vmatprep.subr.bf16.mxu0 %v3510
          %3630 = vmatpush2.bf16.xpose.msra.mxu0 %v3509
          %3631 = vmatprep.subr.bf16.mxu0 %v3502
          %3632 = vmatpush2.bf16.xpose.msra.mxu0 %v3501
          %3633 = vmatprep.subr.bf16.mxu0 %v3494
          %3634 = vmatpush2.bf16.xpose.msra.mxu0 %v3493
          %3635 = vmatprep.subr.bf16.mxu0 %v3486
          %3636 = vmatpush2.bf16.xpose.msra.mxu0 %v3485
          %3637 = vmatprep.subr.bf16.mxu0 %v3478
          %3638 = vmatpush2.bf16.xpose.msra.mxu0 %v3477
          %3639 = vmatprep.subr.bf16.mxu0 %v3470
          %3640 = vmatpush2.bf16.xpose.msra.mxu0 %v3469
          %3641 = vmatprep.subr.bf16.mxu0 %v3462
          %3642 = vmatpush2.bf16.xpose.msra.mxu0 %v3461
          %3643 = vmatprep.mubr.bf16.mxu0 %v3526
          %3644 = vmatmul.mubr.bf16.gmra.mxu0 %v3525
          %v3645 = vpop.f32.mrf.mxu0
          %v3646 = vadd.f32 %v3605, %v3645
          %v3647 = vpop.f32.mrf.mxu0
          %v3648 = vadd.f32 %v3607, %v3647
          %v3649 = vpop.f32.mrf.mxu0
          %v3650 = vpop.f32.mrf.mxu0
          %3651 = vdwg.mxu0
          %3652 = vmatprep.subr.bf16.mxu0 %v3456
          %3653 = vmatpush1.bf16.xpose.msra.mxu0 %v3455
          %3654 = vmatprep.subr.bf16.mxu0 %v3448
          %3655 = vmatpush1.bf16.xpose.msra.mxu0 %v3447
          %3656 = vmatprep.subr.bf16.mxu0 %v3440
          %3657 = vmatpush1.bf16.xpose.msra.mxu0 %v3439
          %3658 = vmatprep.subr.bf16.mxu0 %v3432
          %3659 = vmatpush1.bf16.xpose.msra.mxu0 %v3431
          %3660 = vmatprep.subr.bf16.mxu0 %v3424
          %3661 = vmatpush1.bf16.xpose.msra.mxu0 %v3423
          %3662 = vmatprep.subr.bf16.mxu0 %v3416
          %3663 = vmatpush1.bf16.xpose.msra.mxu0 %v3415
          %3664 = vmatprep.subr.bf16.mxu0 %v3408
          %3665 = vmatpush1.bf16.xpose.msra.mxu0 %v3407
          %3666 = vmatprep.subr.bf16.mxu0 %v3400
          %3667 = vmatpush1.bf16.xpose.msra.mxu0 %v3399
          %3668 = vmatprep.subr.bf16.mxu0 %v3520
          %3669 = vmatpush2.bf16.xpose.msra.mxu0 %v3519
          %3670 = vmatprep.subr.bf16.mxu0 %v3512
          %3671 = vmatpush2.bf16.xpose.msra.mxu0 %v3511
          %3672 = vmatprep.subr.bf16.mxu0 %v3504
          %3673 = vmatpush2.bf16.xpose.msra.mxu0 %v3503
          %3674 = vmatprep.subr.bf16.mxu0 %v3496
          %3675 = vmatpush2.bf16.xpose.msra.mxu0 %v3495
          %3676 = vmatprep.subr.bf16.mxu0 %v3488
          %3677 = vmatpush2.bf16.xpose.msra.mxu0 %v3487
          %3678 = vmatprep.subr.bf16.mxu0 %v3480
          %3679 = vmatpush2.bf16.xpose.msra.mxu0 %v3479
          %3680 = vmatprep.subr.bf16.mxu0 %v3472
          %3681 = vmatpush2.bf16.xpose.msra.mxu0 %v3471
          %3682 = vmatprep.subr.bf16.mxu0 %v3464
          %3683 = vmatpush2.bf16.xpose.msra.mxu0 %v3463
          %3684 = vmatprep.mubr.bf16.mxu0 %v3528
          %3685 = vmatmul.mubr.bf16.gmra.mxu0 %v3527
          %v3686 = vpop.f32.mrf.mxu0
          %v3687 = vadd.f32 %v3646, %v3686
          %v3688 = vpop.f32.mrf.mxu0
          %v3689 = vadd.f32 %v3648, %v3688
          %v3690 = vpop.f32.mrf.mxu0
          %v3691 = vpop.f32.mrf.mxu0
          %3692 = vdwg.mxu0
          %s3693 = smul.u32 %s452, 2
          %s3694 = smul.addr %s3693, 4
          %s3695 = scalar_lea.vmem %s8, %s3694
          %v3696 = vld [vmem:[%s3695] sm:$0xf]
          %v3697 = vld [vmem:[%s3695 + $0x4] sm:$0xf]
          %v3698 = vpack.c.bf16 %v3687, %v3687
          %v3699 = vpack.c.bf16 %v3689, %v3689
          %v3702 = vunpack.c.l.b16 %v3696
          %v3703 = vunpack.c.l.b16 %v3697
          %v3704 = vpack.c.b16 %v3703, %v3702
          %v3706 = vsel %vm915, %v3704, 0
          %v3709 = vsel %vm964, %v3698, 0
          %v3712 = vsel %vm964, %v3699, 0
          %3714 = vmatprep.subr.bf16.mxu0 0
          %3715 = vmatpush1.bf16.msra.mxu0 0
          %3716 = vmatprep.subr.bf16.mxu0 0
          %3717 = vmatpush1.bf16.msra.mxu0 0
          %3718 = vmatprep.subr.bf16.mxu0 0
          %3719 = vmatpush1.bf16.msra.mxu0 0
          %3720 = vmatprep.subr.bf16.mxu0 0
          %3721 = vmatpush1.bf16.msra.mxu0 0
          %3722 = vmatprep.subr.bf16.mxu0 0
          %3723 = vmatpush1.bf16.msra.mxu0 0
          %3724 = vmatprep.subr.bf16.mxu0 0
          %3725 = vmatpush1.bf16.msra.mxu0 0
          %3726 = vmatprep.subr.bf16.mxu0 0
          %3727 = vmatpush1.bf16.msra.mxu0 0
          %3728 = vmatprep.subr.bf16.mxu0 %v3712
          %3729 = vmatpush1.bf16.msra.mxu0 %v3709
          %3730 = vmatprep.subr.bf16.mxu0 0
          %3731 = vmatpush2.bf16.msra.mxu0 0
          %3732 = vmatprep.subr.bf16.mxu0 0
          %3733 = vmatpush2.bf16.msra.mxu0 0
          %3734 = vmatprep.subr.bf16.mxu0 0
          %3735 = vmatpush2.bf16.msra.mxu0 0
          %3736 = vmatprep.subr.bf16.mxu0 0
          %3737 = vmatpush2.bf16.msra.mxu0 0
          %3738 = vmatprep.subr.bf16.mxu0 0
          %3739 = vmatpush2.bf16.msra.mxu0 0
          %3740 = vmatprep.subr.bf16.mxu0 0
          %3741 = vmatpush2.bf16.msra.mxu0 0
          %3742 = vmatprep.subr.bf16.mxu0 0
          %3743 = vmatpush2.bf16.msra.mxu0 0
          %3744 = vmatprep.subr.bf16.mxu0 0
          %3745 = vmatpush2.bf16.msra.mxu0 0
          %3746 = vmatprep.mubr.bf16.mxu0 0
          %3747 = vmatmul.mubr.bf16.gmra.mxu0 %v3706
          %v3748 = vpop.f32.mrf.mxu0
          %v3749 = vadd.f32 0.0, %v3748
          %v3750 = vpop.f32.mrf.mxu0
          %v3751 = vadd.f32 0.0, %v3750
          %v3752 = vpop.f32.mrf.mxu0
          %v3753 = vadd.f32 0.0, %v3752
          %v3754 = vpop.f32.mrf.mxu0
          %v3755 = vadd.f32 0.0, %v3754
          %3756 = vdwg.mxu0
          %v3757 = vadd.f32 %v457, %v3749
          %v3758 = vadd.f32 %v458, %v3751
          %v3759 = vadd.f32 %v459, %v3753
          %v3760 = vadd.f32 %v460, %v3755
        $region88: #{spectral_attention_pallas.3} parent=78 // loop_footer
          %s456 = sadd.s32 1, %s452
        $region89: #{spectral_attention_pallas.3} parent=78 // loop_footer_branch
          %451 = sbr.rel target = $region85
        $region90: #{spectral_attention_pallas.3} parent=78 // loop_exit
          _
        %v3761 = vld [vmem:[%s9] sm:$0xff]
        %v3762 = vld [vmem:[%s9 + $0x8] sm:$0xff]
        %3764 = vset.pattern.permute.xlu0 0
        %3765 = vperm.xlu0 %3764, %v3761
        %v3766 = vpop.permute.xlu0 %3765
        %3769 = vset.pattern.permute.xlu0 0
        %3770 = vperm.xlu0 %3769, %v3762
        %v3771 = vpop.permute.xlu0 %3770
        %v3773 = vadd.f32 %v457, %v3766
        %v3774 = vadd.f32 %v458, %v3766
        %v3775 = vadd.f32 %v459, %v3771
        %v3776 = vadd.f32 %v460, %v3771
        %3777 = vst [vmem:[%s412] sm:$0xff] %v3773
        %3778 = vst [vmem:[%s412 + $0x8] sm:$0xff] %v3774
        %3779 = vst [vmem:[%s412 + $0x10] sm:$0xff] %v3775
        %3780 = vst [vmem:[%s412 + $0x18] sm:$0xff] %v3776
        %s3781 = sand.u32 %s265, 1
        %s3782 = sand.u32 %s265, 1
        %s3783 = smul.addr %s3782, 32
        %s3784 = scalar_lea.vmem [#allocation3], %s3783
        // Predicated region
        $region91: #{spectral_attention_pallas.3} parent=78 // pred_check
          %p3785 = pneg %p275
        $region92: #{spectral_attention_pallas.3} parent=78 // pred_check_branch
          %3787 = sbr.rel (%p3785) target = $region94
        $region93: #{spectral_attention_pallas.3} parent=78 // pred_region
          %s3788 = smul.u32 2, %s26
          %s3789 = smul.addr %s25, 16
          %s3790 = sadd.s32 %s3788, %s3789
          %s3791 = smul.addr %s3790, 8
          %s3792 = scalar_lea.vmem %s10, %s3791
          // Predicated region
          $region95: #{spectral_attention_pallas.3} parent=93 // pred_check
            _
          $region96: #{spectral_attention_pallas.3} parent=93 // pred_check_branch
            %3794 = sbr.rel (0) target = $region98
          $region97: #{spectral_attention_pallas.3} parent=93 // pred_region
            // Predicated region
            $region99: #{spectral_attention_pallas.3} parent=97 // pred_check
              _
            $region100: #{spectral_attention_pallas.3} parent=97 // pred_check_branch
              %3796 = sbr.rel (0) target = $region102
            $region101: #{spectral_attention_pallas.3} parent=97 // pred_region
              loop: start=0, step=1, limit=1
              $region103: #{spectral_attention_pallas.3} parent=101 // loop_pre_header
                _
              $region104: #{spectral_attention_pallas.3} parent=101 // loop_header
                %s3798 = sphi 0, %s3802
                %p3799 = scmp.ge.s32.totalorder %s3798, 1
                %s3803 = sphi %s3784, %s3784
                %s3804 = sphi %s3792, %s3792
              $region105: #{spectral_attention_pallas.3} parent=101 // loop_header_branch
                %3801 = sbr.rel (%p3799) target = $region109
              $region106: #{spectral_attention_pallas.3} parent=101 // loop_body
                %v3805 = vld [vmem:[%s3803] sm:$0xff]
                %3806 = vst [vmem:[%s3804] sm:$0xff] %v3805
                %v3807 = vld [vmem:[%s3803 + $0x8] sm:$0xff]
                %3808 = vst [vmem:[%s3804 + $0x8] sm:$0xff] %v3807
                %v3809 = vld [vmem:[%s3803 + $0x10] sm:$0xff]
                %3810 = vst [vmem:[%s3804 + $0x40] sm:$0xff] %v3809
                %v3811 = vld [vmem:[%s3803 + $0x18] sm:$0xff]
                %3812 = vst [vmem:[%s3804 + $0x48] sm:$0xff] %v3811
              $region107: #{spectral_attention_pallas.3} parent=101 // loop_footer
                %s3802 = sadd.s32 1, %s3798
              $region108: #{spectral_attention_pallas.3} parent=101 // loop_footer_branch
                %3797 = sbr.rel target = $region104
              $region109: #{spectral_attention_pallas.3} parent=101 // loop_exit
                _
            $region102: #{spectral_attention_pallas.3} parent=97 // pred_fallthru
              _
            // Predicated region
            $region110: #{spectral_attention_pallas.3} parent=97 // pred_check
              _
            $region111: #{spectral_attention_pallas.3} parent=97 // pred_check_branch
              %3814 = sbr.rel target = $region113
            $region112: #{spectral_attention_pallas.3} parent=97 // pred_region
              _
            $region113: #{spectral_attention_pallas.3} parent=97 // pred_fallthru
              _
          $region98: #{spectral_attention_pallas.3} parent=93 // pred_fallthru
            _
          %3815 = vnop
        $region94: #{spectral_attention_pallas.3} parent=78 // pred_fallthru
          _
      $region79: #{spectral_attention_pallas.3} parent=5 // pred_fallthru
        _
      %p3816 = scmp.le.s32.totalorder 2, %s16
      // Predicated region
      $region114: #{spectral_attention_pallas.3} parent=5 // pred_check
        %p3817 = pneg %p3816
      $region115: #{spectral_attention_pallas.3} parent=5 // pred_check_branch
        %3819 = sbr.rel (%p3817) target = $region117
      $region116: #{spectral_attention_pallas.3} parent=5 // pred_region
        %s3820 = ssub.s32 %s16, 2
        // Predicated region
        $region118: #{spectral_attention_pallas.3} parent=116 // pred_check
          %p3821 = pneg %p281
        $region119: #{spectral_attention_pallas.3} parent=116 // pred_check_branch
          %3823 = sbr.rel (%p3821) target = $region121
        $region120: #{spectral_attention_pallas.3} parent=116 // pred_region
          %s3824 = sand.u32 %s266, 1
          %s3825 = sand.u32 %s266, 1
          %s3826 = smul.addr %s3825, 32
          %s3827 = scalar_lea.vmem [#allocation3], %s3826
        $region121: #{spectral_attention_pallas.3} parent=116 // pred_fallthru
          _
      $region117: #{spectral_attention_pallas.3} parent=5 // pred_fallthru
        _
    $region6: #{spectral_attention_pallas.3} parent=1 // loop_footer
      %s20 = sadd.s32 1, %s16
    $region7: #{spectral_attention_pallas.3} parent=1 // loop_footer_branch
      %15 = sbr.rel target = $region3
    $region8: #{spectral_attention_pallas.3} parent=1 // loop_exit
      _

</llo_original>
